<compile_context>
chip_gen: v5e
topology: v5e:2x2
jax: 0.10.0
libtpu: 0.0.40
codegen_flags: <defaults>
</compile_context>

<pallas_src>
import jax
import jax.numpy as jnp
from jax.experimental import pallas as pl
from jax.experimental.pallas import tpu as pltpu

H = 512          # GRU input / hidden size (fixed by the module)
N_STEPS = 4      # seq length (must equal n_steps: tout starts with Linear(n_steps, 256))
MULTI = 6        # final output channels
TB = 8           # batch rows per grid step (sublane-aligned)


# --------------------------------------------------------------------------- #
# Parameters
# --------------------------------------------------------------------------- #
def init_params(key):
    """f32 'master' parameters, matching the PyTorch module's init ranges."""
    ks = jax.random.split(key, 10)

    def u(k, shape, s):
        return jax.random.uniform(k, shape, jnp.float32, -s, s)

    s_gru = 1.0 / (H ** 0.5)
    s1 = 1.0 / (N_STEPS ** 0.5)
    s2 = 1.0 / (256.0 ** 0.5)
    s3 = 1.0 / (16.0 ** 0.5)
    return {
        # GRU weights pre-transposed for y = x @ W^T; columns ordered [r | z | n].
        "w_ih_t": u(ks[0], (H, 3 * H), s_gru),
        "w_hh_t": u(ks[1], (H, 3 * H), s_gru),
        "b_ih":   u(ks[2], (1, 3 * H), s_gru),
        "b_hh":   u(ks[3], (1, 3 * H), s_gru),
        # tout Linears in PyTorch (out, in) layout.
        "w1": u(ks[4], (256, N_STEPS), s1),
        "b1": u(ks[5], (256,), s1),
        "w2": u(ks[6], (16, 256), s2),
        "b2": u(ks[7], (16,), s2),
        "w3": u(ks[8], (MULTI, 16), s3),
        "b3": u(ks[9], (MULTI,), s3),
    }


def prepare_params(params, weight_format="int8"):
    """One-time packing of the f32 master params into the kernel's device format.

    Runs once at setup (NOT per forward call), so quantization / bf16 cast / tout
    folding add no per-call HBM traffic.
      weight_format: "int8" (halves the dominant weight DMA; best on v5e/v6e)
                     or "bf16".
    """
    dev = {
        "b_ih": params["b_ih"].astype(jnp.float32),
        "b_hh": params["b_hh"].astype(jnp.float32),
    }
    if weight_format == "int8":
        def quant(w):
            amax = jnp.max(jnp.abs(w), axis=0, keepdims=True)          # (1, 3H)
            scale = jnp.maximum(amax, 1e-30) / 127.0
            q = jnp.clip(jnp.round(w / scale), -127, 127).astype(jnp.int8)
            return q, scale.astype(jnp.float32)
        dev["w_ih"], dev["w_ih_scale"] = quant(params["w_ih_t"])
        dev["w_hh"], dev["w_hh_scale"] = quant(params["w_hh_t"])
    elif weight_format == "bf16":
        dev["w_ih"] = params["w_ih_t"].astype(jnp.bfloat16)
        dev["w_hh"] = params["w_hh_t"].astype(jnp.bfloat16)
    else:
        raise ValueError(f"unknown weight_format: {weight_format}")
    # TODO(synk): add an fp8 (float8_e4m3fn) weight path for v7x's native fp8 MXU.

    # tout = Linear(4,256) -> Linear(256,16) -> Linear(16,6) has NO activations, so
    # its composition is a single affine map over the T axis (exact fold).
    a = params["w3"] @ params["w2"] @ params["w1"]                      # (MULTI, T)
    c = (params["w3"] @ (params["w2"] @ params["b1"])
         + params["w3"] @ params["b2"] + params["b3"])                  # (MULTI,)
    dev["tout_a"] = a.reshape(-1).astype(jnp.float32)                   # (MULTI*T,)
    dev["tout_c"] = c.astype(jnp.float32)                               # (MULTI,)
    return dev


# --------------------------------------------------------------------------- #
# Kernel
# --------------------------------------------------------------------------- #
def _make_kernel(quantized):
    def kernel(*refs):
        if quantized:
            (x_ref, wih_ref, wih_s_ref, whh_ref, whh_s_ref,
             bih_ref, bhh_ref, a_ref, c_ref, out_ref) = refs
        else:
            (x_ref, wih_ref, whh_ref,
             bih_ref, bhh_ref, a_ref, c_ref, out_ref) = refs

        tb = x_ref.shape[1]

        # Weights -> bf16 MXU operands (int8 -> bf16 is exact for |q| <= 127).
        if quantized:
            wih = wih_ref[...].astype(jnp.float32).astype(jnp.bfloat16)
            whh = whh_ref[...].astype(jnp.float32).astype(jnp.bfloat16)
            wih_s = wih_s_ref[...]          # (1, 3H) per-output-column scales
            whh_s = whh_s_ref[...]
        else:
            wih = wih_ref[...]
            whh = whh_ref[...]
        bih = bih_ref[...]                  # (1, 3H) f32
        bhh = bhh_ref[...]

        # ---- Hoisted input projections: off the serial h-chain ----
        # Per-step dots keep each (TB, 3H) result in exactly the layout the gates
        # consume (no gi_all reshapes / sublane-offset slicing).
        gis = []
        for t in range(N_STEPS):
            g = jnp.dot(x_ref[t], wih, preferred_element_type=jnp.float32)
            if quantized:
                g = g * wih_s               # output-side scale == scaling the weights
            gis.append(g + bih)

        # ---- GRU recurrence (T=4, static -> unrolled); gates & h stay f32 ----
        h = jnp.zeros((tb, H), jnp.float32)
        hs = []
        for t in range(N_STEPS):
            gi = gis[t]
            gh = jnp.dot(h.astype(jnp.bfloat16), whh,
                         preferred_element_type=jnp.float32)
            if quantized:
                gh = gh * whh_s
            gh = gh + bhh
            r = jax.nn.sigmoid(gi[:, 0:H] + gh[:, 0:H])
            z = jax.nn.sigmoid(gi[:, H:2 * H] + gh[:, H:2 * H])
            n = jnp.tanh(gi[:, 2 * H:3 * H] + r * gh[:, 2 * H:3 * H])
            h = (1.0 - z) * n + z * h
            hs.append(h)

        # ---- Folded tout epilogue ----
        # out[m, b, hd] = sum_t A[m, t] * h_t[b, hd] + c[m]
        # 24 scalar*vector MACs on (TB, H) blocks, vectorized over batch; every
        # out_ref[m] store is an aligned, lane-dense (TB, H) slab.
        for m in range(MULTI):
            acc = c_ref[m] + a_ref[m * N_STEPS] * hs[0]
            for t in range(1, N_STEPS):
                acc = acc + a_ref[m * N_STEPS + t] * hs[t]
            out_ref[m] = acc

    return kernel


# --------------------------------------------------------------------------- #
# Wrapper
# --------------------------------------------------------------------------- #
def grunet_forward(x, dev):
    """x: (T=4, B, 512) f32, dev: prepare_params(...) -> (512, MULTI, B) f32."""
    T, B, h_in = x.shape
    assert T == N_STEPS and h_in == H, (T, h_in)
    quantized = dev["w_ih"].dtype == jnp.int8

    # Pad batch to a multiple of TB (sublane-aligned); padded rows are dropped after.
    b_pad = -(-B // TB) * TB
    if b_pad != B:
        x = jnp.pad(x, ((0, 0), (0, b_pad - B), (0, 0)))
    x = x.astype(jnp.bfloat16)              # halve activation DMA; accum stays f32

    grid = (b_pad // TB,)
    x_spec = pl.BlockSpec((N_STEPS, TB, H), lambda b: (0, b, 0))
    w_spec = pl.BlockSpec((H, 3 * H), lambda b: (0, 0))     # constant -> fetched once
    v_spec = pl.BlockSpec((1, 3 * H), lambda b: (0, 0))
    smem_spec = pl.BlockSpec(memory_space=pltpu.MemorySpace.SMEM)
    out_spec = pl.BlockSpec((MULTI, TB, H), lambda b: (0, b, 0))

    if quantized:
        in_specs = [x_spec, w_spec, v_spec, w_spec, v_spec, v_spec, v_spec,
                    smem_spec, smem_spec]
        args = (x, dev["w_ih"], dev["w_ih_scale"], dev["w_hh"], dev["w_hh_scale"],
                dev["b_ih"], dev["b_hh"], dev["tout_a"], dev["tout_c"])
    else:
        in_specs = [x_spec, w_spec, w_spec, v_spec, v_spec, smem_spec, smem_spec]
        args = (x, dev["w_ih"], dev["w_hh"],
                dev["b_ih"], dev["b_hh"], dev["tout_a"], dev["tout_c"])

    out = pl.pallas_call(
        _make_kernel(quantized),
        out_shape=jax.ShapeDtypeStruct((MULTI, b_pad, H), jnp.float32),
        grid_spec=pltpu.PrefetchScalarGridSpec(
            num_scalar_prefetch=0,
            grid=grid,
            in_specs=in_specs,
            out_specs=out_spec,
        ),
        compiler_params=pltpu.CompilerParams(
            # Batch blocks are independent -> megacore-parallel (2 TCs on v7x).
            dimension_semantics=("parallel",),
        ),
    )(*args)

    # (MULTI, B_pad, H) -> drop padding -> (H, MULTI, B). Tiny (~24 KB) permute in
    # plain JAX so the in-kernel stores stay aligned and lane-dense on H=512.
    return jnp.transpose(out[:, :B, :], (2, 0, 1))


# --------------------------------------------------------------------------- #
# Pure-JAX f32 reference (exact PyTorch GRUNet semantics)
# --------------------------------------------------------------------------- #
def grunet_reference(x, params):
    T, B, _ = x.shape
    h = jnp.zeros((B, H), jnp.float32)
    hs = []
    for t in range(T):
        gi = x[t] @ params["w_ih_t"] + params["b_ih"]
        gh = h @ params["w_hh_t"] + params["b_hh"]
        r = jax.nn.sigmoid(gi[:, 0:H] + gh[:, 0:H])
        z = jax.nn.sigmoid(gi[:, H:2 * H] + gh[:, H:2 * H])
        n = jnp.tanh(gi[:, 2 * H:3 * H] + r * gh[:, 2 * H:3 * H])
        h = (1.0 - z) * n + z * h
        hs.append(h)
    y = jnp.transpose(jnp.stack(hs, axis=0), (2, 1, 0))       # (H, B, T)
    y = y @ params["w1"].T + params["b1"]                      # (H, B, 256)
    y = y @ params["w2"].T + params["b2"]                      # (H, B, 16)
    y = y @ params["w3"].T + params["b3"]                      # (H, B, MULTI)
    return jnp.transpose(y, (0, 2, 1))                         # (H, MULTI, B)


if __name__ == "__main__":
    key = jax.random.PRNGKey(0)
    k_x, k_p = jax.random.split(key)

    B = 2
    x = jax.random.normal(k_x, (N_STEPS, B, H), jnp.float32)   # (seq=4, batch=2, 512)
    params = init_params(k_p)
    ref = grunet_reference(x, params)

    fwd = jax.jit(grunet_forward)
    for fmt in ("bf16", "int8"):
        dev = prepare_params(params, weight_format=fmt)
        out = fwd(x, dev)
        jax.block_until_ready(out)
        assert out.shape == (H, MULTI, B), out.shape
        err = float(jnp.max(jnp.abs(out - ref)))
        assert err < 5e-2, (fmt, err)
    print("KERNEL_OK")
</pallas_src>

<mosaic_0001>
module attributes {stable_mosaic.version = 11 : i64} {
  func.func @kernel(%arg0: i32, %arg1: memref<4x8x512xbf16, #tpu.memory_space<vmem>>, %arg2: memref<512x1536xbf16, #tpu.memory_space<vmem>>, %arg3: memref<512x1536xbf16, #tpu.memory_space<vmem>>, %arg4: memref<1x1536xf32, #tpu.memory_space<vmem>>, %arg5: memref<1x1536xf32, #tpu.memory_space<vmem>>, %arg6: memref<24xf32, #tpu.memory_space<smem>>, %arg7: memref<6xf32, #tpu.memory_space<smem>>, %arg8: memref<6x8x512xf32, #tpu.memory_space<vmem>>) attributes {dimension_semantics = [#tpu.dimension_semantics<parallel>], iteration_bounds = array<i64: 1>, scalar_prefetch = 0 : i64, scratch_operands = 0 : i64, tpu.core_type = #tpu.core_type<tc>, window_params = [{transform_indices = @transform_0, window_bounds = array<i64: 4, 8, 512>}, {pipeline_mode = #tpu.pipeline_mode<synchronous>, transform_indices = @transform_1, window_bounds = array<i64: 512, 1536>}, {pipeline_mode = #tpu.pipeline_mode<synchronous>, transform_indices = @transform_2, window_bounds = array<i64: 512, 1536>}, {pipeline_mode = #tpu.pipeline_mode<synchronous>, transform_indices = @transform_3, window_bounds = array<i64: 1, 1536>}, {pipeline_mode = #tpu.pipeline_mode<synchronous>, transform_indices = @transform_4, window_bounds = array<i64: 1, 1536>}, {transform_indices = @transform_5, window_bounds = array<i64: 24>}, {transform_indices = @transform_6, window_bounds = array<i64: 6>}, {transform_indices = @transform_7, window_bounds = array<i64: 6, 8, 512>}]} {
    %c0 = arith.constant 0 : index
    %c0_0 = arith.constant 0 : index
    %0 = vector.load %arg2[%c0, %c0_0] : memref<512x1536xbf16, #tpu.memory_space<vmem>>, vector<512x1536xbf16>
    %c0_1 = arith.constant 0 : index
    %c0_2 = arith.constant 0 : index
    %1 = vector.load %arg3[%c0_1, %c0_2] : memref<512x1536xbf16, #tpu.memory_space<vmem>>, vector<512x1536xbf16>
    %c0_3 = arith.constant 0 : index
    %c0_4 = arith.constant 0 : index
    %2 = vector.load %arg4[%c0_3, %c0_4] : memref<1x1536xf32, #tpu.memory_space<vmem>>, vector<1x1536xf32>
    %c0_5 = arith.constant 0 : index
    %c0_6 = arith.constant 0 : index
    %3 = vector.load %arg5[%c0_5, %c0_6] : memref<1x1536xf32, #tpu.memory_space<vmem>>, vector<1x1536xf32>
    %c0_7 = arith.constant 0 : index
    %c0_8 = arith.constant 0 : index
    %c0_9 = arith.constant 0 : index
    %4 = vector.load %arg1[%c0_7, %c0_8, %c0_9] : memref<4x8x512xbf16, #tpu.memory_space<vmem>>, vector<1x8x512xbf16>
    %5 = vector.shape_cast %4 : vector<1x8x512xbf16> to vector<8x512xbf16>
    %cst = arith.constant dense<0.000000e+00> : vector<8x1536xf32>
    %6 = tpu.matmul %5, %0, %cst {dimension_numbers = #tpu.dot_dimension_numbers<[1], [0], [0], [1], [0, 0, 1, 1], [], []>} : vector<8x512xbf16>, vector<512x1536xbf16>, vector<8x1536xf32> -> vector<8x1536xf32>
    %7 = vector.broadcast %2 : vector<1x1536xf32> to vector<8x1536xf32>
    %8 = arith.addf %6, %7 : vector<8x1536xf32>
    %c1 = arith.constant 1 : index
    %c0_10 = arith.constant 0 : index
    %c0_11 = arith.constant 0 : index
    %9 = vector.load %arg1[%c1, %c0_10, %c0_11] : memref<4x8x512xbf16, #tpu.memory_space<vmem>>, vector<1x8x512xbf16>
    %10 = vector.shape_cast %9 : vector<1x8x512xbf16> to vector<8x512xbf16>
    %cst_12 = arith.constant dense<0.000000e+00> : vector<8x1536xf32>
    %11 = tpu.matmul %10, %0, %cst_12 {dimension_numbers = #tpu.dot_dimension_numbers<[1], [0], [0], [1], [0, 0, 1, 1], [], []>} : vector<8x512xbf16>, vector<512x1536xbf16>, vector<8x1536xf32> -> vector<8x1536xf32>
    %12 = vector.broadcast %2 : vector<1x1536xf32> to vector<8x1536xf32>
    %13 = arith.addf %11, %12 : vector<8x1536xf32>
    %c2 = arith.constant 2 : index
    %c0_13 = arith.constant 0 : index
    %c0_14 = arith.constant 0 : index
    %14 = vector.load %arg1[%c2, %c0_13, %c0_14] : memref<4x8x512xbf16, #tpu.memory_space<vmem>>, vector<1x8x512xbf16>
    %15 = vector.shape_cast %14 : vector<1x8x512xbf16> to vector<8x512xbf16>
    %cst_15 = arith.constant dense<0.000000e+00> : vector<8x1536xf32>
    %16 = tpu.matmul %15, %0, %cst_15 {dimension_numbers = #tpu.dot_dimension_numbers<[1], [0], [0], [1], [0, 0, 1, 1], [], []>} : vector<8x512xbf16>, vector<512x1536xbf16>, vector<8x1536xf32> -> vector<8x1536xf32>
    %17 = vector.broadcast %2 : vector<1x1536xf32> to vector<8x1536xf32>
    %18 = arith.addf %16, %17 : vector<8x1536xf32>
    %c3 = arith.constant 3 : index
    %c0_16 = arith.constant 0 : index
    %c0_17 = arith.constant 0 : index
    %19 = vector.load %arg1[%c3, %c0_16, %c0_17] : memref<4x8x512xbf16, #tpu.memory_space<vmem>>, vector<1x8x512xbf16>
    %20 = vector.shape_cast %19 : vector<1x8x512xbf16> to vector<8x512xbf16>
    %cst_18 = arith.constant dense<0.000000e+00> : vector<8x1536xf32>
    %21 = tpu.matmul %20, %0, %cst_18 {dimension_numbers = #tpu.dot_dimension_numbers<[1], [0], [0], [1], [0, 0, 1, 1], [], []>} : vector<8x512xbf16>, vector<512x1536xbf16>, vector<8x1536xf32> -> vector<8x1536xf32>
    %22 = vector.broadcast %2 : vector<1x1536xf32> to vector<8x1536xf32>
    %23 = arith.addf %21, %22 : vector<8x1536xf32>
    %cst_19 = arith.constant 0.000000e+00 : f32
    %24 = vector.broadcast %cst_19 : f32 to vector<8x512xf32>
    %25 = arith.truncf %24 : vector<8x512xf32> to vector<8x512xbf16>
    %cst_20 = arith.constant dense<0.000000e+00> : vector<8x1536xf32>
    %26 = tpu.matmul %25, %1, %cst_20 {dimension_numbers = #tpu.dot_dimension_numbers<[1], [0], [0], [1], [0, 0, 1, 1], [], []>} : vector<8x512xbf16>, vector<512x1536xbf16>, vector<8x1536xf32> -> vector<8x1536xf32>
    %27 = vector.broadcast %3 : vector<1x1536xf32> to vector<8x1536xf32>
    %28 = arith.addf %26, %27 : vector<8x1536xf32>
    %29 = vector.extract_strided_slice %8 {offsets = [0, 0], sizes = [8, 512], strides = [1, 1]} : vector<8x1536xf32> to vector<8x512xf32>
    %30 = vector.extract_strided_slice %28 {offsets = [0, 0], sizes = [8, 512], strides = [1, 1]} : vector<8x1536xf32> to vector<8x512xf32>
    %31 = arith.addf %29, %30 : vector<8x512xf32>
    %32 = arith.negf %31 : vector<8x512xf32>
    %33 = math.exp %32 : vector<8x512xf32>
    %cst_21 = arith.constant 1.000000e+00 : f32
    %34 = vector.broadcast %cst_21 : f32 to vector<8x512xf32>
    %35 = arith.addf %34, %33 : vector<8x512xf32>
    %36 = arith.divf %34, %35 : vector<8x512xf32>
    %37 = vector.extract_strided_slice %8 {offsets = [0, 512], sizes = [8, 512], strides = [1, 1]} : vector<8x1536xf32> to vector<8x512xf32>
    %38 = vector.extract_strided_slice %28 {offsets = [0, 512], sizes = [8, 512], strides = [1, 1]} : vector<8x1536xf32> to vector<8x512xf32>
    %39 = arith.addf %37, %38 : vector<8x512xf32>
    %40 = arith.negf %39 : vector<8x512xf32>
    %41 = math.exp %40 : vector<8x512xf32>
    %cst_22 = arith.constant 1.000000e+00 : f32
    %42 = vector.broadcast %cst_22 : f32 to vector<8x512xf32>
    %43 = arith.addf %42, %41 : vector<8x512xf32>
    %44 = arith.divf %42, %43 : vector<8x512xf32>
    %45 = vector.extract_strided_slice %8 {offsets = [0, 1024], sizes = [8, 512], strides = [1, 1]} : vector<8x1536xf32> to vector<8x512xf32>
    %46 = vector.extract_strided_slice %28 {offsets = [0, 1024], sizes = [8, 512], strides = [1, 1]} : vector<8x1536xf32> to vector<8x512xf32>
    %47 = arith.mulf %36, %46 : vector<8x512xf32>
    %48 = arith.addf %45, %47 : vector<8x512xf32>
    %49 = math.tanh %48 : vector<8x512xf32>
    %cst_23 = arith.constant 1.000000e+00 : f32
    %50 = vector.broadcast %cst_23 : f32 to vector<8x512xf32>
    %51 = arith.subf %50, %44 : vector<8x512xf32>
    %52 = arith.mulf %51, %49 : vector<8x512xf32>
    %53 = arith.mulf %44, %24 : vector<8x512xf32>
    %54 = arith.addf %52, %53 : vector<8x512xf32>
    %55 = arith.truncf %54 : vector<8x512xf32> to vector<8x512xbf16>
    %cst_24 = arith.constant dense<0.000000e+00> : vector<8x1536xf32>
    %56 = tpu.matmul %55, %1, %cst_24 {dimension_numbers = #tpu.dot_dimension_numbers<[1], [0], [0], [1], [0, 0, 1, 1], [], []>} : vector<8x512xbf16>, vector<512x1536xbf16>, vector<8x1536xf32> -> vector<8x1536xf32>
    %57 = vector.broadcast %3 : vector<1x1536xf32> to vector<8x1536xf32>
    %58 = arith.addf %56, %57 : vector<8x1536xf32>
    %59 = vector.extract_strided_slice %13 {offsets = [0, 0], sizes = [8, 512], strides = [1, 1]} : vector<8x1536xf32> to vector<8x512xf32>
    %60 = vector.extract_strided_slice %58 {offsets = [0, 0], sizes = [8, 512], strides = [1, 1]} : vector<8x1536xf32> to vector<8x512xf32>
    %61 = arith.addf %59, %60 : vector<8x512xf32>
    %62 = arith.negf %61 : vector<8x512xf32>
    %63 = math.exp %62 : vector<8x512xf32>
    %cst_25 = arith.constant 1.000000e+00 : f32
    %64 = vector.broadcast %cst_25 : f32 to vector<8x512xf32>
    %65 = arith.addf %64, %63 : vector<8x512xf32>
    %66 = arith.divf %64, %65 : vector<8x512xf32>
    %67 = vector.extract_strided_slice %13 {offsets = [0, 512], sizes = [8, 512], strides = [1, 1]} : vector<8x1536xf32> to vector<8x512xf32>
    %68 = vector.extract_strided_slice %58 {offsets = [0, 512], sizes = [8, 512], strides = [1, 1]} : vector<8x1536xf32> to vector<8x512xf32>
    %69 = arith.addf %67, %68 : vector<8x512xf32>
    %70 = arith.negf %69 : vector<8x512xf32>
    %71 = math.exp %70 : vector<8x512xf32>
    %cst_26 = arith.constant 1.000000e+00 : f32
    %72 = vector.broadcast %cst_26 : f32 to vector<8x512xf32>
    %73 = arith.addf %72, %71 : vector<8x512xf32>
    %74 = arith.divf %72, %73 : vector<8x512xf32>
    %75 = vector.extract_strided_slice %13 {offsets = [0, 1024], sizes = [8, 512], strides = [1, 1]} : vector<8x1536xf32> to vector<8x512xf32>
    %76 = vector.extract_strided_slice %58 {offsets = [0, 1024], sizes = [8, 512], strides = [1, 1]} : vector<8x1536xf32> to vector<8x512xf32>
    %77 = arith.mulf %66, %76 : vector<8x512xf32>
    %78 = arith.addf %75, %77 : vector<8x512xf32>
    %79 = math.tanh %78 : vector<8x512xf32>
    %cst_27 = arith.constant 1.000000e+00 : f32
    %80 = vector.broadcast %cst_27 : f32 to vector<8x512xf32>
    %81 = arith.subf %80, %74 : vector<8x512xf32>
    %82 = arith.mulf %81, %79 : vector<8x512xf32>
    %83 = arith.mulf %74, %54 : vector<8x512xf32>
    %84 = arith.addf %82, %83 : vector<8x512xf32>
    %85 = arith.truncf %84 : vector<8x512xf32> to vector<8x512xbf16>
    %cst_28 = arith.constant dense<0.000000e+00> : vector<8x1536xf32>
    %86 = tpu.matmul %85, %1, %cst_28 {dimension_numbers = #tpu.dot_dimension_numbers<[1], [0], [0], [1], [0, 0, 1, 1], [], []>} : vector<8x512xbf16>, vector<512x1536xbf16>, vector<8x1536xf32> -> vector<8x1536xf32>
    %87 = vector.broadcast %3 : vector<1x1536xf32> to vector<8x1536xf32>
    %88 = arith.addf %86, %87 : vector<8x1536xf32>
    %89 = vector.extract_strided_slice %18 {offsets = [0, 0], sizes = [8, 512], strides = [1, 1]} : vector<8x1536xf32> to vector<8x512xf32>
    %90 = vector.extract_strided_slice %88 {offsets = [0, 0], sizes = [8, 512], strides = [1, 1]} : vector<8x1536xf32> to vector<8x512xf32>
    %91 = arith.addf %89, %90 : vector<8x512xf32>
    %92 = arith.negf %91 : vector<8x512xf32>
    %93 = math.exp %92 : vector<8x512xf32>
    %cst_29 = arith.constant 1.000000e+00 : f32
    %94 = vector.broadcast %cst_29 : f32 to vector<8x512xf32>
    %95 = arith.addf %94, %93 : vector<8x512xf32>
    %96 = arith.divf %94, %95 : vector<8x512xf32>
    %97 = vector.extract_strided_slice %18 {offsets = [0, 512], sizes = [8, 512], strides = [1, 1]} : vector<8x1536xf32> to vector<8x512xf32>
    %98 = vector.extract_strided_slice %88 {offsets = [0, 512], sizes = [8, 512], strides = [1, 1]} : vector<8x1536xf32> to vector<8x512xf32>
    %99 = arith.addf %97, %98 : vector<8x512xf32>
    %100 = arith.negf %99 : vector<8x512xf32>
    %101 = math.exp %100 : vector<8x512xf32>
    %cst_30 = arith.constant 1.000000e+00 : f32
    %102 = vector.broadcast %cst_30 : f32 to vector<8x512xf32>
    %103 = arith.addf %102, %101 : vector<8x512xf32>
    %104 = arith.divf %102, %103 : vector<8x512xf32>
    %105 = vector.extract_strided_slice %18 {offsets = [0, 1024], sizes = [8, 512], strides = [1, 1]} : vector<8x1536xf32> to vector<8x512xf32>
    %106 = vector.extract_strided_slice %88 {offsets = [0, 1024], sizes = [8, 512], strides = [1, 1]} : vector<8x1536xf32> to vector<8x512xf32>
    %107 = arith.mulf %96, %106 : vector<8x512xf32>
    %108 = arith.addf %105, %107 : vector<8x512xf32>
    %109 = math.tanh %108 : vector<8x512xf32>
    %cst_31 = arith.constant 1.000000e+00 : f32
    %110 = vector.broadcast %cst_31 : f32 to vector<8x512xf32>
    %111 = arith.subf %110, %104 : vector<8x512xf32>
    %112 = arith.mulf %111, %109 : vector<8x512xf32>
    %113 = arith.mulf %104, %84 : vector<8x512xf32>
    %114 = arith.addf %112, %113 : vector<8x512xf32>
    %115 = arith.truncf %114 : vector<8x512xf32> to vector<8x512xbf16>
    %cst_32 = arith.constant dense<0.000000e+00> : vector<8x1536xf32>
    %116 = tpu.matmul %115, %1, %cst_32 {dimension_numbers = #tpu.dot_dimension_numbers<[1], [0], [0], [1], [0, 0, 1, 1], [], []>} : vector<8x512xbf16>, vector<512x1536xbf16>, vector<8x1536xf32> -> vector<8x1536xf32>
    %117 = vector.broadcast %3 : vector<1x1536xf32> to vector<8x1536xf32>
    %118 = arith.addf %116, %117 : vector<8x1536xf32>
    %119 = vector.extract_strided_slice %23 {offsets = [0, 0], sizes = [8, 512], strides = [1, 1]} : vector<8x1536xf32> to vector<8x512xf32>
    %120 = vector.extract_strided_slice %118 {offsets = [0, 0], sizes = [8, 512], strides = [1, 1]} : vector<8x1536xf32> to vector<8x512xf32>
    %121 = arith.addf %119, %120 : vector<8x512xf32>
    %122 = arith.negf %121 : vector<8x512xf32>
    %123 = math.exp %122 : vector<8x512xf32>
    %cst_33 = arith.constant 1.000000e+00 : f32
    %124 = vector.broadcast %cst_33 : f32 to vector<8x512xf32>
    %125 = arith.addf %124, %123 : vector<8x512xf32>
    %126 = arith.divf %124, %125 : vector<8x512xf32>
    %127 = vector.extract_strided_slice %23 {offsets = [0, 512], sizes = [8, 512], strides = [1, 1]} : vector<8x1536xf32> to vector<8x512xf32>
    %128 = vector.extract_strided_slice %118 {offsets = [0, 512], sizes = [8, 512], strides = [1, 1]} : vector<8x1536xf32> to vector<8x512xf32>
    %129 = arith.addf %127, %128 : vector<8x512xf32>
    %130 = arith.negf %129 : vector<8x512xf32>
    %131 = math.exp %130 : vector<8x512xf32>
    %cst_34 = arith.constant 1.000000e+00 : f32
    %132 = vector.broadcast %cst_34 : f32 to vector<8x512xf32>
    %133 = arith.addf %132, %131 : vector<8x512xf32>
    %134 = arith.divf %132, %133 : vector<8x512xf32>
    %135 = vector.extract_strided_slice %23 {offsets = [0, 1024], sizes = [8, 512], strides = [1, 1]} : vector<8x1536xf32> to vector<8x512xf32>
    %136 = vector.extract_strided_slice %118 {offsets = [0, 1024], sizes = [8, 512], strides = [1, 1]} : vector<8x1536xf32> to vector<8x512xf32>
    %137 = arith.mulf %126, %136 : vector<8x512xf32>
    %138 = arith.addf %135, %137 : vector<8x512xf32>
    %139 = math.tanh %138 : vector<8x512xf32>
    %cst_35 = arith.constant 1.000000e+00 : f32
    %140 = vector.broadcast %cst_35 : f32 to vector<8x512xf32>
    %141 = arith.subf %140, %134 : vector<8x512xf32>
    %142 = arith.mulf %141, %139 : vector<8x512xf32>
    %143 = arith.mulf %134, %114 : vector<8x512xf32>
    %144 = arith.addf %142, %143 : vector<8x512xf32>
    %c0_36 = arith.constant 0 : index
    %145 = memref.load %arg7[%c0_36] : memref<6xf32, #tpu.memory_space<smem>>
    %c0_37 = arith.constant 0 : index
    %146 = memref.load %arg6[%c0_37] : memref<24xf32, #tpu.memory_space<smem>>
    %147 = vector.broadcast %146 : f32 to vector<8x512xf32>
    %148 = arith.mulf %147, %54 : vector<8x512xf32>
    %149 = vector.broadcast %145 : f32 to vector<8x512xf32>
    %150 = arith.addf %149, %148 : vector<8x512xf32>
    %c1_38 = arith.constant 1 : index
    %151 = memref.load %arg6[%c1_38] : memref<24xf32, #tpu.memory_space<smem>>
    %152 = vector.broadcast %151 : f32 to vector<8x512xf32>
    %153 = arith.mulf %152, %84 : vector<8x512xf32>
    %154 = arith.addf %150, %153 : vector<8x512xf32>
    %c2_39 = arith.constant 2 : index
    %155 = memref.load %arg6[%c2_39] : memref<24xf32, #tpu.memory_space<smem>>
    %156 = vector.broadcast %155 : f32 to vector<8x512xf32>
    %157 = arith.mulf %156, %114 : vector<8x512xf32>
    %158 = arith.addf %154, %157 : vector<8x512xf32>
    %c3_40 = arith.constant 3 : index
    %159 = memref.load %arg6[%c3_40] : memref<24xf32, #tpu.memory_space<smem>>
    %160 = vector.broadcast %159 : f32 to vector<8x512xf32>
    %161 = arith.mulf %160, %144 : vector<8x512xf32>
    %162 = arith.addf %158, %161 : vector<8x512xf32>
    %c0_41 = arith.constant 0 : index
    %c0_42 = arith.constant 0 : index
    %c0_43 = arith.constant 0 : index
    %163 = vector.load %arg8[%c0_41, %c0_42, %c0_43] : memref<6x8x512xf32, #tpu.memory_space<vmem>>, vector<1x8x512xf32>
    %164 = vector.shape_cast %163 : vector<1x8x512xf32> to vector<8x512xf32>
    %165 = vector.shape_cast %162 : vector<8x512xf32> to vector<1x8x512xf32>
    tpu.vector_store %arg8[%c0_41, %c0_42, %c0_43], %165 {strides = array<i32>} : memref<6x8x512xf32, #tpu.memory_space<vmem>>, vector<1x8x512xf32>,
    %c1_44 = arith.constant 1 : index
    %166 = memref.load %arg7[%c1_44] : memref<6xf32, #tpu.memory_space<smem>>
    %c4 = arith.constant 4 : index
    %167 = memref.load %arg6[%c4] : memref<24xf32, #tpu.memory_space<smem>>
    %168 = vector.broadcast %167 : f32 to vector<8x512xf32>
    %169 = arith.mulf %168, %54 : vector<8x512xf32>
    %170 = vector.broadcast %166 : f32 to vector<8x512xf32>
    %171 = arith.addf %170, %169 : vector<8x512xf32>
    %c5 = arith.constant 5 : index
    %172 = memref.load %arg6[%c5] : memref<24xf32, #tpu.memory_space<smem>>
    %173 = vector.broadcast %172 : f32 to vector<8x512xf32>
    %174 = arith.mulf %173, %84 : vector<8x512xf32>
    %175 = arith.addf %171, %174 : vector<8x512xf32>
    %c6 = arith.constant 6 : index
    %176 = memref.load %arg6[%c6] : memref<24xf32, #tpu.memory_space<smem>>
    %177 = vector.broadcast %176 : f32 to vector<8x512xf32>
    %178 = arith.mulf %177, %114 : vector<8x512xf32>
    %179 = arith.addf %175, %178 : vector<8x512xf32>
    %c7 = arith.constant 7 : index
    %180 = memref.load %arg6[%c7] : memref<24xf32, #tpu.memory_space<smem>>
    %181 = vector.broadcast %180 : f32 to vector<8x512xf32>
    %182 = arith.mulf %181, %144 : vector<8x512xf32>
    %183 = arith.addf %179, %182 : vector<8x512xf32>
    %c1_45 = arith.constant 1 : index
    %c0_46 = arith.constant 0 : index
    %c0_47 = arith.constant 0 : index
    %184 = vector.load %arg8[%c1_45, %c0_46, %c0_47] : memref<6x8x512xf32, #tpu.memory_space<vmem>>, vector<1x8x512xf32>
    %185 = vector.shape_cast %184 : vector<1x8x512xf32> to vector<8x512xf32>
    %186 = vector.shape_cast %183 : vector<8x512xf32> to vector<1x8x512xf32>
    tpu.vector_store %arg8[%c1_45, %c0_46, %c0_47], %186 {strides = array<i32>} : memref<6x8x512xf32, #tpu.memory_space<vmem>>, vector<1x8x512xf32>,
    %c2_48 = arith.constant 2 : index
    %187 = memref.load %arg7[%c2_48] : memref<6xf32, #tpu.memory_space<smem>>
    %c8 = arith.constant 8 : index
    %188 = memref.load %arg6[%c8] : memref<24xf32, #tpu.memory_space<smem>>
    %189 = vector.broadcast %188 : f32 to vector<8x512xf32>
    %190 = arith.mulf %189, %54 : vector<8x512xf32>
    %191 = vector.broadcast %187 : f32 to vector<8x512xf32>
    %192 = arith.addf %191, %190 : vector<8x512xf32>
    %c9 = arith.constant 9 : index
    %193 = memref.load %arg6[%c9] : memref<24xf32, #tpu.memory_space<smem>>
    %194 = vector.broadcast %193 : f32 to vector<8x512xf32>
    %195 = arith.mulf %194, %84 : vector<8x512xf32>
    %196 = arith.addf %192, %195 : vector<8x512xf32>
    %c10 = arith.constant 10 : index
    %197 = memref.load %arg6[%c10] : memref<24xf32, #tpu.memory_space<smem>>
    %198 = vector.broadcast %197 : f32 to vector<8x512xf32>
    %199 = arith.mulf %198, %114 : vector<8x512xf32>
    %200 = arith.addf %196, %199 : vector<8x512xf32>
    %c11 = arith.constant 11 : index
    %201 = memref.load %arg6[%c11] : memref<24xf32, #tpu.memory_space<smem>>
    %202 = vector.broadcast %201 : f32 to vector<8x512xf32>
    %203 = arith.mulf %202, %144 : vector<8x512xf32>
    %204 = arith.addf %200, %203 : vector<8x512xf32>
    %c2_49 = arith.constant 2 : index
    %c0_50 = arith.constant 0 : index
    %c0_51 = arith.constant 0 : index
    %205 = vector.load %arg8[%c2_49, %c0_50, %c0_51] : memref<6x8x512xf32, #tpu.memory_space<vmem>>, vector<1x8x512xf32>
    %206 = vector.shape_cast %205 : vector<1x8x512xf32> to vector<8x512xf32>
    %207 = vector.shape_cast %204 : vector<8x512xf32> to vector<1x8x512xf32>
    tpu.vector_store %arg8[%c2_49, %c0_50, %c0_51], %207 {strides = array<i32>} : memref<6x8x512xf32, #tpu.memory_space<vmem>>, vector<1x8x512xf32>,
    %c3_52 = arith.constant 3 : index
    %208 = memref.load %arg7[%c3_52] : memref<6xf32, #tpu.memory_space<smem>>
    %c12 = arith.constant 12 : index
    %209 = memref.load %arg6[%c12] : memref<24xf32, #tpu.memory_space<smem>>
    %210 = vector.broadcast %209 : f32 to vector<8x512xf32>
    %211 = arith.mulf %210, %54 : vector<8x512xf32>
    %212 = vector.broadcast %208 : f32 to vector<8x512xf32>
    %213 = arith.addf %212, %211 : vector<8x512xf32>
    %c13 = arith.constant 13 : index
    %214 = memref.load %arg6[%c13] : memref<24xf32, #tpu.memory_space<smem>>
    %215 = vector.broadcast %214 : f32 to vector<8x512xf32>
    %216 = arith.mulf %215, %84 : vector<8x512xf32>
    %217 = arith.addf %213, %216 : vector<8x512xf32>
    %c14 = arith.constant 14 : index
    %218 = memref.load %arg6[%c14] : memref<24xf32, #tpu.memory_space<smem>>
    %219 = vector.broadcast %218 : f32 to vector<8x512xf32>
    %220 = arith.mulf %219, %114 : vector<8x512xf32>
    %221 = arith.addf %217, %220 : vector<8x512xf32>
    %c15 = arith.constant 15 : index
    %222 = memref.load %arg6[%c15] : memref<24xf32, #tpu.memory_space<smem>>
    %223 = vector.broadcast %222 : f32 to vector<8x512xf32>
    %224 = arith.mulf %223, %144 : vector<8x512xf32>
    %225 = arith.addf %221, %224 : vector<8x512xf32>
    %c3_53 = arith.constant 3 : index
    %c0_54 = arith.constant 0 : index
    %c0_55 = arith.constant 0 : index
    %226 = vector.load %arg8[%c3_53, %c0_54, %c0_55] : memref<6x8x512xf32, #tpu.memory_space<vmem>>, vector<1x8x512xf32>
    %227 = vector.shape_cast %226 : vector<1x8x512xf32> to vector<8x512xf32>
    %228 = vector.shape_cast %225 : vector<8x512xf32> to vector<1x8x512xf32>
    tpu.vector_store %arg8[%c3_53, %c0_54, %c0_55], %228 {strides = array<i32>} : memref<6x8x512xf32, #tpu.memory_space<vmem>>, vector<1x8x512xf32>,
    %c4_56 = arith.constant 4 : index
    %229 = memref.load %arg7[%c4_56] : memref<6xf32, #tpu.memory_space<smem>>
    %c16 = arith.constant 16 : index
    %230 = memref.load %arg6[%c16] : memref<24xf32, #tpu.memory_space<smem>>
    %231 = vector.broadcast %230 : f32 to vector<8x512xf32>
    %232 = arith.mulf %231, %54 : vector<8x512xf32>
    %233 = vector.broadcast %229 : f32 to vector<8x512xf32>
    %234 = arith.addf %233, %232 : vector<8x512xf32>
    %c17 = arith.constant 17 : index
    %235 = memref.load %arg6[%c17] : memref<24xf32, #tpu.memory_space<smem>>
    %236 = vector.broadcast %235 : f32 to vector<8x512xf32>
    %237 = arith.mulf %236, %84 : vector<8x512xf32>
    %238 = arith.addf %234, %237 : vector<8x512xf32>
    %c18 = arith.constant 18 : index
    %239 = memref.load %arg6[%c18] : memref<24xf32, #tpu.memory_space<smem>>
    %240 = vector.broadcast %239 : f32 to vector<8x512xf32>
    %241 = arith.mulf %240, %114 : vector<8x512xf32>
    %242 = arith.addf %238, %241 : vector<8x512xf32>
    %c19 = arith.constant 19 : index
    %243 = memref.load %arg6[%c19] : memref<24xf32, #tpu.memory_space<smem>>
    %244 = vector.broadcast %243 : f32 to vector<8x512xf32>
    %245 = arith.mulf %244, %144 : vector<8x512xf32>
    %246 = arith.addf %242, %245 : vector<8x512xf32>
    %c4_57 = arith.constant 4 : index
    %c0_58 = arith.constant 0 : index
    %c0_59 = arith.constant 0 : index
    %247 = vector.load %arg8[%c4_57, %c0_58, %c0_59] : memref<6x8x512xf32, #tpu.memory_space<vmem>>, vector<1x8x512xf32>
    %248 = vector.shape_cast %247 : vector<1x8x512xf32> to vector<8x512xf32>
    %249 = vector.shape_cast %246 : vector<8x512xf32> to vector<1x8x512xf32>
    tpu.vector_store %arg8[%c4_57, %c0_58, %c0_59], %249 {strides = array<i32>} : memref<6x8x512xf32, #tpu.memory_space<vmem>>, vector<1x8x512xf32>,
    %c5_60 = arith.constant 5 : index
    %250 = memref.load %arg7[%c5_60] : memref<6xf32, #tpu.memory_space<smem>>
    %c20 = arith.constant 20 : index
    %251 = memref.load %arg6[%c20] : memref<24xf32, #tpu.memory_space<smem>>
    %252 = vector.broadcast %251 : f32 to vector<8x512xf32>
    %253 = arith.mulf %252, %54 : vector<8x512xf32>
    %254 = vector.broadcast %250 : f32 to vector<8x512xf32>
    %255 = arith.addf %254, %253 : vector<8x512xf32>
    %c21 = arith.constant 21 : index
    %256 = memref.load %arg6[%c21] : memref<24xf32, #tpu.memory_space<smem>>
    %257 = vector.broadcast %256 : f32 to vector<8x512xf32>
    %258 = arith.mulf %257, %84 : vector<8x512xf32>
    %259 = arith.addf %255, %258 : vector<8x512xf32>
    %c22 = arith.constant 22 : index
    %260 = memref.load %arg6[%c22] : memref<24xf32, #tpu.memory_space<smem>>
    %261 = vector.broadcast %260 : f32 to vector<8x512xf32>
    %262 = arith.mulf %261, %114 : vector<8x512xf32>
    %263 = arith.addf %259, %262 : vector<8x512xf32>
    %c23 = arith.constant 23 : index
    %264 = memref.load %arg6[%c23] : memref<24xf32, #tpu.memory_space<smem>>
    %265 = vector.broadcast %264 : f32 to vector<8x512xf32>
    %266 = arith.mulf %265, %144 : vector<8x512xf32>
    %267 = arith.addf %263, %266 : vector<8x512xf32>
    %c5_61 = arith.constant 5 : index
    %c0_62 = arith.constant 0 : index
    %c0_63 = arith.constant 0 : index
    %268 = vector.load %arg8[%c5_61, %c0_62, %c0_63] : memref<6x8x512xf32, #tpu.memory_space<vmem>>, vector<1x8x512xf32>
    %269 = vector.shape_cast %268 : vector<1x8x512xf32> to vector<8x512xf32>
    %270 = vector.shape_cast %267 : vector<8x512xf32> to vector<1x8x512xf32>
    tpu.vector_store %arg8[%c5_61, %c0_62, %c0_63], %270 {strides = array<i32>} : memref<6x8x512xf32, #tpu.memory_space<vmem>>, vector<1x8x512xf32>,
    return
  }
  func.func @transform_0(%arg0: i32) -> (i32, i32, i32) {
    %c0_i32 = arith.constant 0 : i32
    %c0_i32_0 = arith.constant 0 : i32
    %c0_i32_1 = arith.constant 0 : i32
    return %c0_i32, %arg0, %c0_i32_0 : i32, i32, i32
  }
  func.func @transform_1(%arg0: i32) -> (i32, i32) {
    %c0_i32 = arith.constant 0 : i32
    %c0_i32_0 = arith.constant 0 : i32
    %c0_i32_1 = arith.constant 0 : i32
    return %c0_i32, %c0_i32_0 : i32, i32
  }
  func.func @transform_2(%arg0: i32) -> (i32, i32) {
    %c0_i32 = arith.constant 0 : i32
    %c0_i32_0 = arith.constant 0 : i32
    %c0_i32_1 = arith.constant 0 : i32
    return %c0_i32, %c0_i32_0 : i32, i32
  }
  func.func @transform_3(%arg0: i32) -> (i32, i32) {
    %c0_i32 = arith.constant 0 : i32
    %c0_i32_0 = arith.constant 0 : i32
    %c0_i32_1 = arith.constant 0 : i32
    return %c0_i32, %c0_i32_0 : i32, i32
  }
  func.func @transform_4(%arg0: i32) -> (i32, i32) {
    %c0_i32 = arith.constant 0 : i32
    %c0_i32_0 = arith.constant 0 : i32
    %c0_i32_1 = arith.constant 0 : i32
    return %c0_i32, %c0_i32_0 : i32, i32
  }
  func.func @transform_5(%arg0: i32) -> i32 {
    %c0_i32 = arith.constant 0 : i32
    %c0_i32_0 = arith.constant 0 : i32
    return %c0_i32 : i32
  }
  func.func @transform_6(%arg0: i32) -> i32 {
    %c0_i32 = arith.constant 0 : i32
    %c0_i32_0 = arith.constant 0 : i32
    return %c0_i32 : i32
  }
  func.func @transform_7(%arg0: i32) -> (i32, i32, i32) {
    %c0_i32 = arith.constant 0 : i32
    %c0_i32_0 = arith.constant 0 : i32
    %c0_i32_1 = arith.constant 0 : i32
    return %c0_i32, %arg0, %c0_i32_0 : i32, i32, i32
  }
}

</mosaic_0001>

<llo_original>
// kernel: grunet_forward.1
$region0: #{grunet_forward.1}
  #allocation0 [shape = 'u32[]', space=smem, size = 0x4, offset = 0x4, fixed_abs, tag = 'smem constant byte address 0x4 - core index']
  #allocation1 [shape = 'u32[72,128]{1,0:T(1,128)}', space=vmem, size = 0x9000, scoped, tag = 'internal scratch']
  %s0 = inlined_call_operand.vmem [shape: bf16[4,8,512], index: 0, kind: input, shape index: {}]
  %s1 = inlined_call_operand.hbm [shape: bf16[512,1536], index: 1, kind: input, shape index: {}]
  %s2 = inlined_call_operand.hbm [shape: bf16[512,1536], index: 2, kind: input, shape index: {}]
  %s3 = inlined_call_operand.hbm [shape: f32[1,1536], index: 3, kind: input, shape index: {}]
  %s4 = inlined_call_operand.hbm [shape: f32[1,1536], index: 4, kind: input, shape index: {}]
  %s5 = inlined_call_operand.hbm [shape: f32[24], index: 5, kind: input, shape index: {}]
  %s6 = inlined_call_operand.hbm [shape: f32[6], index: 6, kind: input, shape index: {}]
  %s7 = inlined_call_operand.vmem [shape: f32[6,8,512], index: 7, kind: output, shape index: {}]
  %s8 = sld [smem:[#allocation0]]
  $region62: #{grunet_forward.1} parent=0
    _
  %s10 = ssub.s32 1, %s8
  %s11 = scalar_select 0, %s10, %s8
  $region1: #{grunet_forward.1} parent=0
    #allocation2 [shape = 'u8[1572864]{0}', space=vmem, size = 0x180000, scoped, tag = 'input window, operand 1, single buffered']
    #allocation3 [shape = 's32[1]{0}', space=sflag, size = 0x4, scoped, tag = 'scoped memory for grunet_forward.1']
    #allocation4 [shape = 's32[1]{0}', space=sflag, size = 0x4, scoped, tag = 'scoped memory for grunet_forward.1']
    #allocation5 [shape = 'u8[1572864]{0}', space=vmem, size = 0x180000, scoped, tag = 'input window, operand 2, single buffered']
    #allocation6 [shape = 's32[1]{0}', space=sflag, size = 0x4, scoped, tag = 'scoped memory for grunet_forward.1']
    #allocation7 [shape = 'u8[6144]{0}', space=vmem, size = 0x1800, scoped, tag = 'input window, operand 3, single buffered']
    #allocation8 [shape = 'u8[6144]{0}', space=vmem, size = 0x1800, scoped, tag = 'input window, operand 4, single buffered']
    #allocation9 [shape = 's32[1]{0}', space=sflag, size = 0x4, scoped, tag = 'scoped memory for grunet_forward.1']
    #allocation10 [shape = 'u8[512]{0}', space=smem, size = 0x200, scoped, tag = 'input window, operand 5, single buffered']
    #allocation11 [shape = 'u8[512]{0}', space=smem, size = 0x200, scoped, tag = 'input window, operand 6, single buffered']
    #allocation12 [shape = 's32[1]{0}', space=sflag, size = 0x4, scoped, tag = 'scoped memory for grunet_forward.1']
    %12 = vsyncpa [#allocation3], 0
    %13 = vsyncpa [#allocation6], 0
    %14 = vsyncpa [#allocation9], 0
    %15 = vsyncpa [#allocation4], 0
    %16 = vsyncpa [#allocation12], 0
    // Predicated region
    $region2: #{grunet_forward.1} parent=1 // pred_check
      _
    $region3: #{grunet_forward.1} parent=1 // pred_check_branch
      %18 = sbr.rel (0) target = $region5
    $region4: #{grunet_forward.1} parent=1 // pred_region
      _
    $region5: #{grunet_forward.1} parent=1 // pred_fallthru
      _
    // Predicated region
    $region6: #{grunet_forward.1} parent=1 // pred_check
      _
    $region7: #{grunet_forward.1} parent=1 // pred_check_branch
      %20 = sbr.rel (0) target = $region9
    $region8: #{grunet_forward.1} parent=1 // pred_region
      %22 = vsyncadd [#allocation3], 0
      %s23 = sshll.u32 %s1, 4
      %s24 = int_to_ptr.hbm [resolvable:$true] %s23
      %s25 = sshll.u32 [#allocation2], 4
      %s26 = int_to_ptr.vmem [resolvable:$true] %s25
      %31 = dma.hbm_to_vmem [thread:$0]  %s24, 49152, %s26, [#allocation3], 768, 768, 48
    $region9: #{grunet_forward.1} parent=1 // pred_fallthru
      _
    // Predicated region
    $region10: #{grunet_forward.1} parent=1 // pred_check
      _
    $region11: #{grunet_forward.1} parent=1 // pred_check_branch
      %33 = sbr.rel (0) target = $region13
    $region12: #{grunet_forward.1} parent=1 // pred_region
      %35 = vsyncadd [#allocation6], 0
      %s36 = sshll.u32 %s2, 4
      %s37 = int_to_ptr.hbm [resolvable:$true] %s36
      %s38 = sshll.u32 [#allocation5], 4
      %s39 = int_to_ptr.vmem [resolvable:$true] %s38
      %44 = dma.hbm_to_vmem [thread:$0]  %s37, 49152, %s39, [#allocation6], 768, 768, 48
    $region13: #{grunet_forward.1} parent=1 // pred_fallthru
      _
    // Predicated region
    $region14: #{grunet_forward.1} parent=1 // pred_check
      _
    $region15: #{grunet_forward.1} parent=1 // pred_check_branch
      %46 = sbr.rel (0) target = $region17
    $region16: #{grunet_forward.1} parent=1 // pred_region
      %48 = vsyncadd [#allocation6], 0
      %s50 = sshll.u32 %s3, 4
      %s51 = int_to_ptr.hbm [resolvable:$true] %s50
      %s52 = sshll.u32 [#allocation7], 4
      %s53 = int_to_ptr.vmem [resolvable:$true] %s52
      %55 = dma.hbm_to_vmem [thread:$0]  %s51, 192, %s53, [#allocation6]
    $region17: #{grunet_forward.1} parent=1 // pred_fallthru
      _
    // Predicated region
    $region18: #{grunet_forward.1} parent=1 // pred_check
      _
    $region19: #{grunet_forward.1} parent=1 // pred_check_branch
      %57 = sbr.rel (0) target = $region21
    $region20: #{grunet_forward.1} parent=1 // pred_region
      %59 = vsyncadd [#allocation9], 0
      %s61 = sshll.u32 %s4, 4
      %s62 = int_to_ptr.hbm [resolvable:$true] %s61
      %s63 = sshll.u32 [#allocation8], 4
      %s64 = int_to_ptr.vmem [resolvable:$true] %s63
      %66 = dma.hbm_to_vmem [thread:$0]  %s62, 192, %s64, [#allocation9]
    $region21: #{grunet_forward.1} parent=1 // pred_fallthru
      _
    // Predicated region
    $region22: #{grunet_forward.1} parent=1 // pred_check
      _
    $region23: #{grunet_forward.1} parent=1 // pred_check_branch
      %68 = sbr.rel (0) target = $region25
    $region24: #{grunet_forward.1} parent=1 // pred_region
      %70 = vsyncadd [#allocation4], 0
      %s72 = sshll.u32 %s5, 4
      %s73 = int_to_ptr.hbm [resolvable:$true] %s72
      %75 = dma.hbm_to_smem %s73, 16, [#allocation10], [#allocation4]
    $region25: #{grunet_forward.1} parent=1 // pred_fallthru
      _
    // Predicated region
    $region26: #{grunet_forward.1} parent=1 // pred_check
      _
    $region27: #{grunet_forward.1} parent=1 // pred_check_branch
      %77 = sbr.rel (0) target = $region29
    $region28: #{grunet_forward.1} parent=1 // pred_region
      %79 = vsyncadd [#allocation12], 0
      %s81 = sshll.u32 %s6, 4
      %s82 = int_to_ptr.hbm [resolvable:$true] %s81
      %84 = dma.hbm_to_smem %s82, 16, [#allocation11], [#allocation12]
    $region29: #{grunet_forward.1} parent=1 // pred_fallthru
      _
    // Predicated region
    $region30: #{grunet_forward.1} parent=1 // pred_check
      _
    $region31: #{grunet_forward.1} parent=1 // pred_check_branch
      %86 = sbr.rel (0) target = $region33
    $region32: #{grunet_forward.1} parent=1 // pred_region
      %88 = dma.done [#allocation3], 49152
    $region33: #{grunet_forward.1} parent=1 // pred_fallthru
      _
    // Predicated region
    $region34: #{grunet_forward.1} parent=1 // pred_check
      _
    $region35: #{grunet_forward.1} parent=1 // pred_check_branch
      %90 = sbr.rel (0) target = $region37
    $region36: #{grunet_forward.1} parent=1 // pred_region
      %92 = dma.done [#allocation6], 49152
    $region37: #{grunet_forward.1} parent=1 // pred_fallthru
      _
    // Predicated region
    $region38: #{grunet_forward.1} parent=1 // pred_check
      _
    $region39: #{grunet_forward.1} parent=1 // pred_check_branch
      %94 = sbr.rel (0) target = $region41
    $region40: #{grunet_forward.1} parent=1 // pred_region
      %96 = dma.done [#allocation6], 192
    $region41: #{grunet_forward.1} parent=1 // pred_fallthru
      _
    // Predicated region
    $region42: #{grunet_forward.1} parent=1 // pred_check
      _
    $region43: #{grunet_forward.1} parent=1 // pred_check_branch
      %98 = sbr.rel (0) target = $region45
    $region44: #{grunet_forward.1} parent=1 // pred_region
      %100 = dma.done [#allocation9], 192
    $region45: #{grunet_forward.1} parent=1 // pred_fallthru
      _
    // Predicated region
    $region46: #{grunet_forward.1} parent=1 // pred_check
      _
    $region47: #{grunet_forward.1} parent=1 // pred_check_branch
      %102 = sbr.rel (0) target = $region49
    $region48: #{grunet_forward.1} parent=1 // pred_region
      %104 = dma.done [#allocation4], 16
    $region49: #{grunet_forward.1} parent=1 // pred_fallthru
      _
    // Predicated region
    $region50: #{grunet_forward.1} parent=1 // pred_check
      _
    $region51: #{grunet_forward.1} parent=1 // pred_check_branch
      %106 = sbr.rel (0) target = $region53
    $region52: #{grunet_forward.1} parent=1 // pred_region
      %108 = dma.done [#allocation12], 16
    $region53: #{grunet_forward.1} parent=1 // pred_fallthru
      _
    %109 = sfence
    %v111 = vld [vmem:[#allocation2] sm:$0xff]
    %v112 = vld [vmem:[#allocation2 + $0x8] sm:$0xff]
    %v113 = vld [vmem:[#allocation2 + $0x10] sm:$0xff]
    %v114 = vld [vmem:[#allocation2 + $0x18] sm:$0xff]
    %v115 = vld [vmem:[#allocation2 + $0x20] sm:$0xff]
    %v116 = vld [vmem:[#allocation2 + $0x28] sm:$0xff]
    %v117 = vld [vmem:[#allocation2 + $0x30] sm:$0xff]
    %v118 = vld [vmem:[#allocation2 + $0x38] sm:$0xff]
    %v119 = vld [vmem:[#allocation2 + $0x40] sm:$0xff]
    %v120 = vld [vmem:[#allocation2 + $0x48] sm:$0xff]
    %v121 = vld [vmem:[#allocation2 + $0x50] sm:$0xff]
    %v122 = vld [vmem:[#allocation2 + $0x58] sm:$0xff]
    %v123 = vld [vmem:[#allocation2 + $0x60] sm:$0xff]
    %v124 = vld [vmem:[#allocation2 + $0x68] sm:$0xff]
    %v125 = vld [vmem:[#allocation2 + $0x70] sm:$0xff]
    %v126 = vld [vmem:[#allocation2 + $0x78] sm:$0xff]
    %v127 = vld [vmem:[#allocation2 + $0x80] sm:$0xff]
    %v128 = vld [vmem:[#allocation2 + $0x88] sm:$0xff]
    %v129 = vld [vmem:[#allocation2 + $0x90] sm:$0xff]
    %v130 = vld [vmem:[#allocation2 + $0x98] sm:$0xff]
    %v131 = vld [vmem:[#allocation2 + $0xa0] sm:$0xff]
    %v132 = vld [vmem:[#allocation2 + $0xa8] sm:$0xff]
    %v133 = vld [vmem:[#allocation2 + $0xb0] sm:$0xff]
    %v134 = vld [vmem:[#allocation2 + $0xb8] sm:$0xff]
    %v135 = vld [vmem:[#allocation2 + $0xc0] sm:$0xff]
    %v136 = vld [vmem:[#allocation2 + $0xc8] sm:$0xff]
    %v137 = vld [vmem:[#allocation2 + $0xd0] sm:$0xff]
    %v138 = vld [vmem:[#allocation2 + $0xd8] sm:$0xff]
    %v139 = vld [vmem:[#allocation2 + $0xe0] sm:$0xff]
    %v140 = vld [vmem:[#allocation2 + $0xe8] sm:$0xff]
    %v141 = vld [vmem:[#allocation2 + $0xf0] sm:$0xff]
    %v142 = vld [vmem:[#allocation2 + $0xf8] sm:$0xff]
    %v143 = vld [vmem:[#allocation2 + $0x100] sm:$0xff]
    %v144 = vld [vmem:[#allocation2 + $0x108] sm:$0xff]
    %v145 = vld [vmem:[#allocation2 + $0x110] sm:$0xff]
    %v146 = vld [vmem:[#allocation2 + $0x118] sm:$0xff]
    %v147 = vld [vmem:[#allocation2 + $0x120] sm:$0xff]
    %v148 = vld [vmem:[#allocation2 + $0x128] sm:$0xff]
    %v149 = vld [vmem:[#allocation2 + $0x130] sm:$0xff]
    %v150 = vld [vmem:[#allocation2 + $0x138] sm:$0xff]
    %v151 = vld [vmem:[#allocation2 + $0x140] sm:$0xff]
    %v152 = vld [vmem:[#allocation2 + $0x148] sm:$0xff]
    %v153 = vld [vmem:[#allocation2 + $0x150] sm:$0xff]
    %v154 = vld [vmem:[#allocation2 + $0x158] sm:$0xff]
    %v155 = vld [vmem:[#allocation2 + $0x160] sm:$0xff]
    %v156 = vld [vmem:[#allocation2 + $0x168] sm:$0xff]
    %v157 = vld [vmem:[#allocation2 + $0x170] sm:$0xff]
    %v158 = vld [vmem:[#allocation2 + $0x178] sm:$0xff]
    %v159 = vld [vmem:[#allocation2 + $0x180] sm:$0xff]
    %v160 = vld [vmem:[#allocation2 + $0x188] sm:$0xff]
    %v161 = vld [vmem:[#allocation2 + $0x190] sm:$0xff]
    %v162 = vld [vmem:[#allocation2 + $0x198] sm:$0xff]
    %v163 = vld [vmem:[#allocation2 + $0x1a0] sm:$0xff]
    %v164 = vld [vmem:[#allocation2 + $0x1a8] sm:$0xff]
    %v165 = vld [vmem:[#allocation2 + $0x1b0] sm:$0xff]
    %v166 = vld [vmem:[#allocation2 + $0x1b8] sm:$0xff]
    %v167 = vld [vmem:[#allocation2 + $0x1c0] sm:$0xff]
    %v168 = vld [vmem:[#allocation2 + $0x1c8] sm:$0xff]
    %v169 = vld [vmem:[#allocation2 + $0x1d0] sm:$0xff]
    %v170 = vld [vmem:[#allocation2 + $0x1d8] sm:$0xff]
    %v171 = vld [vmem:[#allocation2 + $0x1e0] sm:$0xff]
    %v172 = vld [vmem:[#allocation2 + $0x1e8] sm:$0xff]
    %v173 = vld [vmem:[#allocation2 + $0x1f0] sm:$0xff]
    %v174 = vld [vmem:[#allocation2 + $0x1f8] sm:$0xff]
    %v175 = vld [vmem:[#allocation2 + $0x200] sm:$0xff]
    %v176 = vld [vmem:[#allocation2 + $0x208] sm:$0xff]
    %v177 = vld [vmem:[#allocation2 + $0x210] sm:$0xff]
    %v178 = vld [vmem:[#allocation2 + $0x218] sm:$0xff]
    %v179 = vld [vmem:[#allocation2 + $0x220] sm:$0xff]
    %v180 = vld [vmem:[#allocation2 + $0x228] sm:$0xff]
    %v181 = vld [vmem:[#allocation2 + $0x230] sm:$0xff]
    %v182 = vld [vmem:[#allocation2 + $0x238] sm:$0xff]
    %v183 = vld [vmem:[#allocation2 + $0x240] sm:$0xff]
    %v184 = vld [vmem:[#allocation2 + $0x248] sm:$0xff]
    %v185 = vld [vmem:[#allocation2 + $0x250] sm:$0xff]
    %v186 = vld [vmem:[#allocation2 + $0x258] sm:$0xff]
    %v187 = vld [vmem:[#allocation2 + $0x260] sm:$0xff]
    %v188 = vld [vmem:[#allocation2 + $0x268] sm:$0xff]
    %v189 = vld [vmem:[#allocation2 + $0x270] sm:$0xff]
    %v190 = vld [vmem:[#allocation2 + $0x278] sm:$0xff]
    %v191 = vld [vmem:[#allocation2 + $0x280] sm:$0xff]
    %v192 = vld [vmem:[#allocation2 + $0x288] sm:$0xff]
    %v193 = vld [vmem:[#allocation2 + $0x290] sm:$0xff]
    %v194 = vld [vmem:[#allocation2 + $0x298] sm:$0xff]
    %v195 = vld [vmem:[#allocation2 + $0x2a0] sm:$0xff]
    %v196 = vld [vmem:[#allocation2 + $0x2a8] sm:$0xff]
    %v197 = vld [vmem:[#allocation2 + $0x2b0] sm:$0xff]
    %v198 = vld [vmem:[#allocation2 + $0x2b8] sm:$0xff]
    %v199 = vld [vmem:[#allocation2 + $0x2c0] sm:$0xff]
    %v200 = vld [vmem:[#allocation2 + $0x2c8] sm:$0xff]
    %v201 = vld [vmem:[#allocation2 + $0x2d0] sm:$0xff]
    %v202 = vld [vmem:[#allocation2 + $0x2d8] sm:$0xff]
    %v203 = vld [vmem:[#allocation2 + $0x2e0] sm:$0xff]
    %v204 = vld [vmem:[#allocation2 + $0x2e8] sm:$0xff]
    %v205 = vld [vmem:[#allocation2 + $0x2f0] sm:$0xff]
    %v206 = vld [vmem:[#allocation2 + $0x2f8] sm:$0xff]
    %v207 = vld [vmem:[#allocation2 + $0x300] sm:$0xff]
    %v208 = vld [vmem:[#allocation2 + $0x308] sm:$0xff]
    %v209 = vld [vmem:[#allocation2 + $0x310] sm:$0xff]
    %v210 = vld [vmem:[#allocation2 + $0x318] sm:$0xff]
    %v211 = vld [vmem:[#allocation2 + $0x320] sm:$0xff]
    %v212 = vld [vmem:[#allocation2 + $0x328] sm:$0xff]
    %v213 = vld [vmem:[#allocation2 + $0x330] sm:$0xff]
    %v214 = vld [vmem:[#allocation2 + $0x338] sm:$0xff]
    %v215 = vld [vmem:[#allocation2 + $0x340] sm:$0xff]
    %v216 = vld [vmem:[#allocation2 + $0x348] sm:$0xff]
    %v217 = vld [vmem:[#allocation2 + $0x350] sm:$0xff]
    %v218 = vld [vmem:[#allocation2 + $0x358] sm:$0xff]
    %v219 = vld [vmem:[#allocation2 + $0x360] sm:$0xff]
    %v220 = vld [vmem:[#allocation2 + $0x368] sm:$0xff]
    %v221 = vld [vmem:[#allocation2 + $0x370] sm:$0xff]
    %v222 = vld [vmem:[#allocation2 + $0x378] sm:$0xff]
    %v223 = vld [vmem:[#allocation2 + $0x380] sm:$0xff]
    %v224 = vld [vmem:[#allocation2 + $0x388] sm:$0xff]
    %v225 = vld [vmem:[#allocation2 + $0x390] sm:$0xff]
    %v226 = vld [vmem:[#allocation2 + $0x398] sm:$0xff]
    %v227 = vld [vmem:[#allocation2 + $0x3a0] sm:$0xff]
    %v228 = vld [vmem:[#allocation2 + $0x3a8] sm:$0xff]
    %v229 = vld [vmem:[#allocation2 + $0x3b0] sm:$0xff]
    %v230 = vld [vmem:[#allocation2 + $0x3b8] sm:$0xff]
    %v231 = vld [vmem:[#allocation2 + $0x3c0] sm:$0xff]
    %v232 = vld [vmem:[#allocation2 + $0x3c8] sm:$0xff]
    %v233 = vld [vmem:[#allocation2 + $0x3d0] sm:$0xff]
    %v234 = vld [vmem:[#allocation2 + $0x3d8] sm:$0xff]
    %v235 = vld [vmem:[#allocation2 + $0x3e0] sm:$0xff]
    %v236 = vld [vmem:[#allocation2 + $0x3e8] sm:$0xff]
    %v237 = vld [vmem:[#allocation2 + $0x3f0] sm:$0xff]
    %v238 = vld [vmem:[#allocation2 + $0x3f8] sm:$0xff]
    %v239 = vld [vmem:[#allocation2 + $0x400] sm:$0xff]
    %v240 = vld [vmem:[#allocation2 + $0x408] sm:$0xff]
    %v241 = vld [vmem:[#allocation2 + $0x410] sm:$0xff]
    %v242 = vld [vmem:[#allocation2 + $0x418] sm:$0xff]
    %v243 = vld [vmem:[#allocation2 + $0x420] sm:$0xff]
    %v244 = vld [vmem:[#allocation2 + $0x428] sm:$0xff]
    %v245 = vld [vmem:[#allocation2 + $0x430] sm:$0xff]
    %v246 = vld [vmem:[#allocation2 + $0x438] sm:$0xff]
    %v247 = vld [vmem:[#allocation2 + $0x440] sm:$0xff]
    %v248 = vld [vmem:[#allocation2 + $0x448] sm:$0xff]
    %v249 = vld [vmem:[#allocation2 + $0x450] sm:$0xff]
    %v250 = vld [vmem:[#allocation2 + $0x458] sm:$0xff]
    %v251 = vld [vmem:[#allocation2 + $0x460] sm:$0xff]
    %v252 = vld [vmem:[#allocation2 + $0x468] sm:$0xff]
    %v253 = vld [vmem:[#allocation2 + $0x470] sm:$0xff]
    %v254 = vld [vmem:[#allocation2 + $0x478] sm:$0xff]
    %v255 = vld [vmem:[#allocation2 + $0x480] sm:$0xff]
    %v256 = vld [vmem:[#allocation2 + $0x488] sm:$0xff]
    %v257 = vld [vmem:[#allocation2 + $0x490] sm:$0xff]
    %v258 = vld [vmem:[#allocation2 + $0x498] sm:$0xff]
    %v259 = vld [vmem:[#allocation2 + $0x4a0] sm:$0xff]
    %v260 = vld [vmem:[#allocation2 + $0x4a8] sm:$0xff]
    %v261 = vld [vmem:[#allocation2 + $0x4b0] sm:$0xff]
    %v262 = vld [vmem:[#allocation2 + $0x4b8] sm:$0xff]
    %v263 = vld [vmem:[#allocation2 + $0x4c0] sm:$0xff]
    %v264 = vld [vmem:[#allocation2 + $0x4c8] sm:$0xff]
    %v265 = vld [vmem:[#allocation2 + $0x4d0] sm:$0xff]
    %v266 = vld [vmem:[#allocation2 + $0x4d8] sm:$0xff]
    %v267 = vld [vmem:[#allocation2 + $0x4e0] sm:$0xff]
    %v268 = vld [vmem:[#allocation2 + $0x4e8] sm:$0xff]
    %v269 = vld [vmem:[#allocation2 + $0x4f0] sm:$0xff]
    %v270 = vld [vmem:[#allocation2 + $0x4f8] sm:$0xff]
    %v271 = vld [vmem:[#allocation2 + $0x500] sm:$0xff]
    %v272 = vld [vmem:[#allocation2 + $0x508] sm:$0xff]
    %v273 = vld [vmem:[#allocation2 + $0x510] sm:$0xff]
    %v274 = vld [vmem:[#allocation2 + $0x518] sm:$0xff]
    %v275 = vld [vmem:[#allocation2 + $0x520] sm:$0xff]
    %v276 = vld [vmem:[#allocation2 + $0x528] sm:$0xff]
    %v277 = vld [vmem:[#allocation2 + $0x530] sm:$0xff]
    %v278 = vld [vmem:[#allocation2 + $0x538] sm:$0xff]
    %v279 = vld [vmem:[#allocation2 + $0x540] sm:$0xff]
    %v280 = vld [vmem:[#allocation2 + $0x548] sm:$0xff]
    %v281 = vld [vmem:[#allocation2 + $0x550] sm:$0xff]
    %v282 = vld [vmem:[#allocation2 + $0x558] sm:$0xff]
    %v283 = vld [vmem:[#allocation2 + $0x560] sm:$0xff]
    %v284 = vld [vmem:[#allocation2 + $0x568] sm:$0xff]
    %v285 = vld [vmem:[#allocation2 + $0x570] sm:$0xff]
    %v286 = vld [vmem:[#allocation2 + $0x578] sm:$0xff]
    %v287 = vld [vmem:[#allocation2 + $0x580] sm:$0xff]
    %v288 = vld [vmem:[#allocation2 + $0x588] sm:$0xff]
    %v289 = vld [vmem:[#allocation2 + $0x590] sm:$0xff]
    %v290 = vld [vmem:[#allocation2 + $0x598] sm:$0xff]
    %v291 = vld [vmem:[#allocation2 + $0x5a0] sm:$0xff]
    %v292 = vld [vmem:[#allocation2 + $0x5a8] sm:$0xff]
    %v293 = vld [vmem:[#allocation2 + $0x5b0] sm:$0xff]
    %v294 = vld [vmem:[#allocation2 + $0x5b8] sm:$0xff]
    %v295 = vld [vmem:[#allocation2 + $0x5c0] sm:$0xff]
    %v296 = vld [vmem:[#allocation2 + $0x5c8] sm:$0xff]
    %v297 = vld [vmem:[#allocation2 + $0x5d0] sm:$0xff]
    %v298 = vld [vmem:[#allocation2 + $0x5d8] sm:$0xff]
    %v299 = vld [vmem:[#allocation2 + $0x5e0] sm:$0xff]
    %v300 = vld [vmem:[#allocation2 + $0x5e8] sm:$0xff]
    %v301 = vld [vmem:[#allocation2 + $0x5f0] sm:$0xff]
    %v302 = vld [vmem:[#allocation2 + $0x5f8] sm:$0xff]
    %v303 = vld [vmem:[#allocation2 + $0x600] sm:$0xff]
    %v304 = vld [vmem:[#allocation2 + $0x608] sm:$0xff]
    %v305 = vld [vmem:[#allocation2 + $0x610] sm:$0xff]
    %v306 = vld [vmem:[#allocation2 + $0x618] sm:$0xff]
    %v307 = vld [vmem:[#allocation2 + $0x620] sm:$0xff]
    %v308 = vld [vmem:[#allocation2 + $0x628] sm:$0xff]
    %v309 = vld [vmem:[#allocation2 + $0x630] sm:$0xff]
    %v310 = vld [vmem:[#allocation2 + $0x638] sm:$0xff]
    %v311 = vld [vmem:[#allocation2 + $0x640] sm:$0xff]
    %v312 = vld [vmem:[#allocation2 + $0x648] sm:$0xff]
    %v313 = vld [vmem:[#allocation2 + $0x650] sm:$0xff]
    %v314 = vld [vmem:[#allocation2 + $0x658] sm:$0xff]
    %v315 = vld [vmem:[#allocation2 + $0x660] sm:$0xff]
    %v316 = vld [vmem:[#allocation2 + $0x668] sm:$0xff]
    %v317 = vld [vmem:[#allocation2 + $0x670] sm:$0xff]
    %v318 = vld [vmem:[#allocation2 + $0x678] sm:$0xff]
    %v319 = vld [vmem:[#allocation2 + $0x680] sm:$0xff]
    %v320 = vld [vmem:[#allocation2 + $0x688] sm:$0xff]
    %v321 = vld [vmem:[#allocation2 + $0x690] sm:$0xff]
    %v322 = vld [vmem:[#allocation2 + $0x698] sm:$0xff]
    %v323 = vld [vmem:[#allocation2 + $0x6a0] sm:$0xff]
    %v324 = vld [vmem:[#allocation2 + $0x6a8] sm:$0xff]
    %v325 = vld [vmem:[#allocation2 + $0x6b0] sm:$0xff]
    %v326 = vld [vmem:[#allocation2 + $0x6b8] sm:$0xff]
    %v327 = vld [vmem:[#allocation2 + $0x6c0] sm:$0xff]
    %v328 = vld [vmem:[#allocation2 + $0x6c8] sm:$0xff]
    %v329 = vld [vmem:[#allocation2 + $0x6d0] sm:$0xff]
    %v330 = vld [vmem:[#allocation2 + $0x6d8] sm:$0xff]
    %v331 = vld [vmem:[#allocation2 + $0x6e0] sm:$0xff]
    %v332 = vld [vmem:[#allocation2 + $0x6e8] sm:$0xff]
    %v333 = vld [vmem:[#allocation2 + $0x6f0] sm:$0xff]
    %v334 = vld [vmem:[#allocation2 + $0x6f8] sm:$0xff]
    %v335 = vld [vmem:[#allocation2 + $0x700] sm:$0xff]
    %v336 = vld [vmem:[#allocation2 + $0x708] sm:$0xff]
    %v337 = vld [vmem:[#allocation2 + $0x710] sm:$0xff]
    %v338 = vld [vmem:[#allocation2 + $0x718] sm:$0xff]
    %v339 = vld [vmem:[#allocation2 + $0x720] sm:$0xff]
    %v340 = vld [vmem:[#allocation2 + $0x728] sm:$0xff]
    %v341 = vld [vmem:[#allocation2 + $0x730] sm:$0xff]
    %v342 = vld [vmem:[#allocation2 + $0x738] sm:$0xff]
    %v343 = vld [vmem:[#allocation2 + $0x740] sm:$0xff]
    %v344 = vld [vmem:[#allocation2 + $0x748] sm:$0xff]
    %v345 = vld [vmem:[#allocation2 + $0x750] sm:$0xff]
    %v346 = vld [vmem:[#allocation2 + $0x758] sm:$0xff]
    %v347 = vld [vmem:[#allocation2 + $0x760] sm:$0xff]
    %v348 = vld [vmem:[#allocation2 + $0x768] sm:$0xff]
    %v349 = vld [vmem:[#allocation2 + $0x770] sm:$0xff]
    %v350 = vld [vmem:[#allocation2 + $0x778] sm:$0xff]
    %v351 = vld [vmem:[#allocation2 + $0x780] sm:$0xff]
    %v352 = vld [vmem:[#allocation2 + $0x788] sm:$0xff]
    %v353 = vld [vmem:[#allocation2 + $0x790] sm:$0xff]
    %v354 = vld [vmem:[#allocation2 + $0x798] sm:$0xff]
    %v355 = vld [vmem:[#allocation2 + $0x7a0] sm:$0xff]
    %v356 = vld [vmem:[#allocation2 + $0x7a8] sm:$0xff]
    %v357 = vld [vmem:[#allocation2 + $0x7b0] sm:$0xff]
    %v358 = vld [vmem:[#allocation2 + $0x7b8] sm:$0xff]
    %v359 = vld [vmem:[#allocation2 + $0x7c0] sm:$0xff]
    %v360 = vld [vmem:[#allocation2 + $0x7c8] sm:$0xff]
    %v361 = vld [vmem:[#allocation2 + $0x7d0] sm:$0xff]
    %v362 = vld [vmem:[#allocation2 + $0x7d8] sm:$0xff]
    %v363 = vld [vmem:[#allocation2 + $0x7e0] sm:$0xff]
    %v364 = vld [vmem:[#allocation2 + $0x7e8] sm:$0xff]
    %v365 = vld [vmem:[#allocation2 + $0x7f0] sm:$0xff]
    %v366 = vld [vmem:[#allocation2 + $0x7f8] sm:$0xff]
    %v367 = vld [vmem:[#allocation2 + $0x800] sm:$0xff]
    %v368 = vld [vmem:[#allocation2 + $0x808] sm:$0xff]
    %v369 = vld [vmem:[#allocation2 + $0x810] sm:$0xff]
    %v370 = vld [vmem:[#allocation2 + $0x818] sm:$0xff]
    %v371 = vld [vmem:[#allocation2 + $0x820] sm:$0xff]
    %v372 = vld [vmem:[#allocation2 + $0x828] sm:$0xff]
    %v373 = vld [vmem:[#allocation2 + $0x830] sm:$0xff]
    %v374 = vld [vmem:[#allocation2 + $0x838] sm:$0xff]
    %v375 = vld [vmem:[#allocation2 + $0x840] sm:$0xff]
    %v376 = vld [vmem:[#allocation2 + $0x848] sm:$0xff]
    %v377 = vld [vmem:[#allocation2 + $0x850] sm:$0xff]
    %v378 = vld [vmem:[#allocation2 + $0x858] sm:$0xff]
    %v379 = vld [vmem:[#allocation2 + $0x860] sm:$0xff]
    %v380 = vld [vmem:[#allocation2 + $0x868] sm:$0xff]
    %v381 = vld [vmem:[#allocation2 + $0x870] sm:$0xff]
    %v382 = vld [vmem:[#allocation2 + $0x878] sm:$0xff]
    %v383 = vld [vmem:[#allocation2 + $0x880] sm:$0xff]
    %v384 = vld [vmem:[#allocation2 + $0x888] sm:$0xff]
    %v385 = vld [vmem:[#allocation2 + $0x890] sm:$0xff]
    %v386 = vld [vmem:[#allocation2 + $0x898] sm:$0xff]
    %v387 = vld [vmem:[#allocation2 + $0x8a0] sm:$0xff]
    %v388 = vld [vmem:[#allocation2 + $0x8a8] sm:$0xff]
    %v389 = vld [vmem:[#allocation2 + $0x8b0] sm:$0xff]
    %v390 = vld [vmem:[#allocation2 + $0x8b8] sm:$0xff]
    %v391 = vld [vmem:[#allocation2 + $0x8c0] sm:$0xff]
    %v392 = vld [vmem:[#allocation2 + $0x8c8] sm:$0xff]
    %v393 = vld [vmem:[#allocation2 + $0x8d0] sm:$0xff]
    %v394 = vld [vmem:[#allocation2 + $0x8d8] sm:$0xff]
    %v395 = vld [vmem:[#allocation2 + $0x8e0] sm:$0xff]
    %v396 = vld [vmem:[#allocation2 + $0x8e8] sm:$0xff]
    %v397 = vld [vmem:[#allocation2 + $0x8f0] sm:$0xff]
    %v398 = vld [vmem:[#allocation2 + $0x8f8] sm:$0xff]
    %v399 = vld [vmem:[#allocation2 + $0x900] sm:$0xff]
    %v400 = vld [vmem:[#allocation2 + $0x908] sm:$0xff]
    %v401 = vld [vmem:[#allocation2 + $0x910] sm:$0xff]
    %v402 = vld [vmem:[#allocation2 + $0x918] sm:$0xff]
    %v403 = vld [vmem:[#allocation2 + $0x920] sm:$0xff]
    %v404 = vld [vmem:[#allocation2 + $0x928] sm:$0xff]
    %v405 = vld [vmem:[#allocation2 + $0x930] sm:$0xff]
    %v406 = vld [vmem:[#allocation2 + $0x938] sm:$0xff]
    %v407 = vld [vmem:[#allocation2 + $0x940] sm:$0xff]
    %v408 = vld [vmem:[#allocation2 + $0x948] sm:$0xff]
    %v409 = vld [vmem:[#allocation2 + $0x950] sm:$0xff]
    %v410 = vld [vmem:[#allocation2 + $0x958] sm:$0xff]
    %v411 = vld [vmem:[#allocation2 + $0x960] sm:$0xff]
    %v412 = vld [vmem:[#allocation2 + $0x968] sm:$0xff]
    %v413 = vld [vmem:[#allocation2 + $0x970] sm:$0xff]
    %v414 = vld [vmem:[#allocation2 + $0x978] sm:$0xff]
    %v415 = vld [vmem:[#allocation2 + $0x980] sm:$0xff]
    %v416 = vld [vmem:[#allocation2 + $0x988] sm:$0xff]
    %v417 = vld [vmem:[#allocation2 + $0x990] sm:$0xff]
    %v418 = vld [vmem:[#allocation2 + $0x998] sm:$0xff]
    %v419 = vld [vmem:[#allocation2 + $0x9a0] sm:$0xff]
    %v420 = vld [vmem:[#allocation2 + $0x9a8] sm:$0xff]
    %v421 = vld [vmem:[#allocation2 + $0x9b0] sm:$0xff]
    %v422 = vld [vmem:[#allocation2 + $0x9b8] sm:$0xff]
    %v423 = vld [vmem:[#allocation2 + $0x9c0] sm:$0xff]
    %v424 = vld [vmem:[#allocation2 + $0x9c8] sm:$0xff]
    %v425 = vld [vmem:[#allocation2 + $0x9d0] sm:$0xff]
    %v426 = vld [vmem:[#allocation2 + $0x9d8] sm:$0xff]
    %v427 = vld [vmem:[#allocation2 + $0x9e0] sm:$0xff]
    %v428 = vld [vmem:[#allocation2 + $0x9e8] sm:$0xff]
    %v429 = vld [vmem:[#allocation2 + $0x9f0] sm:$0xff]
    %v430 = vld [vmem:[#allocation2 + $0x9f8] sm:$0xff]
    %v431 = vld [vmem:[#allocation2 + $0xa00] sm:$0xff]
    %v432 = vld [vmem:[#allocation2 + $0xa08] sm:$0xff]
    %v433 = vld [vmem:[#allocation2 + $0xa10] sm:$0xff]
    %v434 = vld [vmem:[#allocation2 + $0xa18] sm:$0xff]
    %v435 = vld [vmem:[#allocation2 + $0xa20] sm:$0xff]
    %v436 = vld [vmem:[#allocation2 + $0xa28] sm:$0xff]
    %v437 = vld [vmem:[#allocation2 + $0xa30] sm:$0xff]
    %v438 = vld [vmem:[#allocation2 + $0xa38] sm:$0xff]
    %v439 = vld [vmem:[#allocation2 + $0xa40] sm:$0xff]
    %v440 = vld [vmem:[#allocation2 + $0xa48] sm:$0xff]
    %v441 = vld [vmem:[#allocation2 + $0xa50] sm:$0xff]
    %v442 = vld [vmem:[#allocation2 + $0xa58] sm:$0xff]
    %v443 = vld [vmem:[#allocation2 + $0xa60] sm:$0xff]
    %v444 = vld [vmem:[#allocation2 + $0xa68] sm:$0xff]
    %v445 = vld [vmem:[#allocation2 + $0xa70] sm:$0xff]
    %v446 = vld [vmem:[#allocation2 + $0xa78] sm:$0xff]
    %v447 = vld [vmem:[#allocation2 + $0xa80] sm:$0xff]
    %v448 = vld [vmem:[#allocation2 + $0xa88] sm:$0xff]
    %v449 = vld [vmem:[#allocation2 + $0xa90] sm:$0xff]
    %v450 = vld [vmem:[#allocation2 + $0xa98] sm:$0xff]
    %v451 = vld [vmem:[#allocation2 + $0xaa0] sm:$0xff]
    %v452 = vld [vmem:[#allocation2 + $0xaa8] sm:$0xff]
    %v453 = vld [vmem:[#allocation2 + $0xab0] sm:$0xff]
    %v454 = vld [vmem:[#allocation2 + $0xab8] sm:$0xff]
    %v455 = vld [vmem:[#allocation2 + $0xac0] sm:$0xff]
    %v456 = vld [vmem:[#allocation2 + $0xac8] sm:$0xff]
    %v457 = vld [vmem:[#allocation2 + $0xad0] sm:$0xff]
    %v458 = vld [vmem:[#allocation2 + $0xad8] sm:$0xff]
    %v459 = vld [vmem:[#allocation2 + $0xae0] sm:$0xff]
    %v460 = vld [vmem:[#allocation2 + $0xae8] sm:$0xff]
    %v461 = vld [vmem:[#allocation2 + $0xaf0] sm:$0xff]
    %v462 = vld [vmem:[#allocation2 + $0xaf8] sm:$0xff]
    %v463 = vld [vmem:[#allocation2 + $0xb00] sm:$0xff]
    %v464 = vld [vmem:[#allocation2 + $0xb08] sm:$0xff]
    %v465 = vld [vmem:[#allocation2 + $0xb10] sm:$0xff]
    %v466 = vld [vmem:[#allocation2 + $0xb18] sm:$0xff]
    %v467 = vld [vmem:[#allocation2 + $0xb20] sm:$0xff]
    %v468 = vld [vmem:[#allocation2 + $0xb28] sm:$0xff]
    %v469 = vld [vmem:[#allocation2 + $0xb30] sm:$0xff]
    %v470 = vld [vmem:[#allocation2 + $0xb38] sm:$0xff]
    %v471 = vld [vmem:[#allocation2 + $0xb40] sm:$0xff]
    %v472 = vld [vmem:[#allocation2 + $0xb48] sm:$0xff]
    %v473 = vld [vmem:[#allocation2 + $0xb50] sm:$0xff]
    %v474 = vld [vmem:[#allocation2 + $0xb58] sm:$0xff]
    %v475 = vld [vmem:[#allocation2 + $0xb60] sm:$0xff]
    %v476 = vld [vmem:[#allocation2 + $0xb68] sm:$0xff]
    %v477 = vld [vmem:[#allocation2 + $0xb70] sm:$0xff]
    %v478 = vld [vmem:[#allocation2 + $0xb78] sm:$0xff]
    %v479 = vld [vmem:[#allocation2 + $0xb80] sm:$0xff]
    %v480 = vld [vmem:[#allocation2 + $0xb88] sm:$0xff]
    %v481 = vld [vmem:[#allocation2 + $0xb90] sm:$0xff]
    %v482 = vld [vmem:[#allocation2 + $0xb98] sm:$0xff]
    %v483 = vld [vmem:[#allocation2 + $0xba0] sm:$0xff]
    %v484 = vld [vmem:[#allocation2 + $0xba8] sm:$0xff]
    %v485 = vld [vmem:[#allocation2 + $0xbb0] sm:$0xff]
    %v486 = vld [vmem:[#allocation2 + $0xbb8] sm:$0xff]
    %v487 = vld [vmem:[#allocation2 + $0xbc0] sm:$0xff]
    %v488 = vld [vmem:[#allocation2 + $0xbc8] sm:$0xff]
    %v489 = vld [vmem:[#allocation2 + $0xbd0] sm:$0xff]
    %v490 = vld [vmem:[#allocation2 + $0xbd8] sm:$0xff]
    %v491 = vld [vmem:[#allocation2 + $0xbe0] sm:$0xff]
    %v492 = vld [vmem:[#allocation2 + $0xbe8] sm:$0xff]
    %v493 = vld [vmem:[#allocation2 + $0xbf0] sm:$0xff]
    %v494 = vld [vmem:[#allocation2 + $0xbf8] sm:$0xff]
    %v495 = vld [vmem:[#allocation5] sm:$0xff]
    %v496 = vld [vmem:[#allocation5 + $0x8] sm:$0xff]
    %v497 = vld [vmem:[#allocation5 + $0x10] sm:$0xff]
    %v498 = vld [vmem:[#allocation5 + $0x18] sm:$0xff]
    %v499 = vld [vmem:[#allocation5 + $0x20] sm:$0xff]
    %v500 = vld [vmem:[#allocation5 + $0x28] sm:$0xff]
    %v501 = vld [vmem:[#allocation5 + $0x30] sm:$0xff]
    %v502 = vld [vmem:[#allocation5 + $0x38] sm:$0xff]
    %v503 = vld [vmem:[#allocation5 + $0x40] sm:$0xff]
    %v504 = vld [vmem:[#allocation5 + $0x48] sm:$0xff]
    %v505 = vld [vmem:[#allocation5 + $0x50] sm:$0xff]
    %v506 = vld [vmem:[#allocation5 + $0x58] sm:$0xff]
    %v507 = vld [vmem:[#allocation5 + $0x60] sm:$0xff]
    %v508 = vld [vmem:[#allocation5 + $0x68] sm:$0xff]
    %v509 = vld [vmem:[#allocation5 + $0x70] sm:$0xff]
    %v510 = vld [vmem:[#allocation5 + $0x78] sm:$0xff]
    %v511 = vld [vmem:[#allocation5 + $0x80] sm:$0xff]
    %v512 = vld [vmem:[#allocation5 + $0x88] sm:$0xff]
    %v513 = vld [vmem:[#allocation5 + $0x90] sm:$0xff]
    %v514 = vld [vmem:[#allocation5 + $0x98] sm:$0xff]
    %v515 = vld [vmem:[#allocation5 + $0xa0] sm:$0xff]
    %v516 = vld [vmem:[#allocation5 + $0xa8] sm:$0xff]
    %v517 = vld [vmem:[#allocation5 + $0xb0] sm:$0xff]
    %v518 = vld [vmem:[#allocation5 + $0xb8] sm:$0xff]
    %v519 = vld [vmem:[#allocation5 + $0xc0] sm:$0xff]
    %v520 = vld [vmem:[#allocation5 + $0xc8] sm:$0xff]
    %v521 = vld [vmem:[#allocation5 + $0xd0] sm:$0xff]
    %v522 = vld [vmem:[#allocation5 + $0xd8] sm:$0xff]
    %v523 = vld [vmem:[#allocation5 + $0xe0] sm:$0xff]
    %v524 = vld [vmem:[#allocation5 + $0xe8] sm:$0xff]
    %v525 = vld [vmem:[#allocation5 + $0xf0] sm:$0xff]
    %v526 = vld [vmem:[#allocation5 + $0xf8] sm:$0xff]
    %v527 = vld [vmem:[#allocation5 + $0x100] sm:$0xff]
    %v528 = vld [vmem:[#allocation5 + $0x108] sm:$0xff]
    %v529 = vld [vmem:[#allocation5 + $0x110] sm:$0xff]
    %v530 = vld [vmem:[#allocation5 + $0x118] sm:$0xff]
    %v531 = vld [vmem:[#allocation5 + $0x120] sm:$0xff]
    %v532 = vld [vmem:[#allocation5 + $0x128] sm:$0xff]
    %v533 = vld [vmem:[#allocation5 + $0x130] sm:$0xff]
    %v534 = vld [vmem:[#allocation5 + $0x138] sm:$0xff]
    %v535 = vld [vmem:[#allocation5 + $0x140] sm:$0xff]
    %v536 = vld [vmem:[#allocation5 + $0x148] sm:$0xff]
    %v537 = vld [vmem:[#allocation5 + $0x150] sm:$0xff]
    %v538 = vld [vmem:[#allocation5 + $0x158] sm:$0xff]
    %v539 = vld [vmem:[#allocation5 + $0x160] sm:$0xff]
    %v540 = vld [vmem:[#allocation5 + $0x168] sm:$0xff]
    %v541 = vld [vmem:[#allocation5 + $0x170] sm:$0xff]
    %v542 = vld [vmem:[#allocation5 + $0x178] sm:$0xff]
    %v543 = vld [vmem:[#allocation5 + $0x180] sm:$0xff]
    %v544 = vld [vmem:[#allocation5 + $0x188] sm:$0xff]
    %v545 = vld [vmem:[#allocation5 + $0x190] sm:$0xff]
    %v546 = vld [vmem:[#allocation5 + $0x198] sm:$0xff]
    %v547 = vld [vmem:[#allocation5 + $0x1a0] sm:$0xff]
    %v548 = vld [vmem:[#allocation5 + $0x1a8] sm:$0xff]
    %v549 = vld [vmem:[#allocation5 + $0x1b0] sm:$0xff]
    %v550 = vld [vmem:[#allocation5 + $0x1b8] sm:$0xff]
    %v551 = vld [vmem:[#allocation5 + $0x1c0] sm:$0xff]
    %v552 = vld [vmem:[#allocation5 + $0x1c8] sm:$0xff]
    %v553 = vld [vmem:[#allocation5 + $0x1d0] sm:$0xff]
    %v554 = vld [vmem:[#allocation5 + $0x1d8] sm:$0xff]
    %v555 = vld [vmem:[#allocation5 + $0x1e0] sm:$0xff]
    %v556 = vld [vmem:[#allocation5 + $0x1e8] sm:$0xff]
    %v557 = vld [vmem:[#allocation5 + $0x1f0] sm:$0xff]
    %v558 = vld [vmem:[#allocation5 + $0x1f8] sm:$0xff]
    %v559 = vld [vmem:[#allocation5 + $0x200] sm:$0xff]
    %v560 = vld [vmem:[#allocation5 + $0x208] sm:$0xff]
    %v561 = vld [vmem:[#allocation5 + $0x210] sm:$0xff]
    %v562 = vld [vmem:[#allocation5 + $0x218] sm:$0xff]
    %v563 = vld [vmem:[#allocation5 + $0x220] sm:$0xff]
    %v564 = vld [vmem:[#allocation5 + $0x228] sm:$0xff]
    %v565 = vld [vmem:[#allocation5 + $0x230] sm:$0xff]
    %v566 = vld [vmem:[#allocation5 + $0x238] sm:$0xff]
    %v567 = vld [vmem:[#allocation5 + $0x240] sm:$0xff]
    %v568 = vld [vmem:[#allocation5 + $0x248] sm:$0xff]
    %v569 = vld [vmem:[#allocation5 + $0x250] sm:$0xff]
    %v570 = vld [vmem:[#allocation5 + $0x258] sm:$0xff]
    %v571 = vld [vmem:[#allocation5 + $0x260] sm:$0xff]
    %v572 = vld [vmem:[#allocation5 + $0x268] sm:$0xff]
    %v573 = vld [vmem:[#allocation5 + $0x270] sm:$0xff]
    %v574 = vld [vmem:[#allocation5 + $0x278] sm:$0xff]
    %v575 = vld [vmem:[#allocation5 + $0x280] sm:$0xff]
    %v576 = vld [vmem:[#allocation5 + $0x288] sm:$0xff]
    %v577 = vld [vmem:[#allocation5 + $0x290] sm:$0xff]
    %v578 = vld [vmem:[#allocation5 + $0x298] sm:$0xff]
    %v579 = vld [vmem:[#allocation5 + $0x2a0] sm:$0xff]
    %v580 = vld [vmem:[#allocation5 + $0x2a8] sm:$0xff]
    %v581 = vld [vmem:[#allocation5 + $0x2b0] sm:$0xff]
    %v582 = vld [vmem:[#allocation5 + $0x2b8] sm:$0xff]
    %v583 = vld [vmem:[#allocation5 + $0x2c0] sm:$0xff]
    %v584 = vld [vmem:[#allocation5 + $0x2c8] sm:$0xff]
    %v585 = vld [vmem:[#allocation5 + $0x2d0] sm:$0xff]
    %v586 = vld [vmem:[#allocation5 + $0x2d8] sm:$0xff]
    %v587 = vld [vmem:[#allocation5 + $0x2e0] sm:$0xff]
    %v588 = vld [vmem:[#allocation5 + $0x2e8] sm:$0xff]
    %v589 = vld [vmem:[#allocation5 + $0x2f0] sm:$0xff]
    %v590 = vld [vmem:[#allocation5 + $0x2f8] sm:$0xff]
    %v591 = vld [vmem:[#allocation5 + $0x300] sm:$0xff]
    %v592 = vld [vmem:[#allocation5 + $0x308] sm:$0xff]
    %v593 = vld [vmem:[#allocation5 + $0x310] sm:$0xff]
    %v594 = vld [vmem:[#allocation5 + $0x318] sm:$0xff]
    %v595 = vld [vmem:[#allocation5 + $0x320] sm:$0xff]
    %v596 = vld [vmem:[#allocation5 + $0x328] sm:$0xff]
    %v597 = vld [vmem:[#allocation5 + $0x330] sm:$0xff]
    %v598 = vld [vmem:[#allocation5 + $0x338] sm:$0xff]
    %v599 = vld [vmem:[#allocation5 + $0x340] sm:$0xff]
    %v600 = vld [vmem:[#allocation5 + $0x348] sm:$0xff]
    %v601 = vld [vmem:[#allocation5 + $0x350] sm:$0xff]
    %v602 = vld [vmem:[#allocation5 + $0x358] sm:$0xff]
    %v603 = vld [vmem:[#allocation5 + $0x360] sm:$0xff]
    %v604 = vld [vmem:[#allocation5 + $0x368] sm:$0xff]
    %v605 = vld [vmem:[#allocation5 + $0x370] sm:$0xff]
    %v606 = vld [vmem:[#allocation5 + $0x378] sm:$0xff]
    %v607 = vld [vmem:[#allocation5 + $0x380] sm:$0xff]
    %v608 = vld [vmem:[#allocation5 + $0x388] sm:$0xff]
    %v609 = vld [vmem:[#allocation5 + $0x390] sm:$0xff]
    %v610 = vld [vmem:[#allocation5 + $0x398] sm:$0xff]
    %v611 = vld [vmem:[#allocation5 + $0x3a0] sm:$0xff]
    %v612 = vld [vmem:[#allocation5 + $0x3a8] sm:$0xff]
    %v613 = vld [vmem:[#allocation5 + $0x3b0] sm:$0xff]
    %v614 = vld [vmem:[#allocation5 + $0x3b8] sm:$0xff]
    %v615 = vld [vmem:[#allocation5 + $0x3c0] sm:$0xff]
    %v616 = vld [vmem:[#allocation5 + $0x3c8] sm:$0xff]
    %v617 = vld [vmem:[#allocation5 + $0x3d0] sm:$0xff]
    %v618 = vld [vmem:[#allocation5 + $0x3d8] sm:$0xff]
    %v619 = vld [vmem:[#allocation5 + $0x3e0] sm:$0xff]
    %v620 = vld [vmem:[#allocation5 + $0x3e8] sm:$0xff]
    %v621 = vld [vmem:[#allocation5 + $0x3f0] sm:$0xff]
    %v622 = vld [vmem:[#allocation5 + $0x3f8] sm:$0xff]
    %v623 = vld [vmem:[#allocation5 + $0x400] sm:$0xff]
    %v624 = vld [vmem:[#allocation5 + $0x408] sm:$0xff]
    %v625 = vld [vmem:[#allocation5 + $0x410] sm:$0xff]
    %v626 = vld [vmem:[#allocation5 + $0x418] sm:$0xff]
    %v627 = vld [vmem:[#allocation5 + $0x420] sm:$0xff]
    %v628 = vld [vmem:[#allocation5 + $0x428] sm:$0xff]
    %v629 = vld [vmem:[#allocation5 + $0x430] sm:$0xff]
    %v630 = vld [vmem:[#allocation5 + $0x438] sm:$0xff]
    %v631 = vld [vmem:[#allocation5 + $0x440] sm:$0xff]
    %v632 = vld [vmem:[#allocation5 + $0x448] sm:$0xff]
    %v633 = vld [vmem:[#allocation5 + $0x450] sm:$0xff]
    %v634 = vld [vmem:[#allocation5 + $0x458] sm:$0xff]
    %v635 = vld [vmem:[#allocation5 + $0x460] sm:$0xff]
    %v636 = vld [vmem:[#allocation5 + $0x468] sm:$0xff]
    %v637 = vld [vmem:[#allocation5 + $0x470] sm:$0xff]
    %v638 = vld [vmem:[#allocation5 + $0x478] sm:$0xff]
    %v639 = vld [vmem:[#allocation5 + $0x480] sm:$0xff]
    %v640 = vld [vmem:[#allocation5 + $0x488] sm:$0xff]
    %v641 = vld [vmem:[#allocation5 + $0x490] sm:$0xff]
    %v642 = vld [vmem:[#allocation5 + $0x498] sm:$0xff]
    %v643 = vld [vmem:[#allocation5 + $0x4a0] sm:$0xff]
    %v644 = vld [vmem:[#allocation5 + $0x4a8] sm:$0xff]
    %v645 = vld [vmem:[#allocation5 + $0x4b0] sm:$0xff]
    %v646 = vld [vmem:[#allocation5 + $0x4b8] sm:$0xff]
    %v647 = vld [vmem:[#allocation5 + $0x4c0] sm:$0xff]
    %v648 = vld [vmem:[#allocation5 + $0x4c8] sm:$0xff]
    %v649 = vld [vmem:[#allocation5 + $0x4d0] sm:$0xff]
    %v650 = vld [vmem:[#allocation5 + $0x4d8] sm:$0xff]
    %v651 = vld [vmem:[#allocation5 + $0x4e0] sm:$0xff]
    %v652 = vld [vmem:[#allocation5 + $0x4e8] sm:$0xff]
    %v653 = vld [vmem:[#allocation5 + $0x4f0] sm:$0xff]
    %v654 = vld [vmem:[#allocation5 + $0x4f8] sm:$0xff]
    %v655 = vld [vmem:[#allocation5 + $0x500] sm:$0xff]
    %v656 = vld [vmem:[#allocation5 + $0x508] sm:$0xff]
    %v657 = vld [vmem:[#allocation5 + $0x510] sm:$0xff]
    %v658 = vld [vmem:[#allocation5 + $0x518] sm:$0xff]
    %v659 = vld [vmem:[#allocation5 + $0x520] sm:$0xff]
    %v660 = vld [vmem:[#allocation5 + $0x528] sm:$0xff]
    %v661 = vld [vmem:[#allocation5 + $0x530] sm:$0xff]
    %v662 = vld [vmem:[#allocation5 + $0x538] sm:$0xff]
    %v663 = vld [vmem:[#allocation5 + $0x540] sm:$0xff]
    %v664 = vld [vmem:[#allocation5 + $0x548] sm:$0xff]
    %v665 = vld [vmem:[#allocation5 + $0x550] sm:$0xff]
    %v666 = vld [vmem:[#allocation5 + $0x558] sm:$0xff]
    %v667 = vld [vmem:[#allocation5 + $0x560] sm:$0xff]
    %v668 = vld [vmem:[#allocation5 + $0x568] sm:$0xff]
    %v669 = vld [vmem:[#allocation5 + $0x570] sm:$0xff]
    %v670 = vld [vmem:[#allocation5 + $0x578] sm:$0xff]
    %v671 = vld [vmem:[#allocation5 + $0x580] sm:$0xff]
    %v672 = vld [vmem:[#allocation5 + $0x588] sm:$0xff]
    %v673 = vld [vmem:[#allocation5 + $0x590] sm:$0xff]
    %v674 = vld [vmem:[#allocation5 + $0x598] sm:$0xff]
    %v675 = vld [vmem:[#allocation5 + $0x5a0] sm:$0xff]
    %v676 = vld [vmem:[#allocation5 + $0x5a8] sm:$0xff]
    %v677 = vld [vmem:[#allocation5 + $0x5b0] sm:$0xff]
    %v678 = vld [vmem:[#allocation5 + $0x5b8] sm:$0xff]
    %v679 = vld [vmem:[#allocation5 + $0x5c0] sm:$0xff]
    %v680 = vld [vmem:[#allocation5 + $0x5c8] sm:$0xff]
    %v681 = vld [vmem:[#allocation5 + $0x5d0] sm:$0xff]
    %v682 = vld [vmem:[#allocation5 + $0x5d8] sm:$0xff]
    %v683 = vld [vmem:[#allocation5 + $0x5e0] sm:$0xff]
    %v684 = vld [vmem:[#allocation5 + $0x5e8] sm:$0xff]
    %v685 = vld [vmem:[#allocation5 + $0x5f0] sm:$0xff]
    %v686 = vld [vmem:[#allocation5 + $0x5f8] sm:$0xff]
    %v687 = vld [vmem:[#allocation5 + $0x600] sm:$0xff]
    %v688 = vld [vmem:[#allocation5 + $0x608] sm:$0xff]
    %v689 = vld [vmem:[#allocation5 + $0x610] sm:$0xff]
    %v690 = vld [vmem:[#allocation5 + $0x618] sm:$0xff]
    %v691 = vld [vmem:[#allocation5 + $0x620] sm:$0xff]
    %v692 = vld [vmem:[#allocation5 + $0x628] sm:$0xff]
    %v693 = vld [vmem:[#allocation5 + $0x630] sm:$0xff]
    %v694 = vld [vmem:[#allocation5 + $0x638] sm:$0xff]
    %v695 = vld [vmem:[#allocation5 + $0x640] sm:$0xff]
    %v696 = vld [vmem:[#allocation5 + $0x648] sm:$0xff]
    %v697 = vld [vmem:[#allocation5 + $0x650] sm:$0xff]
    %v698 = vld [vmem:[#allocation5 + $0x658] sm:$0xff]
    %v699 = vld [vmem:[#allocation5 + $0x660] sm:$0xff]
    %v700 = vld [vmem:[#allocation5 + $0x668] sm:$0xff]
    %v701 = vld [vmem:[#allocation5 + $0x670] sm:$0xff]
    %v702 = vld [vmem:[#allocation5 + $0x678] sm:$0xff]
    %v703 = vld [vmem:[#allocation5 + $0x680] sm:$0xff]
    %v704 = vld [vmem:[#allocation5 + $0x688] sm:$0xff]
    %v705 = vld [vmem:[#allocation5 + $0x690] sm:$0xff]
    %v706 = vld [vmem:[#allocation5 + $0x698] sm:$0xff]
    %v707 = vld [vmem:[#allocation5 + $0x6a0] sm:$0xff]
    %v708 = vld [vmem:[#allocation5 + $0x6a8] sm:$0xff]
    %v709 = vld [vmem:[#allocation5 + $0x6b0] sm:$0xff]
    %v710 = vld [vmem:[#allocation5 + $0x6b8] sm:$0xff]
    %v711 = vld [vmem:[#allocation5 + $0x6c0] sm:$0xff]
    %v712 = vld [vmem:[#allocation5 + $0x6c8] sm:$0xff]
    %v713 = vld [vmem:[#allocation5 + $0x6d0] sm:$0xff]
    %v714 = vld [vmem:[#allocation5 + $0x6d8] sm:$0xff]
    %v715 = vld [vmem:[#allocation5 + $0x6e0] sm:$0xff]
    %v716 = vld [vmem:[#allocation5 + $0x6e8] sm:$0xff]
    %v717 = vld [vmem:[#allocation5 + $0x6f0] sm:$0xff]
    %v718 = vld [vmem:[#allocation5 + $0x6f8] sm:$0xff]
    %v719 = vld [vmem:[#allocation5 + $0x700] sm:$0xff]
    %v720 = vld [vmem:[#allocation5 + $0x708] sm:$0xff]
    %v721 = vld [vmem:[#allocation5 + $0x710] sm:$0xff]
    %v722 = vld [vmem:[#allocation5 + $0x718] sm:$0xff]
    %v723 = vld [vmem:[#allocation5 + $0x720] sm:$0xff]
    %v724 = vld [vmem:[#allocation5 + $0x728] sm:$0xff]
    %v725 = vld [vmem:[#allocation5 + $0x730] sm:$0xff]
    %v726 = vld [vmem:[#allocation5 + $0x738] sm:$0xff]
    %v727 = vld [vmem:[#allocation5 + $0x740] sm:$0xff]
    %v728 = vld [vmem:[#allocation5 + $0x748] sm:$0xff]
    %v729 = vld [vmem:[#allocation5 + $0x750] sm:$0xff]
    %v730 = vld [vmem:[#allocation5 + $0x758] sm:$0xff]
    %v731 = vld [vmem:[#allocation5 + $0x760] sm:$0xff]
    %v732 = vld [vmem:[#allocation5 + $0x768] sm:$0xff]
    %v733 = vld [vmem:[#allocation5 + $0x770] sm:$0xff]
    %v734 = vld [vmem:[#allocation5 + $0x778] sm:$0xff]
    %v735 = vld [vmem:[#allocation5 + $0x780] sm:$0xff]
    %v736 = vld [vmem:[#allocation5 + $0x788] sm:$0xff]
    %v737 = vld [vmem:[#allocation5 + $0x790] sm:$0xff]
    %v738 = vld [vmem:[#allocation5 + $0x798] sm:$0xff]
    %v739 = vld [vmem:[#allocation5 + $0x7a0] sm:$0xff]
    %v740 = vld [vmem:[#allocation5 + $0x7a8] sm:$0xff]
    %v741 = vld [vmem:[#allocation5 + $0x7b0] sm:$0xff]
    %v742 = vld [vmem:[#allocation5 + $0x7b8] sm:$0xff]
    %v743 = vld [vmem:[#allocation5 + $0x7c0] sm:$0xff]
    %v744 = vld [vmem:[#allocation5 + $0x7c8] sm:$0xff]
    %v745 = vld [vmem:[#allocation5 + $0x7d0] sm:$0xff]
    %v746 = vld [vmem:[#allocation5 + $0x7d8] sm:$0xff]
    %v747 = vld [vmem:[#allocation5 + $0x7e0] sm:$0xff]
    %v748 = vld [vmem:[#allocation5 + $0x7e8] sm:$0xff]
    %v749 = vld [vmem:[#allocation5 + $0x7f0] sm:$0xff]
    %v750 = vld [vmem:[#allocation5 + $0x7f8] sm:$0xff]
    %v751 = vld [vmem:[#allocation5 + $0x800] sm:$0xff]
    %v752 = vld [vmem:[#allocation5 + $0x808] sm:$0xff]
    %v753 = vld [vmem:[#allocation5 + $0x810] sm:$0xff]
    %v754 = vld [vmem:[#allocation5 + $0x818] sm:$0xff]
    %v755 = vld [vmem:[#allocation5 + $0x820] sm:$0xff]
    %v756 = vld [vmem:[#allocation5 + $0x828] sm:$0xff]
    %v757 = vld [vmem:[#allocation5 + $0x830] sm:$0xff]
    %v758 = vld [vmem:[#allocation5 + $0x838] sm:$0xff]
    %v759 = vld [vmem:[#allocation5 + $0x840] sm:$0xff]
    %v760 = vld [vmem:[#allocation5 + $0x848] sm:$0xff]
    %v761 = vld [vmem:[#allocation5 + $0x850] sm:$0xff]
    %v762 = vld [vmem:[#allocation5 + $0x858] sm:$0xff]
    %v763 = vld [vmem:[#allocation5 + $0x860] sm:$0xff]
    %v764 = vld [vmem:[#allocation5 + $0x868] sm:$0xff]
    %v765 = vld [vmem:[#allocation5 + $0x870] sm:$0xff]
    %v766 = vld [vmem:[#allocation5 + $0x878] sm:$0xff]
    %v767 = vld [vmem:[#allocation5 + $0x880] sm:$0xff]
    %v768 = vld [vmem:[#allocation5 + $0x888] sm:$0xff]
    %v769 = vld [vmem:[#allocation5 + $0x890] sm:$0xff]
    %v770 = vld [vmem:[#allocation5 + $0x898] sm:$0xff]
    %v771 = vld [vmem:[#allocation5 + $0x8a0] sm:$0xff]
    %v772 = vld [vmem:[#allocation5 + $0x8a8] sm:$0xff]
    %v773 = vld [vmem:[#allocation5 + $0x8b0] sm:$0xff]
    %v774 = vld [vmem:[#allocation5 + $0x8b8] sm:$0xff]
    %v775 = vld [vmem:[#allocation5 + $0x8c0] sm:$0xff]
    %v776 = vld [vmem:[#allocation5 + $0x8c8] sm:$0xff]
    %v777 = vld [vmem:[#allocation5 + $0x8d0] sm:$0xff]
    %v778 = vld [vmem:[#allocation5 + $0x8d8] sm:$0xff]
    %v779 = vld [vmem:[#allocation5 + $0x8e0] sm:$0xff]
    %v780 = vld [vmem:[#allocation5 + $0x8e8] sm:$0xff]
    %v781 = vld [vmem:[#allocation5 + $0x8f0] sm:$0xff]
    %v782 = vld [vmem:[#allocation5 + $0x8f8] sm:$0xff]
    %v783 = vld [vmem:[#allocation5 + $0x900] sm:$0xff]
    %v784 = vld [vmem:[#allocation5 + $0x908] sm:$0xff]
    %v785 = vld [vmem:[#allocation5 + $0x910] sm:$0xff]
    %v786 = vld [vmem:[#allocation5 + $0x918] sm:$0xff]
    %v787 = vld [vmem:[#allocation5 + $0x920] sm:$0xff]
    %v788 = vld [vmem:[#allocation5 + $0x928] sm:$0xff]
    %v789 = vld [vmem:[#allocation5 + $0x930] sm:$0xff]
    %v790 = vld [vmem:[#allocation5 + $0x938] sm:$0xff]
    %v791 = vld [vmem:[#allocation5 + $0x940] sm:$0xff]
    %v792 = vld [vmem:[#allocation5 + $0x948] sm:$0xff]
    %v793 = vld [vmem:[#allocation5 + $0x950] sm:$0xff]
    %v794 = vld [vmem:[#allocation5 + $0x958] sm:$0xff]
    %v795 = vld [vmem:[#allocation5 + $0x960] sm:$0xff]
    %v796 = vld [vmem:[#allocation5 + $0x968] sm:$0xff]
    %v797 = vld [vmem:[#allocation5 + $0x970] sm:$0xff]
    %v798 = vld [vmem:[#allocation5 + $0x978] sm:$0xff]
    %v799 = vld [vmem:[#allocation5 + $0x980] sm:$0xff]
    %v800 = vld [vmem:[#allocation5 + $0x988] sm:$0xff]
    %v801 = vld [vmem:[#allocation5 + $0x990] sm:$0xff]
    %v802 = vld [vmem:[#allocation5 + $0x998] sm:$0xff]
    %v803 = vld [vmem:[#allocation5 + $0x9a0] sm:$0xff]
    %v804 = vld [vmem:[#allocation5 + $0x9a8] sm:$0xff]
    %v805 = vld [vmem:[#allocation5 + $0x9b0] sm:$0xff]
    %v806 = vld [vmem:[#allocation5 + $0x9b8] sm:$0xff]
    %v807 = vld [vmem:[#allocation5 + $0x9c0] sm:$0xff]
    %v808 = vld [vmem:[#allocation5 + $0x9c8] sm:$0xff]
    %v809 = vld [vmem:[#allocation5 + $0x9d0] sm:$0xff]
    %v810 = vld [vmem:[#allocation5 + $0x9d8] sm:$0xff]
    %v811 = vld [vmem:[#allocation5 + $0x9e0] sm:$0xff]
    %v812 = vld [vmem:[#allocation5 + $0x9e8] sm:$0xff]
    %v813 = vld [vmem:[#allocation5 + $0x9f0] sm:$0xff]
    %v814 = vld [vmem:[#allocation5 + $0x9f8] sm:$0xff]
    %v815 = vld [vmem:[#allocation5 + $0xa00] sm:$0xff]
    %v816 = vld [vmem:[#allocation5 + $0xa08] sm:$0xff]
    %v817 = vld [vmem:[#allocation5 + $0xa10] sm:$0xff]
    %v818 = vld [vmem:[#allocation5 + $0xa18] sm:$0xff]
    %v819 = vld [vmem:[#allocation5 + $0xa20] sm:$0xff]
    %v820 = vld [vmem:[#allocation5 + $0xa28] sm:$0xff]
    %v821 = vld [vmem:[#allocation5 + $0xa30] sm:$0xff]
    %v822 = vld [vmem:[#allocation5 + $0xa38] sm:$0xff]
    %v823 = vld [vmem:[#allocation5 + $0xa40] sm:$0xff]
    %v824 = vld [vmem:[#allocation5 + $0xa48] sm:$0xff]
    %v825 = vld [vmem:[#allocation5 + $0xa50] sm:$0xff]
    %v826 = vld [vmem:[#allocation5 + $0xa58] sm:$0xff]
    %v827 = vld [vmem:[#allocation5 + $0xa60] sm:$0xff]
    %v828 = vld [vmem:[#allocation5 + $0xa68] sm:$0xff]
    %v829 = vld [vmem:[#allocation5 + $0xa70] sm:$0xff]
    %v830 = vld [vmem:[#allocation5 + $0xa78] sm:$0xff]
    %v831 = vld [vmem:[#allocation5 + $0xa80] sm:$0xff]
    %v832 = vld [vmem:[#allocation5 + $0xa88] sm:$0xff]
    %v833 = vld [vmem:[#allocation5 + $0xa90] sm:$0xff]
    %v834 = vld [vmem:[#allocation5 + $0xa98] sm:$0xff]
    %v835 = vld [vmem:[#allocation5 + $0xaa0] sm:$0xff]
    %v836 = vld [vmem:[#allocation5 + $0xaa8] sm:$0xff]
    %v837 = vld [vmem:[#allocation5 + $0xab0] sm:$0xff]
    %v838 = vld [vmem:[#allocation5 + $0xab8] sm:$0xff]
    %v839 = vld [vmem:[#allocation5 + $0xac0] sm:$0xff]
    %v840 = vld [vmem:[#allocation5 + $0xac8] sm:$0xff]
    %v841 = vld [vmem:[#allocation5 + $0xad0] sm:$0xff]
    %v842 = vld [vmem:[#allocation5 + $0xad8] sm:$0xff]
    %v843 = vld [vmem:[#allocation5 + $0xae0] sm:$0xff]
    %v844 = vld [vmem:[#allocation5 + $0xae8] sm:$0xff]
    %v845 = vld [vmem:[#allocation5 + $0xaf0] sm:$0xff]
    %v846 = vld [vmem:[#allocation5 + $0xaf8] sm:$0xff]
    %v847 = vld [vmem:[#allocation5 + $0xb00] sm:$0xff]
    %v848 = vld [vmem:[#allocation5 + $0xb08] sm:$0xff]
    %v849 = vld [vmem:[#allocation5 + $0xb10] sm:$0xff]
    %v850 = vld [vmem:[#allocation5 + $0xb18] sm:$0xff]
    %v851 = vld [vmem:[#allocation5 + $0xb20] sm:$0xff]
    %v852 = vld [vmem:[#allocation5 + $0xb28] sm:$0xff]
    %v853 = vld [vmem:[#allocation5 + $0xb30] sm:$0xff]
    %v854 = vld [vmem:[#allocation5 + $0xb38] sm:$0xff]
    %v855 = vld [vmem:[#allocation5 + $0xb40] sm:$0xff]
    %v856 = vld [vmem:[#allocation5 + $0xb48] sm:$0xff]
    %v857 = vld [vmem:[#allocation5 + $0xb50] sm:$0xff]
    %v858 = vld [vmem:[#allocation5 + $0xb58] sm:$0xff]
    %v859 = vld [vmem:[#allocation5 + $0xb60] sm:$0xff]
    %v860 = vld [vmem:[#allocation5 + $0xb68] sm:$0xff]
    %v861 = vld [vmem:[#allocation5 + $0xb70] sm:$0xff]
    %v862 = vld [vmem:[#allocation5 + $0xb78] sm:$0xff]
    %v863 = vld [vmem:[#allocation5 + $0xb80] sm:$0xff]
    %v864 = vld [vmem:[#allocation5 + $0xb88] sm:$0xff]
    %v865 = vld [vmem:[#allocation5 + $0xb90] sm:$0xff]
    %v866 = vld [vmem:[#allocation5 + $0xb98] sm:$0xff]
    %v867 = vld [vmem:[#allocation5 + $0xba0] sm:$0xff]
    %v868 = vld [vmem:[#allocation5 + $0xba8] sm:$0xff]
    %v869 = vld [vmem:[#allocation5 + $0xbb0] sm:$0xff]
    %v870 = vld [vmem:[#allocation5 + $0xbb8] sm:$0xff]
    %v871 = vld [vmem:[#allocation5 + $0xbc0] sm:$0xff]
    %v872 = vld [vmem:[#allocation5 + $0xbc8] sm:$0xff]
    %v873 = vld [vmem:[#allocation5 + $0xbd0] sm:$0xff]
    %v874 = vld [vmem:[#allocation5 + $0xbd8] sm:$0xff]
    %v875 = vld [vmem:[#allocation5 + $0xbe0] sm:$0xff]
    %v876 = vld [vmem:[#allocation5 + $0xbe8] sm:$0xff]
    %v877 = vld [vmem:[#allocation5 + $0xbf0] sm:$0xff]
    %v878 = vld [vmem:[#allocation5 + $0xbf8] sm:$0xff]
    %v879 = vld [vmem:[#allocation7] sm:$0xff]
    %v880 = vld [vmem:[#allocation7 + $0x8] sm:$0xf]
    %v881 = vld [vmem:[#allocation8] sm:$0xff]
    %v882 = vld [vmem:[#allocation8 + $0x8] sm:$0xf]
    %v883 = vld [vmem:[%s0] sm:$0xff]
    %v884 = vld [vmem:[%s0 + $0x8] sm:$0xff]
    %v887 = vperm.slane %v879, 0
    %v888 = vperm.slane %v879, 1
    %v889 = vperm.slane %v879, 2
    %v890 = vperm.slane %v879, 3
    %v891 = vperm.slane %v879, 4
    %v892 = vperm.slane %v879, 5
    %v893 = vperm.slane %v879, 6
    %v894 = vperm.slane %v879, 7
    %v895 = vperm.slane %v880, 0
    %v896 = vperm.slane %v880, 1
    %v897 = vperm.slane %v880, 2
    %v898 = vperm.slane %v880, 3
    %v913 = vunpack.c.l.b16 %v883
    %v914 = vunpack.c.h.b16 %v883
    %v915 = vunpack.c.l.b16 %v884
    %v916 = vunpack.c.h.b16 %v884
    %v917 = vpack.c.b16 %v913, %v913
    %v918 = vpack.c.b16 %v914, %v914
    %v919 = vpack.c.b16 %v915, %v915
    %v920 = vpack.c.b16 %v916, %v916
    %v1309 = vunpack.c.l.b16 %v111
    %v1310 = vunpack.c.h.b16 %v111
    %v1311 = vunpack.c.l.b16 %v112
    %v1312 = vunpack.c.h.b16 %v112
    %v1313 = vunpack.c.l.b16 %v113
    %v1314 = vunpack.c.h.b16 %v113
    %v1315 = vunpack.c.l.b16 %v114
    %v1316 = vunpack.c.h.b16 %v114
    %v1317 = vunpack.c.l.b16 %v115
    %v1318 = vunpack.c.h.b16 %v115
    %v1319 = vunpack.c.l.b16 %v116
    %v1320 = vunpack.c.h.b16 %v116
    %v1321 = vunpack.c.l.b16 %v117
    %v1322 = vunpack.c.h.b16 %v117
    %v1323 = vunpack.c.l.b16 %v118
    %v1324 = vunpack.c.h.b16 %v118
    %v1325 = vunpack.c.l.b16 %v119
    %v1326 = vunpack.c.h.b16 %v119
    %v1327 = vunpack.c.l.b16 %v120
    %v1328 = vunpack.c.h.b16 %v120
    %v1329 = vunpack.c.l.b16 %v121
    %v1330 = vunpack.c.h.b16 %v121
    %v1331 = vunpack.c.l.b16 %v122
    %v1332 = vunpack.c.h.b16 %v122
    %v1333 = vunpack.c.l.b16 %v123
    %v1334 = vunpack.c.h.b16 %v123
    %v1335 = vunpack.c.l.b16 %v124
    %v1336 = vunpack.c.h.b16 %v124
    %v1337 = vunpack.c.l.b16 %v125
    %v1338 = vunpack.c.h.b16 %v125
    %v1339 = vunpack.c.l.b16 %v126
    %v1340 = vunpack.c.h.b16 %v126
    %v1341 = vunpack.c.l.b16 %v127
    %v1342 = vunpack.c.h.b16 %v127
    %v1343 = vunpack.c.l.b16 %v128
    %v1344 = vunpack.c.h.b16 %v128
    %v1345 = vunpack.c.l.b16 %v129
    %v1346 = vunpack.c.h.b16 %v129
    %v1347 = vunpack.c.l.b16 %v130
    %v1348 = vunpack.c.h.b16 %v130
    %v1349 = vunpack.c.l.b16 %v131
    %v1350 = vunpack.c.h.b16 %v131
    %v1351 = vunpack.c.l.b16 %v132
    %v1352 = vunpack.c.h.b16 %v132
    %v1353 = vunpack.c.l.b16 %v133
    %v1354 = vunpack.c.h.b16 %v133
    %v1355 = vunpack.c.l.b16 %v134
    %v1356 = vunpack.c.h.b16 %v134
    %v1357 = vunpack.c.l.b16 %v135
    %v1358 = vunpack.c.h.b16 %v135
    %v1359 = vunpack.c.l.b16 %v136
    %v1360 = vunpack.c.h.b16 %v136
    %v1361 = vunpack.c.l.b16 %v137
    %v1362 = vunpack.c.h.b16 %v137
    %v1363 = vunpack.c.l.b16 %v138
    %v1364 = vunpack.c.h.b16 %v138
    %v1365 = vunpack.c.l.b16 %v139
    %v1366 = vunpack.c.h.b16 %v139
    %v1367 = vunpack.c.l.b16 %v140
    %v1368 = vunpack.c.h.b16 %v140
    %v1369 = vunpack.c.l.b16 %v141
    %v1370 = vunpack.c.h.b16 %v141
    %v1371 = vunpack.c.l.b16 %v142
    %v1372 = vunpack.c.h.b16 %v142
    %v1373 = vunpack.c.l.b16 %v143
    %v1374 = vunpack.c.h.b16 %v143
    %v1375 = vunpack.c.l.b16 %v144
    %v1376 = vunpack.c.h.b16 %v144
    %v1377 = vunpack.c.l.b16 %v145
    %v1378 = vunpack.c.h.b16 %v145
    %v1379 = vunpack.c.l.b16 %v146
    %v1380 = vunpack.c.h.b16 %v146
    %v1381 = vunpack.c.l.b16 %v147
    %v1382 = vunpack.c.h.b16 %v147
    %v1383 = vunpack.c.l.b16 %v148
    %v1384 = vunpack.c.h.b16 %v148
    %v1385 = vunpack.c.l.b16 %v149
    %v1386 = vunpack.c.h.b16 %v149
    %v1387 = vunpack.c.l.b16 %v150
    %v1388 = vunpack.c.h.b16 %v150
    %v1389 = vunpack.c.l.b16 %v151
    %v1390 = vunpack.c.h.b16 %v151
    %v1391 = vunpack.c.l.b16 %v152
    %v1392 = vunpack.c.h.b16 %v152
    %v1393 = vunpack.c.l.b16 %v153
    %v1394 = vunpack.c.h.b16 %v153
    %v1395 = vunpack.c.l.b16 %v154
    %v1396 = vunpack.c.h.b16 %v154
    %v1397 = vunpack.c.l.b16 %v155
    %v1398 = vunpack.c.h.b16 %v155
    %v1399 = vunpack.c.l.b16 %v156
    %v1400 = vunpack.c.h.b16 %v156
    %v1401 = vunpack.c.l.b16 %v157
    %v1402 = vunpack.c.h.b16 %v157
    %v1403 = vunpack.c.l.b16 %v158
    %v1404 = vunpack.c.h.b16 %v158
    %v1405 = vunpack.c.l.b16 %v159
    %v1406 = vunpack.c.h.b16 %v159
    %v1407 = vunpack.c.l.b16 %v160
    %v1408 = vunpack.c.h.b16 %v160
    %v1409 = vunpack.c.l.b16 %v161
    %v1410 = vunpack.c.h.b16 %v161
    %v1411 = vunpack.c.l.b16 %v162
    %v1412 = vunpack.c.h.b16 %v162
    %v1413 = vunpack.c.l.b16 %v163
    %v1414 = vunpack.c.h.b16 %v163
    %v1415 = vunpack.c.l.b16 %v164
    %v1416 = vunpack.c.h.b16 %v164
    %v1417 = vunpack.c.l.b16 %v165
    %v1418 = vunpack.c.h.b16 %v165
    %v1419 = vunpack.c.l.b16 %v166
    %v1420 = vunpack.c.h.b16 %v166
    %v1421 = vunpack.c.l.b16 %v167
    %v1422 = vunpack.c.h.b16 %v167
    %v1423 = vunpack.c.l.b16 %v168
    %v1424 = vunpack.c.h.b16 %v168
    %v1425 = vunpack.c.l.b16 %v169
    %v1426 = vunpack.c.h.b16 %v169
    %v1427 = vunpack.c.l.b16 %v170
    %v1428 = vunpack.c.h.b16 %v170
    %v1429 = vunpack.c.l.b16 %v171
    %v1430 = vunpack.c.h.b16 %v171
    %v1431 = vunpack.c.l.b16 %v172
    %v1432 = vunpack.c.h.b16 %v172
    %v1433 = vunpack.c.l.b16 %v173
    %v1434 = vunpack.c.h.b16 %v173
    %v1435 = vunpack.c.l.b16 %v174
    %v1436 = vunpack.c.h.b16 %v174
    %v1437 = vunpack.c.l.b16 %v175
    %v1438 = vunpack.c.h.b16 %v175
    %v1439 = vunpack.c.l.b16 %v176
    %v1440 = vunpack.c.h.b16 %v176
    %v1441 = vunpack.c.l.b16 %v177
    %v1442 = vunpack.c.h.b16 %v177
    %v1443 = vunpack.c.l.b16 %v178
    %v1444 = vunpack.c.h.b16 %v178
    %v1445 = vunpack.c.l.b16 %v179
    %v1446 = vunpack.c.h.b16 %v179
    %v1447 = vunpack.c.l.b16 %v180
    %v1448 = vunpack.c.h.b16 %v180
    %v1449 = vunpack.c.l.b16 %v181
    %v1450 = vunpack.c.h.b16 %v181
    %v1451 = vunpack.c.l.b16 %v182
    %v1452 = vunpack.c.h.b16 %v182
    %v1453 = vunpack.c.l.b16 %v183
    %v1454 = vunpack.c.h.b16 %v183
    %v1455 = vunpack.c.l.b16 %v184
    %v1456 = vunpack.c.h.b16 %v184
    %v1457 = vunpack.c.l.b16 %v185
    %v1458 = vunpack.c.h.b16 %v185
    %v1459 = vunpack.c.l.b16 %v186
    %v1460 = vunpack.c.h.b16 %v186
    %v1461 = vunpack.c.l.b16 %v187
    %v1462 = vunpack.c.h.b16 %v187
    %v1463 = vunpack.c.l.b16 %v188
    %v1464 = vunpack.c.h.b16 %v188
    %v1465 = vunpack.c.l.b16 %v189
    %v1466 = vunpack.c.h.b16 %v189
    %v1467 = vunpack.c.l.b16 %v190
    %v1468 = vunpack.c.h.b16 %v190
    %v1469 = vunpack.c.l.b16 %v191
    %v1470 = vunpack.c.h.b16 %v191
    %v1471 = vunpack.c.l.b16 %v192
    %v1472 = vunpack.c.h.b16 %v192
    %v1473 = vunpack.c.l.b16 %v193
    %v1474 = vunpack.c.h.b16 %v193
    %v1475 = vunpack.c.l.b16 %v194
    %v1476 = vunpack.c.h.b16 %v194
    %v1477 = vunpack.c.l.b16 %v195
    %v1478 = vunpack.c.h.b16 %v195
    %v1479 = vunpack.c.l.b16 %v196
    %v1480 = vunpack.c.h.b16 %v196
    %v1481 = vunpack.c.l.b16 %v197
    %v1482 = vunpack.c.h.b16 %v197
    %v1483 = vunpack.c.l.b16 %v198
    %v1484 = vunpack.c.h.b16 %v198
    %v1485 = vunpack.c.l.b16 %v199
    %v1486 = vunpack.c.h.b16 %v199
    %v1487 = vunpack.c.l.b16 %v200
    %v1488 = vunpack.c.h.b16 %v200
    %v1489 = vunpack.c.l.b16 %v201
    %v1490 = vunpack.c.h.b16 %v201
    %v1491 = vunpack.c.l.b16 %v202
    %v1492 = vunpack.c.h.b16 %v202
    %v1493 = vunpack.c.l.b16 %v203
    %v1494 = vunpack.c.h.b16 %v203
    %v1495 = vunpack.c.l.b16 %v204
    %v1496 = vunpack.c.h.b16 %v204
    %v1497 = vunpack.c.l.b16 %v205
    %v1498 = vunpack.c.h.b16 %v205
    %v1499 = vunpack.c.l.b16 %v206
    %v1500 = vunpack.c.h.b16 %v206
    %v1501 = vunpack.c.l.b16 %v207
    %v1502 = vunpack.c.h.b16 %v207
    %v1503 = vunpack.c.l.b16 %v208
    %v1504 = vunpack.c.h.b16 %v208
    %v1505 = vunpack.c.l.b16 %v209
    %v1506 = vunpack.c.h.b16 %v209
    %v1507 = vunpack.c.l.b16 %v210
    %v1508 = vunpack.c.h.b16 %v210
    %v1509 = vunpack.c.l.b16 %v211
    %v1510 = vunpack.c.h.b16 %v211
    %v1511 = vunpack.c.l.b16 %v212
    %v1512 = vunpack.c.h.b16 %v212
    %v1513 = vunpack.c.l.b16 %v213
    %v1514 = vunpack.c.h.b16 %v213
    %v1515 = vunpack.c.l.b16 %v214
    %v1516 = vunpack.c.h.b16 %v214
    %v1517 = vunpack.c.l.b16 %v215
    %v1518 = vunpack.c.h.b16 %v215
    %v1519 = vunpack.c.l.b16 %v216
    %v1520 = vunpack.c.h.b16 %v216
    %v1521 = vunpack.c.l.b16 %v217
    %v1522 = vunpack.c.h.b16 %v217
    %v1523 = vunpack.c.l.b16 %v218
    %v1524 = vunpack.c.h.b16 %v218
    %v1525 = vunpack.c.l.b16 %v219
    %v1526 = vunpack.c.h.b16 %v219
    %v1527 = vunpack.c.l.b16 %v220
    %v1528 = vunpack.c.h.b16 %v220
    %v1529 = vunpack.c.l.b16 %v221
    %v1530 = vunpack.c.h.b16 %v221
    %v1531 = vunpack.c.l.b16 %v222
    %v1532 = vunpack.c.h.b16 %v222
    %v1533 = vunpack.c.l.b16 %v223
    %v1534 = vunpack.c.h.b16 %v223
    %v1535 = vunpack.c.l.b16 %v224
    %v1536 = vunpack.c.h.b16 %v224
    %v1537 = vunpack.c.l.b16 %v225
    %v1538 = vunpack.c.h.b16 %v225
    %v1539 = vunpack.c.l.b16 %v226
    %v1540 = vunpack.c.h.b16 %v226
    %v1541 = vunpack.c.l.b16 %v227
    %v1542 = vunpack.c.h.b16 %v227
    %v1543 = vunpack.c.l.b16 %v228
    %v1544 = vunpack.c.h.b16 %v228
    %v1545 = vunpack.c.l.b16 %v229
    %v1546 = vunpack.c.h.b16 %v229
    %v1547 = vunpack.c.l.b16 %v230
    %v1548 = vunpack.c.h.b16 %v230
    %v1549 = vunpack.c.l.b16 %v231
    %v1550 = vunpack.c.h.b16 %v231
    %v1551 = vunpack.c.l.b16 %v232
    %v1552 = vunpack.c.h.b16 %v232
    %v1553 = vunpack.c.l.b16 %v233
    %v1554 = vunpack.c.h.b16 %v233
    %v1555 = vunpack.c.l.b16 %v234
    %v1556 = vunpack.c.h.b16 %v234
    %v1557 = vunpack.c.l.b16 %v235
    %v1558 = vunpack.c.h.b16 %v235
    %v1559 = vunpack.c.l.b16 %v236
    %v1560 = vunpack.c.h.b16 %v236
    %v1561 = vunpack.c.l.b16 %v237
    %v1562 = vunpack.c.h.b16 %v237
    %v1563 = vunpack.c.l.b16 %v238
    %v1564 = vunpack.c.h.b16 %v238
    %v1565 = vunpack.c.l.b16 %v239
    %v1566 = vunpack.c.h.b16 %v239
    %v1567 = vunpack.c.l.b16 %v240
    %v1568 = vunpack.c.h.b16 %v240
    %v1569 = vunpack.c.l.b16 %v241
    %v1570 = vunpack.c.h.b16 %v241
    %v1571 = vunpack.c.l.b16 %v242
    %v1572 = vunpack.c.h.b16 %v242
    %v1573 = vunpack.c.l.b16 %v243
    %v1574 = vunpack.c.h.b16 %v243
    %v1575 = vunpack.c.l.b16 %v244
    %v1576 = vunpack.c.h.b16 %v244
    %v1577 = vunpack.c.l.b16 %v245
    %v1578 = vunpack.c.h.b16 %v245
    %v1579 = vunpack.c.l.b16 %v246
    %v1580 = vunpack.c.h.b16 %v246
    %v1581 = vunpack.c.l.b16 %v247
    %v1582 = vunpack.c.h.b16 %v247
    %v1583 = vunpack.c.l.b16 %v248
    %v1584 = vunpack.c.h.b16 %v248
    %v1585 = vunpack.c.l.b16 %v249
    %v1586 = vunpack.c.h.b16 %v249
    %v1587 = vunpack.c.l.b16 %v250
    %v1588 = vunpack.c.h.b16 %v250
    %v1589 = vunpack.c.l.b16 %v251
    %v1590 = vunpack.c.h.b16 %v251
    %v1591 = vunpack.c.l.b16 %v252
    %v1592 = vunpack.c.h.b16 %v252
    %v1593 = vunpack.c.l.b16 %v253
    %v1594 = vunpack.c.h.b16 %v253
    %v1595 = vunpack.c.l.b16 %v254
    %v1596 = vunpack.c.h.b16 %v254
    %v1597 = vunpack.c.l.b16 %v255
    %v1598 = vunpack.c.h.b16 %v255
    %v1599 = vunpack.c.l.b16 %v256
    %v1600 = vunpack.c.h.b16 %v256
    %v1601 = vunpack.c.l.b16 %v257
    %v1602 = vunpack.c.h.b16 %v257
    %v1603 = vunpack.c.l.b16 %v258
    %v1604 = vunpack.c.h.b16 %v258
    %v1605 = vunpack.c.l.b16 %v259
    %v1606 = vunpack.c.h.b16 %v259
    %v1607 = vunpack.c.l.b16 %v260
    %v1608 = vunpack.c.h.b16 %v260
    %v1609 = vunpack.c.l.b16 %v261
    %v1610 = vunpack.c.h.b16 %v261
    %v1611 = vunpack.c.l.b16 %v262
    %v1612 = vunpack.c.h.b16 %v262
    %v1613 = vunpack.c.l.b16 %v263
    %v1614 = vunpack.c.h.b16 %v263
    %v1615 = vunpack.c.l.b16 %v264
    %v1616 = vunpack.c.h.b16 %v264
    %v1617 = vunpack.c.l.b16 %v265
    %v1618 = vunpack.c.h.b16 %v265
    %v1619 = vunpack.c.l.b16 %v266
    %v1620 = vunpack.c.h.b16 %v266
    %v1621 = vunpack.c.l.b16 %v267
    %v1622 = vunpack.c.h.b16 %v267
    %v1623 = vunpack.c.l.b16 %v268
    %v1624 = vunpack.c.h.b16 %v268
    %v1625 = vunpack.c.l.b16 %v269
    %v1626 = vunpack.c.h.b16 %v269
    %v1627 = vunpack.c.l.b16 %v270
    %v1628 = vunpack.c.h.b16 %v270
    %v1629 = vunpack.c.l.b16 %v271
    %v1630 = vunpack.c.h.b16 %v271
    %v1631 = vunpack.c.l.b16 %v272
    %v1632 = vunpack.c.h.b16 %v272
    %v1633 = vunpack.c.l.b16 %v273
    %v1634 = vunpack.c.h.b16 %v273
    %v1635 = vunpack.c.l.b16 %v274
    %v1636 = vunpack.c.h.b16 %v274
    %v1637 = vunpack.c.l.b16 %v275
    %v1638 = vunpack.c.h.b16 %v275
    %v1639 = vunpack.c.l.b16 %v276
    %v1640 = vunpack.c.h.b16 %v276
    %v1641 = vunpack.c.l.b16 %v277
    %v1642 = vunpack.c.h.b16 %v277
    %v1643 = vunpack.c.l.b16 %v278
    %v1644 = vunpack.c.h.b16 %v278
    %v1645 = vunpack.c.l.b16 %v279
    %v1646 = vunpack.c.h.b16 %v279
    %v1647 = vunpack.c.l.b16 %v280
    %v1648 = vunpack.c.h.b16 %v280
    %v1649 = vunpack.c.l.b16 %v281
    %v1650 = vunpack.c.h.b16 %v281
    %v1651 = vunpack.c.l.b16 %v282
    %v1652 = vunpack.c.h.b16 %v282
    %v1653 = vunpack.c.l.b16 %v283
    %v1654 = vunpack.c.h.b16 %v283
    %v1655 = vunpack.c.l.b16 %v284
    %v1656 = vunpack.c.h.b16 %v284
    %v1657 = vunpack.c.l.b16 %v285
    %v1658 = vunpack.c.h.b16 %v285
    %v1659 = vunpack.c.l.b16 %v286
    %v1660 = vunpack.c.h.b16 %v286
    %v1661 = vunpack.c.l.b16 %v287
    %v1662 = vunpack.c.h.b16 %v287
    %v1663 = vunpack.c.l.b16 %v288
    %v1664 = vunpack.c.h.b16 %v288
    %v1665 = vunpack.c.l.b16 %v289
    %v1666 = vunpack.c.h.b16 %v289
    %v1667 = vunpack.c.l.b16 %v290
    %v1668 = vunpack.c.h.b16 %v290
    %v1669 = vunpack.c.l.b16 %v291
    %v1670 = vunpack.c.h.b16 %v291
    %v1671 = vunpack.c.l.b16 %v292
    %v1672 = vunpack.c.h.b16 %v292
    %v1673 = vunpack.c.l.b16 %v293
    %v1674 = vunpack.c.h.b16 %v293
    %v1675 = vunpack.c.l.b16 %v294
    %v1676 = vunpack.c.h.b16 %v294
    %v1677 = vunpack.c.l.b16 %v295
    %v1678 = vunpack.c.h.b16 %v295
    %v1679 = vunpack.c.l.b16 %v296
    %v1680 = vunpack.c.h.b16 %v296
    %v1681 = vunpack.c.l.b16 %v297
    %v1682 = vunpack.c.h.b16 %v297
    %v1683 = vunpack.c.l.b16 %v298
    %v1684 = vunpack.c.h.b16 %v298
    %v1685 = vunpack.c.l.b16 %v299
    %v1686 = vunpack.c.h.b16 %v299
    %v1687 = vunpack.c.l.b16 %v300
    %v1688 = vunpack.c.h.b16 %v300
    %v1689 = vunpack.c.l.b16 %v301
    %v1690 = vunpack.c.h.b16 %v301
    %v1691 = vunpack.c.l.b16 %v302
    %v1692 = vunpack.c.h.b16 %v302
    %v1693 = vunpack.c.l.b16 %v303
    %v1694 = vunpack.c.h.b16 %v303
    %v1695 = vunpack.c.l.b16 %v304
    %v1696 = vunpack.c.h.b16 %v304
    %v1697 = vunpack.c.l.b16 %v305
    %v1698 = vunpack.c.h.b16 %v305
    %v1699 = vunpack.c.l.b16 %v306
    %v1700 = vunpack.c.h.b16 %v306
    %v1701 = vunpack.c.l.b16 %v307
    %v1702 = vunpack.c.h.b16 %v307
    %v1703 = vunpack.c.l.b16 %v308
    %v1704 = vunpack.c.h.b16 %v308
    %v1705 = vunpack.c.l.b16 %v309
    %v1706 = vunpack.c.h.b16 %v309
    %v1707 = vunpack.c.l.b16 %v310
    %v1708 = vunpack.c.h.b16 %v310
    %v1709 = vunpack.c.l.b16 %v311
    %v1710 = vunpack.c.h.b16 %v311
    %v1711 = vunpack.c.l.b16 %v312
    %v1712 = vunpack.c.h.b16 %v312
    %v1713 = vunpack.c.l.b16 %v313
    %v1714 = vunpack.c.h.b16 %v313
    %v1715 = vunpack.c.l.b16 %v314
    %v1716 = vunpack.c.h.b16 %v314
    %v1717 = vunpack.c.l.b16 %v315
    %v1718 = vunpack.c.h.b16 %v315
    %v1719 = vunpack.c.l.b16 %v316
    %v1720 = vunpack.c.h.b16 %v316
    %v1721 = vunpack.c.l.b16 %v317
    %v1722 = vunpack.c.h.b16 %v317
    %v1723 = vunpack.c.l.b16 %v318
    %v1724 = vunpack.c.h.b16 %v318
    %v1725 = vunpack.c.l.b16 %v319
    %v1726 = vunpack.c.h.b16 %v319
    %v1727 = vunpack.c.l.b16 %v320
    %v1728 = vunpack.c.h.b16 %v320
    %v1729 = vunpack.c.l.b16 %v321
    %v1730 = vunpack.c.h.b16 %v321
    %v1731 = vunpack.c.l.b16 %v322
    %v1732 = vunpack.c.h.b16 %v322
    %v1733 = vunpack.c.l.b16 %v323
    %v1734 = vunpack.c.h.b16 %v323
    %v1735 = vunpack.c.l.b16 %v324
    %v1736 = vunpack.c.h.b16 %v324
    %v1737 = vunpack.c.l.b16 %v325
    %v1738 = vunpack.c.h.b16 %v325
    %v1739 = vunpack.c.l.b16 %v326
    %v1740 = vunpack.c.h.b16 %v326
    %v1741 = vunpack.c.l.b16 %v327
    %v1742 = vunpack.c.h.b16 %v327
    %v1743 = vunpack.c.l.b16 %v328
    %v1744 = vunpack.c.h.b16 %v328
    %v1745 = vunpack.c.l.b16 %v329
    %v1746 = vunpack.c.h.b16 %v329
    %v1747 = vunpack.c.l.b16 %v330
    %v1748 = vunpack.c.h.b16 %v330
    %v1749 = vunpack.c.l.b16 %v331
    %v1750 = vunpack.c.h.b16 %v331
    %v1751 = vunpack.c.l.b16 %v332
    %v1752 = vunpack.c.h.b16 %v332
    %v1753 = vunpack.c.l.b16 %v333
    %v1754 = vunpack.c.h.b16 %v333
    %v1755 = vunpack.c.l.b16 %v334
    %v1756 = vunpack.c.h.b16 %v334
    %v1757 = vunpack.c.l.b16 %v335
    %v1758 = vunpack.c.h.b16 %v335
    %v1759 = vunpack.c.l.b16 %v336
    %v1760 = vunpack.c.h.b16 %v336
    %v1761 = vunpack.c.l.b16 %v337
    %v1762 = vunpack.c.h.b16 %v337
    %v1763 = vunpack.c.l.b16 %v338
    %v1764 = vunpack.c.h.b16 %v338
    %v1765 = vunpack.c.l.b16 %v339
    %v1766 = vunpack.c.h.b16 %v339
    %v1767 = vunpack.c.l.b16 %v340
    %v1768 = vunpack.c.h.b16 %v340
    %v1769 = vunpack.c.l.b16 %v341
    %v1770 = vunpack.c.h.b16 %v341
    %v1771 = vunpack.c.l.b16 %v342
    %v1772 = vunpack.c.h.b16 %v342
    %v1773 = vunpack.c.l.b16 %v343
    %v1774 = vunpack.c.h.b16 %v343
    %v1775 = vunpack.c.l.b16 %v344
    %v1776 = vunpack.c.h.b16 %v344
    %v1777 = vunpack.c.l.b16 %v345
    %v1778 = vunpack.c.h.b16 %v345
    %v1779 = vunpack.c.l.b16 %v346
    %v1780 = vunpack.c.h.b16 %v346
    %v1781 = vunpack.c.l.b16 %v347
    %v1782 = vunpack.c.h.b16 %v347
    %v1783 = vunpack.c.l.b16 %v348
    %v1784 = vunpack.c.h.b16 %v348
    %v1785 = vunpack.c.l.b16 %v349
    %v1786 = vunpack.c.h.b16 %v349
    %v1787 = vunpack.c.l.b16 %v350
    %v1788 = vunpack.c.h.b16 %v350
    %v1789 = vunpack.c.l.b16 %v351
    %v1790 = vunpack.c.h.b16 %v351
    %v1791 = vunpack.c.l.b16 %v352
    %v1792 = vunpack.c.h.b16 %v352
    %v1793 = vunpack.c.l.b16 %v353
    %v1794 = vunpack.c.h.b16 %v353
    %v1795 = vunpack.c.l.b16 %v354
    %v1796 = vunpack.c.h.b16 %v354
    %v1797 = vunpack.c.l.b16 %v355
    %v1798 = vunpack.c.h.b16 %v355
    %v1799 = vunpack.c.l.b16 %v356
    %v1800 = vunpack.c.h.b16 %v356
    %v1801 = vunpack.c.l.b16 %v357
    %v1802 = vunpack.c.h.b16 %v357
    %v1803 = vunpack.c.l.b16 %v358
    %v1804 = vunpack.c.h.b16 %v358
    %v1805 = vunpack.c.l.b16 %v359
    %v1806 = vunpack.c.h.b16 %v359
    %v1807 = vunpack.c.l.b16 %v360
    %v1808 = vunpack.c.h.b16 %v360
    %v1809 = vunpack.c.l.b16 %v361
    %v1810 = vunpack.c.h.b16 %v361
    %v1811 = vunpack.c.l.b16 %v362
    %v1812 = vunpack.c.h.b16 %v362
    %v1813 = vunpack.c.l.b16 %v363
    %v1814 = vunpack.c.h.b16 %v363
    %v1815 = vunpack.c.l.b16 %v364
    %v1816 = vunpack.c.h.b16 %v364
    %v1817 = vunpack.c.l.b16 %v365
    %v1818 = vunpack.c.h.b16 %v365
    %v1819 = vunpack.c.l.b16 %v366
    %v1820 = vunpack.c.h.b16 %v366
    %v1821 = vunpack.c.l.b16 %v367
    %v1822 = vunpack.c.h.b16 %v367
    %v1823 = vunpack.c.l.b16 %v368
    %v1824 = vunpack.c.h.b16 %v368
    %v1825 = vunpack.c.l.b16 %v369
    %v1826 = vunpack.c.h.b16 %v369
    %v1827 = vunpack.c.l.b16 %v370
    %v1828 = vunpack.c.h.b16 %v370
    %v1829 = vunpack.c.l.b16 %v371
    %v1830 = vunpack.c.h.b16 %v371
    %v1831 = vunpack.c.l.b16 %v372
    %v1832 = vunpack.c.h.b16 %v372
    %v1833 = vunpack.c.l.b16 %v373
    %v1834 = vunpack.c.h.b16 %v373
    %v1835 = vunpack.c.l.b16 %v374
    %v1836 = vunpack.c.h.b16 %v374
    %v1837 = vunpack.c.l.b16 %v375
    %v1838 = vunpack.c.h.b16 %v375
    %v1839 = vunpack.c.l.b16 %v376
    %v1840 = vunpack.c.h.b16 %v376
    %v1841 = vunpack.c.l.b16 %v377
    %v1842 = vunpack.c.h.b16 %v377
    %v1843 = vunpack.c.l.b16 %v378
    %v1844 = vunpack.c.h.b16 %v378
    %v1845 = vunpack.c.l.b16 %v379
    %v1846 = vunpack.c.h.b16 %v379
    %v1847 = vunpack.c.l.b16 %v380
    %v1848 = vunpack.c.h.b16 %v380
    %v1849 = vunpack.c.l.b16 %v381
    %v1850 = vunpack.c.h.b16 %v381
    %v1851 = vunpack.c.l.b16 %v382
    %v1852 = vunpack.c.h.b16 %v382
    %v1853 = vunpack.c.l.b16 %v383
    %v1854 = vunpack.c.h.b16 %v383
    %v1855 = vunpack.c.l.b16 %v384
    %v1856 = vunpack.c.h.b16 %v384
    %v1857 = vunpack.c.l.b16 %v385
    %v1858 = vunpack.c.h.b16 %v385
    %v1859 = vunpack.c.l.b16 %v386
    %v1860 = vunpack.c.h.b16 %v386
    %v1861 = vunpack.c.l.b16 %v387
    %v1862 = vunpack.c.h.b16 %v387
    %v1863 = vunpack.c.l.b16 %v388
    %v1864 = vunpack.c.h.b16 %v388
    %v1865 = vunpack.c.l.b16 %v389
    %v1866 = vunpack.c.h.b16 %v389
    %v1867 = vunpack.c.l.b16 %v390
    %v1868 = vunpack.c.h.b16 %v390
    %v1869 = vunpack.c.l.b16 %v391
    %v1870 = vunpack.c.h.b16 %v391
    %v1871 = vunpack.c.l.b16 %v392
    %v1872 = vunpack.c.h.b16 %v392
    %v1873 = vunpack.c.l.b16 %v393
    %v1874 = vunpack.c.h.b16 %v393
    %v1875 = vunpack.c.l.b16 %v394
    %v1876 = vunpack.c.h.b16 %v394
    %v1877 = vunpack.c.l.b16 %v395
    %v1878 = vunpack.c.h.b16 %v395
    %v1879 = vunpack.c.l.b16 %v396
    %v1880 = vunpack.c.h.b16 %v396
    %v1881 = vunpack.c.l.b16 %v397
    %v1882 = vunpack.c.h.b16 %v397
    %v1883 = vunpack.c.l.b16 %v398
    %v1884 = vunpack.c.h.b16 %v398
    %v1885 = vunpack.c.l.b16 %v399
    %v1886 = vunpack.c.h.b16 %v399
    %v1887 = vunpack.c.l.b16 %v400
    %v1888 = vunpack.c.h.b16 %v400
    %v1889 = vunpack.c.l.b16 %v401
    %v1890 = vunpack.c.h.b16 %v401
    %v1891 = vunpack.c.l.b16 %v402
    %v1892 = vunpack.c.h.b16 %v402
    %v1893 = vunpack.c.l.b16 %v403
    %v1894 = vunpack.c.h.b16 %v403
    %v1895 = vunpack.c.l.b16 %v404
    %v1896 = vunpack.c.h.b16 %v404
    %v1897 = vunpack.c.l.b16 %v405
    %v1898 = vunpack.c.h.b16 %v405
    %v1899 = vunpack.c.l.b16 %v406
    %v1900 = vunpack.c.h.b16 %v406
    %v1901 = vunpack.c.l.b16 %v407
    %v1902 = vunpack.c.h.b16 %v407
    %v1903 = vunpack.c.l.b16 %v408
    %v1904 = vunpack.c.h.b16 %v408
    %v1905 = vunpack.c.l.b16 %v409
    %v1906 = vunpack.c.h.b16 %v409
    %v1907 = vunpack.c.l.b16 %v410
    %v1908 = vunpack.c.h.b16 %v410
    %v1909 = vunpack.c.l.b16 %v411
    %v1910 = vunpack.c.h.b16 %v411
    %v1911 = vunpack.c.l.b16 %v412
    %v1912 = vunpack.c.h.b16 %v412
    %v1913 = vunpack.c.l.b16 %v413
    %v1914 = vunpack.c.h.b16 %v413
    %v1915 = vunpack.c.l.b16 %v414
    %v1916 = vunpack.c.h.b16 %v414
    %v1917 = vunpack.c.l.b16 %v415
    %v1918 = vunpack.c.h.b16 %v415
    %v1919 = vunpack.c.l.b16 %v416
    %v1920 = vunpack.c.h.b16 %v416
    %v1921 = vunpack.c.l.b16 %v417
    %v1922 = vunpack.c.h.b16 %v417
    %v1923 = vunpack.c.l.b16 %v418
    %v1924 = vunpack.c.h.b16 %v418
    %v1925 = vunpack.c.l.b16 %v419
    %v1926 = vunpack.c.h.b16 %v419
    %v1927 = vunpack.c.l.b16 %v420
    %v1928 = vunpack.c.h.b16 %v420
    %v1929 = vunpack.c.l.b16 %v421
    %v1930 = vunpack.c.h.b16 %v421
    %v1931 = vunpack.c.l.b16 %v422
    %v1932 = vunpack.c.h.b16 %v422
    %v1933 = vunpack.c.l.b16 %v423
    %v1934 = vunpack.c.h.b16 %v423
    %v1935 = vunpack.c.l.b16 %v424
    %v1936 = vunpack.c.h.b16 %v424
    %v1937 = vunpack.c.l.b16 %v425
    %v1938 = vunpack.c.h.b16 %v425
    %v1939 = vunpack.c.l.b16 %v426
    %v1940 = vunpack.c.h.b16 %v426
    %v1941 = vunpack.c.l.b16 %v427
    %v1942 = vunpack.c.h.b16 %v427
    %v1943 = vunpack.c.l.b16 %v428
    %v1944 = vunpack.c.h.b16 %v428
    %v1945 = vunpack.c.l.b16 %v429
    %v1946 = vunpack.c.h.b16 %v429
    %v1947 = vunpack.c.l.b16 %v430
    %v1948 = vunpack.c.h.b16 %v430
    %v1949 = vunpack.c.l.b16 %v431
    %v1950 = vunpack.c.h.b16 %v431
    %v1951 = vunpack.c.l.b16 %v432
    %v1952 = vunpack.c.h.b16 %v432
    %v1953 = vunpack.c.l.b16 %v433
    %v1954 = vunpack.c.h.b16 %v433
    %v1955 = vunpack.c.l.b16 %v434
    %v1956 = vunpack.c.h.b16 %v434
    %v1957 = vunpack.c.l.b16 %v435
    %v1958 = vunpack.c.h.b16 %v435
    %v1959 = vunpack.c.l.b16 %v436
    %v1960 = vunpack.c.h.b16 %v436
    %v1961 = vunpack.c.l.b16 %v437
    %v1962 = vunpack.c.h.b16 %v437
    %v1963 = vunpack.c.l.b16 %v438
    %v1964 = vunpack.c.h.b16 %v438
    %v1965 = vunpack.c.l.b16 %v439
    %v1966 = vunpack.c.h.b16 %v439
    %v1967 = vunpack.c.l.b16 %v440
    %v1968 = vunpack.c.h.b16 %v440
    %v1969 = vunpack.c.l.b16 %v441
    %v1970 = vunpack.c.h.b16 %v441
    %v1971 = vunpack.c.l.b16 %v442
    %v1972 = vunpack.c.h.b16 %v442
    %v1973 = vunpack.c.l.b16 %v443
    %v1974 = vunpack.c.h.b16 %v443
    %v1975 = vunpack.c.l.b16 %v444
    %v1976 = vunpack.c.h.b16 %v444
    %v1977 = vunpack.c.l.b16 %v445
    %v1978 = vunpack.c.h.b16 %v445
    %v1979 = vunpack.c.l.b16 %v446
    %v1980 = vunpack.c.h.b16 %v446
    %v1981 = vunpack.c.l.b16 %v447
    %v1982 = vunpack.c.h.b16 %v447
    %v1983 = vunpack.c.l.b16 %v448
    %v1984 = vunpack.c.h.b16 %v448
    %v1985 = vunpack.c.l.b16 %v449
    %v1986 = vunpack.c.h.b16 %v449
    %v1987 = vunpack.c.l.b16 %v450
    %v1988 = vunpack.c.h.b16 %v450
    %v1989 = vunpack.c.l.b16 %v451
    %v1990 = vunpack.c.h.b16 %v451
    %v1991 = vunpack.c.l.b16 %v452
    %v1992 = vunpack.c.h.b16 %v452
    %v1993 = vunpack.c.l.b16 %v453
    %v1994 = vunpack.c.h.b16 %v453
    %v1995 = vunpack.c.l.b16 %v454
    %v1996 = vunpack.c.h.b16 %v454
    %v1997 = vunpack.c.l.b16 %v455
    %v1998 = vunpack.c.h.b16 %v455
    %v1999 = vunpack.c.l.b16 %v456
    %v2000 = vunpack.c.h.b16 %v456
    %v2001 = vunpack.c.l.b16 %v457
    %v2002 = vunpack.c.h.b16 %v457
    %v2003 = vunpack.c.l.b16 %v458
    %v2004 = vunpack.c.h.b16 %v458
    %v2005 = vunpack.c.l.b16 %v459
    %v2006 = vunpack.c.h.b16 %v459
    %v2007 = vunpack.c.l.b16 %v460
    %v2008 = vunpack.c.h.b16 %v460
    %v2009 = vunpack.c.l.b16 %v461
    %v2010 = vunpack.c.h.b16 %v461
    %v2011 = vunpack.c.l.b16 %v462
    %v2012 = vunpack.c.h.b16 %v462
    %v2013 = vunpack.c.l.b16 %v463
    %v2014 = vunpack.c.h.b16 %v463
    %v2015 = vunpack.c.l.b16 %v464
    %v2016 = vunpack.c.h.b16 %v464
    %v2017 = vunpack.c.l.b16 %v465
    %v2018 = vunpack.c.h.b16 %v465
    %v2019 = vunpack.c.l.b16 %v466
    %v2020 = vunpack.c.h.b16 %v466
    %v2021 = vunpack.c.l.b16 %v467
    %v2022 = vunpack.c.h.b16 %v467
    %v2023 = vunpack.c.l.b16 %v468
    %v2024 = vunpack.c.h.b16 %v468
    %v2025 = vunpack.c.l.b16 %v469
    %v2026 = vunpack.c.h.b16 %v469
    %v2027 = vunpack.c.l.b16 %v470
    %v2028 = vunpack.c.h.b16 %v470
    %v2029 = vunpack.c.l.b16 %v471
    %v2030 = vunpack.c.h.b16 %v471
    %v2031 = vunpack.c.l.b16 %v472
    %v2032 = vunpack.c.h.b16 %v472
    %v2033 = vunpack.c.l.b16 %v473
    %v2034 = vunpack.c.h.b16 %v473
    %v2035 = vunpack.c.l.b16 %v474
    %v2036 = vunpack.c.h.b16 %v474
    %v2037 = vunpack.c.l.b16 %v475
    %v2038 = vunpack.c.h.b16 %v475
    %v2039 = vunpack.c.l.b16 %v476
    %v2040 = vunpack.c.h.b16 %v476
    %v2041 = vunpack.c.l.b16 %v477
    %v2042 = vunpack.c.h.b16 %v477
    %v2043 = vunpack.c.l.b16 %v478
    %v2044 = vunpack.c.h.b16 %v478
    %v2045 = vunpack.c.l.b16 %v479
    %v2046 = vunpack.c.h.b16 %v479
    %v2047 = vunpack.c.l.b16 %v480
    %v2048 = vunpack.c.h.b16 %v480
    %v2049 = vunpack.c.l.b16 %v481
    %v2050 = vunpack.c.h.b16 %v481
    %v2051 = vunpack.c.l.b16 %v482
    %v2052 = vunpack.c.h.b16 %v482
    %v2053 = vunpack.c.l.b16 %v483
    %v2054 = vunpack.c.h.b16 %v483
    %v2055 = vunpack.c.l.b16 %v484
    %v2056 = vunpack.c.h.b16 %v484
    %v2057 = vunpack.c.l.b16 %v485
    %v2058 = vunpack.c.h.b16 %v485
    %v2059 = vunpack.c.l.b16 %v486
    %v2060 = vunpack.c.h.b16 %v486
    %v2061 = vunpack.c.l.b16 %v487
    %v2062 = vunpack.c.h.b16 %v487
    %v2063 = vunpack.c.l.b16 %v488
    %v2064 = vunpack.c.h.b16 %v488
    %v2065 = vunpack.c.l.b16 %v489
    %v2066 = vunpack.c.h.b16 %v489
    %v2067 = vunpack.c.l.b16 %v490
    %v2068 = vunpack.c.h.b16 %v490
    %v2069 = vunpack.c.l.b16 %v491
    %v2070 = vunpack.c.h.b16 %v491
    %v2071 = vunpack.c.l.b16 %v492
    %v2072 = vunpack.c.h.b16 %v492
    %v2073 = vunpack.c.l.b16 %v493
    %v2074 = vunpack.c.h.b16 %v493
    %v2075 = vunpack.c.l.b16 %v494
    %v2076 = vunpack.c.h.b16 %v494
    %v2077 = vpack.c.b16 %v1321, %v1309
    %v2078 = vpack.c.b16 %v1322, %v1310
    %v2079 = vpack.c.b16 %v1323, %v1311
    %v2080 = vpack.c.b16 %v1324, %v1312
    %v2081 = vpack.c.b16 %v1325, %v1313
    %v2082 = vpack.c.b16 %v1326, %v1314
    %v2083 = vpack.c.b16 %v1327, %v1315
    %v2084 = vpack.c.b16 %v1328, %v1316
    %v2085 = vpack.c.b16 %v1329, %v1317
    %v2086 = vpack.c.b16 %v1330, %v1318
    %v2087 = vpack.c.b16 %v1331, %v1319
    %v2088 = vpack.c.b16 %v1332, %v1320
    %v2089 = vpack.c.b16 %v1345, %v1333
    %v2090 = vpack.c.b16 %v1346, %v1334
    %v2091 = vpack.c.b16 %v1347, %v1335
    %v2092 = vpack.c.b16 %v1348, %v1336
    %v2093 = vpack.c.b16 %v1349, %v1337
    %v2094 = vpack.c.b16 %v1350, %v1338
    %v2095 = vpack.c.b16 %v1351, %v1339
    %v2096 = vpack.c.b16 %v1352, %v1340
    %v2097 = vpack.c.b16 %v1353, %v1341
    %v2098 = vpack.c.b16 %v1354, %v1342
    %v2099 = vpack.c.b16 %v1355, %v1343
    %v2100 = vpack.c.b16 %v1356, %v1344
    %v2101 = vpack.c.b16 %v1369, %v1357
    %v2102 = vpack.c.b16 %v1370, %v1358
    %v2103 = vpack.c.b16 %v1371, %v1359
    %v2104 = vpack.c.b16 %v1372, %v1360
    %v2105 = vpack.c.b16 %v1373, %v1361
    %v2106 = vpack.c.b16 %v1374, %v1362
    %v2107 = vpack.c.b16 %v1375, %v1363
    %v2108 = vpack.c.b16 %v1376, %v1364
    %v2109 = vpack.c.b16 %v1377, %v1365
    %v2110 = vpack.c.b16 %v1378, %v1366
    %v2111 = vpack.c.b16 %v1379, %v1367
    %v2112 = vpack.c.b16 %v1380, %v1368
    %v2113 = vpack.c.b16 %v1393, %v1381
    %v2114 = vpack.c.b16 %v1394, %v1382
    %v2115 = vpack.c.b16 %v1395, %v1383
    %v2116 = vpack.c.b16 %v1396, %v1384
    %v2117 = vpack.c.b16 %v1397, %v1385
    %v2118 = vpack.c.b16 %v1398, %v1386
    %v2119 = vpack.c.b16 %v1399, %v1387
    %v2120 = vpack.c.b16 %v1400, %v1388
    %v2121 = vpack.c.b16 %v1401, %v1389
    %v2122 = vpack.c.b16 %v1402, %v1390
    %v2123 = vpack.c.b16 %v1403, %v1391
    %v2124 = vpack.c.b16 %v1404, %v1392
    %v2125 = vpack.c.b16 %v1417, %v1405
    %v2126 = vpack.c.b16 %v1418, %v1406
    %v2127 = vpack.c.b16 %v1419, %v1407
    %v2128 = vpack.c.b16 %v1420, %v1408
    %v2129 = vpack.c.b16 %v1421, %v1409
    %v2130 = vpack.c.b16 %v1422, %v1410
    %v2131 = vpack.c.b16 %v1423, %v1411
    %v2132 = vpack.c.b16 %v1424, %v1412
    %v2133 = vpack.c.b16 %v1425, %v1413
    %v2134 = vpack.c.b16 %v1426, %v1414
    %v2135 = vpack.c.b16 %v1427, %v1415
    %v2136 = vpack.c.b16 %v1428, %v1416
    %v2137 = vpack.c.b16 %v1441, %v1429
    %v2138 = vpack.c.b16 %v1442, %v1430
    %v2139 = vpack.c.b16 %v1443, %v1431
    %v2140 = vpack.c.b16 %v1444, %v1432
    %v2141 = vpack.c.b16 %v1445, %v1433
    %v2142 = vpack.c.b16 %v1446, %v1434
    %v2143 = vpack.c.b16 %v1447, %v1435
    %v2144 = vpack.c.b16 %v1448, %v1436
    %v2145 = vpack.c.b16 %v1449, %v1437
    %v2146 = vpack.c.b16 %v1450, %v1438
    %v2147 = vpack.c.b16 %v1451, %v1439
    %v2148 = vpack.c.b16 %v1452, %v1440
    %v2149 = vpack.c.b16 %v1465, %v1453
    %v2150 = vpack.c.b16 %v1466, %v1454
    %v2151 = vpack.c.b16 %v1467, %v1455
    %v2152 = vpack.c.b16 %v1468, %v1456
    %v2153 = vpack.c.b16 %v1469, %v1457
    %v2154 = vpack.c.b16 %v1470, %v1458
    %v2155 = vpack.c.b16 %v1471, %v1459
    %v2156 = vpack.c.b16 %v1472, %v1460
    %v2157 = vpack.c.b16 %v1473, %v1461
    %v2158 = vpack.c.b16 %v1474, %v1462
    %v2159 = vpack.c.b16 %v1475, %v1463
    %v2160 = vpack.c.b16 %v1476, %v1464
    %v2161 = vpack.c.b16 %v1489, %v1477
    %v2162 = vpack.c.b16 %v1490, %v1478
    %v2163 = vpack.c.b16 %v1491, %v1479
    %v2164 = vpack.c.b16 %v1492, %v1480
    %v2165 = vpack.c.b16 %v1493, %v1481
    %v2166 = vpack.c.b16 %v1494, %v1482
    %v2167 = vpack.c.b16 %v1495, %v1483
    %v2168 = vpack.c.b16 %v1496, %v1484
    %v2169 = vpack.c.b16 %v1497, %v1485
    %v2170 = vpack.c.b16 %v1498, %v1486
    %v2171 = vpack.c.b16 %v1499, %v1487
    %v2172 = vpack.c.b16 %v1500, %v1488
    %v2173 = vpack.c.b16 %v1513, %v1501
    %v2174 = vpack.c.b16 %v1514, %v1502
    %v2175 = vpack.c.b16 %v1515, %v1503
    %v2176 = vpack.c.b16 %v1516, %v1504
    %v2177 = vpack.c.b16 %v1517, %v1505
    %v2178 = vpack.c.b16 %v1518, %v1506
    %v2179 = vpack.c.b16 %v1519, %v1507
    %v2180 = vpack.c.b16 %v1520, %v1508
    %v2181 = vpack.c.b16 %v1521, %v1509
    %v2182 = vpack.c.b16 %v1522, %v1510
    %v2183 = vpack.c.b16 %v1523, %v1511
    %v2184 = vpack.c.b16 %v1524, %v1512
    %v2185 = vpack.c.b16 %v1537, %v1525
    %v2186 = vpack.c.b16 %v1538, %v1526
    %v2187 = vpack.c.b16 %v1539, %v1527
    %v2188 = vpack.c.b16 %v1540, %v1528
    %v2189 = vpack.c.b16 %v1541, %v1529
    %v2190 = vpack.c.b16 %v1542, %v1530
    %v2191 = vpack.c.b16 %v1543, %v1531
    %v2192 = vpack.c.b16 %v1544, %v1532
    %v2193 = vpack.c.b16 %v1545, %v1533
    %v2194 = vpack.c.b16 %v1546, %v1534
    %v2195 = vpack.c.b16 %v1547, %v1535
    %v2196 = vpack.c.b16 %v1548, %v1536
    %v2197 = vpack.c.b16 %v1561, %v1549
    %v2198 = vpack.c.b16 %v1562, %v1550
    %v2199 = vpack.c.b16 %v1563, %v1551
    %v2200 = vpack.c.b16 %v1564, %v1552
    %v2201 = vpack.c.b16 %v1565, %v1553
    %v2202 = vpack.c.b16 %v1566, %v1554
    %v2203 = vpack.c.b16 %v1567, %v1555
    %v2204 = vpack.c.b16 %v1568, %v1556
    %v2205 = vpack.c.b16 %v1569, %v1557
    %v2206 = vpack.c.b16 %v1570, %v1558
    %v2207 = vpack.c.b16 %v1571, %v1559
    %v2208 = vpack.c.b16 %v1572, %v1560
    %v2209 = vpack.c.b16 %v1585, %v1573
    %v2210 = vpack.c.b16 %v1586, %v1574
    %v2211 = vpack.c.b16 %v1587, %v1575
    %v2212 = vpack.c.b16 %v1588, %v1576
    %v2213 = vpack.c.b16 %v1589, %v1577
    %v2214 = vpack.c.b16 %v1590, %v1578
    %v2215 = vpack.c.b16 %v1591, %v1579
    %v2216 = vpack.c.b16 %v1592, %v1580
    %v2217 = vpack.c.b16 %v1593, %v1581
    %v2218 = vpack.c.b16 %v1594, %v1582
    %v2219 = vpack.c.b16 %v1595, %v1583
    %v2220 = vpack.c.b16 %v1596, %v1584
    %v2221 = vpack.c.b16 %v1609, %v1597
    %v2222 = vpack.c.b16 %v1610, %v1598
    %v2223 = vpack.c.b16 %v1611, %v1599
    %v2224 = vpack.c.b16 %v1612, %v1600
    %v2225 = vpack.c.b16 %v1613, %v1601
    %v2226 = vpack.c.b16 %v1614, %v1602
    %v2227 = vpack.c.b16 %v1615, %v1603
    %v2228 = vpack.c.b16 %v1616, %v1604
    %v2229 = vpack.c.b16 %v1617, %v1605
    %v2230 = vpack.c.b16 %v1618, %v1606
    %v2231 = vpack.c.b16 %v1619, %v1607
    %v2232 = vpack.c.b16 %v1620, %v1608
    %v2233 = vpack.c.b16 %v1633, %v1621
    %v2234 = vpack.c.b16 %v1634, %v1622
    %v2235 = vpack.c.b16 %v1635, %v1623
    %v2236 = vpack.c.b16 %v1636, %v1624
    %v2237 = vpack.c.b16 %v1637, %v1625
    %v2238 = vpack.c.b16 %v1638, %v1626
    %v2239 = vpack.c.b16 %v1639, %v1627
    %v2240 = vpack.c.b16 %v1640, %v1628
    %v2241 = vpack.c.b16 %v1641, %v1629
    %v2242 = vpack.c.b16 %v1642, %v1630
    %v2243 = vpack.c.b16 %v1643, %v1631
    %v2244 = vpack.c.b16 %v1644, %v1632
    %v2245 = vpack.c.b16 %v1657, %v1645
    %v2246 = vpack.c.b16 %v1658, %v1646
    %v2247 = vpack.c.b16 %v1659, %v1647
    %v2248 = vpack.c.b16 %v1660, %v1648
    %v2249 = vpack.c.b16 %v1661, %v1649
    %v2250 = vpack.c.b16 %v1662, %v1650
    %v2251 = vpack.c.b16 %v1663, %v1651
    %v2252 = vpack.c.b16 %v1664, %v1652
    %v2253 = vpack.c.b16 %v1665, %v1653
    %v2254 = vpack.c.b16 %v1666, %v1654
    %v2255 = vpack.c.b16 %v1667, %v1655
    %v2256 = vpack.c.b16 %v1668, %v1656
    %v2257 = vpack.c.b16 %v1681, %v1669
    %v2258 = vpack.c.b16 %v1682, %v1670
    %v2259 = vpack.c.b16 %v1683, %v1671
    %v2260 = vpack.c.b16 %v1684, %v1672
    %v2261 = vpack.c.b16 %v1685, %v1673
    %v2262 = vpack.c.b16 %v1686, %v1674
    %v2263 = vpack.c.b16 %v1687, %v1675
    %v2264 = vpack.c.b16 %v1688, %v1676
    %v2265 = vpack.c.b16 %v1689, %v1677
    %v2266 = vpack.c.b16 %v1690, %v1678
    %v2267 = vpack.c.b16 %v1691, %v1679
    %v2268 = vpack.c.b16 %v1692, %v1680
    %v2269 = vpack.c.b16 %v1705, %v1693
    %v2270 = vpack.c.b16 %v1706, %v1694
    %v2271 = vpack.c.b16 %v1707, %v1695
    %v2272 = vpack.c.b16 %v1708, %v1696
    %v2273 = vpack.c.b16 %v1709, %v1697
    %v2274 = vpack.c.b16 %v1710, %v1698
    %v2275 = vpack.c.b16 %v1711, %v1699
    %v2276 = vpack.c.b16 %v1712, %v1700
    %v2277 = vpack.c.b16 %v1713, %v1701
    %v2278 = vpack.c.b16 %v1714, %v1702
    %v2279 = vpack.c.b16 %v1715, %v1703
    %v2280 = vpack.c.b16 %v1716, %v1704
    %v2281 = vpack.c.b16 %v1729, %v1717
    %v2282 = vpack.c.b16 %v1730, %v1718
    %v2283 = vpack.c.b16 %v1731, %v1719
    %v2284 = vpack.c.b16 %v1732, %v1720
    %v2285 = vpack.c.b16 %v1733, %v1721
    %v2286 = vpack.c.b16 %v1734, %v1722
    %v2287 = vpack.c.b16 %v1735, %v1723
    %v2288 = vpack.c.b16 %v1736, %v1724
    %v2289 = vpack.c.b16 %v1737, %v1725
    %v2290 = vpack.c.b16 %v1738, %v1726
    %v2291 = vpack.c.b16 %v1739, %v1727
    %v2292 = vpack.c.b16 %v1740, %v1728
    %v2293 = vpack.c.b16 %v1753, %v1741
    %v2294 = vpack.c.b16 %v1754, %v1742
    %v2295 = vpack.c.b16 %v1755, %v1743
    %v2296 = vpack.c.b16 %v1756, %v1744
    %v2297 = vpack.c.b16 %v1757, %v1745
    %v2298 = vpack.c.b16 %v1758, %v1746
    %v2299 = vpack.c.b16 %v1759, %v1747
    %v2300 = vpack.c.b16 %v1760, %v1748
    %v2301 = vpack.c.b16 %v1761, %v1749
    %v2302 = vpack.c.b16 %v1762, %v1750
    %v2303 = vpack.c.b16 %v1763, %v1751
    %v2304 = vpack.c.b16 %v1764, %v1752
    %v2305 = vpack.c.b16 %v1777, %v1765
    %v2306 = vpack.c.b16 %v1778, %v1766
    %v2307 = vpack.c.b16 %v1779, %v1767
    %v2308 = vpack.c.b16 %v1780, %v1768
    %v2309 = vpack.c.b16 %v1781, %v1769
    %v2310 = vpack.c.b16 %v1782, %v1770
    %v2311 = vpack.c.b16 %v1783, %v1771
    %v2312 = vpack.c.b16 %v1784, %v1772
    %v2313 = vpack.c.b16 %v1785, %v1773
    %v2314 = vpack.c.b16 %v1786, %v1774
    %v2315 = vpack.c.b16 %v1787, %v1775
    %v2316 = vpack.c.b16 %v1788, %v1776
    %v2317 = vpack.c.b16 %v1801, %v1789
    %v2318 = vpack.c.b16 %v1802, %v1790
    %v2319 = vpack.c.b16 %v1803, %v1791
    %v2320 = vpack.c.b16 %v1804, %v1792
    %v2321 = vpack.c.b16 %v1805, %v1793
    %v2322 = vpack.c.b16 %v1806, %v1794
    %v2323 = vpack.c.b16 %v1807, %v1795
    %v2324 = vpack.c.b16 %v1808, %v1796
    %v2325 = vpack.c.b16 %v1809, %v1797
    %v2326 = vpack.c.b16 %v1810, %v1798
    %v2327 = vpack.c.b16 %v1811, %v1799
    %v2328 = vpack.c.b16 %v1812, %v1800
    %v2329 = vpack.c.b16 %v1825, %v1813
    %v2330 = vpack.c.b16 %v1826, %v1814
    %v2331 = vpack.c.b16 %v1827, %v1815
    %v2332 = vpack.c.b16 %v1828, %v1816
    %v2333 = vpack.c.b16 %v1829, %v1817
    %v2334 = vpack.c.b16 %v1830, %v1818
    %v2335 = vpack.c.b16 %v1831, %v1819
    %v2336 = vpack.c.b16 %v1832, %v1820
    %v2337 = vpack.c.b16 %v1833, %v1821
    %v2338 = vpack.c.b16 %v1834, %v1822
    %v2339 = vpack.c.b16 %v1835, %v1823
    %v2340 = vpack.c.b16 %v1836, %v1824
    %v2341 = vpack.c.b16 %v1849, %v1837
    %v2342 = vpack.c.b16 %v1850, %v1838
    %v2343 = vpack.c.b16 %v1851, %v1839
    %v2344 = vpack.c.b16 %v1852, %v1840
    %v2345 = vpack.c.b16 %v1853, %v1841
    %v2346 = vpack.c.b16 %v1854, %v1842
    %v2347 = vpack.c.b16 %v1855, %v1843
    %v2348 = vpack.c.b16 %v1856, %v1844
    %v2349 = vpack.c.b16 %v1857, %v1845
    %v2350 = vpack.c.b16 %v1858, %v1846
    %v2351 = vpack.c.b16 %v1859, %v1847
    %v2352 = vpack.c.b16 %v1860, %v1848
    %v2353 = vpack.c.b16 %v1873, %v1861
    %v2354 = vpack.c.b16 %v1874, %v1862
    %v2355 = vpack.c.b16 %v1875, %v1863
    %v2356 = vpack.c.b16 %v1876, %v1864
    %v2357 = vpack.c.b16 %v1877, %v1865
    %v2358 = vpack.c.b16 %v1878, %v1866
    %v2359 = vpack.c.b16 %v1879, %v1867
    %v2360 = vpack.c.b16 %v1880, %v1868
    %v2361 = vpack.c.b16 %v1881, %v1869
    %v2362 = vpack.c.b16 %v1882, %v1870
    %v2363 = vpack.c.b16 %v1883, %v1871
    %v2364 = vpack.c.b16 %v1884, %v1872
    %v2365 = vpack.c.b16 %v1897, %v1885
    %v2366 = vpack.c.b16 %v1898, %v1886
    %v2367 = vpack.c.b16 %v1899, %v1887
    %v2368 = vpack.c.b16 %v1900, %v1888
    %v2369 = vpack.c.b16 %v1901, %v1889
    %v2370 = vpack.c.b16 %v1902, %v1890
    %v2371 = vpack.c.b16 %v1903, %v1891
    %v2372 = vpack.c.b16 %v1904, %v1892
    %v2373 = vpack.c.b16 %v1905, %v1893
    %v2374 = vpack.c.b16 %v1906, %v1894
    %v2375 = vpack.c.b16 %v1907, %v1895
    %v2376 = vpack.c.b16 %v1908, %v1896
    %v2377 = vpack.c.b16 %v1921, %v1909
    %v2378 = vpack.c.b16 %v1922, %v1910
    %v2379 = vpack.c.b16 %v1923, %v1911
    %v2380 = vpack.c.b16 %v1924, %v1912
    %v2381 = vpack.c.b16 %v1925, %v1913
    %v2382 = vpack.c.b16 %v1926, %v1914
    %v2383 = vpack.c.b16 %v1927, %v1915
    %v2384 = vpack.c.b16 %v1928, %v1916
    %v2385 = vpack.c.b16 %v1929, %v1917
    %v2386 = vpack.c.b16 %v1930, %v1918
    %v2387 = vpack.c.b16 %v1931, %v1919
    %v2388 = vpack.c.b16 %v1932, %v1920
    %v2389 = vpack.c.b16 %v1945, %v1933
    %v2390 = vpack.c.b16 %v1946, %v1934
    %v2391 = vpack.c.b16 %v1947, %v1935
    %v2392 = vpack.c.b16 %v1948, %v1936
    %v2393 = vpack.c.b16 %v1949, %v1937
    %v2394 = vpack.c.b16 %v1950, %v1938
    %v2395 = vpack.c.b16 %v1951, %v1939
    %v2396 = vpack.c.b16 %v1952, %v1940
    %v2397 = vpack.c.b16 %v1953, %v1941
    %v2398 = vpack.c.b16 %v1954, %v1942
    %v2399 = vpack.c.b16 %v1955, %v1943
    %v2400 = vpack.c.b16 %v1956, %v1944
    %v2401 = vpack.c.b16 %v1969, %v1957
    %v2402 = vpack.c.b16 %v1970, %v1958
    %v2403 = vpack.c.b16 %v1971, %v1959
    %v2404 = vpack.c.b16 %v1972, %v1960
    %v2405 = vpack.c.b16 %v1973, %v1961
    %v2406 = vpack.c.b16 %v1974, %v1962
    %v2407 = vpack.c.b16 %v1975, %v1963
    %v2408 = vpack.c.b16 %v1976, %v1964
    %v2409 = vpack.c.b16 %v1977, %v1965
    %v2410 = vpack.c.b16 %v1978, %v1966
    %v2411 = vpack.c.b16 %v1979, %v1967
    %v2412 = vpack.c.b16 %v1980, %v1968
    %v2413 = vpack.c.b16 %v1993, %v1981
    %v2414 = vpack.c.b16 %v1994, %v1982
    %v2415 = vpack.c.b16 %v1995, %v1983
    %v2416 = vpack.c.b16 %v1996, %v1984
    %v2417 = vpack.c.b16 %v1997, %v1985
    %v2418 = vpack.c.b16 %v1998, %v1986
    %v2419 = vpack.c.b16 %v1999, %v1987
    %v2420 = vpack.c.b16 %v2000, %v1988
    %v2421 = vpack.c.b16 %v2001, %v1989
    %v2422 = vpack.c.b16 %v2002, %v1990
    %v2423 = vpack.c.b16 %v2003, %v1991
    %v2424 = vpack.c.b16 %v2004, %v1992
    %v2425 = vpack.c.b16 %v2017, %v2005
    %v2426 = vpack.c.b16 %v2018, %v2006
    %v2427 = vpack.c.b16 %v2019, %v2007
    %v2428 = vpack.c.b16 %v2020, %v2008
    %v2429 = vpack.c.b16 %v2021, %v2009
    %v2430 = vpack.c.b16 %v2022, %v2010
    %v2431 = vpack.c.b16 %v2023, %v2011
    %v2432 = vpack.c.b16 %v2024, %v2012
    %v2433 = vpack.c.b16 %v2025, %v2013
    %v2434 = vpack.c.b16 %v2026, %v2014
    %v2435 = vpack.c.b16 %v2027, %v2015
    %v2436 = vpack.c.b16 %v2028, %v2016
    %v2437 = vpack.c.b16 %v2041, %v2029
    %v2438 = vpack.c.b16 %v2042, %v2030
    %v2439 = vpack.c.b16 %v2043, %v2031
    %v2440 = vpack.c.b16 %v2044, %v2032
    %v2441 = vpack.c.b16 %v2045, %v2033
    %v2442 = vpack.c.b16 %v2046, %v2034
    %v2443 = vpack.c.b16 %v2047, %v2035
    %v2444 = vpack.c.b16 %v2048, %v2036
    %v2445 = vpack.c.b16 %v2049, %v2037
    %v2446 = vpack.c.b16 %v2050, %v2038
    %v2447 = vpack.c.b16 %v2051, %v2039
    %v2448 = vpack.c.b16 %v2052, %v2040
    %v2449 = vpack.c.b16 %v2065, %v2053
    %v2450 = vpack.c.b16 %v2066, %v2054
    %v2451 = vpack.c.b16 %v2067, %v2055
    %v2452 = vpack.c.b16 %v2068, %v2056
    %v2453 = vpack.c.b16 %v2069, %v2057
    %v2454 = vpack.c.b16 %v2070, %v2058
    %v2455 = vpack.c.b16 %v2071, %v2059
    %v2456 = vpack.c.b16 %v2072, %v2060
    %v2457 = vpack.c.b16 %v2073, %v2061
    %v2458 = vpack.c.b16 %v2074, %v2062
    %v2459 = vpack.c.b16 %v2075, %v2063
    %v2460 = vpack.c.b16 %v2076, %v2064
    %2845 = vmatpush.bf16.msra.mxu0 %v2161
    %2846 = vmatpush.bf16.msra.mxu0 %v2149
    %2847 = vmatpush.bf16.msra.mxu0 %v2137
    %2848 = vmatpush.bf16.msra.mxu0 %v2125
    %2849 = vmatpush.bf16.msra.mxu0 %v2113
    %2850 = vmatpush.bf16.msra.mxu0 %v2101
    %2851 = vmatpush.bf16.msra.mxu0 %v2089
    %2852 = vmatpush.bf16.msra.mxu0 %v2077
    %2853 = vmatmul.bf16.gmra.mxu0 %v917
    %v2854 = vpop.f32.mrf.mxu0
    %v2855 = vadd.f32 %v887, %v2854
    %v2856 = vpop.f32.mrf.mxu0
    %2857 = vdwg.mxu0
    %2858 = vmatpush.bf16.msra.mxu0 %v2257
    %2859 = vmatpush.bf16.msra.mxu0 %v2245
    %2860 = vmatpush.bf16.msra.mxu0 %v2233
    %2861 = vmatpush.bf16.msra.mxu0 %v2221
    %2862 = vmatpush.bf16.msra.mxu0 %v2209
    %2863 = vmatpush.bf16.msra.mxu0 %v2197
    %2864 = vmatpush.bf16.msra.mxu0 %v2185
    %2865 = vmatpush.bf16.msra.mxu0 %v2173
    %2866 = vmatmul.bf16.gmra.mxu0 %v918
    %v2867 = vpop.f32.mrf.mxu0
    %v2868 = vadd.f32 %v2855, %v2867
    %v2869 = vpop.f32.mrf.mxu0
    %2870 = vdwg.mxu0
    %2871 = vmatpush.bf16.msra.mxu0 %v2353
    %2872 = vmatpush.bf16.msra.mxu0 %v2341
    %2873 = vmatpush.bf16.msra.mxu0 %v2329
    %2874 = vmatpush.bf16.msra.mxu0 %v2317
    %2875 = vmatpush.bf16.msra.mxu0 %v2305
    %2876 = vmatpush.bf16.msra.mxu0 %v2293
    %2877 = vmatpush.bf16.msra.mxu0 %v2281
    %2878 = vmatpush.bf16.msra.mxu0 %v2269
    %2879 = vmatmul.bf16.gmra.mxu0 %v919
    %v2880 = vpop.f32.mrf.mxu0
    %v2881 = vadd.f32 %v2868, %v2880
    %v2882 = vpop.f32.mrf.mxu0
    %2883 = vdwg.mxu0
    %2884 = vmatpush.bf16.msra.mxu0 %v2449
    %2885 = vmatpush.bf16.msra.mxu0 %v2437
    %2886 = vmatpush.bf16.msra.mxu0 %v2425
    %2887 = vmatpush.bf16.msra.mxu0 %v2413
    %2888 = vmatpush.bf16.msra.mxu0 %v2401
    %2889 = vmatpush.bf16.msra.mxu0 %v2389
    %2890 = vmatpush.bf16.msra.mxu0 %v2377
    %2891 = vmatpush.bf16.msra.mxu0 %v2365
    %2892 = vmatmul.bf16.gmra.mxu0 %v920
    %v2893 = vpop.f32.mrf.mxu0
    %v2894 = vadd.f32 %v2881, %v2893
    %v2895 = vpop.f32.mrf.mxu0
    %2896 = vdwg.mxu0
    %2897 = vmatpush.bf16.msra.mxu0 %v2162
    %2898 = vmatpush.bf16.msra.mxu0 %v2150
    %2899 = vmatpush.bf16.msra.mxu0 %v2138
    %2900 = vmatpush.bf16.msra.mxu0 %v2126
    %2901 = vmatpush.bf16.msra.mxu0 %v2114
    %2902 = vmatpush.bf16.msra.mxu0 %v2102
    %2903 = vmatpush.bf16.msra.mxu0 %v2090
    %2904 = vmatpush.bf16.msra.mxu0 %v2078
    %2905 = vmatmul.bf16.gmra.mxu0 %v917
    %v2906 = vpop.f32.mrf.mxu0
    %v2907 = vadd.f32 %v888, %v2906
    %v2908 = vpop.f32.mrf.mxu0
    %2909 = vdwg.mxu0
    %2910 = vmatpush.bf16.msra.mxu0 %v2258
    %2911 = vmatpush.bf16.msra.mxu0 %v2246
    %2912 = vmatpush.bf16.msra.mxu0 %v2234
    %2913 = vmatpush.bf16.msra.mxu0 %v2222
    %2914 = vmatpush.bf16.msra.mxu0 %v2210
    %2915 = vmatpush.bf16.msra.mxu0 %v2198
    %2916 = vmatpush.bf16.msra.mxu0 %v2186
    %2917 = vmatpush.bf16.msra.mxu0 %v2174
    %2918 = vmatmul.bf16.gmra.mxu0 %v918
    %v2919 = vpop.f32.mrf.mxu0
    %v2920 = vadd.f32 %v2907, %v2919
    %v2921 = vpop.f32.mrf.mxu0
    %2922 = vdwg.mxu0
    %2923 = vmatpush.bf16.msra.mxu0 %v2354
    %2924 = vmatpush.bf16.msra.mxu0 %v2342
    %2925 = vmatpush.bf16.msra.mxu0 %v2330
    %2926 = vmatpush.bf16.msra.mxu0 %v2318
    %2927 = vmatpush.bf16.msra.mxu0 %v2306
    %2928 = vmatpush.bf16.msra.mxu0 %v2294
    %2929 = vmatpush.bf16.msra.mxu0 %v2282
    %2930 = vmatpush.bf16.msra.mxu0 %v2270
    %2931 = vmatmul.bf16.gmra.mxu0 %v919
    %v2932 = vpop.f32.mrf.mxu0
    %v2933 = vadd.f32 %v2920, %v2932
    %v2934 = vpop.f32.mrf.mxu0
    %2935 = vdwg.mxu0
    %2936 = vmatpush.bf16.msra.mxu0 %v2450
    %2937 = vmatpush.bf16.msra.mxu0 %v2438
    %2938 = vmatpush.bf16.msra.mxu0 %v2426
    %2939 = vmatpush.bf16.msra.mxu0 %v2414
    %2940 = vmatpush.bf16.msra.mxu0 %v2402
    %2941 = vmatpush.bf16.msra.mxu0 %v2390
    %2942 = vmatpush.bf16.msra.mxu0 %v2378
    %2943 = vmatpush.bf16.msra.mxu0 %v2366
    %2944 = vmatmul.bf16.gmra.mxu0 %v920
    %v2945 = vpop.f32.mrf.mxu0
    %v2946 = vadd.f32 %v2933, %v2945
    %v2947 = vpop.f32.mrf.mxu0
    %2948 = vdwg.mxu0
    %2949 = vmatpush.bf16.msra.mxu0 %v2163
    %2950 = vmatpush.bf16.msra.mxu0 %v2151
    %2951 = vmatpush.bf16.msra.mxu0 %v2139
    %2952 = vmatpush.bf16.msra.mxu0 %v2127
    %2953 = vmatpush.bf16.msra.mxu0 %v2115
    %2954 = vmatpush.bf16.msra.mxu0 %v2103
    %2955 = vmatpush.bf16.msra.mxu0 %v2091
    %2956 = vmatpush.bf16.msra.mxu0 %v2079
    %2957 = vmatmul.bf16.gmra.mxu0 %v917
    %v2958 = vpop.f32.mrf.mxu0
    %v2959 = vadd.f32 %v889, %v2958
    %v2960 = vpop.f32.mrf.mxu0
    %2961 = vdwg.mxu0
    %2962 = vmatpush.bf16.msra.mxu0 %v2259
    %2963 = vmatpush.bf16.msra.mxu0 %v2247
    %2964 = vmatpush.bf16.msra.mxu0 %v2235
    %2965 = vmatpush.bf16.msra.mxu0 %v2223
    %2966 = vmatpush.bf16.msra.mxu0 %v2211
    %2967 = vmatpush.bf16.msra.mxu0 %v2199
    %2968 = vmatpush.bf16.msra.mxu0 %v2187
    %2969 = vmatpush.bf16.msra.mxu0 %v2175
    %2970 = vmatmul.bf16.gmra.mxu0 %v918
    %v2971 = vpop.f32.mrf.mxu0
    %v2972 = vadd.f32 %v2959, %v2971
    %v2973 = vpop.f32.mrf.mxu0
    %2974 = vdwg.mxu0
    %2975 = vmatpush.bf16.msra.mxu0 %v2355
    %2976 = vmatpush.bf16.msra.mxu0 %v2343
    %2977 = vmatpush.bf16.msra.mxu0 %v2331
    %2978 = vmatpush.bf16.msra.mxu0 %v2319
    %2979 = vmatpush.bf16.msra.mxu0 %v2307
    %2980 = vmatpush.bf16.msra.mxu0 %v2295
    %2981 = vmatpush.bf16.msra.mxu0 %v2283
    %2982 = vmatpush.bf16.msra.mxu0 %v2271
    %2983 = vmatmul.bf16.gmra.mxu0 %v919
    %v2984 = vpop.f32.mrf.mxu0
    %v2985 = vadd.f32 %v2972, %v2984
    %v2986 = vpop.f32.mrf.mxu0
    %2987 = vdwg.mxu0
    %2988 = vmatpush.bf16.msra.mxu0 %v2451
    %2989 = vmatpush.bf16.msra.mxu0 %v2439
    %2990 = vmatpush.bf16.msra.mxu0 %v2427
    %2991 = vmatpush.bf16.msra.mxu0 %v2415
    %2992 = vmatpush.bf16.msra.mxu0 %v2403
    %2993 = vmatpush.bf16.msra.mxu0 %v2391
    %2994 = vmatpush.bf16.msra.mxu0 %v2379
    %2995 = vmatpush.bf16.msra.mxu0 %v2367
    %2996 = vmatmul.bf16.gmra.mxu0 %v920
    %v2997 = vpop.f32.mrf.mxu0
    %v2998 = vadd.f32 %v2985, %v2997
    %v2999 = vpop.f32.mrf.mxu0
    %3000 = vdwg.mxu0
    %3001 = vmatpush.bf16.msra.mxu0 %v2164
    %3002 = vmatpush.bf16.msra.mxu0 %v2152
    %3003 = vmatpush.bf16.msra.mxu0 %v2140
    %3004 = vmatpush.bf16.msra.mxu0 %v2128
    %3005 = vmatpush.bf16.msra.mxu0 %v2116
    %3006 = vmatpush.bf16.msra.mxu0 %v2104
    %3007 = vmatpush.bf16.msra.mxu0 %v2092
    %3008 = vmatpush.bf16.msra.mxu0 %v2080
    %3009 = vmatmul.bf16.gmra.mxu0 %v917
    %v3010 = vpop.f32.mrf.mxu0
    %v3011 = vadd.f32 %v890, %v3010
    %v3012 = vpop.f32.mrf.mxu0
    %3013 = vdwg.mxu0
    %3014 = vmatpush.bf16.msra.mxu0 %v2260
    %3015 = vmatpush.bf16.msra.mxu0 %v2248
    %3016 = vmatpush.bf16.msra.mxu0 %v2236
    %3017 = vmatpush.bf16.msra.mxu0 %v2224
    %3018 = vmatpush.bf16.msra.mxu0 %v2212
    %3019 = vmatpush.bf16.msra.mxu0 %v2200
    %3020 = vmatpush.bf16.msra.mxu0 %v2188
    %3021 = vmatpush.bf16.msra.mxu0 %v2176
    %3022 = vmatmul.bf16.gmra.mxu0 %v918
    %v3023 = vpop.f32.mrf.mxu0
    %v3024 = vadd.f32 %v3011, %v3023
    %v3025 = vpop.f32.mrf.mxu0
    %3026 = vdwg.mxu0
    %3027 = vmatpush.bf16.msra.mxu0 %v2356
    %3028 = vmatpush.bf16.msra.mxu0 %v2344
    %3029 = vmatpush.bf16.msra.mxu0 %v2332
    %3030 = vmatpush.bf16.msra.mxu0 %v2320
    %3031 = vmatpush.bf16.msra.mxu0 %v2308
    %3032 = vmatpush.bf16.msra.mxu0 %v2296
    %3033 = vmatpush.bf16.msra.mxu0 %v2284
    %3034 = vmatpush.bf16.msra.mxu0 %v2272
    %3035 = vmatmul.bf16.gmra.mxu0 %v919
    %v3036 = vpop.f32.mrf.mxu0
    %v3037 = vadd.f32 %v3024, %v3036
    %v3038 = vpop.f32.mrf.mxu0
    %3039 = vdwg.mxu0
    %3040 = vmatpush.bf16.msra.mxu0 %v2452
    %3041 = vmatpush.bf16.msra.mxu0 %v2440
    %3042 = vmatpush.bf16.msra.mxu0 %v2428
    %3043 = vmatpush.bf16.msra.mxu0 %v2416
    %3044 = vmatpush.bf16.msra.mxu0 %v2404
    %3045 = vmatpush.bf16.msra.mxu0 %v2392
    %3046 = vmatpush.bf16.msra.mxu0 %v2380
    %3047 = vmatpush.bf16.msra.mxu0 %v2368
    %3048 = vmatmul.bf16.gmra.mxu0 %v920
    %v3049 = vpop.f32.mrf.mxu0
    %v3050 = vadd.f32 %v3037, %v3049
    %v3051 = vpop.f32.mrf.mxu0
    %3052 = vdwg.mxu0
    %3053 = vmatpush.bf16.msra.mxu0 %v2165
    %3054 = vmatpush.bf16.msra.mxu0 %v2153
    %3055 = vmatpush.bf16.msra.mxu0 %v2141
    %3056 = vmatpush.bf16.msra.mxu0 %v2129
    %3057 = vmatpush.bf16.msra.mxu0 %v2117
    %3058 = vmatpush.bf16.msra.mxu0 %v2105
    %3059 = vmatpush.bf16.msra.mxu0 %v2093
    %3060 = vmatpush.bf16.msra.mxu0 %v2081
    %3061 = vmatmul.bf16.gmra.mxu0 %v917
    %v3062 = vpop.f32.mrf.mxu0
    %v3063 = vadd.f32 %v891, %v3062
    %v3064 = vpop.f32.mrf.mxu0
    %3065 = vdwg.mxu0
    %3066 = vmatpush.bf16.msra.mxu0 %v2261
    %3067 = vmatpush.bf16.msra.mxu0 %v2249
    %3068 = vmatpush.bf16.msra.mxu0 %v2237
    %3069 = vmatpush.bf16.msra.mxu0 %v2225
    %3070 = vmatpush.bf16.msra.mxu0 %v2213
    %3071 = vmatpush.bf16.msra.mxu0 %v2201
    %3072 = vmatpush.bf16.msra.mxu0 %v2189
    %3073 = vmatpush.bf16.msra.mxu0 %v2177
    %3074 = vmatmul.bf16.gmra.mxu0 %v918
    %v3075 = vpop.f32.mrf.mxu0
    %v3076 = vadd.f32 %v3063, %v3075
    %v3077 = vpop.f32.mrf.mxu0
    %3078 = vdwg.mxu0
    %3079 = vmatpush.bf16.msra.mxu0 %v2357
    %3080 = vmatpush.bf16.msra.mxu0 %v2345
    %3081 = vmatpush.bf16.msra.mxu0 %v2333
    %3082 = vmatpush.bf16.msra.mxu0 %v2321
    %3083 = vmatpush.bf16.msra.mxu0 %v2309
    %3084 = vmatpush.bf16.msra.mxu0 %v2297
    %3085 = vmatpush.bf16.msra.mxu0 %v2285
    %3086 = vmatpush.bf16.msra.mxu0 %v2273
    %3087 = vmatmul.bf16.gmra.mxu0 %v919
    %v3088 = vpop.f32.mrf.mxu0
    %v3089 = vadd.f32 %v3076, %v3088
    %v3090 = vpop.f32.mrf.mxu0
    %3091 = vdwg.mxu0
    %3092 = vmatpush.bf16.msra.mxu0 %v2453
    %3093 = vmatpush.bf16.msra.mxu0 %v2441
    %3094 = vmatpush.bf16.msra.mxu0 %v2429
    %3095 = vmatpush.bf16.msra.mxu0 %v2417
    %3096 = vmatpush.bf16.msra.mxu0 %v2405
    %3097 = vmatpush.bf16.msra.mxu0 %v2393
    %3098 = vmatpush.bf16.msra.mxu0 %v2381
    %3099 = vmatpush.bf16.msra.mxu0 %v2369
    %3100 = vmatmul.bf16.gmra.mxu0 %v920
    %v3101 = vpop.f32.mrf.mxu0
    %v3102 = vadd.f32 %v3089, %v3101
    %v3103 = vpop.f32.mrf.mxu0
    %3104 = vdwg.mxu0
    %3105 = vmatpush.bf16.msra.mxu0 %v2166
    %3106 = vmatpush.bf16.msra.mxu0 %v2154
    %3107 = vmatpush.bf16.msra.mxu0 %v2142
    %3108 = vmatpush.bf16.msra.mxu0 %v2130
    %3109 = vmatpush.bf16.msra.mxu0 %v2118
    %3110 = vmatpush.bf16.msra.mxu0 %v2106
    %3111 = vmatpush.bf16.msra.mxu0 %v2094
    %3112 = vmatpush.bf16.msra.mxu0 %v2082
    %3113 = vmatmul.bf16.gmra.mxu0 %v917
    %v3114 = vpop.f32.mrf.mxu0
    %v3115 = vadd.f32 %v892, %v3114
    %v3116 = vpop.f32.mrf.mxu0
    %3117 = vdwg.mxu0
    %3118 = vmatpush.bf16.msra.mxu0 %v2262
    %3119 = vmatpush.bf16.msra.mxu0 %v2250
    %3120 = vmatpush.bf16.msra.mxu0 %v2238
    %3121 = vmatpush.bf16.msra.mxu0 %v2226
    %3122 = vmatpush.bf16.msra.mxu0 %v2214
    %3123 = vmatpush.bf16.msra.mxu0 %v2202
    %3124 = vmatpush.bf16.msra.mxu0 %v2190
    %3125 = vmatpush.bf16.msra.mxu0 %v2178
    %3126 = vmatmul.bf16.gmra.mxu0 %v918
    %v3127 = vpop.f32.mrf.mxu0
    %v3128 = vadd.f32 %v3115, %v3127
    %v3129 = vpop.f32.mrf.mxu0
    %3130 = vdwg.mxu0
    %3131 = vmatpush.bf16.msra.mxu0 %v2358
    %3132 = vmatpush.bf16.msra.mxu0 %v2346
    %3133 = vmatpush.bf16.msra.mxu0 %v2334
    %3134 = vmatpush.bf16.msra.mxu0 %v2322
    %3135 = vmatpush.bf16.msra.mxu0 %v2310
    %3136 = vmatpush.bf16.msra.mxu0 %v2298
    %3137 = vmatpush.bf16.msra.mxu0 %v2286
    %3138 = vmatpush.bf16.msra.mxu0 %v2274
    %3139 = vmatmul.bf16.gmra.mxu0 %v919
    %v3140 = vpop.f32.mrf.mxu0
    %v3141 = vadd.f32 %v3128, %v3140
    %v3142 = vpop.f32.mrf.mxu0
    %3143 = vdwg.mxu0
    %3144 = vmatpush.bf16.msra.mxu0 %v2454
    %3145 = vmatpush.bf16.msra.mxu0 %v2442
    %3146 = vmatpush.bf16.msra.mxu0 %v2430
    %3147 = vmatpush.bf16.msra.mxu0 %v2418
    %3148 = vmatpush.bf16.msra.mxu0 %v2406
    %3149 = vmatpush.bf16.msra.mxu0 %v2394
    %3150 = vmatpush.bf16.msra.mxu0 %v2382
    %3151 = vmatpush.bf16.msra.mxu0 %v2370
    %3152 = vmatmul.bf16.gmra.mxu0 %v920
    %v3153 = vpop.f32.mrf.mxu0
    %v3154 = vadd.f32 %v3141, %v3153
    %v3155 = vpop.f32.mrf.mxu0
    %3156 = vdwg.mxu0
    %3157 = vmatpush.bf16.msra.mxu0 %v2167
    %3158 = vmatpush.bf16.msra.mxu0 %v2155
    %3159 = vmatpush.bf16.msra.mxu0 %v2143
    %3160 = vmatpush.bf16.msra.mxu0 %v2131
    %3161 = vmatpush.bf16.msra.mxu0 %v2119
    %3162 = vmatpush.bf16.msra.mxu0 %v2107
    %3163 = vmatpush.bf16.msra.mxu0 %v2095
    %3164 = vmatpush.bf16.msra.mxu0 %v2083
    %3165 = vmatmul.bf16.gmra.mxu0 %v917
    %v3166 = vpop.f32.mrf.mxu0
    %v3167 = vadd.f32 %v893, %v3166
    %v3168 = vpop.f32.mrf.mxu0
    %3169 = vdwg.mxu0
    %3170 = vmatpush.bf16.msra.mxu0 %v2263
    %3171 = vmatpush.bf16.msra.mxu0 %v2251
    %3172 = vmatpush.bf16.msra.mxu0 %v2239
    %3173 = vmatpush.bf16.msra.mxu0 %v2227
    %3174 = vmatpush.bf16.msra.mxu0 %v2215
    %3175 = vmatpush.bf16.msra.mxu0 %v2203
    %3176 = vmatpush.bf16.msra.mxu0 %v2191
    %3177 = vmatpush.bf16.msra.mxu0 %v2179
    %3178 = vmatmul.bf16.gmra.mxu0 %v918
    %v3179 = vpop.f32.mrf.mxu0
    %v3180 = vadd.f32 %v3167, %v3179
    %v3181 = vpop.f32.mrf.mxu0
    %3182 = vdwg.mxu0
    %3183 = vmatpush.bf16.msra.mxu0 %v2359
    %3184 = vmatpush.bf16.msra.mxu0 %v2347
    %3185 = vmatpush.bf16.msra.mxu0 %v2335
    %3186 = vmatpush.bf16.msra.mxu0 %v2323
    %3187 = vmatpush.bf16.msra.mxu0 %v2311
    %3188 = vmatpush.bf16.msra.mxu0 %v2299
    %3189 = vmatpush.bf16.msra.mxu0 %v2287
    %3190 = vmatpush.bf16.msra.mxu0 %v2275
    %3191 = vmatmul.bf16.gmra.mxu0 %v919
    %v3192 = vpop.f32.mrf.mxu0
    %v3193 = vadd.f32 %v3180, %v3192
    %v3194 = vpop.f32.mrf.mxu0
    %3195 = vdwg.mxu0
    %3196 = vmatpush.bf16.msra.mxu0 %v2455
    %3197 = vmatpush.bf16.msra.mxu0 %v2443
    %3198 = vmatpush.bf16.msra.mxu0 %v2431
    %3199 = vmatpush.bf16.msra.mxu0 %v2419
    %3200 = vmatpush.bf16.msra.mxu0 %v2407
    %3201 = vmatpush.bf16.msra.mxu0 %v2395
    %3202 = vmatpush.bf16.msra.mxu0 %v2383
    %3203 = vmatpush.bf16.msra.mxu0 %v2371
    %3204 = vmatmul.bf16.gmra.mxu0 %v920
    %v3205 = vpop.f32.mrf.mxu0
    %v3206 = vadd.f32 %v3193, %v3205
    %v3207 = vpop.f32.mrf.mxu0
    %3208 = vdwg.mxu0
    %3209 = vmatpush.bf16.msra.mxu0 %v2168
    %3210 = vmatpush.bf16.msra.mxu0 %v2156
    %3211 = vmatpush.bf16.msra.mxu0 %v2144
    %3212 = vmatpush.bf16.msra.mxu0 %v2132
    %3213 = vmatpush.bf16.msra.mxu0 %v2120
    %3214 = vmatpush.bf16.msra.mxu0 %v2108
    %3215 = vmatpush.bf16.msra.mxu0 %v2096
    %3216 = vmatpush.bf16.msra.mxu0 %v2084
    %3217 = vmatmul.bf16.gmra.mxu0 %v917
    %v3218 = vpop.f32.mrf.mxu0
    %v3219 = vadd.f32 %v894, %v3218
    %v3220 = vpop.f32.mrf.mxu0
    %3221 = vdwg.mxu0
    %3222 = vmatpush.bf16.msra.mxu0 %v2264
    %3223 = vmatpush.bf16.msra.mxu0 %v2252
    %3224 = vmatpush.bf16.msra.mxu0 %v2240
    %3225 = vmatpush.bf16.msra.mxu0 %v2228
    %3226 = vmatpush.bf16.msra.mxu0 %v2216
    %3227 = vmatpush.bf16.msra.mxu0 %v2204
    %3228 = vmatpush.bf16.msra.mxu0 %v2192
    %3229 = vmatpush.bf16.msra.mxu0 %v2180
    %3230 = vmatmul.bf16.gmra.mxu0 %v918
    %v3231 = vpop.f32.mrf.mxu0
    %v3232 = vadd.f32 %v3219, %v3231
    %v3233 = vpop.f32.mrf.mxu0
    %3234 = vdwg.mxu0
    %3235 = vmatpush.bf16.msra.mxu0 %v2360
    %3236 = vmatpush.bf16.msra.mxu0 %v2348
    %3237 = vmatpush.bf16.msra.mxu0 %v2336
    %3238 = vmatpush.bf16.msra.mxu0 %v2324
    %3239 = vmatpush.bf16.msra.mxu0 %v2312
    %3240 = vmatpush.bf16.msra.mxu0 %v2300
    %3241 = vmatpush.bf16.msra.mxu0 %v2288
    %3242 = vmatpush.bf16.msra.mxu0 %v2276
    %3243 = vmatmul.bf16.gmra.mxu0 %v919
    %v3244 = vpop.f32.mrf.mxu0
    %v3245 = vadd.f32 %v3232, %v3244
    %v3246 = vpop.f32.mrf.mxu0
    %3247 = vdwg.mxu0
    %3248 = vmatpush.bf16.msra.mxu0 %v2456
    %3249 = vmatpush.bf16.msra.mxu0 %v2444
    %3250 = vmatpush.bf16.msra.mxu0 %v2432
    %3251 = vmatpush.bf16.msra.mxu0 %v2420
    %3252 = vmatpush.bf16.msra.mxu0 %v2408
    %3253 = vmatpush.bf16.msra.mxu0 %v2396
    %3254 = vmatpush.bf16.msra.mxu0 %v2384
    %3255 = vmatpush.bf16.msra.mxu0 %v2372
    %3256 = vmatmul.bf16.gmra.mxu0 %v920
    %v3257 = vpop.f32.mrf.mxu0
    %v3258 = vadd.f32 %v3245, %v3257
    %v3259 = vpop.f32.mrf.mxu0
    %3260 = vdwg.mxu0
    %3261 = vmatpush.bf16.msra.mxu0 %v2169
    %3262 = vmatpush.bf16.msra.mxu0 %v2157
    %3263 = vmatpush.bf16.msra.mxu0 %v2145
    %3264 = vmatpush.bf16.msra.mxu0 %v2133
    %3265 = vmatpush.bf16.msra.mxu0 %v2121
    %3266 = vmatpush.bf16.msra.mxu0 %v2109
    %3267 = vmatpush.bf16.msra.mxu0 %v2097
    %3268 = vmatpush.bf16.msra.mxu0 %v2085
    %3269 = vmatmul.bf16.gmra.mxu0 %v917
    %v3270 = vpop.f32.mrf.mxu0
    %v3271 = vadd.f32 %v895, %v3270
    %v3272 = vpop.f32.mrf.mxu0
    %3273 = vdwg.mxu0
    %3274 = vmatpush.bf16.msra.mxu0 %v2265
    %3275 = vmatpush.bf16.msra.mxu0 %v2253
    %3276 = vmatpush.bf16.msra.mxu0 %v2241
    %3277 = vmatpush.bf16.msra.mxu0 %v2229
    %3278 = vmatpush.bf16.msra.mxu0 %v2217
    %3279 = vmatpush.bf16.msra.mxu0 %v2205
    %3280 = vmatpush.bf16.msra.mxu0 %v2193
    %3281 = vmatpush.bf16.msra.mxu0 %v2181
    %3282 = vmatmul.bf16.gmra.mxu0 %v918
    %v3283 = vpop.f32.mrf.mxu0
    %v3284 = vadd.f32 %v3271, %v3283
    %v3285 = vpop.f32.mrf.mxu0
    %3286 = vdwg.mxu0
    %3287 = vmatpush.bf16.msra.mxu0 %v2361
    %3288 = vmatpush.bf16.msra.mxu0 %v2349
    %3289 = vmatpush.bf16.msra.mxu0 %v2337
    %3290 = vmatpush.bf16.msra.mxu0 %v2325
    %3291 = vmatpush.bf16.msra.mxu0 %v2313
    %3292 = vmatpush.bf16.msra.mxu0 %v2301
    %3293 = vmatpush.bf16.msra.mxu0 %v2289
    %3294 = vmatpush.bf16.msra.mxu0 %v2277
    %3295 = vmatmul.bf16.gmra.mxu0 %v919
    %v3296 = vpop.f32.mrf.mxu0
    %v3297 = vadd.f32 %v3284, %v3296
    %v3298 = vpop.f32.mrf.mxu0
    %3299 = vdwg.mxu0
    %3300 = vmatpush.bf16.msra.mxu0 %v2457
    %3301 = vmatpush.bf16.msra.mxu0 %v2445
    %3302 = vmatpush.bf16.msra.mxu0 %v2433
    %3303 = vmatpush.bf16.msra.mxu0 %v2421
    %3304 = vmatpush.bf16.msra.mxu0 %v2409
    %3305 = vmatpush.bf16.msra.mxu0 %v2397
    %3306 = vmatpush.bf16.msra.mxu0 %v2385
    %3307 = vmatpush.bf16.msra.mxu0 %v2373
    %3308 = vmatmul.bf16.gmra.mxu0 %v920
    %v3309 = vpop.f32.mrf.mxu0
    %v3310 = vadd.f32 %v3297, %v3309
    %v3311 = vpop.f32.mrf.mxu0
    %3312 = vdwg.mxu0
    %3313 = vmatpush.bf16.msra.mxu0 %v2170
    %3314 = vmatpush.bf16.msra.mxu0 %v2158
    %3315 = vmatpush.bf16.msra.mxu0 %v2146
    %3316 = vmatpush.bf16.msra.mxu0 %v2134
    %3317 = vmatpush.bf16.msra.mxu0 %v2122
    %3318 = vmatpush.bf16.msra.mxu0 %v2110
    %3319 = vmatpush.bf16.msra.mxu0 %v2098
    %3320 = vmatpush.bf16.msra.mxu0 %v2086
    %3321 = vmatmul.bf16.gmra.mxu0 %v917
    %v3322 = vpop.f32.mrf.mxu0
    %v3323 = vadd.f32 %v896, %v3322
    %v3324 = vpop.f32.mrf.mxu0
    %3325 = vdwg.mxu0
    %3326 = vmatpush.bf16.msra.mxu0 %v2266
    %3327 = vmatpush.bf16.msra.mxu0 %v2254
    %3328 = vmatpush.bf16.msra.mxu0 %v2242
    %3329 = vmatpush.bf16.msra.mxu0 %v2230
    %3330 = vmatpush.bf16.msra.mxu0 %v2218
    %3331 = vmatpush.bf16.msra.mxu0 %v2206
    %3332 = vmatpush.bf16.msra.mxu0 %v2194
    %3333 = vmatpush.bf16.msra.mxu0 %v2182
    %3334 = vmatmul.bf16.gmra.mxu0 %v918
    %v3335 = vpop.f32.mrf.mxu0
    %v3336 = vadd.f32 %v3323, %v3335
    %v3337 = vpop.f32.mrf.mxu0
    %3338 = vdwg.mxu0
    %3339 = vmatpush.bf16.msra.mxu0 %v2362
    %3340 = vmatpush.bf16.msra.mxu0 %v2350
    %3341 = vmatpush.bf16.msra.mxu0 %v2338
    %3342 = vmatpush.bf16.msra.mxu0 %v2326
    %3343 = vmatpush.bf16.msra.mxu0 %v2314
    %3344 = vmatpush.bf16.msra.mxu0 %v2302
    %3345 = vmatpush.bf16.msra.mxu0 %v2290
    %3346 = vmatpush.bf16.msra.mxu0 %v2278
    %3347 = vmatmul.bf16.gmra.mxu0 %v919
    %v3348 = vpop.f32.mrf.mxu0
    %v3349 = vadd.f32 %v3336, %v3348
    %v3350 = vpop.f32.mrf.mxu0
    %3351 = vdwg.mxu0
    %3352 = vmatpush.bf16.msra.mxu0 %v2458
    %3353 = vmatpush.bf16.msra.mxu0 %v2446
    %3354 = vmatpush.bf16.msra.mxu0 %v2434
    %3355 = vmatpush.bf16.msra.mxu0 %v2422
    %3356 = vmatpush.bf16.msra.mxu0 %v2410
    %3357 = vmatpush.bf16.msra.mxu0 %v2398
    %3358 = vmatpush.bf16.msra.mxu0 %v2386
    %3359 = vmatpush.bf16.msra.mxu0 %v2374
    %3360 = vmatmul.bf16.gmra.mxu0 %v920
    %v3361 = vpop.f32.mrf.mxu0
    %v3362 = vadd.f32 %v3349, %v3361
    %v3363 = vpop.f32.mrf.mxu0
    %3364 = vdwg.mxu0
    %3365 = vmatpush.bf16.msra.mxu0 %v2171
    %3366 = vmatpush.bf16.msra.mxu0 %v2159
    %3367 = vmatpush.bf16.msra.mxu0 %v2147
    %3368 = vmatpush.bf16.msra.mxu0 %v2135
    %3369 = vmatpush.bf16.msra.mxu0 %v2123
    %3370 = vmatpush.bf16.msra.mxu0 %v2111
    %3371 = vmatpush.bf16.msra.mxu0 %v2099
    %3372 = vmatpush.bf16.msra.mxu0 %v2087
    %3373 = vmatmul.bf16.gmra.mxu0 %v917
    %v3374 = vpop.f32.mrf.mxu0
    %v3375 = vadd.f32 %v897, %v3374
    %v3376 = vpop.f32.mrf.mxu0
    %3377 = vdwg.mxu0
    %3378 = vmatpush.bf16.msra.mxu0 %v2267
    %3379 = vmatpush.bf16.msra.mxu0 %v2255
    %3380 = vmatpush.bf16.msra.mxu0 %v2243
    %3381 = vmatpush.bf16.msra.mxu0 %v2231
    %3382 = vmatpush.bf16.msra.mxu0 %v2219
    %3383 = vmatpush.bf16.msra.mxu0 %v2207
    %3384 = vmatpush.bf16.msra.mxu0 %v2195
    %3385 = vmatpush.bf16.msra.mxu0 %v2183
    %3386 = vmatmul.bf16.gmra.mxu0 %v918
    %v3387 = vpop.f32.mrf.mxu0
    %v3388 = vadd.f32 %v3375, %v3387
    %v3389 = vpop.f32.mrf.mxu0
    %3390 = vdwg.mxu0
    %3391 = vmatpush.bf16.msra.mxu0 %v2363
    %3392 = vmatpush.bf16.msra.mxu0 %v2351
    %3393 = vmatpush.bf16.msra.mxu0 %v2339
    %3394 = vmatpush.bf16.msra.mxu0 %v2327
    %3395 = vmatpush.bf16.msra.mxu0 %v2315
    %3396 = vmatpush.bf16.msra.mxu0 %v2303
    %3397 = vmatpush.bf16.msra.mxu0 %v2291
    %3398 = vmatpush.bf16.msra.mxu0 %v2279
    %3399 = vmatmul.bf16.gmra.mxu0 %v919
    %v3400 = vpop.f32.mrf.mxu0
    %v3401 = vadd.f32 %v3388, %v3400
    %v3402 = vpop.f32.mrf.mxu0
    %3403 = vdwg.mxu0
    %3404 = vmatpush.bf16.msra.mxu0 %v2459
    %3405 = vmatpush.bf16.msra.mxu0 %v2447
    %3406 = vmatpush.bf16.msra.mxu0 %v2435
    %3407 = vmatpush.bf16.msra.mxu0 %v2423
    %3408 = vmatpush.bf16.msra.mxu0 %v2411
    %3409 = vmatpush.bf16.msra.mxu0 %v2399
    %3410 = vmatpush.bf16.msra.mxu0 %v2387
    %3411 = vmatpush.bf16.msra.mxu0 %v2375
    %3412 = vmatmul.bf16.gmra.mxu0 %v920
    %v3413 = vpop.f32.mrf.mxu0
    %v3414 = vadd.f32 %v3401, %v3413
    %v3415 = vpop.f32.mrf.mxu0
    %3416 = vdwg.mxu0
    %3417 = vmatpush.bf16.msra.mxu0 %v2172
    %3418 = vmatpush.bf16.msra.mxu0 %v2160
    %3419 = vmatpush.bf16.msra.mxu0 %v2148
    %3420 = vmatpush.bf16.msra.mxu0 %v2136
    %3421 = vmatpush.bf16.msra.mxu0 %v2124
    %3422 = vmatpush.bf16.msra.mxu0 %v2112
    %3423 = vmatpush.bf16.msra.mxu0 %v2100
    %3424 = vmatpush.bf16.msra.mxu0 %v2088
    %3425 = vmatmul.bf16.gmra.mxu0 %v917
    %v3426 = vpop.f32.mrf.mxu0
    %v3427 = vadd.f32 %v898, %v3426
    %v3428 = vpop.f32.mrf.mxu0
    %3429 = vdwg.mxu0
    %3430 = vmatpush.bf16.msra.mxu0 %v2268
    %3431 = vmatpush.bf16.msra.mxu0 %v2256
    %3432 = vmatpush.bf16.msra.mxu0 %v2244
    %3433 = vmatpush.bf16.msra.mxu0 %v2232
    %3434 = vmatpush.bf16.msra.mxu0 %v2220
    %3435 = vmatpush.bf16.msra.mxu0 %v2208
    %3436 = vmatpush.bf16.msra.mxu0 %v2196
    %3437 = vmatpush.bf16.msra.mxu0 %v2184
    %3438 = vmatmul.bf16.gmra.mxu0 %v918
    %v3439 = vpop.f32.mrf.mxu0
    %v3440 = vadd.f32 %v3427, %v3439
    %v3441 = vpop.f32.mrf.mxu0
    %3442 = vdwg.mxu0
    %3443 = vmatpush.bf16.msra.mxu0 %v2364
    %3444 = vmatpush.bf16.msra.mxu0 %v2352
    %3445 = vmatpush.bf16.msra.mxu0 %v2340
    %3446 = vmatpush.bf16.msra.mxu0 %v2328
    %3447 = vmatpush.bf16.msra.mxu0 %v2316
    %3448 = vmatpush.bf16.msra.mxu0 %v2304
    %3449 = vmatpush.bf16.msra.mxu0 %v2292
    %3450 = vmatpush.bf16.msra.mxu0 %v2280
    %3451 = vmatmul.bf16.gmra.mxu0 %v919
    %v3452 = vpop.f32.mrf.mxu0
    %v3453 = vadd.f32 %v3440, %v3452
    %v3454 = vpop.f32.mrf.mxu0
    %3455 = vdwg.mxu0
    %3456 = vmatpush.bf16.msra.mxu0 %v2460
    %3457 = vmatpush.bf16.msra.mxu0 %v2448
    %3458 = vmatpush.bf16.msra.mxu0 %v2436
    %3459 = vmatpush.bf16.msra.mxu0 %v2424
    %3460 = vmatpush.bf16.msra.mxu0 %v2412
    %3461 = vmatpush.bf16.msra.mxu0 %v2400
    %3462 = vmatpush.bf16.msra.mxu0 %v2388
    %3463 = vmatpush.bf16.msra.mxu0 %v2376
    %3464 = vmatmul.bf16.gmra.mxu0 %v920
    %v3465 = vpop.f32.mrf.mxu0
    %v3466 = vadd.f32 %v3453, %v3465
    %v3467 = vpop.f32.mrf.mxu0
    %3468 = vdwg.mxu0
    %s3469 = scalar_lea.vmem %s0, 16
    %v3470 = vld [vmem:[%s3469] sm:$0xff]
    %v3471 = vld [vmem:[%s3469 + $0x8] sm:$0xff]
    %v3474 = vunpack.c.l.b16 %v3470
    %v3475 = vunpack.c.h.b16 %v3470
    %v3476 = vunpack.c.l.b16 %v3471
    %v3477 = vunpack.c.h.b16 %v3471
    %v3478 = vpack.c.b16 %v3474, %v3474
    %v3479 = vpack.c.b16 %v3475, %v3475
    %v3480 = vpack.c.b16 %v3476, %v3476
    %v3481 = vpack.c.b16 %v3477, %v3477
    %3486 = vmatpush.bf16.msra.mxu0 %v2161
    %3487 = vmatpush.bf16.msra.mxu0 %v2149
    %3488 = vmatpush.bf16.msra.mxu0 %v2137
    %3489 = vmatpush.bf16.msra.mxu0 %v2125
    %3490 = vmatpush.bf16.msra.mxu0 %v2113
    %3491 = vmatpush.bf16.msra.mxu0 %v2101
    %3492 = vmatpush.bf16.msra.mxu0 %v2089
    %3493 = vmatpush.bf16.msra.mxu0 %v2077
    %3494 = vmatmul.bf16.gmra.mxu0 %v3478
    %v3495 = vpop.f32.mrf.mxu0
    %v3496 = vadd.f32 %v887, %v3495
    %v3497 = vpop.f32.mrf.mxu0
    %3498 = vdwg.mxu0
    %3499 = vmatpush.bf16.msra.mxu0 %v2257
    %3500 = vmatpush.bf16.msra.mxu0 %v2245
    %3501 = vmatpush.bf16.msra.mxu0 %v2233
    %3502 = vmatpush.bf16.msra.mxu0 %v2221
    %3503 = vmatpush.bf16.msra.mxu0 %v2209
    %3504 = vmatpush.bf16.msra.mxu0 %v2197
    %3505 = vmatpush.bf16.msra.mxu0 %v2185
    %3506 = vmatpush.bf16.msra.mxu0 %v2173
    %3507 = vmatmul.bf16.gmra.mxu0 %v3479
    %v3508 = vpop.f32.mrf.mxu0
    %v3509 = vadd.f32 %v3496, %v3508
    %v3510 = vpop.f32.mrf.mxu0
    %3511 = vdwg.mxu0
    %3512 = vmatpush.bf16.msra.mxu0 %v2353
    %3513 = vmatpush.bf16.msra.mxu0 %v2341
    %3514 = vmatpush.bf16.msra.mxu0 %v2329
    %3515 = vmatpush.bf16.msra.mxu0 %v2317
    %3516 = vmatpush.bf16.msra.mxu0 %v2305
    %3517 = vmatpush.bf16.msra.mxu0 %v2293
    %3518 = vmatpush.bf16.msra.mxu0 %v2281
    %3519 = vmatpush.bf16.msra.mxu0 %v2269
    %3520 = vmatmul.bf16.gmra.mxu0 %v3480
    %v3521 = vpop.f32.mrf.mxu0
    %v3522 = vadd.f32 %v3509, %v3521
    %v3523 = vpop.f32.mrf.mxu0
    %3524 = vdwg.mxu0
    %3525 = vmatpush.bf16.msra.mxu0 %v2449
    %3526 = vmatpush.bf16.msra.mxu0 %v2437
    %3527 = vmatpush.bf16.msra.mxu0 %v2425
    %3528 = vmatpush.bf16.msra.mxu0 %v2413
    %3529 = vmatpush.bf16.msra.mxu0 %v2401
    %3530 = vmatpush.bf16.msra.mxu0 %v2389
    %3531 = vmatpush.bf16.msra.mxu0 %v2377
    %3532 = vmatpush.bf16.msra.mxu0 %v2365
    %3533 = vmatmul.bf16.gmra.mxu0 %v3481
    %v3534 = vpop.f32.mrf.mxu0
    %v3535 = vadd.f32 %v3522, %v3534
    %v3536 = vpop.f32.mrf.mxu0
    %3537 = vdwg.mxu0
    %3538 = vmatpush.bf16.msra.mxu0 %v2162
    %3539 = vmatpush.bf16.msra.mxu0 %v2150
    %3540 = vmatpush.bf16.msra.mxu0 %v2138
    %3541 = vmatpush.bf16.msra.mxu0 %v2126
    %3542 = vmatpush.bf16.msra.mxu0 %v2114
    %3543 = vmatpush.bf16.msra.mxu0 %v2102
    %3544 = vmatpush.bf16.msra.mxu0 %v2090
    %3545 = vmatpush.bf16.msra.mxu0 %v2078
    %3546 = vmatmul.bf16.gmra.mxu0 %v3478
    %v3547 = vpop.f32.mrf.mxu0
    %v3548 = vadd.f32 %v888, %v3547
    %v3549 = vpop.f32.mrf.mxu0
    %3550 = vdwg.mxu0
    %3551 = vmatpush.bf16.msra.mxu0 %v2258
    %3552 = vmatpush.bf16.msra.mxu0 %v2246
    %3553 = vmatpush.bf16.msra.mxu0 %v2234
    %3554 = vmatpush.bf16.msra.mxu0 %v2222
    %3555 = vmatpush.bf16.msra.mxu0 %v2210
    %3556 = vmatpush.bf16.msra.mxu0 %v2198
    %3557 = vmatpush.bf16.msra.mxu0 %v2186
    %3558 = vmatpush.bf16.msra.mxu0 %v2174
    %3559 = vmatmul.bf16.gmra.mxu0 %v3479
    %v3560 = vpop.f32.mrf.mxu0
    %v3561 = vadd.f32 %v3548, %v3560
    %v3562 = vpop.f32.mrf.mxu0
    %3563 = vdwg.mxu0
    %3564 = vmatpush.bf16.msra.mxu0 %v2354
    %3565 = vmatpush.bf16.msra.mxu0 %v2342
    %3566 = vmatpush.bf16.msra.mxu0 %v2330
    %3567 = vmatpush.bf16.msra.mxu0 %v2318
    %3568 = vmatpush.bf16.msra.mxu0 %v2306
    %3569 = vmatpush.bf16.msra.mxu0 %v2294
    %3570 = vmatpush.bf16.msra.mxu0 %v2282
    %3571 = vmatpush.bf16.msra.mxu0 %v2270
    %3572 = vmatmul.bf16.gmra.mxu0 %v3480
    %v3573 = vpop.f32.mrf.mxu0
    %v3574 = vadd.f32 %v3561, %v3573
    %v3575 = vpop.f32.mrf.mxu0
    %3576 = vdwg.mxu0
    %3577 = vmatpush.bf16.msra.mxu0 %v2450
    %3578 = vmatpush.bf16.msra.mxu0 %v2438
    %3579 = vmatpush.bf16.msra.mxu0 %v2426
    %3580 = vmatpush.bf16.msra.mxu0 %v2414
    %3581 = vmatpush.bf16.msra.mxu0 %v2402
    %3582 = vmatpush.bf16.msra.mxu0 %v2390
    %3583 = vmatpush.bf16.msra.mxu0 %v2378
    %3584 = vmatpush.bf16.msra.mxu0 %v2366
    %3585 = vmatmul.bf16.gmra.mxu0 %v3481
    %v3586 = vpop.f32.mrf.mxu0
    %v3587 = vadd.f32 %v3574, %v3586
    %v3588 = vpop.f32.mrf.mxu0
    %3589 = vdwg.mxu0
    %3590 = vmatpush.bf16.msra.mxu0 %v2163
    %3591 = vmatpush.bf16.msra.mxu0 %v2151
    %3592 = vmatpush.bf16.msra.mxu0 %v2139
    %3593 = vmatpush.bf16.msra.mxu0 %v2127
    %3594 = vmatpush.bf16.msra.mxu0 %v2115
    %3595 = vmatpush.bf16.msra.mxu0 %v2103
    %3596 = vmatpush.bf16.msra.mxu0 %v2091
    %3597 = vmatpush.bf16.msra.mxu0 %v2079
    %3598 = vmatmul.bf16.gmra.mxu0 %v3478
    %v3599 = vpop.f32.mrf.mxu0
    %v3600 = vadd.f32 %v889, %v3599
    %v3601 = vpop.f32.mrf.mxu0
    %3602 = vdwg.mxu0
    %3603 = vmatpush.bf16.msra.mxu0 %v2259
    %3604 = vmatpush.bf16.msra.mxu0 %v2247
    %3605 = vmatpush.bf16.msra.mxu0 %v2235
    %3606 = vmatpush.bf16.msra.mxu0 %v2223
    %3607 = vmatpush.bf16.msra.mxu0 %v2211
    %3608 = vmatpush.bf16.msra.mxu0 %v2199
    %3609 = vmatpush.bf16.msra.mxu0 %v2187
    %3610 = vmatpush.bf16.msra.mxu0 %v2175
    %3611 = vmatmul.bf16.gmra.mxu0 %v3479
    %v3612 = vpop.f32.mrf.mxu0
    %v3613 = vadd.f32 %v3600, %v3612
    %v3614 = vpop.f32.mrf.mxu0
    %3615 = vdwg.mxu0
    %3616 = vmatpush.bf16.msra.mxu0 %v2355
    %3617 = vmatpush.bf16.msra.mxu0 %v2343
    %3618 = vmatpush.bf16.msra.mxu0 %v2331
    %3619 = vmatpush.bf16.msra.mxu0 %v2319
    %3620 = vmatpush.bf16.msra.mxu0 %v2307
    %3621 = vmatpush.bf16.msra.mxu0 %v2295
    %3622 = vmatpush.bf16.msra.mxu0 %v2283
    %3623 = vmatpush.bf16.msra.mxu0 %v2271
    %3624 = vmatmul.bf16.gmra.mxu0 %v3480
    %v3625 = vpop.f32.mrf.mxu0
    %v3626 = vadd.f32 %v3613, %v3625
    %v3627 = vpop.f32.mrf.mxu0
    %3628 = vdwg.mxu0
    %3629 = vmatpush.bf16.msra.mxu0 %v2451
    %3630 = vmatpush.bf16.msra.mxu0 %v2439
    %3631 = vmatpush.bf16.msra.mxu0 %v2427
    %3632 = vmatpush.bf16.msra.mxu0 %v2415
    %3633 = vmatpush.bf16.msra.mxu0 %v2403
    %3634 = vmatpush.bf16.msra.mxu0 %v2391
    %3635 = vmatpush.bf16.msra.mxu0 %v2379
    %3636 = vmatpush.bf16.msra.mxu0 %v2367
    %3637 = vmatmul.bf16.gmra.mxu0 %v3481
    %v3638 = vpop.f32.mrf.mxu0
    %v3639 = vadd.f32 %v3626, %v3638
    %v3640 = vpop.f32.mrf.mxu0
    %3641 = vdwg.mxu0
    %3642 = vmatpush.bf16.msra.mxu0 %v2164
    %3643 = vmatpush.bf16.msra.mxu0 %v2152
    %3644 = vmatpush.bf16.msra.mxu0 %v2140
    %3645 = vmatpush.bf16.msra.mxu0 %v2128
    %3646 = vmatpush.bf16.msra.mxu0 %v2116
    %3647 = vmatpush.bf16.msra.mxu0 %v2104
    %3648 = vmatpush.bf16.msra.mxu0 %v2092
    %3649 = vmatpush.bf16.msra.mxu0 %v2080
    %3650 = vmatmul.bf16.gmra.mxu0 %v3478
    %v3651 = vpop.f32.mrf.mxu0
    %v3652 = vadd.f32 %v890, %v3651
    %v3653 = vpop.f32.mrf.mxu0
    %3654 = vdwg.mxu0
    %3655 = vmatpush.bf16.msra.mxu0 %v2260
    %3656 = vmatpush.bf16.msra.mxu0 %v2248
    %3657 = vmatpush.bf16.msra.mxu0 %v2236
    %3658 = vmatpush.bf16.msra.mxu0 %v2224
    %3659 = vmatpush.bf16.msra.mxu0 %v2212
    %3660 = vmatpush.bf16.msra.mxu0 %v2200
    %3661 = vmatpush.bf16.msra.mxu0 %v2188
    %3662 = vmatpush.bf16.msra.mxu0 %v2176
    %3663 = vmatmul.bf16.gmra.mxu0 %v3479
    %v3664 = vpop.f32.mrf.mxu0
    %v3665 = vadd.f32 %v3652, %v3664
    %v3666 = vpop.f32.mrf.mxu0
    %3667 = vdwg.mxu0
    %3668 = vmatpush.bf16.msra.mxu0 %v2356
    %3669 = vmatpush.bf16.msra.mxu0 %v2344
    %3670 = vmatpush.bf16.msra.mxu0 %v2332
    %3671 = vmatpush.bf16.msra.mxu0 %v2320
    %3672 = vmatpush.bf16.msra.mxu0 %v2308
    %3673 = vmatpush.bf16.msra.mxu0 %v2296
    %3674 = vmatpush.bf16.msra.mxu0 %v2284
    %3675 = vmatpush.bf16.msra.mxu0 %v2272
    %3676 = vmatmul.bf16.gmra.mxu0 %v3480
    %v3677 = vpop.f32.mrf.mxu0
    %v3678 = vadd.f32 %v3665, %v3677
    %v3679 = vpop.f32.mrf.mxu0
    %3680 = vdwg.mxu0
    %3681 = vmatpush.bf16.msra.mxu0 %v2452
    %3682 = vmatpush.bf16.msra.mxu0 %v2440
    %3683 = vmatpush.bf16.msra.mxu0 %v2428
    %3684 = vmatpush.bf16.msra.mxu0 %v2416
    %3685 = vmatpush.bf16.msra.mxu0 %v2404
    %3686 = vmatpush.bf16.msra.mxu0 %v2392
    %3687 = vmatpush.bf16.msra.mxu0 %v2380
    %3688 = vmatpush.bf16.msra.mxu0 %v2368
    %3689 = vmatmul.bf16.gmra.mxu0 %v3481
    %v3690 = vpop.f32.mrf.mxu0
    %v3691 = vadd.f32 %v3678, %v3690
    %v3692 = vpop.f32.mrf.mxu0
    %3693 = vdwg.mxu0
    %3694 = vmatpush.bf16.msra.mxu0 %v2165
    %3695 = vmatpush.bf16.msra.mxu0 %v2153
    %3696 = vmatpush.bf16.msra.mxu0 %v2141
    %3697 = vmatpush.bf16.msra.mxu0 %v2129
    %3698 = vmatpush.bf16.msra.mxu0 %v2117
    %3699 = vmatpush.bf16.msra.mxu0 %v2105
    %3700 = vmatpush.bf16.msra.mxu0 %v2093
    %3701 = vmatpush.bf16.msra.mxu0 %v2081
    %3702 = vmatmul.bf16.gmra.mxu0 %v3478
    %v3703 = vpop.f32.mrf.mxu0
    %v3704 = vadd.f32 %v891, %v3703
    %v3705 = vpop.f32.mrf.mxu0
    %3706 = vdwg.mxu0
    %3707 = vmatpush.bf16.msra.mxu0 %v2261
    %3708 = vmatpush.bf16.msra.mxu0 %v2249
    %3709 = vmatpush.bf16.msra.mxu0 %v2237
    %3710 = vmatpush.bf16.msra.mxu0 %v2225
    %3711 = vmatpush.bf16.msra.mxu0 %v2213
    %3712 = vmatpush.bf16.msra.mxu0 %v2201
    %3713 = vmatpush.bf16.msra.mxu0 %v2189
    %3714 = vmatpush.bf16.msra.mxu0 %v2177
    %3715 = vmatmul.bf16.gmra.mxu0 %v3479
    %v3716 = vpop.f32.mrf.mxu0
    %v3717 = vadd.f32 %v3704, %v3716
    %v3718 = vpop.f32.mrf.mxu0
    %3719 = vdwg.mxu0
    %3720 = vmatpush.bf16.msra.mxu0 %v2357
    %3721 = vmatpush.bf16.msra.mxu0 %v2345
    %3722 = vmatpush.bf16.msra.mxu0 %v2333
    %3723 = vmatpush.bf16.msra.mxu0 %v2321
    %3724 = vmatpush.bf16.msra.mxu0 %v2309
    %3725 = vmatpush.bf16.msra.mxu0 %v2297
    %3726 = vmatpush.bf16.msra.mxu0 %v2285
    %3727 = vmatpush.bf16.msra.mxu0 %v2273
    %3728 = vmatmul.bf16.gmra.mxu0 %v3480
    %v3729 = vpop.f32.mrf.mxu0
    %v3730 = vadd.f32 %v3717, %v3729
    %v3731 = vpop.f32.mrf.mxu0
    %3732 = vdwg.mxu0
    %3733 = vmatpush.bf16.msra.mxu0 %v2453
    %3734 = vmatpush.bf16.msra.mxu0 %v2441
    %3735 = vmatpush.bf16.msra.mxu0 %v2429
    %3736 = vmatpush.bf16.msra.mxu0 %v2417
    %3737 = vmatpush.bf16.msra.mxu0 %v2405
    %3738 = vmatpush.bf16.msra.mxu0 %v2393
    %3739 = vmatpush.bf16.msra.mxu0 %v2381
    %3740 = vmatpush.bf16.msra.mxu0 %v2369
    %3741 = vmatmul.bf16.gmra.mxu0 %v3481
    %v3742 = vpop.f32.mrf.mxu0
    %v3743 = vadd.f32 %v3730, %v3742
    %v3744 = vpop.f32.mrf.mxu0
    %3745 = vdwg.mxu0
    %3746 = vmatpush.bf16.msra.mxu0 %v2166
    %3747 = vmatpush.bf16.msra.mxu0 %v2154
    %3748 = vmatpush.bf16.msra.mxu0 %v2142
    %3749 = vmatpush.bf16.msra.mxu0 %v2130
    %3750 = vmatpush.bf16.msra.mxu0 %v2118
    %3751 = vmatpush.bf16.msra.mxu0 %v2106
    %3752 = vmatpush.bf16.msra.mxu0 %v2094
    %3753 = vmatpush.bf16.msra.mxu0 %v2082
    %3754 = vmatmul.bf16.gmra.mxu0 %v3478
    %v3755 = vpop.f32.mrf.mxu0
    %v3756 = vadd.f32 %v892, %v3755
    %v3757 = vpop.f32.mrf.mxu0
    %3758 = vdwg.mxu0
    %3759 = vmatpush.bf16.msra.mxu0 %v2262
    %3760 = vmatpush.bf16.msra.mxu0 %v2250
    %3761 = vmatpush.bf16.msra.mxu0 %v2238
    %3762 = vmatpush.bf16.msra.mxu0 %v2226
    %3763 = vmatpush.bf16.msra.mxu0 %v2214
    %3764 = vmatpush.bf16.msra.mxu0 %v2202
    %3765 = vmatpush.bf16.msra.mxu0 %v2190
    %3766 = vmatpush.bf16.msra.mxu0 %v2178
    %3767 = vmatmul.bf16.gmra.mxu0 %v3479
    %v3768 = vpop.f32.mrf.mxu0
    %v3769 = vadd.f32 %v3756, %v3768
    %v3770 = vpop.f32.mrf.mxu0
    %3771 = vdwg.mxu0
    %3772 = vmatpush.bf16.msra.mxu0 %v2358
    %3773 = vmatpush.bf16.msra.mxu0 %v2346
    %3774 = vmatpush.bf16.msra.mxu0 %v2334
    %3775 = vmatpush.bf16.msra.mxu0 %v2322
    %3776 = vmatpush.bf16.msra.mxu0 %v2310
    %3777 = vmatpush.bf16.msra.mxu0 %v2298
    %3778 = vmatpush.bf16.msra.mxu0 %v2286
    %3779 = vmatpush.bf16.msra.mxu0 %v2274
    %3780 = vmatmul.bf16.gmra.mxu0 %v3480
    %v3781 = vpop.f32.mrf.mxu0
    %v3782 = vadd.f32 %v3769, %v3781
    %v3783 = vpop.f32.mrf.mxu0
    %3784 = vdwg.mxu0
    %3785 = vmatpush.bf16.msra.mxu0 %v2454
    %3786 = vmatpush.bf16.msra.mxu0 %v2442
    %3787 = vmatpush.bf16.msra.mxu0 %v2430
    %3788 = vmatpush.bf16.msra.mxu0 %v2418
    %3789 = vmatpush.bf16.msra.mxu0 %v2406
    %3790 = vmatpush.bf16.msra.mxu0 %v2394
    %3791 = vmatpush.bf16.msra.mxu0 %v2382
    %3792 = vmatpush.bf16.msra.mxu0 %v2370
    %3793 = vmatmul.bf16.gmra.mxu0 %v3481
    %v3794 = vpop.f32.mrf.mxu0
    %v3795 = vadd.f32 %v3782, %v3794
    %v3796 = vpop.f32.mrf.mxu0
    %3797 = vdwg.mxu0
    %3798 = vmatpush.bf16.msra.mxu0 %v2167
    %3799 = vmatpush.bf16.msra.mxu0 %v2155
    %3800 = vmatpush.bf16.msra.mxu0 %v2143
    %3801 = vmatpush.bf16.msra.mxu0 %v2131
    %3802 = vmatpush.bf16.msra.mxu0 %v2119
    %3803 = vmatpush.bf16.msra.mxu0 %v2107
    %3804 = vmatpush.bf16.msra.mxu0 %v2095
    %3805 = vmatpush.bf16.msra.mxu0 %v2083
    %3806 = vmatmul.bf16.gmra.mxu0 %v3478
    %v3807 = vpop.f32.mrf.mxu0
    %v3808 = vadd.f32 %v893, %v3807
    %v3809 = vpop.f32.mrf.mxu0
    %3810 = vdwg.mxu0
    %3811 = vmatpush.bf16.msra.mxu0 %v2263
    %3812 = vmatpush.bf16.msra.mxu0 %v2251
    %3813 = vmatpush.bf16.msra.mxu0 %v2239
    %3814 = vmatpush.bf16.msra.mxu0 %v2227
    %3815 = vmatpush.bf16.msra.mxu0 %v2215
    %3816 = vmatpush.bf16.msra.mxu0 %v2203
    %3817 = vmatpush.bf16.msra.mxu0 %v2191
    %3818 = vmatpush.bf16.msra.mxu0 %v2179
    %3819 = vmatmul.bf16.gmra.mxu0 %v3479
    %v3820 = vpop.f32.mrf.mxu0
    %v3821 = vadd.f32 %v3808, %v3820
    %v3822 = vpop.f32.mrf.mxu0
    %3823 = vdwg.mxu0
    %3824 = vmatpush.bf16.msra.mxu0 %v2359
    %3825 = vmatpush.bf16.msra.mxu0 %v2347
    %3826 = vmatpush.bf16.msra.mxu0 %v2335
    %3827 = vmatpush.bf16.msra.mxu0 %v2323
    %3828 = vmatpush.bf16.msra.mxu0 %v2311
    %3829 = vmatpush.bf16.msra.mxu0 %v2299
    %3830 = vmatpush.bf16.msra.mxu0 %v2287
    %3831 = vmatpush.bf16.msra.mxu0 %v2275
    %3832 = vmatmul.bf16.gmra.mxu0 %v3480
    %v3833 = vpop.f32.mrf.mxu0
    %v3834 = vadd.f32 %v3821, %v3833
    %v3835 = vpop.f32.mrf.mxu0
    %3836 = vdwg.mxu0
    %3837 = vmatpush.bf16.msra.mxu0 %v2455
    %3838 = vmatpush.bf16.msra.mxu0 %v2443
    %3839 = vmatpush.bf16.msra.mxu0 %v2431
    %3840 = vmatpush.bf16.msra.mxu0 %v2419
    %3841 = vmatpush.bf16.msra.mxu0 %v2407
    %3842 = vmatpush.bf16.msra.mxu0 %v2395
    %3843 = vmatpush.bf16.msra.mxu0 %v2383
    %3844 = vmatpush.bf16.msra.mxu0 %v2371
    %3845 = vmatmul.bf16.gmra.mxu0 %v3481
    %v3846 = vpop.f32.mrf.mxu0
    %v3847 = vadd.f32 %v3834, %v3846
    %v3848 = vpop.f32.mrf.mxu0
    %3849 = vdwg.mxu0
    %3850 = vmatpush.bf16.msra.mxu0 %v2168
    %3851 = vmatpush.bf16.msra.mxu0 %v2156
    %3852 = vmatpush.bf16.msra.mxu0 %v2144
    %3853 = vmatpush.bf16.msra.mxu0 %v2132
    %3854 = vmatpush.bf16.msra.mxu0 %v2120
    %3855 = vmatpush.bf16.msra.mxu0 %v2108
    %3856 = vmatpush.bf16.msra.mxu0 %v2096
    %3857 = vmatpush.bf16.msra.mxu0 %v2084
    %3858 = vmatmul.bf16.gmra.mxu0 %v3478
    %v3859 = vpop.f32.mrf.mxu0
    %v3860 = vadd.f32 %v894, %v3859
    %v3861 = vpop.f32.mrf.mxu0
    %3862 = vdwg.mxu0
    %3863 = vmatpush.bf16.msra.mxu0 %v2264
    %3864 = vmatpush.bf16.msra.mxu0 %v2252
    %3865 = vmatpush.bf16.msra.mxu0 %v2240
    %3866 = vmatpush.bf16.msra.mxu0 %v2228
    %3867 = vmatpush.bf16.msra.mxu0 %v2216
    %3868 = vmatpush.bf16.msra.mxu0 %v2204
    %3869 = vmatpush.bf16.msra.mxu0 %v2192
    %3870 = vmatpush.bf16.msra.mxu0 %v2180
    %3871 = vmatmul.bf16.gmra.mxu0 %v3479
    %v3872 = vpop.f32.mrf.mxu0
    %v3873 = vadd.f32 %v3860, %v3872
    %v3874 = vpop.f32.mrf.mxu0
    %3875 = vdwg.mxu0
    %3876 = vmatpush.bf16.msra.mxu0 %v2360
    %3877 = vmatpush.bf16.msra.mxu0 %v2348
    %3878 = vmatpush.bf16.msra.mxu0 %v2336
    %3879 = vmatpush.bf16.msra.mxu0 %v2324
    %3880 = vmatpush.bf16.msra.mxu0 %v2312
    %3881 = vmatpush.bf16.msra.mxu0 %v2300
    %3882 = vmatpush.bf16.msra.mxu0 %v2288
    %3883 = vmatpush.bf16.msra.mxu0 %v2276
    %3884 = vmatmul.bf16.gmra.mxu0 %v3480
    %v3885 = vpop.f32.mrf.mxu0
    %v3886 = vadd.f32 %v3873, %v3885
    %v3887 = vpop.f32.mrf.mxu0
    %3888 = vdwg.mxu0
    %3889 = vmatpush.bf16.msra.mxu0 %v2456
    %3890 = vmatpush.bf16.msra.mxu0 %v2444
    %3891 = vmatpush.bf16.msra.mxu0 %v2432
    %3892 = vmatpush.bf16.msra.mxu0 %v2420
    %3893 = vmatpush.bf16.msra.mxu0 %v2408
    %3894 = vmatpush.bf16.msra.mxu0 %v2396
    %3895 = vmatpush.bf16.msra.mxu0 %v2384
    %3896 = vmatpush.bf16.msra.mxu0 %v2372
    %3897 = vmatmul.bf16.gmra.mxu0 %v3481
    %v3898 = vpop.f32.mrf.mxu0
    %v3899 = vadd.f32 %v3886, %v3898
    %v3900 = vpop.f32.mrf.mxu0
    %3901 = vdwg.mxu0
    %3902 = vmatpush.bf16.msra.mxu0 %v2169
    %3903 = vmatpush.bf16.msra.mxu0 %v2157
    %3904 = vmatpush.bf16.msra.mxu0 %v2145
    %3905 = vmatpush.bf16.msra.mxu0 %v2133
    %3906 = vmatpush.bf16.msra.mxu0 %v2121
    %3907 = vmatpush.bf16.msra.mxu0 %v2109
    %3908 = vmatpush.bf16.msra.mxu0 %v2097
    %3909 = vmatpush.bf16.msra.mxu0 %v2085
    %3910 = vmatmul.bf16.gmra.mxu0 %v3478
    %v3911 = vpop.f32.mrf.mxu0
    %v3912 = vadd.f32 %v895, %v3911
    %v3913 = vpop.f32.mrf.mxu0
    %3914 = vdwg.mxu0
    %3915 = vmatpush.bf16.msra.mxu0 %v2265
    %3916 = vmatpush.bf16.msra.mxu0 %v2253
    %3917 = vmatpush.bf16.msra.mxu0 %v2241
    %3918 = vmatpush.bf16.msra.mxu0 %v2229
    %3919 = vmatpush.bf16.msra.mxu0 %v2217
    %3920 = vmatpush.bf16.msra.mxu0 %v2205
    %3921 = vmatpush.bf16.msra.mxu0 %v2193
    %3922 = vmatpush.bf16.msra.mxu0 %v2181
    %3923 = vmatmul.bf16.gmra.mxu0 %v3479
    %v3924 = vpop.f32.mrf.mxu0
    %v3925 = vadd.f32 %v3912, %v3924
    %v3926 = vpop.f32.mrf.mxu0
    %3927 = vdwg.mxu0
    %3928 = vmatpush.bf16.msra.mxu0 %v2361
    %3929 = vmatpush.bf16.msra.mxu0 %v2349
    %3930 = vmatpush.bf16.msra.mxu0 %v2337
    %3931 = vmatpush.bf16.msra.mxu0 %v2325
    %3932 = vmatpush.bf16.msra.mxu0 %v2313
    %3933 = vmatpush.bf16.msra.mxu0 %v2301
    %3934 = vmatpush.bf16.msra.mxu0 %v2289
    %3935 = vmatpush.bf16.msra.mxu0 %v2277
    %3936 = vmatmul.bf16.gmra.mxu0 %v3480
    %v3937 = vpop.f32.mrf.mxu0
    %v3938 = vadd.f32 %v3925, %v3937
    %v3939 = vpop.f32.mrf.mxu0
    %3940 = vdwg.mxu0
    %3941 = vmatpush.bf16.msra.mxu0 %v2457
    %3942 = vmatpush.bf16.msra.mxu0 %v2445
    %3943 = vmatpush.bf16.msra.mxu0 %v2433
    %3944 = vmatpush.bf16.msra.mxu0 %v2421
    %3945 = vmatpush.bf16.msra.mxu0 %v2409
    %3946 = vmatpush.bf16.msra.mxu0 %v2397
    %3947 = vmatpush.bf16.msra.mxu0 %v2385
    %3948 = vmatpush.bf16.msra.mxu0 %v2373
    %3949 = vmatmul.bf16.gmra.mxu0 %v3481
    %v3950 = vpop.f32.mrf.mxu0
    %v3951 = vadd.f32 %v3938, %v3950
    %v3952 = vpop.f32.mrf.mxu0
    %3953 = vdwg.mxu0
    %3954 = vmatpush.bf16.msra.mxu0 %v2170
    %3955 = vmatpush.bf16.msra.mxu0 %v2158
    %3956 = vmatpush.bf16.msra.mxu0 %v2146
    %3957 = vmatpush.bf16.msra.mxu0 %v2134
    %3958 = vmatpush.bf16.msra.mxu0 %v2122
    %3959 = vmatpush.bf16.msra.mxu0 %v2110
    %3960 = vmatpush.bf16.msra.mxu0 %v2098
    %3961 = vmatpush.bf16.msra.mxu0 %v2086
    %3962 = vmatmul.bf16.gmra.mxu0 %v3478
    %v3963 = vpop.f32.mrf.mxu0
    %v3964 = vadd.f32 %v896, %v3963
    %v3965 = vpop.f32.mrf.mxu0
    %3966 = vdwg.mxu0
    %3967 = vmatpush.bf16.msra.mxu0 %v2266
    %3968 = vmatpush.bf16.msra.mxu0 %v2254
    %3969 = vmatpush.bf16.msra.mxu0 %v2242
    %3970 = vmatpush.bf16.msra.mxu0 %v2230
    %3971 = vmatpush.bf16.msra.mxu0 %v2218
    %3972 = vmatpush.bf16.msra.mxu0 %v2206
    %3973 = vmatpush.bf16.msra.mxu0 %v2194
    %3974 = vmatpush.bf16.msra.mxu0 %v2182
    %3975 = vmatmul.bf16.gmra.mxu0 %v3479
    %v3976 = vpop.f32.mrf.mxu0
    %v3977 = vadd.f32 %v3964, %v3976
    %v3978 = vpop.f32.mrf.mxu0
    %3979 = vdwg.mxu0
    %3980 = vmatpush.bf16.msra.mxu0 %v2362
    %3981 = vmatpush.bf16.msra.mxu0 %v2350
    %3982 = vmatpush.bf16.msra.mxu0 %v2338
    %3983 = vmatpush.bf16.msra.mxu0 %v2326
    %3984 = vmatpush.bf16.msra.mxu0 %v2314
    %3985 = vmatpush.bf16.msra.mxu0 %v2302
    %3986 = vmatpush.bf16.msra.mxu0 %v2290
    %3987 = vmatpush.bf16.msra.mxu0 %v2278
    %3988 = vmatmul.bf16.gmra.mxu0 %v3480
    %v3989 = vpop.f32.mrf.mxu0
    %v3990 = vadd.f32 %v3977, %v3989
    %v3991 = vpop.f32.mrf.mxu0
    %3992 = vdwg.mxu0
    %3993 = vmatpush.bf16.msra.mxu0 %v2458
    %3994 = vmatpush.bf16.msra.mxu0 %v2446
    %3995 = vmatpush.bf16.msra.mxu0 %v2434
    %3996 = vmatpush.bf16.msra.mxu0 %v2422
    %3997 = vmatpush.bf16.msra.mxu0 %v2410
    %3998 = vmatpush.bf16.msra.mxu0 %v2398
    %3999 = vmatpush.bf16.msra.mxu0 %v2386
    %4000 = vmatpush.bf16.msra.mxu0 %v2374
    %4001 = vmatmul.bf16.gmra.mxu0 %v3481
    %v4002 = vpop.f32.mrf.mxu0
    %v4003 = vadd.f32 %v3990, %v4002
    %v4004 = vpop.f32.mrf.mxu0
    %4005 = vdwg.mxu0
    %4006 = vmatpush.bf16.msra.mxu0 %v2171
    %4007 = vmatpush.bf16.msra.mxu0 %v2159
    %4008 = vmatpush.bf16.msra.mxu0 %v2147
    %4009 = vmatpush.bf16.msra.mxu0 %v2135
    %4010 = vmatpush.bf16.msra.mxu0 %v2123
    %4011 = vmatpush.bf16.msra.mxu0 %v2111
    %4012 = vmatpush.bf16.msra.mxu0 %v2099
    %4013 = vmatpush.bf16.msra.mxu0 %v2087
    %4014 = vmatmul.bf16.gmra.mxu0 %v3478
    %v4015 = vpop.f32.mrf.mxu0
    %v4016 = vadd.f32 %v897, %v4015
    %v4017 = vpop.f32.mrf.mxu0
    %4018 = vdwg.mxu0
    %4019 = vmatpush.bf16.msra.mxu0 %v2267
    %4020 = vmatpush.bf16.msra.mxu0 %v2255
    %4021 = vmatpush.bf16.msra.mxu0 %v2243
    %4022 = vmatpush.bf16.msra.mxu0 %v2231
    %4023 = vmatpush.bf16.msra.mxu0 %v2219
    %4024 = vmatpush.bf16.msra.mxu0 %v2207
    %4025 = vmatpush.bf16.msra.mxu0 %v2195
    %4026 = vmatpush.bf16.msra.mxu0 %v2183
    %4027 = vmatmul.bf16.gmra.mxu0 %v3479
    %v4028 = vpop.f32.mrf.mxu0
    %v4029 = vadd.f32 %v4016, %v4028
    %v4030 = vpop.f32.mrf.mxu0
    %4031 = vdwg.mxu0
    %4032 = vmatpush.bf16.msra.mxu0 %v2363
    %4033 = vmatpush.bf16.msra.mxu0 %v2351
    %4034 = vmatpush.bf16.msra.mxu0 %v2339
    %4035 = vmatpush.bf16.msra.mxu0 %v2327
    %4036 = vmatpush.bf16.msra.mxu0 %v2315
    %4037 = vmatpush.bf16.msra.mxu0 %v2303
    %4038 = vmatpush.bf16.msra.mxu0 %v2291
    %4039 = vmatpush.bf16.msra.mxu0 %v2279
    %4040 = vmatmul.bf16.gmra.mxu0 %v3480
    %v4041 = vpop.f32.mrf.mxu0
    %v4042 = vadd.f32 %v4029, %v4041
    %v4043 = vpop.f32.mrf.mxu0
    %4044 = vdwg.mxu0
    %4045 = vmatpush.bf16.msra.mxu0 %v2459
    %4046 = vmatpush.bf16.msra.mxu0 %v2447
    %4047 = vmatpush.bf16.msra.mxu0 %v2435
    %4048 = vmatpush.bf16.msra.mxu0 %v2423
    %4049 = vmatpush.bf16.msra.mxu0 %v2411
    %4050 = vmatpush.bf16.msra.mxu0 %v2399
    %4051 = vmatpush.bf16.msra.mxu0 %v2387
    %4052 = vmatpush.bf16.msra.mxu0 %v2375
    %4053 = vmatmul.bf16.gmra.mxu0 %v3481
    %v4054 = vpop.f32.mrf.mxu0
    %v4055 = vadd.f32 %v4042, %v4054
    %v4056 = vpop.f32.mrf.mxu0
    %4057 = vdwg.mxu0
    %4058 = vmatpush.bf16.msra.mxu0 %v2172
    %4059 = vmatpush.bf16.msra.mxu0 %v2160
    %4060 = vmatpush.bf16.msra.mxu0 %v2148
    %4061 = vmatpush.bf16.msra.mxu0 %v2136
    %4062 = vmatpush.bf16.msra.mxu0 %v2124
    %4063 = vmatpush.bf16.msra.mxu0 %v2112
    %4064 = vmatpush.bf16.msra.mxu0 %v2100
    %4065 = vmatpush.bf16.msra.mxu0 %v2088
    %4066 = vmatmul.bf16.gmra.mxu0 %v3478
    %v4067 = vpop.f32.mrf.mxu0
    %v4068 = vadd.f32 %v898, %v4067
    %v4069 = vpop.f32.mrf.mxu0
    %4070 = vdwg.mxu0
    %4071 = vmatpush.bf16.msra.mxu0 %v2268
    %4072 = vmatpush.bf16.msra.mxu0 %v2256
    %4073 = vmatpush.bf16.msra.mxu0 %v2244
    %4074 = vmatpush.bf16.msra.mxu0 %v2232
    %4075 = vmatpush.bf16.msra.mxu0 %v2220
    %4076 = vmatpush.bf16.msra.mxu0 %v2208
    %4077 = vmatpush.bf16.msra.mxu0 %v2196
    %4078 = vmatpush.bf16.msra.mxu0 %v2184
    %4079 = vmatmul.bf16.gmra.mxu0 %v3479
    %v4080 = vpop.f32.mrf.mxu0
    %v4081 = vadd.f32 %v4068, %v4080
    %v4082 = vpop.f32.mrf.mxu0
    %4083 = vdwg.mxu0
    %4084 = vmatpush.bf16.msra.mxu0 %v2364
    %4085 = vmatpush.bf16.msra.mxu0 %v2352
    %4086 = vmatpush.bf16.msra.mxu0 %v2340
    %4087 = vmatpush.bf16.msra.mxu0 %v2328
    %4088 = vmatpush.bf16.msra.mxu0 %v2316
    %4089 = vmatpush.bf16.msra.mxu0 %v2304
    %4090 = vmatpush.bf16.msra.mxu0 %v2292
    %4091 = vmatpush.bf16.msra.mxu0 %v2280
    %4092 = vmatmul.bf16.gmra.mxu0 %v3480
    %v4093 = vpop.f32.mrf.mxu0
    %v4094 = vadd.f32 %v4081, %v4093
    %v4095 = vpop.f32.mrf.mxu0
    %4096 = vdwg.mxu0
    %4097 = vmatpush.bf16.msra.mxu0 %v2460
    %4098 = vmatpush.bf16.msra.mxu0 %v2448
    %4099 = vmatpush.bf16.msra.mxu0 %v2436
    %4100 = vmatpush.bf16.msra.mxu0 %v2424
    %4101 = vmatpush.bf16.msra.mxu0 %v2412
    %4102 = vmatpush.bf16.msra.mxu0 %v2400
    %4103 = vmatpush.bf16.msra.mxu0 %v2388
    %4104 = vmatpush.bf16.msra.mxu0 %v2376
    %4105 = vmatmul.bf16.gmra.mxu0 %v3481
    %v4106 = vpop.f32.mrf.mxu0
    %v4107 = vadd.f32 %v4094, %v4106
    %v4108 = vpop.f32.mrf.mxu0
    %4109 = vdwg.mxu0
    %s4110 = scalar_lea.vmem %s0, 32
    %v4111 = vld [vmem:[%s4110] sm:$0xff]
    %v4112 = vld [vmem:[%s4110 + $0x8] sm:$0xff]
    %v4115 = vunpack.c.l.b16 %v4111
    %v4116 = vunpack.c.h.b16 %v4111
    %v4117 = vunpack.c.l.b16 %v4112
    %v4118 = vunpack.c.h.b16 %v4112
    %v4119 = vpack.c.b16 %v4115, %v4115
    %v4120 = vpack.c.b16 %v4116, %v4116
    %v4121 = vpack.c.b16 %v4117, %v4117
    %v4122 = vpack.c.b16 %v4118, %v4118
    %4127 = vmatpush.bf16.msra.mxu0 %v2161
    %4128 = vmatpush.bf16.msra.mxu0 %v2149
    %4129 = vmatpush.bf16.msra.mxu0 %v2137
    %4130 = vmatpush.bf16.msra.mxu0 %v2125
    %4131 = vmatpush.bf16.msra.mxu0 %v2113
    %4132 = vmatpush.bf16.msra.mxu0 %v2101
    %4133 = vmatpush.bf16.msra.mxu0 %v2089
    %4134 = vmatpush.bf16.msra.mxu0 %v2077
    %4135 = vmatmul.bf16.gmra.mxu0 %v4119
    %v4136 = vpop.f32.mrf.mxu0
    %v4137 = vadd.f32 %v887, %v4136
    %v4138 = vpop.f32.mrf.mxu0
    %4139 = vdwg.mxu0
    %4140 = vmatpush.bf16.msra.mxu0 %v2257
    %4141 = vmatpush.bf16.msra.mxu0 %v2245
    %4142 = vmatpush.bf16.msra.mxu0 %v2233
    %4143 = vmatpush.bf16.msra.mxu0 %v2221
    %4144 = vmatpush.bf16.msra.mxu0 %v2209
    %4145 = vmatpush.bf16.msra.mxu0 %v2197
    %4146 = vmatpush.bf16.msra.mxu0 %v2185
    %4147 = vmatpush.bf16.msra.mxu0 %v2173
    %4148 = vmatmul.bf16.gmra.mxu0 %v4120
    %v4149 = vpop.f32.mrf.mxu0
    %v4150 = vadd.f32 %v4137, %v4149
    %v4151 = vpop.f32.mrf.mxu0
    %4152 = vdwg.mxu0
    %4153 = vmatpush.bf16.msra.mxu0 %v2353
    %4154 = vmatpush.bf16.msra.mxu0 %v2341
    %4155 = vmatpush.bf16.msra.mxu0 %v2329
    %4156 = vmatpush.bf16.msra.mxu0 %v2317
    %4157 = vmatpush.bf16.msra.mxu0 %v2305
    %4158 = vmatpush.bf16.msra.mxu0 %v2293
    %4159 = vmatpush.bf16.msra.mxu0 %v2281
    %4160 = vmatpush.bf16.msra.mxu0 %v2269
    %4161 = vmatmul.bf16.gmra.mxu0 %v4121
    %v4162 = vpop.f32.mrf.mxu0
    %v4163 = vadd.f32 %v4150, %v4162
    %v4164 = vpop.f32.mrf.mxu0
    %4165 = vdwg.mxu0
    %4166 = vmatpush.bf16.msra.mxu0 %v2449
    %4167 = vmatpush.bf16.msra.mxu0 %v2437
    %4168 = vmatpush.bf16.msra.mxu0 %v2425
    %4169 = vmatpush.bf16.msra.mxu0 %v2413
    %4170 = vmatpush.bf16.msra.mxu0 %v2401
    %4171 = vmatpush.bf16.msra.mxu0 %v2389
    %4172 = vmatpush.bf16.msra.mxu0 %v2377
    %4173 = vmatpush.bf16.msra.mxu0 %v2365
    %4174 = vmatmul.bf16.gmra.mxu0 %v4122
    %v4175 = vpop.f32.mrf.mxu0
    %v4176 = vadd.f32 %v4163, %v4175
    %v4177 = vpop.f32.mrf.mxu0
    %4178 = vdwg.mxu0
    %4179 = vmatpush.bf16.msra.mxu0 %v2162
    %4180 = vmatpush.bf16.msra.mxu0 %v2150
    %4181 = vmatpush.bf16.msra.mxu0 %v2138
    %4182 = vmatpush.bf16.msra.mxu0 %v2126
    %4183 = vmatpush.bf16.msra.mxu0 %v2114
    %4184 = vmatpush.bf16.msra.mxu0 %v2102
    %4185 = vmatpush.bf16.msra.mxu0 %v2090
    %4186 = vmatpush.bf16.msra.mxu0 %v2078
    %4187 = vmatmul.bf16.gmra.mxu0 %v4119
    %v4188 = vpop.f32.mrf.mxu0
    %v4189 = vadd.f32 %v888, %v4188
    %v4190 = vpop.f32.mrf.mxu0
    %4191 = vdwg.mxu0
    %4192 = vmatpush.bf16.msra.mxu0 %v2258
    %4193 = vmatpush.bf16.msra.mxu0 %v2246
    %4194 = vmatpush.bf16.msra.mxu0 %v2234
    %4195 = vmatpush.bf16.msra.mxu0 %v2222
    %4196 = vmatpush.bf16.msra.mxu0 %v2210
    %4197 = vmatpush.bf16.msra.mxu0 %v2198
    %4198 = vmatpush.bf16.msra.mxu0 %v2186
    %4199 = vmatpush.bf16.msra.mxu0 %v2174
    %4200 = vmatmul.bf16.gmra.mxu0 %v4120
    %v4201 = vpop.f32.mrf.mxu0
    %v4202 = vadd.f32 %v4189, %v4201
    %v4203 = vpop.f32.mrf.mxu0
    %4204 = vdwg.mxu0
    %4205 = vmatpush.bf16.msra.mxu0 %v2354
    %4206 = vmatpush.bf16.msra.mxu0 %v2342
    %4207 = vmatpush.bf16.msra.mxu0 %v2330
    %4208 = vmatpush.bf16.msra.mxu0 %v2318
    %4209 = vmatpush.bf16.msra.mxu0 %v2306
    %4210 = vmatpush.bf16.msra.mxu0 %v2294
    %4211 = vmatpush.bf16.msra.mxu0 %v2282
    %4212 = vmatpush.bf16.msra.mxu0 %v2270
    %4213 = vmatmul.bf16.gmra.mxu0 %v4121
    %v4214 = vpop.f32.mrf.mxu0
    %v4215 = vadd.f32 %v4202, %v4214
    %v4216 = vpop.f32.mrf.mxu0
    %4217 = vdwg.mxu0
    %4218 = vmatpush.bf16.msra.mxu0 %v2450
    %4219 = vmatpush.bf16.msra.mxu0 %v2438
    %4220 = vmatpush.bf16.msra.mxu0 %v2426
    %4221 = vmatpush.bf16.msra.mxu0 %v2414
    %4222 = vmatpush.bf16.msra.mxu0 %v2402
    %4223 = vmatpush.bf16.msra.mxu0 %v2390
    %4224 = vmatpush.bf16.msra.mxu0 %v2378
    %4225 = vmatpush.bf16.msra.mxu0 %v2366
    %4226 = vmatmul.bf16.gmra.mxu0 %v4122
    %v4227 = vpop.f32.mrf.mxu0
    %v4228 = vadd.f32 %v4215, %v4227
    %v4229 = vpop.f32.mrf.mxu0
    %4230 = vdwg.mxu0
    %4231 = vmatpush.bf16.msra.mxu0 %v2163
    %4232 = vmatpush.bf16.msra.mxu0 %v2151
    %4233 = vmatpush.bf16.msra.mxu0 %v2139
    %4234 = vmatpush.bf16.msra.mxu0 %v2127
    %4235 = vmatpush.bf16.msra.mxu0 %v2115
    %4236 = vmatpush.bf16.msra.mxu0 %v2103
    %4237 = vmatpush.bf16.msra.mxu0 %v2091
    %4238 = vmatpush.bf16.msra.mxu0 %v2079
    %4239 = vmatmul.bf16.gmra.mxu0 %v4119
    %v4240 = vpop.f32.mrf.mxu0
    %v4241 = vadd.f32 %v889, %v4240
    %v4242 = vpop.f32.mrf.mxu0
    %4243 = vdwg.mxu0
    %4244 = vmatpush.bf16.msra.mxu0 %v2259
    %4245 = vmatpush.bf16.msra.mxu0 %v2247
    %4246 = vmatpush.bf16.msra.mxu0 %v2235
    %4247 = vmatpush.bf16.msra.mxu0 %v2223
    %4248 = vmatpush.bf16.msra.mxu0 %v2211
    %4249 = vmatpush.bf16.msra.mxu0 %v2199
    %4250 = vmatpush.bf16.msra.mxu0 %v2187
    %4251 = vmatpush.bf16.msra.mxu0 %v2175
    %4252 = vmatmul.bf16.gmra.mxu0 %v4120
    %v4253 = vpop.f32.mrf.mxu0
    %v4254 = vadd.f32 %v4241, %v4253
    %v4255 = vpop.f32.mrf.mxu0
    %4256 = vdwg.mxu0
    %4257 = vmatpush.bf16.msra.mxu0 %v2355
    %4258 = vmatpush.bf16.msra.mxu0 %v2343
    %4259 = vmatpush.bf16.msra.mxu0 %v2331
    %4260 = vmatpush.bf16.msra.mxu0 %v2319
    %4261 = vmatpush.bf16.msra.mxu0 %v2307
    %4262 = vmatpush.bf16.msra.mxu0 %v2295
    %4263 = vmatpush.bf16.msra.mxu0 %v2283
    %4264 = vmatpush.bf16.msra.mxu0 %v2271
    %4265 = vmatmul.bf16.gmra.mxu0 %v4121
    %v4266 = vpop.f32.mrf.mxu0
    %v4267 = vadd.f32 %v4254, %v4266
    %v4268 = vpop.f32.mrf.mxu0
    %4269 = vdwg.mxu0
    %4270 = vmatpush.bf16.msra.mxu0 %v2451
    %4271 = vmatpush.bf16.msra.mxu0 %v2439
    %4272 = vmatpush.bf16.msra.mxu0 %v2427
    %4273 = vmatpush.bf16.msra.mxu0 %v2415
    %4274 = vmatpush.bf16.msra.mxu0 %v2403
    %4275 = vmatpush.bf16.msra.mxu0 %v2391
    %4276 = vmatpush.bf16.msra.mxu0 %v2379
    %4277 = vmatpush.bf16.msra.mxu0 %v2367
    %4278 = vmatmul.bf16.gmra.mxu0 %v4122
    %v4279 = vpop.f32.mrf.mxu0
    %v4280 = vadd.f32 %v4267, %v4279
    %v4281 = vpop.f32.mrf.mxu0
    %4282 = vdwg.mxu0
    %4283 = vmatpush.bf16.msra.mxu0 %v2164
    %4284 = vmatpush.bf16.msra.mxu0 %v2152
    %4285 = vmatpush.bf16.msra.mxu0 %v2140
    %4286 = vmatpush.bf16.msra.mxu0 %v2128
    %4287 = vmatpush.bf16.msra.mxu0 %v2116
    %4288 = vmatpush.bf16.msra.mxu0 %v2104
    %4289 = vmatpush.bf16.msra.mxu0 %v2092
    %4290 = vmatpush.bf16.msra.mxu0 %v2080
    %4291 = vmatmul.bf16.gmra.mxu0 %v4119
    %v4292 = vpop.f32.mrf.mxu0
    %v4293 = vadd.f32 %v890, %v4292
    %v4294 = vpop.f32.mrf.mxu0
    %4295 = vdwg.mxu0
    %4296 = vmatpush.bf16.msra.mxu0 %v2260
    %4297 = vmatpush.bf16.msra.mxu0 %v2248
    %4298 = vmatpush.bf16.msra.mxu0 %v2236
    %4299 = vmatpush.bf16.msra.mxu0 %v2224
    %4300 = vmatpush.bf16.msra.mxu0 %v2212
    %4301 = vmatpush.bf16.msra.mxu0 %v2200
    %4302 = vmatpush.bf16.msra.mxu0 %v2188
    %4303 = vmatpush.bf16.msra.mxu0 %v2176
    %4304 = vmatmul.bf16.gmra.mxu0 %v4120
    %v4305 = vpop.f32.mrf.mxu0
    %v4306 = vadd.f32 %v4293, %v4305
    %v4307 = vpop.f32.mrf.mxu0
    %4308 = vdwg.mxu0
    %4309 = vmatpush.bf16.msra.mxu0 %v2356
    %4310 = vmatpush.bf16.msra.mxu0 %v2344
    %4311 = vmatpush.bf16.msra.mxu0 %v2332
    %4312 = vmatpush.bf16.msra.mxu0 %v2320
    %4313 = vmatpush.bf16.msra.mxu0 %v2308
    %4314 = vmatpush.bf16.msra.mxu0 %v2296
    %4315 = vmatpush.bf16.msra.mxu0 %v2284
    %4316 = vmatpush.bf16.msra.mxu0 %v2272
    %4317 = vmatmul.bf16.gmra.mxu0 %v4121
    %v4318 = vpop.f32.mrf.mxu0
    %v4319 = vadd.f32 %v4306, %v4318
    %v4320 = vpop.f32.mrf.mxu0
    %4321 = vdwg.mxu0
    %4322 = vmatpush.bf16.msra.mxu0 %v2452
    %4323 = vmatpush.bf16.msra.mxu0 %v2440
    %4324 = vmatpush.bf16.msra.mxu0 %v2428
    %4325 = vmatpush.bf16.msra.mxu0 %v2416
    %4326 = vmatpush.bf16.msra.mxu0 %v2404
    %4327 = vmatpush.bf16.msra.mxu0 %v2392
    %4328 = vmatpush.bf16.msra.mxu0 %v2380
    %4329 = vmatpush.bf16.msra.mxu0 %v2368
    %4330 = vmatmul.bf16.gmra.mxu0 %v4122
    %v4331 = vpop.f32.mrf.mxu0
    %v4332 = vadd.f32 %v4319, %v4331
    %v4333 = vpop.f32.mrf.mxu0
    %4334 = vdwg.mxu0
    %4335 = vmatpush.bf16.msra.mxu0 %v2165
    %4336 = vmatpush.bf16.msra.mxu0 %v2153
    %4337 = vmatpush.bf16.msra.mxu0 %v2141
    %4338 = vmatpush.bf16.msra.mxu0 %v2129
    %4339 = vmatpush.bf16.msra.mxu0 %v2117
    %4340 = vmatpush.bf16.msra.mxu0 %v2105
    %4341 = vmatpush.bf16.msra.mxu0 %v2093
    %4342 = vmatpush.bf16.msra.mxu0 %v2081
    %4343 = vmatmul.bf16.gmra.mxu0 %v4119
    %v4344 = vpop.f32.mrf.mxu0
    %v4345 = vadd.f32 %v891, %v4344
    %v4346 = vpop.f32.mrf.mxu0
    %4347 = vdwg.mxu0
    %4348 = vmatpush.bf16.msra.mxu0 %v2261
    %4349 = vmatpush.bf16.msra.mxu0 %v2249
    %4350 = vmatpush.bf16.msra.mxu0 %v2237
    %4351 = vmatpush.bf16.msra.mxu0 %v2225
    %4352 = vmatpush.bf16.msra.mxu0 %v2213
    %4353 = vmatpush.bf16.msra.mxu0 %v2201
    %4354 = vmatpush.bf16.msra.mxu0 %v2189
    %4355 = vmatpush.bf16.msra.mxu0 %v2177
    %4356 = vmatmul.bf16.gmra.mxu0 %v4120
    %v4357 = vpop.f32.mrf.mxu0
    %v4358 = vadd.f32 %v4345, %v4357
    %v4359 = vpop.f32.mrf.mxu0
    %4360 = vdwg.mxu0
    %4361 = vmatpush.bf16.msra.mxu0 %v2357
    %4362 = vmatpush.bf16.msra.mxu0 %v2345
    %4363 = vmatpush.bf16.msra.mxu0 %v2333
    %4364 = vmatpush.bf16.msra.mxu0 %v2321
    %4365 = vmatpush.bf16.msra.mxu0 %v2309
    %4366 = vmatpush.bf16.msra.mxu0 %v2297
    %4367 = vmatpush.bf16.msra.mxu0 %v2285
    %4368 = vmatpush.bf16.msra.mxu0 %v2273
    %4369 = vmatmul.bf16.gmra.mxu0 %v4121
    %v4370 = vpop.f32.mrf.mxu0
    %v4371 = vadd.f32 %v4358, %v4370
    %v4372 = vpop.f32.mrf.mxu0
    %4373 = vdwg.mxu0
    %4374 = vmatpush.bf16.msra.mxu0 %v2453
    %4375 = vmatpush.bf16.msra.mxu0 %v2441
    %4376 = vmatpush.bf16.msra.mxu0 %v2429
    %4377 = vmatpush.bf16.msra.mxu0 %v2417
    %4378 = vmatpush.bf16.msra.mxu0 %v2405
    %4379 = vmatpush.bf16.msra.mxu0 %v2393
    %4380 = vmatpush.bf16.msra.mxu0 %v2381
    %4381 = vmatpush.bf16.msra.mxu0 %v2369
    %4382 = vmatmul.bf16.gmra.mxu0 %v4122
    %v4383 = vpop.f32.mrf.mxu0
    %v4384 = vadd.f32 %v4371, %v4383
    %v4385 = vpop.f32.mrf.mxu0
    %4386 = vdwg.mxu0
    %4387 = vmatpush.bf16.msra.mxu0 %v2166
    %4388 = vmatpush.bf16.msra.mxu0 %v2154
    %4389 = vmatpush.bf16.msra.mxu0 %v2142
    %4390 = vmatpush.bf16.msra.mxu0 %v2130
    %4391 = vmatpush.bf16.msra.mxu0 %v2118
    %4392 = vmatpush.bf16.msra.mxu0 %v2106
    %4393 = vmatpush.bf16.msra.mxu0 %v2094
    %4394 = vmatpush.bf16.msra.mxu0 %v2082
    %4395 = vmatmul.bf16.gmra.mxu0 %v4119
    %v4396 = vpop.f32.mrf.mxu0
    %v4397 = vadd.f32 %v892, %v4396
    %v4398 = vpop.f32.mrf.mxu0
    %4399 = vdwg.mxu0
    %4400 = vmatpush.bf16.msra.mxu0 %v2262
    %4401 = vmatpush.bf16.msra.mxu0 %v2250
    %4402 = vmatpush.bf16.msra.mxu0 %v2238
    %4403 = vmatpush.bf16.msra.mxu0 %v2226
    %4404 = vmatpush.bf16.msra.mxu0 %v2214
    %4405 = vmatpush.bf16.msra.mxu0 %v2202
    %4406 = vmatpush.bf16.msra.mxu0 %v2190
    %4407 = vmatpush.bf16.msra.mxu0 %v2178
    %4408 = vmatmul.bf16.gmra.mxu0 %v4120
    %v4409 = vpop.f32.mrf.mxu0
    %v4410 = vadd.f32 %v4397, %v4409
    %v4411 = vpop.f32.mrf.mxu0
    %4412 = vdwg.mxu0
    %4413 = vmatpush.bf16.msra.mxu0 %v2358
    %4414 = vmatpush.bf16.msra.mxu0 %v2346
    %4415 = vmatpush.bf16.msra.mxu0 %v2334
    %4416 = vmatpush.bf16.msra.mxu0 %v2322
    %4417 = vmatpush.bf16.msra.mxu0 %v2310
    %4418 = vmatpush.bf16.msra.mxu0 %v2298
    %4419 = vmatpush.bf16.msra.mxu0 %v2286
    %4420 = vmatpush.bf16.msra.mxu0 %v2274
    %4421 = vmatmul.bf16.gmra.mxu0 %v4121
    %v4422 = vpop.f32.mrf.mxu0
    %v4423 = vadd.f32 %v4410, %v4422
    %v4424 = vpop.f32.mrf.mxu0
    %4425 = vdwg.mxu0
    %4426 = vmatpush.bf16.msra.mxu0 %v2454
    %4427 = vmatpush.bf16.msra.mxu0 %v2442
    %4428 = vmatpush.bf16.msra.mxu0 %v2430
    %4429 = vmatpush.bf16.msra.mxu0 %v2418
    %4430 = vmatpush.bf16.msra.mxu0 %v2406
    %4431 = vmatpush.bf16.msra.mxu0 %v2394
    %4432 = vmatpush.bf16.msra.mxu0 %v2382
    %4433 = vmatpush.bf16.msra.mxu0 %v2370
    %4434 = vmatmul.bf16.gmra.mxu0 %v4122
    %v4435 = vpop.f32.mrf.mxu0
    %v4436 = vadd.f32 %v4423, %v4435
    %v4437 = vpop.f32.mrf.mxu0
    %4438 = vdwg.mxu0
    %4439 = vmatpush.bf16.msra.mxu0 %v2167
    %4440 = vmatpush.bf16.msra.mxu0 %v2155
    %4441 = vmatpush.bf16.msra.mxu0 %v2143
    %4442 = vmatpush.bf16.msra.mxu0 %v2131
    %4443 = vmatpush.bf16.msra.mxu0 %v2119
    %4444 = vmatpush.bf16.msra.mxu0 %v2107
    %4445 = vmatpush.bf16.msra.mxu0 %v2095
    %4446 = vmatpush.bf16.msra.mxu0 %v2083
    %4447 = vmatmul.bf16.gmra.mxu0 %v4119
    %v4448 = vpop.f32.mrf.mxu0
    %v4449 = vadd.f32 %v893, %v4448
    %v4450 = vpop.f32.mrf.mxu0
    %4451 = vdwg.mxu0
    %4452 = vmatpush.bf16.msra.mxu0 %v2263
    %4453 = vmatpush.bf16.msra.mxu0 %v2251
    %4454 = vmatpush.bf16.msra.mxu0 %v2239
    %4455 = vmatpush.bf16.msra.mxu0 %v2227
    %4456 = vmatpush.bf16.msra.mxu0 %v2215
    %4457 = vmatpush.bf16.msra.mxu0 %v2203
    %4458 = vmatpush.bf16.msra.mxu0 %v2191
    %4459 = vmatpush.bf16.msra.mxu0 %v2179
    %4460 = vmatmul.bf16.gmra.mxu0 %v4120
    %v4461 = vpop.f32.mrf.mxu0
    %v4462 = vadd.f32 %v4449, %v4461
    %v4463 = vpop.f32.mrf.mxu0
    %4464 = vdwg.mxu0
    %4465 = vmatpush.bf16.msra.mxu0 %v2359
    %4466 = vmatpush.bf16.msra.mxu0 %v2347
    %4467 = vmatpush.bf16.msra.mxu0 %v2335
    %4468 = vmatpush.bf16.msra.mxu0 %v2323
    %4469 = vmatpush.bf16.msra.mxu0 %v2311
    %4470 = vmatpush.bf16.msra.mxu0 %v2299
    %4471 = vmatpush.bf16.msra.mxu0 %v2287
    %4472 = vmatpush.bf16.msra.mxu0 %v2275
    %4473 = vmatmul.bf16.gmra.mxu0 %v4121
    %v4474 = vpop.f32.mrf.mxu0
    %v4475 = vadd.f32 %v4462, %v4474
    %v4476 = vpop.f32.mrf.mxu0
    %4477 = vdwg.mxu0
    %4478 = vmatpush.bf16.msra.mxu0 %v2455
    %4479 = vmatpush.bf16.msra.mxu0 %v2443
    %4480 = vmatpush.bf16.msra.mxu0 %v2431
    %4481 = vmatpush.bf16.msra.mxu0 %v2419
    %4482 = vmatpush.bf16.msra.mxu0 %v2407
    %4483 = vmatpush.bf16.msra.mxu0 %v2395
    %4484 = vmatpush.bf16.msra.mxu0 %v2383
    %4485 = vmatpush.bf16.msra.mxu0 %v2371
    %4486 = vmatmul.bf16.gmra.mxu0 %v4122
    %v4487 = vpop.f32.mrf.mxu0
    %v4488 = vadd.f32 %v4475, %v4487
    %v4489 = vpop.f32.mrf.mxu0
    %4490 = vdwg.mxu0
    %4491 = vmatpush.bf16.msra.mxu0 %v2168
    %4492 = vmatpush.bf16.msra.mxu0 %v2156
    %4493 = vmatpush.bf16.msra.mxu0 %v2144
    %4494 = vmatpush.bf16.msra.mxu0 %v2132
    %4495 = vmatpush.bf16.msra.mxu0 %v2120
    %4496 = vmatpush.bf16.msra.mxu0 %v2108
    %4497 = vmatpush.bf16.msra.mxu0 %v2096
    %4498 = vmatpush.bf16.msra.mxu0 %v2084
    %4499 = vmatmul.bf16.gmra.mxu0 %v4119
    %v4500 = vpop.f32.mrf.mxu0
    %v4501 = vadd.f32 %v894, %v4500
    %v4502 = vpop.f32.mrf.mxu0
    %4503 = vdwg.mxu0
    %4504 = vmatpush.bf16.msra.mxu0 %v2264
    %4505 = vmatpush.bf16.msra.mxu0 %v2252
    %4506 = vmatpush.bf16.msra.mxu0 %v2240
    %4507 = vmatpush.bf16.msra.mxu0 %v2228
    %4508 = vmatpush.bf16.msra.mxu0 %v2216
    %4509 = vmatpush.bf16.msra.mxu0 %v2204
    %4510 = vmatpush.bf16.msra.mxu0 %v2192
    %4511 = vmatpush.bf16.msra.mxu0 %v2180
    %4512 = vmatmul.bf16.gmra.mxu0 %v4120
    %v4513 = vpop.f32.mrf.mxu0
    %v4514 = vadd.f32 %v4501, %v4513
    %v4515 = vpop.f32.mrf.mxu0
    %4516 = vdwg.mxu0
    %4517 = vmatpush.bf16.msra.mxu0 %v2360
    %4518 = vmatpush.bf16.msra.mxu0 %v2348
    %4519 = vmatpush.bf16.msra.mxu0 %v2336
    %4520 = vmatpush.bf16.msra.mxu0 %v2324
    %4521 = vmatpush.bf16.msra.mxu0 %v2312
    %4522 = vmatpush.bf16.msra.mxu0 %v2300
    %4523 = vmatpush.bf16.msra.mxu0 %v2288
    %4524 = vmatpush.bf16.msra.mxu0 %v2276
    %4525 = vmatmul.bf16.gmra.mxu0 %v4121
    %v4526 = vpop.f32.mrf.mxu0
    %v4527 = vadd.f32 %v4514, %v4526
    %v4528 = vpop.f32.mrf.mxu0
    %4529 = vdwg.mxu0
    %4530 = vmatpush.bf16.msra.mxu0 %v2456
    %4531 = vmatpush.bf16.msra.mxu0 %v2444
    %4532 = vmatpush.bf16.msra.mxu0 %v2432
    %4533 = vmatpush.bf16.msra.mxu0 %v2420
    %4534 = vmatpush.bf16.msra.mxu0 %v2408
    %4535 = vmatpush.bf16.msra.mxu0 %v2396
    %4536 = vmatpush.bf16.msra.mxu0 %v2384
    %4537 = vmatpush.bf16.msra.mxu0 %v2372
    %4538 = vmatmul.bf16.gmra.mxu0 %v4122
    %v4539 = vpop.f32.mrf.mxu0
    %v4540 = vadd.f32 %v4527, %v4539
    %v4541 = vpop.f32.mrf.mxu0
    %4542 = vdwg.mxu0
    %4543 = vmatpush.bf16.msra.mxu0 %v2169
    %4544 = vmatpush.bf16.msra.mxu0 %v2157
    %4545 = vmatpush.bf16.msra.mxu0 %v2145
    %4546 = vmatpush.bf16.msra.mxu0 %v2133
    %4547 = vmatpush.bf16.msra.mxu0 %v2121
    %4548 = vmatpush.bf16.msra.mxu0 %v2109
    %4549 = vmatpush.bf16.msra.mxu0 %v2097
    %4550 = vmatpush.bf16.msra.mxu0 %v2085
    %4551 = vmatmul.bf16.gmra.mxu0 %v4119
    %v4552 = vpop.f32.mrf.mxu0
    %v4553 = vadd.f32 %v895, %v4552
    %v4554 = vpop.f32.mrf.mxu0
    %4555 = vdwg.mxu0
    %4556 = vmatpush.bf16.msra.mxu0 %v2265
    %4557 = vmatpush.bf16.msra.mxu0 %v2253
    %4558 = vmatpush.bf16.msra.mxu0 %v2241
    %4559 = vmatpush.bf16.msra.mxu0 %v2229
    %4560 = vmatpush.bf16.msra.mxu0 %v2217
    %4561 = vmatpush.bf16.msra.mxu0 %v2205
    %4562 = vmatpush.bf16.msra.mxu0 %v2193
    %4563 = vmatpush.bf16.msra.mxu0 %v2181
    %4564 = vmatmul.bf16.gmra.mxu0 %v4120
    %v4565 = vpop.f32.mrf.mxu0
    %v4566 = vadd.f32 %v4553, %v4565
    %v4567 = vpop.f32.mrf.mxu0
    %4568 = vdwg.mxu0
    %4569 = vmatpush.bf16.msra.mxu0 %v2361
    %4570 = vmatpush.bf16.msra.mxu0 %v2349
    %4571 = vmatpush.bf16.msra.mxu0 %v2337
    %4572 = vmatpush.bf16.msra.mxu0 %v2325
    %4573 = vmatpush.bf16.msra.mxu0 %v2313
    %4574 = vmatpush.bf16.msra.mxu0 %v2301
    %4575 = vmatpush.bf16.msra.mxu0 %v2289
    %4576 = vmatpush.bf16.msra.mxu0 %v2277
    %4577 = vmatmul.bf16.gmra.mxu0 %v4121
    %v4578 = vpop.f32.mrf.mxu0
    %v4579 = vadd.f32 %v4566, %v4578
    %v4580 = vpop.f32.mrf.mxu0
    %4581 = vdwg.mxu0
    %4582 = vmatpush.bf16.msra.mxu0 %v2457
    %4583 = vmatpush.bf16.msra.mxu0 %v2445
    %4584 = vmatpush.bf16.msra.mxu0 %v2433
    %4585 = vmatpush.bf16.msra.mxu0 %v2421
    %4586 = vmatpush.bf16.msra.mxu0 %v2409
    %4587 = vmatpush.bf16.msra.mxu0 %v2397
    %4588 = vmatpush.bf16.msra.mxu0 %v2385
    %4589 = vmatpush.bf16.msra.mxu0 %v2373
    %4590 = vmatmul.bf16.gmra.mxu0 %v4122
    %v4591 = vpop.f32.mrf.mxu0
    %v4592 = vadd.f32 %v4579, %v4591
    %v4593 = vpop.f32.mrf.mxu0
    %4594 = vdwg.mxu0
    %4595 = vmatpush.bf16.msra.mxu0 %v2170
    %4596 = vmatpush.bf16.msra.mxu0 %v2158
    %4597 = vmatpush.bf16.msra.mxu0 %v2146
    %4598 = vmatpush.bf16.msra.mxu0 %v2134
    %4599 = vmatpush.bf16.msra.mxu0 %v2122
    %4600 = vmatpush.bf16.msra.mxu0 %v2110
    %4601 = vmatpush.bf16.msra.mxu0 %v2098
    %4602 = vmatpush.bf16.msra.mxu0 %v2086
    %4603 = vmatmul.bf16.gmra.mxu0 %v4119
    %v4604 = vpop.f32.mrf.mxu0
    %v4605 = vadd.f32 %v896, %v4604
    %v4606 = vpop.f32.mrf.mxu0
    %4607 = vdwg.mxu0
    %4608 = vmatpush.bf16.msra.mxu0 %v2266
    %4609 = vmatpush.bf16.msra.mxu0 %v2254
    %4610 = vmatpush.bf16.msra.mxu0 %v2242
    %4611 = vmatpush.bf16.msra.mxu0 %v2230
    %4612 = vmatpush.bf16.msra.mxu0 %v2218
    %4613 = vmatpush.bf16.msra.mxu0 %v2206
    %4614 = vmatpush.bf16.msra.mxu0 %v2194
    %4615 = vmatpush.bf16.msra.mxu0 %v2182
    %4616 = vmatmul.bf16.gmra.mxu0 %v4120
    %v4617 = vpop.f32.mrf.mxu0
    %v4618 = vadd.f32 %v4605, %v4617
    %v4619 = vpop.f32.mrf.mxu0
    %4620 = vdwg.mxu0
    %4621 = vmatpush.bf16.msra.mxu0 %v2362
    %4622 = vmatpush.bf16.msra.mxu0 %v2350
    %4623 = vmatpush.bf16.msra.mxu0 %v2338
    %4624 = vmatpush.bf16.msra.mxu0 %v2326
    %4625 = vmatpush.bf16.msra.mxu0 %v2314
    %4626 = vmatpush.bf16.msra.mxu0 %v2302
    %4627 = vmatpush.bf16.msra.mxu0 %v2290
    %4628 = vmatpush.bf16.msra.mxu0 %v2278
    %4629 = vmatmul.bf16.gmra.mxu0 %v4121
    %v4630 = vpop.f32.mrf.mxu0
    %v4631 = vadd.f32 %v4618, %v4630
    %v4632 = vpop.f32.mrf.mxu0
    %4633 = vdwg.mxu0
    %4634 = vmatpush.bf16.msra.mxu0 %v2458
    %4635 = vmatpush.bf16.msra.mxu0 %v2446
    %4636 = vmatpush.bf16.msra.mxu0 %v2434
    %4637 = vmatpush.bf16.msra.mxu0 %v2422
    %4638 = vmatpush.bf16.msra.mxu0 %v2410
    %4639 = vmatpush.bf16.msra.mxu0 %v2398
    %4640 = vmatpush.bf16.msra.mxu0 %v2386
    %4641 = vmatpush.bf16.msra.mxu0 %v2374
    %4642 = vmatmul.bf16.gmra.mxu0 %v4122
    %v4643 = vpop.f32.mrf.mxu0
    %v4644 = vadd.f32 %v4631, %v4643
    %v4645 = vpop.f32.mrf.mxu0
    %4646 = vdwg.mxu0
    %4647 = vmatpush.bf16.msra.mxu0 %v2171
    %4648 = vmatpush.bf16.msra.mxu0 %v2159
    %4649 = vmatpush.bf16.msra.mxu0 %v2147
    %4650 = vmatpush.bf16.msra.mxu0 %v2135
    %4651 = vmatpush.bf16.msra.mxu0 %v2123
    %4652 = vmatpush.bf16.msra.mxu0 %v2111
    %4653 = vmatpush.bf16.msra.mxu0 %v2099
    %4654 = vmatpush.bf16.msra.mxu0 %v2087
    %4655 = vmatmul.bf16.gmra.mxu0 %v4119
    %v4656 = vpop.f32.mrf.mxu0
    %v4657 = vadd.f32 %v897, %v4656
    %v4658 = vpop.f32.mrf.mxu0
    %4659 = vdwg.mxu0
    %4660 = vmatpush.bf16.msra.mxu0 %v2267
    %4661 = vmatpush.bf16.msra.mxu0 %v2255
    %4662 = vmatpush.bf16.msra.mxu0 %v2243
    %4663 = vmatpush.bf16.msra.mxu0 %v2231
    %4664 = vmatpush.bf16.msra.mxu0 %v2219
    %4665 = vmatpush.bf16.msra.mxu0 %v2207
    %4666 = vmatpush.bf16.msra.mxu0 %v2195
    %4667 = vmatpush.bf16.msra.mxu0 %v2183
    %4668 = vmatmul.bf16.gmra.mxu0 %v4120
    %v4669 = vpop.f32.mrf.mxu0
    %v4670 = vadd.f32 %v4657, %v4669
    %v4671 = vpop.f32.mrf.mxu0
    %4672 = vdwg.mxu0
    %4673 = vmatpush.bf16.msra.mxu0 %v2363
    %4674 = vmatpush.bf16.msra.mxu0 %v2351
    %4675 = vmatpush.bf16.msra.mxu0 %v2339
    %4676 = vmatpush.bf16.msra.mxu0 %v2327
    %4677 = vmatpush.bf16.msra.mxu0 %v2315
    %4678 = vmatpush.bf16.msra.mxu0 %v2303
    %4679 = vmatpush.bf16.msra.mxu0 %v2291
    %4680 = vmatpush.bf16.msra.mxu0 %v2279
    %4681 = vmatmul.bf16.gmra.mxu0 %v4121
    %v4682 = vpop.f32.mrf.mxu0
    %v4683 = vadd.f32 %v4670, %v4682
    %v4684 = vpop.f32.mrf.mxu0
    %4685 = vdwg.mxu0
    %4686 = vmatpush.bf16.msra.mxu0 %v2459
    %4687 = vmatpush.bf16.msra.mxu0 %v2447
    %4688 = vmatpush.bf16.msra.mxu0 %v2435
    %4689 = vmatpush.bf16.msra.mxu0 %v2423
    %4690 = vmatpush.bf16.msra.mxu0 %v2411
    %4691 = vmatpush.bf16.msra.mxu0 %v2399
    %4692 = vmatpush.bf16.msra.mxu0 %v2387
    %4693 = vmatpush.bf16.msra.mxu0 %v2375
    %4694 = vmatmul.bf16.gmra.mxu0 %v4122
    %v4695 = vpop.f32.mrf.mxu0
    %v4696 = vadd.f32 %v4683, %v4695
    %v4697 = vpop.f32.mrf.mxu0
    %4698 = vdwg.mxu0
    %4699 = vmatpush.bf16.msra.mxu0 %v2172
    %4700 = vmatpush.bf16.msra.mxu0 %v2160
    %4701 = vmatpush.bf16.msra.mxu0 %v2148
    %4702 = vmatpush.bf16.msra.mxu0 %v2136
    %4703 = vmatpush.bf16.msra.mxu0 %v2124
    %4704 = vmatpush.bf16.msra.mxu0 %v2112
    %4705 = vmatpush.bf16.msra.mxu0 %v2100
    %4706 = vmatpush.bf16.msra.mxu0 %v2088
    %4707 = vmatmul.bf16.gmra.mxu0 %v4119
    %v4708 = vpop.f32.mrf.mxu0
    %v4709 = vadd.f32 %v898, %v4708
    %v4710 = vpop.f32.mrf.mxu0
    %4711 = vdwg.mxu0
    %4712 = vmatpush.bf16.msra.mxu0 %v2268
    %4713 = vmatpush.bf16.msra.mxu0 %v2256
    %4714 = vmatpush.bf16.msra.mxu0 %v2244
    %4715 = vmatpush.bf16.msra.mxu0 %v2232
    %4716 = vmatpush.bf16.msra.mxu0 %v2220
    %4717 = vmatpush.bf16.msra.mxu0 %v2208
    %4718 = vmatpush.bf16.msra.mxu0 %v2196
    %4719 = vmatpush.bf16.msra.mxu0 %v2184
    %4720 = vmatmul.bf16.gmra.mxu0 %v4120
    %v4721 = vpop.f32.mrf.mxu0
    %v4722 = vadd.f32 %v4709, %v4721
    %v4723 = vpop.f32.mrf.mxu0
    %4724 = vdwg.mxu0
    %4725 = vmatpush.bf16.msra.mxu0 %v2364
    %4726 = vmatpush.bf16.msra.mxu0 %v2352
    %4727 = vmatpush.bf16.msra.mxu0 %v2340
    %4728 = vmatpush.bf16.msra.mxu0 %v2328
    %4729 = vmatpush.bf16.msra.mxu0 %v2316
    %4730 = vmatpush.bf16.msra.mxu0 %v2304
    %4731 = vmatpush.bf16.msra.mxu0 %v2292
    %4732 = vmatpush.bf16.msra.mxu0 %v2280
    %4733 = vmatmul.bf16.gmra.mxu0 %v4121
    %v4734 = vpop.f32.mrf.mxu0
    %v4735 = vadd.f32 %v4722, %v4734
    %v4736 = vpop.f32.mrf.mxu0
    %4737 = vdwg.mxu0
    %4738 = vmatpush.bf16.msra.mxu0 %v2460
    %4739 = vmatpush.bf16.msra.mxu0 %v2448
    %4740 = vmatpush.bf16.msra.mxu0 %v2436
    %4741 = vmatpush.bf16.msra.mxu0 %v2424
    %4742 = vmatpush.bf16.msra.mxu0 %v2412
    %4743 = vmatpush.bf16.msra.mxu0 %v2400
    %4744 = vmatpush.bf16.msra.mxu0 %v2388
    %4745 = vmatpush.bf16.msra.mxu0 %v2376
    %4746 = vmatmul.bf16.gmra.mxu0 %v4122
    %v4747 = vpop.f32.mrf.mxu0
    %v4748 = vadd.f32 %v4735, %v4747
    %v4749 = vpop.f32.mrf.mxu0
    %4750 = vdwg.mxu0
    %s4751 = scalar_lea.vmem %s0, 48
    %v4752 = vld [vmem:[%s4751] sm:$0xff]
    %v4753 = vld [vmem:[%s4751 + $0x8] sm:$0xff]
    %v4756 = vunpack.c.l.b16 %v4752
    %v4757 = vunpack.c.h.b16 %v4752
    %v4758 = vunpack.c.l.b16 %v4753
    %v4759 = vunpack.c.h.b16 %v4753
    %v4760 = vpack.c.b16 %v4756, %v4756
    %v4761 = vpack.c.b16 %v4757, %v4757
    %v4762 = vpack.c.b16 %v4758, %v4758
    %v4763 = vpack.c.b16 %v4759, %v4759
    %4768 = vmatpush.bf16.msra.mxu0 %v2161
    %4769 = vmatpush.bf16.msra.mxu0 %v2149
    %4770 = vmatpush.bf16.msra.mxu0 %v2137
    %4771 = vmatpush.bf16.msra.mxu0 %v2125
    %4772 = vmatpush.bf16.msra.mxu0 %v2113
    %4773 = vmatpush.bf16.msra.mxu0 %v2101
    %4774 = vmatpush.bf16.msra.mxu0 %v2089
    %4775 = vmatpush.bf16.msra.mxu0 %v2077
    %4776 = vmatmul.bf16.gmra.mxu0 %v4760
    %v4777 = vpop.f32.mrf.mxu0
    %v4778 = vadd.f32 %v887, %v4777
    %v4779 = vpop.f32.mrf.mxu0
    %4780 = vdwg.mxu0
    %4781 = vmatpush.bf16.msra.mxu0 %v2257
    %4782 = vmatpush.bf16.msra.mxu0 %v2245
    %4783 = vmatpush.bf16.msra.mxu0 %v2233
    %4784 = vmatpush.bf16.msra.mxu0 %v2221
    %4785 = vmatpush.bf16.msra.mxu0 %v2209
    %4786 = vmatpush.bf16.msra.mxu0 %v2197
    %4787 = vmatpush.bf16.msra.mxu0 %v2185
    %4788 = vmatpush.bf16.msra.mxu0 %v2173
    %4789 = vmatmul.bf16.gmra.mxu0 %v4761
    %v4790 = vpop.f32.mrf.mxu0
    %v4791 = vadd.f32 %v4778, %v4790
    %v4792 = vpop.f32.mrf.mxu0
    %4793 = vdwg.mxu0
    %4794 = vmatpush.bf16.msra.mxu0 %v2353
    %4795 = vmatpush.bf16.msra.mxu0 %v2341
    %4796 = vmatpush.bf16.msra.mxu0 %v2329
    %4797 = vmatpush.bf16.msra.mxu0 %v2317
    %4798 = vmatpush.bf16.msra.mxu0 %v2305
    %4799 = vmatpush.bf16.msra.mxu0 %v2293
    %4800 = vmatpush.bf16.msra.mxu0 %v2281
    %4801 = vmatpush.bf16.msra.mxu0 %v2269
    %4802 = vmatmul.bf16.gmra.mxu0 %v4762
    %v4803 = vpop.f32.mrf.mxu0
    %v4804 = vadd.f32 %v4791, %v4803
    %v4805 = vpop.f32.mrf.mxu0
    %4806 = vdwg.mxu0
    %4807 = vmatpush.bf16.msra.mxu0 %v2449
    %4808 = vmatpush.bf16.msra.mxu0 %v2437
    %4809 = vmatpush.bf16.msra.mxu0 %v2425
    %4810 = vmatpush.bf16.msra.mxu0 %v2413
    %4811 = vmatpush.bf16.msra.mxu0 %v2401
    %4812 = vmatpush.bf16.msra.mxu0 %v2389
    %4813 = vmatpush.bf16.msra.mxu0 %v2377
    %4814 = vmatpush.bf16.msra.mxu0 %v2365
    %4815 = vmatmul.bf16.gmra.mxu0 %v4763
    %v4816 = vpop.f32.mrf.mxu0
    %v4817 = vadd.f32 %v4804, %v4816
    %v4818 = vpop.f32.mrf.mxu0
    %4819 = vdwg.mxu0
    %4820 = vmatpush.bf16.msra.mxu0 %v2162
    %4821 = vmatpush.bf16.msra.mxu0 %v2150
    %4822 = vmatpush.bf16.msra.mxu0 %v2138
    %4823 = vmatpush.bf16.msra.mxu0 %v2126
    %4824 = vmatpush.bf16.msra.mxu0 %v2114
    %4825 = vmatpush.bf16.msra.mxu0 %v2102
    %4826 = vmatpush.bf16.msra.mxu0 %v2090
    %4827 = vmatpush.bf16.msra.mxu0 %v2078
    %4828 = vmatmul.bf16.gmra.mxu0 %v4760
    %v4829 = vpop.f32.mrf.mxu0
    %v4830 = vadd.f32 %v888, %v4829
    %v4831 = vpop.f32.mrf.mxu0
    %4832 = vdwg.mxu0
    %4833 = vmatpush.bf16.msra.mxu0 %v2258
    %4834 = vmatpush.bf16.msra.mxu0 %v2246
    %4835 = vmatpush.bf16.msra.mxu0 %v2234
    %4836 = vmatpush.bf16.msra.mxu0 %v2222
    %4837 = vmatpush.bf16.msra.mxu0 %v2210
    %4838 = vmatpush.bf16.msra.mxu0 %v2198
    %4839 = vmatpush.bf16.msra.mxu0 %v2186
    %4840 = vmatpush.bf16.msra.mxu0 %v2174
    %4841 = vmatmul.bf16.gmra.mxu0 %v4761
    %v4842 = vpop.f32.mrf.mxu0
    %v4843 = vadd.f32 %v4830, %v4842
    %v4844 = vpop.f32.mrf.mxu0
    %4845 = vdwg.mxu0
    %4846 = vmatpush.bf16.msra.mxu0 %v2354
    %4847 = vmatpush.bf16.msra.mxu0 %v2342
    %4848 = vmatpush.bf16.msra.mxu0 %v2330
    %4849 = vmatpush.bf16.msra.mxu0 %v2318
    %4850 = vmatpush.bf16.msra.mxu0 %v2306
    %4851 = vmatpush.bf16.msra.mxu0 %v2294
    %4852 = vmatpush.bf16.msra.mxu0 %v2282
    %4853 = vmatpush.bf16.msra.mxu0 %v2270
    %4854 = vmatmul.bf16.gmra.mxu0 %v4762
    %v4855 = vpop.f32.mrf.mxu0
    %v4856 = vadd.f32 %v4843, %v4855
    %v4857 = vpop.f32.mrf.mxu0
    %4858 = vdwg.mxu0
    %4859 = vmatpush.bf16.msra.mxu0 %v2450
    %4860 = vmatpush.bf16.msra.mxu0 %v2438
    %4861 = vmatpush.bf16.msra.mxu0 %v2426
    %4862 = vmatpush.bf16.msra.mxu0 %v2414
    %4863 = vmatpush.bf16.msra.mxu0 %v2402
    %4864 = vmatpush.bf16.msra.mxu0 %v2390
    %4865 = vmatpush.bf16.msra.mxu0 %v2378
    %4866 = vmatpush.bf16.msra.mxu0 %v2366
    %4867 = vmatmul.bf16.gmra.mxu0 %v4763
    %v4868 = vpop.f32.mrf.mxu0
    %v4869 = vadd.f32 %v4856, %v4868
    %v4870 = vpop.f32.mrf.mxu0
    %4871 = vdwg.mxu0
    %4872 = vmatpush.bf16.msra.mxu0 %v2163
    %4873 = vmatpush.bf16.msra.mxu0 %v2151
    %4874 = vmatpush.bf16.msra.mxu0 %v2139
    %4875 = vmatpush.bf16.msra.mxu0 %v2127
    %4876 = vmatpush.bf16.msra.mxu0 %v2115
    %4877 = vmatpush.bf16.msra.mxu0 %v2103
    %4878 = vmatpush.bf16.msra.mxu0 %v2091
    %4879 = vmatpush.bf16.msra.mxu0 %v2079
    %4880 = vmatmul.bf16.gmra.mxu0 %v4760
    %v4881 = vpop.f32.mrf.mxu0
    %v4882 = vadd.f32 %v889, %v4881
    %v4883 = vpop.f32.mrf.mxu0
    %4884 = vdwg.mxu0
    %4885 = vmatpush.bf16.msra.mxu0 %v2259
    %4886 = vmatpush.bf16.msra.mxu0 %v2247
    %4887 = vmatpush.bf16.msra.mxu0 %v2235
    %4888 = vmatpush.bf16.msra.mxu0 %v2223
    %4889 = vmatpush.bf16.msra.mxu0 %v2211
    %4890 = vmatpush.bf16.msra.mxu0 %v2199
    %4891 = vmatpush.bf16.msra.mxu0 %v2187
    %4892 = vmatpush.bf16.msra.mxu0 %v2175
    %4893 = vmatmul.bf16.gmra.mxu0 %v4761
    %v4894 = vpop.f32.mrf.mxu0
    %v4895 = vadd.f32 %v4882, %v4894
    %v4896 = vpop.f32.mrf.mxu0
    %4897 = vdwg.mxu0
    %4898 = vmatpush.bf16.msra.mxu0 %v2355
    %4899 = vmatpush.bf16.msra.mxu0 %v2343
    %4900 = vmatpush.bf16.msra.mxu0 %v2331
    %4901 = vmatpush.bf16.msra.mxu0 %v2319
    %4902 = vmatpush.bf16.msra.mxu0 %v2307
    %4903 = vmatpush.bf16.msra.mxu0 %v2295
    %4904 = vmatpush.bf16.msra.mxu0 %v2283
    %4905 = vmatpush.bf16.msra.mxu0 %v2271
    %4906 = vmatmul.bf16.gmra.mxu0 %v4762
    %v4907 = vpop.f32.mrf.mxu0
    %v4908 = vadd.f32 %v4895, %v4907
    %v4909 = vpop.f32.mrf.mxu0
    %4910 = vdwg.mxu0
    %4911 = vmatpush.bf16.msra.mxu0 %v2451
    %4912 = vmatpush.bf16.msra.mxu0 %v2439
    %4913 = vmatpush.bf16.msra.mxu0 %v2427
    %4914 = vmatpush.bf16.msra.mxu0 %v2415
    %4915 = vmatpush.bf16.msra.mxu0 %v2403
    %4916 = vmatpush.bf16.msra.mxu0 %v2391
    %4917 = vmatpush.bf16.msra.mxu0 %v2379
    %4918 = vmatpush.bf16.msra.mxu0 %v2367
    %4919 = vmatmul.bf16.gmra.mxu0 %v4763
    %v4920 = vpop.f32.mrf.mxu0
    %v4921 = vadd.f32 %v4908, %v4920
    %v4922 = vpop.f32.mrf.mxu0
    %4923 = vdwg.mxu0
    %4924 = vmatpush.bf16.msra.mxu0 %v2164
    %4925 = vmatpush.bf16.msra.mxu0 %v2152
    %4926 = vmatpush.bf16.msra.mxu0 %v2140
    %4927 = vmatpush.bf16.msra.mxu0 %v2128
    %4928 = vmatpush.bf16.msra.mxu0 %v2116
    %4929 = vmatpush.bf16.msra.mxu0 %v2104
    %4930 = vmatpush.bf16.msra.mxu0 %v2092
    %4931 = vmatpush.bf16.msra.mxu0 %v2080
    %4932 = vmatmul.bf16.gmra.mxu0 %v4760
    %v4933 = vpop.f32.mrf.mxu0
    %v4934 = vadd.f32 %v890, %v4933
    %v4935 = vpop.f32.mrf.mxu0
    %4936 = vdwg.mxu0
    %4937 = vmatpush.bf16.msra.mxu0 %v2260
    %4938 = vmatpush.bf16.msra.mxu0 %v2248
    %4939 = vmatpush.bf16.msra.mxu0 %v2236
    %4940 = vmatpush.bf16.msra.mxu0 %v2224
    %4941 = vmatpush.bf16.msra.mxu0 %v2212
    %4942 = vmatpush.bf16.msra.mxu0 %v2200
    %4943 = vmatpush.bf16.msra.mxu0 %v2188
    %4944 = vmatpush.bf16.msra.mxu0 %v2176
    %4945 = vmatmul.bf16.gmra.mxu0 %v4761
    %v4946 = vpop.f32.mrf.mxu0
    %v4947 = vadd.f32 %v4934, %v4946
    %v4948 = vpop.f32.mrf.mxu0
    %4949 = vdwg.mxu0
    %4950 = vmatpush.bf16.msra.mxu0 %v2356
    %4951 = vmatpush.bf16.msra.mxu0 %v2344
    %4952 = vmatpush.bf16.msra.mxu0 %v2332
    %4953 = vmatpush.bf16.msra.mxu0 %v2320
    %4954 = vmatpush.bf16.msra.mxu0 %v2308
    %4955 = vmatpush.bf16.msra.mxu0 %v2296
    %4956 = vmatpush.bf16.msra.mxu0 %v2284
    %4957 = vmatpush.bf16.msra.mxu0 %v2272
    %4958 = vmatmul.bf16.gmra.mxu0 %v4762
    %v4959 = vpop.f32.mrf.mxu0
    %v4960 = vadd.f32 %v4947, %v4959
    %v4961 = vpop.f32.mrf.mxu0
    %4962 = vdwg.mxu0
    %4963 = vmatpush.bf16.msra.mxu0 %v2452
    %4964 = vmatpush.bf16.msra.mxu0 %v2440
    %4965 = vmatpush.bf16.msra.mxu0 %v2428
    %4966 = vmatpush.bf16.msra.mxu0 %v2416
    %4967 = vmatpush.bf16.msra.mxu0 %v2404
    %4968 = vmatpush.bf16.msra.mxu0 %v2392
    %4969 = vmatpush.bf16.msra.mxu0 %v2380
    %4970 = vmatpush.bf16.msra.mxu0 %v2368
    %4971 = vmatmul.bf16.gmra.mxu0 %v4763
    %v4972 = vpop.f32.mrf.mxu0
    %v4973 = vadd.f32 %v4960, %v4972
    %v4974 = vpop.f32.mrf.mxu0
    %4975 = vdwg.mxu0
    %4976 = vmatpush.bf16.msra.mxu0 %v2165
    %4977 = vmatpush.bf16.msra.mxu0 %v2153
    %4978 = vmatpush.bf16.msra.mxu0 %v2141
    %4979 = vmatpush.bf16.msra.mxu0 %v2129
    %4980 = vmatpush.bf16.msra.mxu0 %v2117
    %4981 = vmatpush.bf16.msra.mxu0 %v2105
    %4982 = vmatpush.bf16.msra.mxu0 %v2093
    %4983 = vmatpush.bf16.msra.mxu0 %v2081
    %4984 = vmatmul.bf16.gmra.mxu0 %v4760
    %v4985 = vpop.f32.mrf.mxu0
    %v4986 = vadd.f32 %v891, %v4985
    %v4987 = vpop.f32.mrf.mxu0
    %4988 = vdwg.mxu0
    %4989 = vmatpush.bf16.msra.mxu0 %v2261
    %4990 = vmatpush.bf16.msra.mxu0 %v2249
    %4991 = vmatpush.bf16.msra.mxu0 %v2237
    %4992 = vmatpush.bf16.msra.mxu0 %v2225
    %4993 = vmatpush.bf16.msra.mxu0 %v2213
    %4994 = vmatpush.bf16.msra.mxu0 %v2201
    %4995 = vmatpush.bf16.msra.mxu0 %v2189
    %4996 = vmatpush.bf16.msra.mxu0 %v2177
    %4997 = vmatmul.bf16.gmra.mxu0 %v4761
    %v4998 = vpop.f32.mrf.mxu0
    %v4999 = vadd.f32 %v4986, %v4998
    %v5000 = vpop.f32.mrf.mxu0
    %5001 = vdwg.mxu0
    %5002 = vmatpush.bf16.msra.mxu0 %v2357
    %5003 = vmatpush.bf16.msra.mxu0 %v2345
    %5004 = vmatpush.bf16.msra.mxu0 %v2333
    %5005 = vmatpush.bf16.msra.mxu0 %v2321
    %5006 = vmatpush.bf16.msra.mxu0 %v2309
    %5007 = vmatpush.bf16.msra.mxu0 %v2297
    %5008 = vmatpush.bf16.msra.mxu0 %v2285
    %5009 = vmatpush.bf16.msra.mxu0 %v2273
    %5010 = vmatmul.bf16.gmra.mxu0 %v4762
    %v5011 = vpop.f32.mrf.mxu0
    %v5012 = vadd.f32 %v4999, %v5011
    %v5013 = vpop.f32.mrf.mxu0
    %5014 = vdwg.mxu0
    %5015 = vmatpush.bf16.msra.mxu0 %v2453
    %5016 = vmatpush.bf16.msra.mxu0 %v2441
    %5017 = vmatpush.bf16.msra.mxu0 %v2429
    %5018 = vmatpush.bf16.msra.mxu0 %v2417
    %5019 = vmatpush.bf16.msra.mxu0 %v2405
    %5020 = vmatpush.bf16.msra.mxu0 %v2393
    %5021 = vmatpush.bf16.msra.mxu0 %v2381
    %5022 = vmatpush.bf16.msra.mxu0 %v2369
    %5023 = vmatmul.bf16.gmra.mxu0 %v4763
    %v5024 = vpop.f32.mrf.mxu0
    %v5025 = vadd.f32 %v5012, %v5024
    %v5026 = vpop.f32.mrf.mxu0
    %5027 = vdwg.mxu0
    %5028 = vmatpush.bf16.msra.mxu0 %v2166
    %5029 = vmatpush.bf16.msra.mxu0 %v2154
    %5030 = vmatpush.bf16.msra.mxu0 %v2142
    %5031 = vmatpush.bf16.msra.mxu0 %v2130
    %5032 = vmatpush.bf16.msra.mxu0 %v2118
    %5033 = vmatpush.bf16.msra.mxu0 %v2106
    %5034 = vmatpush.bf16.msra.mxu0 %v2094
    %5035 = vmatpush.bf16.msra.mxu0 %v2082
    %5036 = vmatmul.bf16.gmra.mxu0 %v4760
    %v5037 = vpop.f32.mrf.mxu0
    %v5038 = vadd.f32 %v892, %v5037
    %v5039 = vpop.f32.mrf.mxu0
    %5040 = vdwg.mxu0
    %5041 = vmatpush.bf16.msra.mxu0 %v2262
    %5042 = vmatpush.bf16.msra.mxu0 %v2250
    %5043 = vmatpush.bf16.msra.mxu0 %v2238
    %5044 = vmatpush.bf16.msra.mxu0 %v2226
    %5045 = vmatpush.bf16.msra.mxu0 %v2214
    %5046 = vmatpush.bf16.msra.mxu0 %v2202
    %5047 = vmatpush.bf16.msra.mxu0 %v2190
    %5048 = vmatpush.bf16.msra.mxu0 %v2178
    %5049 = vmatmul.bf16.gmra.mxu0 %v4761
    %v5050 = vpop.f32.mrf.mxu0
    %v5051 = vadd.f32 %v5038, %v5050
    %v5052 = vpop.f32.mrf.mxu0
    %5053 = vdwg.mxu0
    %5054 = vmatpush.bf16.msra.mxu0 %v2358
    %5055 = vmatpush.bf16.msra.mxu0 %v2346
    %5056 = vmatpush.bf16.msra.mxu0 %v2334
    %5057 = vmatpush.bf16.msra.mxu0 %v2322
    %5058 = vmatpush.bf16.msra.mxu0 %v2310
    %5059 = vmatpush.bf16.msra.mxu0 %v2298
    %5060 = vmatpush.bf16.msra.mxu0 %v2286
    %5061 = vmatpush.bf16.msra.mxu0 %v2274
    %5062 = vmatmul.bf16.gmra.mxu0 %v4762
    %v5063 = vpop.f32.mrf.mxu0
    %v5064 = vadd.f32 %v5051, %v5063
    %v5065 = vpop.f32.mrf.mxu0
    %5066 = vdwg.mxu0
    %5067 = vmatpush.bf16.msra.mxu0 %v2454
    %5068 = vmatpush.bf16.msra.mxu0 %v2442
    %5069 = vmatpush.bf16.msra.mxu0 %v2430
    %5070 = vmatpush.bf16.msra.mxu0 %v2418
    %5071 = vmatpush.bf16.msra.mxu0 %v2406
    %5072 = vmatpush.bf16.msra.mxu0 %v2394
    %5073 = vmatpush.bf16.msra.mxu0 %v2382
    %5074 = vmatpush.bf16.msra.mxu0 %v2370
    %5075 = vmatmul.bf16.gmra.mxu0 %v4763
    %v5076 = vpop.f32.mrf.mxu0
    %v5077 = vadd.f32 %v5064, %v5076
    %v5078 = vpop.f32.mrf.mxu0
    %5079 = vdwg.mxu0
    %5080 = vmatpush.bf16.msra.mxu0 %v2167
    %5081 = vmatpush.bf16.msra.mxu0 %v2155
    %5082 = vmatpush.bf16.msra.mxu0 %v2143
    %5083 = vmatpush.bf16.msra.mxu0 %v2131
    %5084 = vmatpush.bf16.msra.mxu0 %v2119
    %5085 = vmatpush.bf16.msra.mxu0 %v2107
    %5086 = vmatpush.bf16.msra.mxu0 %v2095
    %5087 = vmatpush.bf16.msra.mxu0 %v2083
    %5088 = vmatmul.bf16.gmra.mxu0 %v4760
    %v5089 = vpop.f32.mrf.mxu0
    %v5090 = vadd.f32 %v893, %v5089
    %v5091 = vpop.f32.mrf.mxu0
    %5092 = vdwg.mxu0
    %5093 = vmatpush.bf16.msra.mxu0 %v2263
    %5094 = vmatpush.bf16.msra.mxu0 %v2251
    %5095 = vmatpush.bf16.msra.mxu0 %v2239
    %5096 = vmatpush.bf16.msra.mxu0 %v2227
    %5097 = vmatpush.bf16.msra.mxu0 %v2215
    %5098 = vmatpush.bf16.msra.mxu0 %v2203
    %5099 = vmatpush.bf16.msra.mxu0 %v2191
    %5100 = vmatpush.bf16.msra.mxu0 %v2179
    %5101 = vmatmul.bf16.gmra.mxu0 %v4761
    %v5102 = vpop.f32.mrf.mxu0
    %v5103 = vadd.f32 %v5090, %v5102
    %v5104 = vpop.f32.mrf.mxu0
    %5105 = vdwg.mxu0
    %5106 = vmatpush.bf16.msra.mxu0 %v2359
    %5107 = vmatpush.bf16.msra.mxu0 %v2347
    %5108 = vmatpush.bf16.msra.mxu0 %v2335
    %5109 = vmatpush.bf16.msra.mxu0 %v2323
    %5110 = vmatpush.bf16.msra.mxu0 %v2311
    %5111 = vmatpush.bf16.msra.mxu0 %v2299
    %5112 = vmatpush.bf16.msra.mxu0 %v2287
    %5113 = vmatpush.bf16.msra.mxu0 %v2275
    %5114 = vmatmul.bf16.gmra.mxu0 %v4762
    %v5115 = vpop.f32.mrf.mxu0
    %v5116 = vadd.f32 %v5103, %v5115
    %v5117 = vpop.f32.mrf.mxu0
    %5118 = vdwg.mxu0
    %5119 = vmatpush.bf16.msra.mxu0 %v2455
    %5120 = vmatpush.bf16.msra.mxu0 %v2443
    %5121 = vmatpush.bf16.msra.mxu0 %v2431
    %5122 = vmatpush.bf16.msra.mxu0 %v2419
    %5123 = vmatpush.bf16.msra.mxu0 %v2407
    %5124 = vmatpush.bf16.msra.mxu0 %v2395
    %5125 = vmatpush.bf16.msra.mxu0 %v2383
    %5126 = vmatpush.bf16.msra.mxu0 %v2371
    %5127 = vmatmul.bf16.gmra.mxu0 %v4763
    %v5128 = vpop.f32.mrf.mxu0
    %v5129 = vadd.f32 %v5116, %v5128
    %v5130 = vpop.f32.mrf.mxu0
    %5131 = vdwg.mxu0
    %5132 = vmatpush.bf16.msra.mxu0 %v2168
    %5133 = vmatpush.bf16.msra.mxu0 %v2156
    %5134 = vmatpush.bf16.msra.mxu0 %v2144
    %5135 = vmatpush.bf16.msra.mxu0 %v2132
    %5136 = vmatpush.bf16.msra.mxu0 %v2120
    %5137 = vmatpush.bf16.msra.mxu0 %v2108
    %5138 = vmatpush.bf16.msra.mxu0 %v2096
    %5139 = vmatpush.bf16.msra.mxu0 %v2084
    %5140 = vmatmul.bf16.gmra.mxu0 %v4760
    %v5141 = vpop.f32.mrf.mxu0
    %v5142 = vadd.f32 %v894, %v5141
    %v5143 = vpop.f32.mrf.mxu0
    %5144 = vdwg.mxu0
    %5145 = vmatpush.bf16.msra.mxu0 %v2264
    %5146 = vmatpush.bf16.msra.mxu0 %v2252
    %5147 = vmatpush.bf16.msra.mxu0 %v2240
    %5148 = vmatpush.bf16.msra.mxu0 %v2228
    %5149 = vmatpush.bf16.msra.mxu0 %v2216
    %5150 = vmatpush.bf16.msra.mxu0 %v2204
    %5151 = vmatpush.bf16.msra.mxu0 %v2192
    %5152 = vmatpush.bf16.msra.mxu0 %v2180
    %5153 = vmatmul.bf16.gmra.mxu0 %v4761
    %v5154 = vpop.f32.mrf.mxu0
    %v5155 = vadd.f32 %v5142, %v5154
    %v5156 = vpop.f32.mrf.mxu0
    %5157 = vdwg.mxu0
    %5158 = vmatpush.bf16.msra.mxu0 %v2360
    %5159 = vmatpush.bf16.msra.mxu0 %v2348
    %5160 = vmatpush.bf16.msra.mxu0 %v2336
    %5161 = vmatpush.bf16.msra.mxu0 %v2324
    %5162 = vmatpush.bf16.msra.mxu0 %v2312
    %5163 = vmatpush.bf16.msra.mxu0 %v2300
    %5164 = vmatpush.bf16.msra.mxu0 %v2288
    %5165 = vmatpush.bf16.msra.mxu0 %v2276
    %5166 = vmatmul.bf16.gmra.mxu0 %v4762
    %v5167 = vpop.f32.mrf.mxu0
    %v5168 = vadd.f32 %v5155, %v5167
    %v5169 = vpop.f32.mrf.mxu0
    %5170 = vdwg.mxu0
    %5171 = vmatpush.bf16.msra.mxu0 %v2456
    %5172 = vmatpush.bf16.msra.mxu0 %v2444
    %5173 = vmatpush.bf16.msra.mxu0 %v2432
    %5174 = vmatpush.bf16.msra.mxu0 %v2420
    %5175 = vmatpush.bf16.msra.mxu0 %v2408
    %5176 = vmatpush.bf16.msra.mxu0 %v2396
    %5177 = vmatpush.bf16.msra.mxu0 %v2384
    %5178 = vmatpush.bf16.msra.mxu0 %v2372
    %5179 = vmatmul.bf16.gmra.mxu0 %v4763
    %v5180 = vpop.f32.mrf.mxu0
    %v5181 = vadd.f32 %v5168, %v5180
    %v5182 = vpop.f32.mrf.mxu0
    %5183 = vdwg.mxu0
    %5184 = vmatpush.bf16.msra.mxu0 %v2169
    %5185 = vmatpush.bf16.msra.mxu0 %v2157
    %5186 = vmatpush.bf16.msra.mxu0 %v2145
    %5187 = vmatpush.bf16.msra.mxu0 %v2133
    %5188 = vmatpush.bf16.msra.mxu0 %v2121
    %5189 = vmatpush.bf16.msra.mxu0 %v2109
    %5190 = vmatpush.bf16.msra.mxu0 %v2097
    %5191 = vmatpush.bf16.msra.mxu0 %v2085
    %5192 = vmatmul.bf16.gmra.mxu0 %v4760
    %v5193 = vpop.f32.mrf.mxu0
    %v5194 = vadd.f32 %v895, %v5193
    %v5195 = vpop.f32.mrf.mxu0
    %5196 = vdwg.mxu0
    %5197 = vmatpush.bf16.msra.mxu0 %v2265
    %5198 = vmatpush.bf16.msra.mxu0 %v2253
    %5199 = vmatpush.bf16.msra.mxu0 %v2241
    %5200 = vmatpush.bf16.msra.mxu0 %v2229
    %5201 = vmatpush.bf16.msra.mxu0 %v2217
    %5202 = vmatpush.bf16.msra.mxu0 %v2205
    %5203 = vmatpush.bf16.msra.mxu0 %v2193
    %5204 = vmatpush.bf16.msra.mxu0 %v2181
    %5205 = vmatmul.bf16.gmra.mxu0 %v4761
    %v5206 = vpop.f32.mrf.mxu0
    %v5207 = vadd.f32 %v5194, %v5206
    %v5208 = vpop.f32.mrf.mxu0
    %5209 = vdwg.mxu0
    %5210 = vmatpush.bf16.msra.mxu0 %v2361
    %5211 = vmatpush.bf16.msra.mxu0 %v2349
    %5212 = vmatpush.bf16.msra.mxu0 %v2337
    %5213 = vmatpush.bf16.msra.mxu0 %v2325
    %5214 = vmatpush.bf16.msra.mxu0 %v2313
    %5215 = vmatpush.bf16.msra.mxu0 %v2301
    %5216 = vmatpush.bf16.msra.mxu0 %v2289
    %5217 = vmatpush.bf16.msra.mxu0 %v2277
    %5218 = vmatmul.bf16.gmra.mxu0 %v4762
    %v5219 = vpop.f32.mrf.mxu0
    %v5220 = vadd.f32 %v5207, %v5219
    %v5221 = vpop.f32.mrf.mxu0
    %5222 = vdwg.mxu0
    %5223 = vmatpush.bf16.msra.mxu0 %v2457
    %5224 = vmatpush.bf16.msra.mxu0 %v2445
    %5225 = vmatpush.bf16.msra.mxu0 %v2433
    %5226 = vmatpush.bf16.msra.mxu0 %v2421
    %5227 = vmatpush.bf16.msra.mxu0 %v2409
    %5228 = vmatpush.bf16.msra.mxu0 %v2397
    %5229 = vmatpush.bf16.msra.mxu0 %v2385
    %5230 = vmatpush.bf16.msra.mxu0 %v2373
    %5231 = vmatmul.bf16.gmra.mxu0 %v4763
    %v5232 = vpop.f32.mrf.mxu0
    %v5233 = vadd.f32 %v5220, %v5232
    %v5234 = vpop.f32.mrf.mxu0
    %5235 = vdwg.mxu0
    %5236 = vmatpush.bf16.msra.mxu0 %v2170
    %5237 = vmatpush.bf16.msra.mxu0 %v2158
    %5238 = vmatpush.bf16.msra.mxu0 %v2146
    %5239 = vmatpush.bf16.msra.mxu0 %v2134
    %5240 = vmatpush.bf16.msra.mxu0 %v2122
    %5241 = vmatpush.bf16.msra.mxu0 %v2110
    %5242 = vmatpush.bf16.msra.mxu0 %v2098
    %5243 = vmatpush.bf16.msra.mxu0 %v2086
    %5244 = vmatmul.bf16.gmra.mxu0 %v4760
    %v5245 = vpop.f32.mrf.mxu0
    %v5246 = vadd.f32 %v896, %v5245
    %v5247 = vpop.f32.mrf.mxu0
    %5248 = vdwg.mxu0
    %5249 = vmatpush.bf16.msra.mxu0 %v2266
    %5250 = vmatpush.bf16.msra.mxu0 %v2254
    %5251 = vmatpush.bf16.msra.mxu0 %v2242
    %5252 = vmatpush.bf16.msra.mxu0 %v2230
    %5253 = vmatpush.bf16.msra.mxu0 %v2218
    %5254 = vmatpush.bf16.msra.mxu0 %v2206
    %5255 = vmatpush.bf16.msra.mxu0 %v2194
    %5256 = vmatpush.bf16.msra.mxu0 %v2182
    %5257 = vmatmul.bf16.gmra.mxu0 %v4761
    %v5258 = vpop.f32.mrf.mxu0
    %v5259 = vadd.f32 %v5246, %v5258
    %v5260 = vpop.f32.mrf.mxu0
    %5261 = vdwg.mxu0
    %5262 = vmatpush.bf16.msra.mxu0 %v2362
    %5263 = vmatpush.bf16.msra.mxu0 %v2350
    %5264 = vmatpush.bf16.msra.mxu0 %v2338
    %5265 = vmatpush.bf16.msra.mxu0 %v2326
    %5266 = vmatpush.bf16.msra.mxu0 %v2314
    %5267 = vmatpush.bf16.msra.mxu0 %v2302
    %5268 = vmatpush.bf16.msra.mxu0 %v2290
    %5269 = vmatpush.bf16.msra.mxu0 %v2278
    %5270 = vmatmul.bf16.gmra.mxu0 %v4762
    %v5271 = vpop.f32.mrf.mxu0
    %v5272 = vadd.f32 %v5259, %v5271
    %v5273 = vpop.f32.mrf.mxu0
    %5274 = vdwg.mxu0
    %5275 = vmatpush.bf16.msra.mxu0 %v2458
    %5276 = vmatpush.bf16.msra.mxu0 %v2446
    %5277 = vmatpush.bf16.msra.mxu0 %v2434
    %5278 = vmatpush.bf16.msra.mxu0 %v2422
    %5279 = vmatpush.bf16.msra.mxu0 %v2410
    %5280 = vmatpush.bf16.msra.mxu0 %v2398
    %5281 = vmatpush.bf16.msra.mxu0 %v2386
    %5282 = vmatpush.bf16.msra.mxu0 %v2374
    %5283 = vmatmul.bf16.gmra.mxu0 %v4763
    %v5284 = vpop.f32.mrf.mxu0
    %v5285 = vadd.f32 %v5272, %v5284
    %v5286 = vpop.f32.mrf.mxu0
    %5287 = vdwg.mxu0
    %5288 = vmatpush.bf16.msra.mxu0 %v2171
    %5289 = vmatpush.bf16.msra.mxu0 %v2159
    %5290 = vmatpush.bf16.msra.mxu0 %v2147
    %5291 = vmatpush.bf16.msra.mxu0 %v2135
    %5292 = vmatpush.bf16.msra.mxu0 %v2123
    %5293 = vmatpush.bf16.msra.mxu0 %v2111
    %5294 = vmatpush.bf16.msra.mxu0 %v2099
    %5295 = vmatpush.bf16.msra.mxu0 %v2087
    %5296 = vmatmul.bf16.gmra.mxu0 %v4760
    %v5297 = vpop.f32.mrf.mxu0
    %v5298 = vadd.f32 %v897, %v5297
    %v5299 = vpop.f32.mrf.mxu0
    %5300 = vdwg.mxu0
    %5301 = vmatpush.bf16.msra.mxu0 %v2267
    %5302 = vmatpush.bf16.msra.mxu0 %v2255
    %5303 = vmatpush.bf16.msra.mxu0 %v2243
    %5304 = vmatpush.bf16.msra.mxu0 %v2231
    %5305 = vmatpush.bf16.msra.mxu0 %v2219
    %5306 = vmatpush.bf16.msra.mxu0 %v2207
    %5307 = vmatpush.bf16.msra.mxu0 %v2195
    %5308 = vmatpush.bf16.msra.mxu0 %v2183
    %5309 = vmatmul.bf16.gmra.mxu0 %v4761
    %v5310 = vpop.f32.mrf.mxu0
    %v5311 = vadd.f32 %v5298, %v5310
    %v5312 = vpop.f32.mrf.mxu0
    %5313 = vdwg.mxu0
    %5314 = vmatpush.bf16.msra.mxu0 %v2363
    %5315 = vmatpush.bf16.msra.mxu0 %v2351
    %5316 = vmatpush.bf16.msra.mxu0 %v2339
    %5317 = vmatpush.bf16.msra.mxu0 %v2327
    %5318 = vmatpush.bf16.msra.mxu0 %v2315
    %5319 = vmatpush.bf16.msra.mxu0 %v2303
    %5320 = vmatpush.bf16.msra.mxu0 %v2291
    %5321 = vmatpush.bf16.msra.mxu0 %v2279
    %5322 = vmatmul.bf16.gmra.mxu0 %v4762
    %v5323 = vpop.f32.mrf.mxu0
    %v5324 = vadd.f32 %v5311, %v5323
    %v5325 = vpop.f32.mrf.mxu0
    %5326 = vdwg.mxu0
    %5327 = vmatpush.bf16.msra.mxu0 %v2459
    %5328 = vmatpush.bf16.msra.mxu0 %v2447
    %5329 = vmatpush.bf16.msra.mxu0 %v2435
    %5330 = vmatpush.bf16.msra.mxu0 %v2423
    %5331 = vmatpush.bf16.msra.mxu0 %v2411
    %5332 = vmatpush.bf16.msra.mxu0 %v2399
    %5333 = vmatpush.bf16.msra.mxu0 %v2387
    %5334 = vmatpush.bf16.msra.mxu0 %v2375
    %5335 = vmatmul.bf16.gmra.mxu0 %v4763
    %v5336 = vpop.f32.mrf.mxu0
    %v5337 = vadd.f32 %v5324, %v5336
    %v5338 = vpop.f32.mrf.mxu0
    %5339 = vdwg.mxu0
    %5340 = vmatpush.bf16.msra.mxu0 %v2172
    %5341 = vmatpush.bf16.msra.mxu0 %v2160
    %5342 = vmatpush.bf16.msra.mxu0 %v2148
    %5343 = vmatpush.bf16.msra.mxu0 %v2136
    %5344 = vmatpush.bf16.msra.mxu0 %v2124
    %5345 = vmatpush.bf16.msra.mxu0 %v2112
    %5346 = vmatpush.bf16.msra.mxu0 %v2100
    %5347 = vmatpush.bf16.msra.mxu0 %v2088
    %5348 = vmatmul.bf16.gmra.mxu0 %v4760
    %v5349 = vpop.f32.mrf.mxu0
    %v5350 = vadd.f32 %v898, %v5349
    %v5351 = vpop.f32.mrf.mxu0
    %5352 = vdwg.mxu0
    %5353 = vmatpush.bf16.msra.mxu0 %v2268
    %5354 = vmatpush.bf16.msra.mxu0 %v2256
    %5355 = vmatpush.bf16.msra.mxu0 %v2244
    %5356 = vmatpush.bf16.msra.mxu0 %v2232
    %5357 = vmatpush.bf16.msra.mxu0 %v2220
    %5358 = vmatpush.bf16.msra.mxu0 %v2208
    %5359 = vmatpush.bf16.msra.mxu0 %v2196
    %5360 = vmatpush.bf16.msra.mxu0 %v2184
    %5361 = vmatmul.bf16.gmra.mxu0 %v4761
    %v5362 = vpop.f32.mrf.mxu0
    %v5363 = vadd.f32 %v5350, %v5362
    %v5364 = vpop.f32.mrf.mxu0
    %5365 = vdwg.mxu0
    %5366 = vmatpush.bf16.msra.mxu0 %v2364
    %5367 = vmatpush.bf16.msra.mxu0 %v2352
    %5368 = vmatpush.bf16.msra.mxu0 %v2340
    %5369 = vmatpush.bf16.msra.mxu0 %v2328
    %5370 = vmatpush.bf16.msra.mxu0 %v2316
    %5371 = vmatpush.bf16.msra.mxu0 %v2304
    %5372 = vmatpush.bf16.msra.mxu0 %v2292
    %5373 = vmatpush.bf16.msra.mxu0 %v2280
    %5374 = vmatmul.bf16.gmra.mxu0 %v4762
    %v5375 = vpop.f32.mrf.mxu0
    %v5376 = vadd.f32 %v5363, %v5375
    %v5377 = vpop.f32.mrf.mxu0
    %5378 = vdwg.mxu0
    %5379 = vmatpush.bf16.msra.mxu0 %v2460
    %5380 = vmatpush.bf16.msra.mxu0 %v2448
    %5381 = vmatpush.bf16.msra.mxu0 %v2436
    %5382 = vmatpush.bf16.msra.mxu0 %v2424
    %5383 = vmatpush.bf16.msra.mxu0 %v2412
    %5384 = vmatpush.bf16.msra.mxu0 %v2400
    %5385 = vmatpush.bf16.msra.mxu0 %v2388
    %5386 = vmatpush.bf16.msra.mxu0 %v2376
    %5387 = vmatmul.bf16.gmra.mxu0 %v4763
    %v5388 = vpop.f32.mrf.mxu0
    %v5389 = vadd.f32 %v5376, %v5388
    %v5390 = vpop.f32.mrf.mxu0
    %5391 = vdwg.mxu0
    %v5394 = vperm.slane %v881, 0
    %v5395 = vperm.slane %v881, 1
    %v5396 = vperm.slane %v881, 2
    %v5397 = vperm.slane %v881, 3
    %v5398 = vperm.slane %v881, 4
    %v5399 = vperm.slane %v881, 5
    %v5400 = vperm.slane %v881, 6
    %v5401 = vperm.slane %v881, 7
    %v5402 = vperm.slane %v882, 0
    %v5403 = vperm.slane %v882, 1
    %v5404 = vperm.slane %v882, 2
    %v5405 = vperm.slane %v882, 3
    %v5802 = vunpack.c.l.b16 %v495
    %v5803 = vunpack.c.h.b16 %v495
    %v5804 = vunpack.c.l.b16 %v496
    %v5805 = vunpack.c.h.b16 %v496
    %v5806 = vunpack.c.l.b16 %v497
    %v5807 = vunpack.c.h.b16 %v497
    %v5808 = vunpack.c.l.b16 %v498
    %v5809 = vunpack.c.h.b16 %v498
    %v5810 = vunpack.c.l.b16 %v499
    %v5811 = vunpack.c.h.b16 %v499
    %v5812 = vunpack.c.l.b16 %v500
    %v5813 = vunpack.c.h.b16 %v500
    %v5814 = vunpack.c.l.b16 %v501
    %v5815 = vunpack.c.h.b16 %v501
    %v5816 = vunpack.c.l.b16 %v502
    %v5817 = vunpack.c.h.b16 %v502
    %v5818 = vunpack.c.l.b16 %v503
    %v5819 = vunpack.c.h.b16 %v503
    %v5820 = vunpack.c.l.b16 %v504
    %v5821 = vunpack.c.h.b16 %v504
    %v5822 = vunpack.c.l.b16 %v505
    %v5823 = vunpack.c.h.b16 %v505
    %v5824 = vunpack.c.l.b16 %v506
    %v5825 = vunpack.c.h.b16 %v506
    %v5826 = vunpack.c.l.b16 %v507
    %v5827 = vunpack.c.h.b16 %v507
    %v5828 = vunpack.c.l.b16 %v508
    %v5829 = vunpack.c.h.b16 %v508
    %v5830 = vunpack.c.l.b16 %v509
    %v5831 = vunpack.c.h.b16 %v509
    %v5832 = vunpack.c.l.b16 %v510
    %v5833 = vunpack.c.h.b16 %v510
    %v5834 = vunpack.c.l.b16 %v511
    %v5835 = vunpack.c.h.b16 %v511
    %v5836 = vunpack.c.l.b16 %v512
    %v5837 = vunpack.c.h.b16 %v512
    %v5838 = vunpack.c.l.b16 %v513
    %v5839 = vunpack.c.h.b16 %v513
    %v5840 = vunpack.c.l.b16 %v514
    %v5841 = vunpack.c.h.b16 %v514
    %v5842 = vunpack.c.l.b16 %v515
    %v5843 = vunpack.c.h.b16 %v515
    %v5844 = vunpack.c.l.b16 %v516
    %v5845 = vunpack.c.h.b16 %v516
    %v5846 = vunpack.c.l.b16 %v517
    %v5847 = vunpack.c.h.b16 %v517
    %v5848 = vunpack.c.l.b16 %v518
    %v5849 = vunpack.c.h.b16 %v518
    %v5850 = vunpack.c.l.b16 %v519
    %v5851 = vunpack.c.h.b16 %v519
    %v5852 = vunpack.c.l.b16 %v520
    %v5853 = vunpack.c.h.b16 %v520
    %v5854 = vunpack.c.l.b16 %v521
    %v5855 = vunpack.c.h.b16 %v521
    %v5856 = vunpack.c.l.b16 %v522
    %v5857 = vunpack.c.h.b16 %v522
    %v5858 = vunpack.c.l.b16 %v523
    %v5859 = vunpack.c.h.b16 %v523
    %v5860 = vunpack.c.l.b16 %v524
    %v5861 = vunpack.c.h.b16 %v524
    %v5862 = vunpack.c.l.b16 %v525
    %v5863 = vunpack.c.h.b16 %v525
    %v5864 = vunpack.c.l.b16 %v526
    %v5865 = vunpack.c.h.b16 %v526
    %v5866 = vunpack.c.l.b16 %v527
    %v5867 = vunpack.c.h.b16 %v527
    %v5868 = vunpack.c.l.b16 %v528
    %v5869 = vunpack.c.h.b16 %v528
    %v5870 = vunpack.c.l.b16 %v529
    %v5871 = vunpack.c.h.b16 %v529
    %v5872 = vunpack.c.l.b16 %v530
    %v5873 = vunpack.c.h.b16 %v530
    %v5874 = vunpack.c.l.b16 %v531
    %v5875 = vunpack.c.h.b16 %v531
    %v5876 = vunpack.c.l.b16 %v532
    %v5877 = vunpack.c.h.b16 %v532
    %v5878 = vunpack.c.l.b16 %v533
    %v5879 = vunpack.c.h.b16 %v533
    %v5880 = vunpack.c.l.b16 %v534
    %v5881 = vunpack.c.h.b16 %v534
    %v5882 = vunpack.c.l.b16 %v535
    %v5883 = vunpack.c.h.b16 %v535
    %v5884 = vunpack.c.l.b16 %v536
    %v5885 = vunpack.c.h.b16 %v536
    %v5886 = vunpack.c.l.b16 %v537
    %v5887 = vunpack.c.h.b16 %v537
    %v5888 = vunpack.c.l.b16 %v538
    %v5889 = vunpack.c.h.b16 %v538
    %v5890 = vunpack.c.l.b16 %v539
    %v5891 = vunpack.c.h.b16 %v539
    %v5892 = vunpack.c.l.b16 %v540
    %v5893 = vunpack.c.h.b16 %v540
    %v5894 = vunpack.c.l.b16 %v541
    %v5895 = vunpack.c.h.b16 %v541
    %v5896 = vunpack.c.l.b16 %v542
    %v5897 = vunpack.c.h.b16 %v542
    %v5898 = vunpack.c.l.b16 %v543
    %v5899 = vunpack.c.h.b16 %v543
    %v5900 = vunpack.c.l.b16 %v544
    %v5901 = vunpack.c.h.b16 %v544
    %v5902 = vunpack.c.l.b16 %v545
    %v5903 = vunpack.c.h.b16 %v545
    %v5904 = vunpack.c.l.b16 %v546
    %v5905 = vunpack.c.h.b16 %v546
    %v5906 = vunpack.c.l.b16 %v547
    %v5907 = vunpack.c.h.b16 %v547
    %v5908 = vunpack.c.l.b16 %v548
    %v5909 = vunpack.c.h.b16 %v548
    %v5910 = vunpack.c.l.b16 %v549
    %v5911 = vunpack.c.h.b16 %v549
    %v5912 = vunpack.c.l.b16 %v550
    %v5913 = vunpack.c.h.b16 %v550
    %v5914 = vunpack.c.l.b16 %v551
    %v5915 = vunpack.c.h.b16 %v551
    %v5916 = vunpack.c.l.b16 %v552
    %v5917 = vunpack.c.h.b16 %v552
    %v5918 = vunpack.c.l.b16 %v553
    %v5919 = vunpack.c.h.b16 %v553
    %v5920 = vunpack.c.l.b16 %v554
    %v5921 = vunpack.c.h.b16 %v554
    %v5922 = vunpack.c.l.b16 %v555
    %v5923 = vunpack.c.h.b16 %v555
    %v5924 = vunpack.c.l.b16 %v556
    %v5925 = vunpack.c.h.b16 %v556
    %v5926 = vunpack.c.l.b16 %v557
    %v5927 = vunpack.c.h.b16 %v557
    %v5928 = vunpack.c.l.b16 %v558
    %v5929 = vunpack.c.h.b16 %v558
    %v5930 = vunpack.c.l.b16 %v559
    %v5931 = vunpack.c.h.b16 %v559
    %v5932 = vunpack.c.l.b16 %v560
    %v5933 = vunpack.c.h.b16 %v560
    %v5934 = vunpack.c.l.b16 %v561
    %v5935 = vunpack.c.h.b16 %v561
    %v5936 = vunpack.c.l.b16 %v562
    %v5937 = vunpack.c.h.b16 %v562
    %v5938 = vunpack.c.l.b16 %v563
    %v5939 = vunpack.c.h.b16 %v563
    %v5940 = vunpack.c.l.b16 %v564
    %v5941 = vunpack.c.h.b16 %v564
    %v5942 = vunpack.c.l.b16 %v565
    %v5943 = vunpack.c.h.b16 %v565
    %v5944 = vunpack.c.l.b16 %v566
    %v5945 = vunpack.c.h.b16 %v566
    %v5946 = vunpack.c.l.b16 %v567
    %v5947 = vunpack.c.h.b16 %v567
    %v5948 = vunpack.c.l.b16 %v568
    %v5949 = vunpack.c.h.b16 %v568
    %v5950 = vunpack.c.l.b16 %v569
    %v5951 = vunpack.c.h.b16 %v569
    %v5952 = vunpack.c.l.b16 %v570
    %v5953 = vunpack.c.h.b16 %v570
    %v5954 = vunpack.c.l.b16 %v571
    %v5955 = vunpack.c.h.b16 %v571
    %v5956 = vunpack.c.l.b16 %v572
    %v5957 = vunpack.c.h.b16 %v572
    %v5958 = vunpack.c.l.b16 %v573
    %v5959 = vunpack.c.h.b16 %v573
    %v5960 = vunpack.c.l.b16 %v574
    %v5961 = vunpack.c.h.b16 %v574
    %v5962 = vunpack.c.l.b16 %v575
    %v5963 = vunpack.c.h.b16 %v575
    %v5964 = vunpack.c.l.b16 %v576
    %v5965 = vunpack.c.h.b16 %v576
    %v5966 = vunpack.c.l.b16 %v577
    %v5967 = vunpack.c.h.b16 %v577
    %v5968 = vunpack.c.l.b16 %v578
    %v5969 = vunpack.c.h.b16 %v578
    %v5970 = vunpack.c.l.b16 %v579
    %v5971 = vunpack.c.h.b16 %v579
    %v5972 = vunpack.c.l.b16 %v580
    %v5973 = vunpack.c.h.b16 %v580
    %v5974 = vunpack.c.l.b16 %v581
    %v5975 = vunpack.c.h.b16 %v581
    %v5976 = vunpack.c.l.b16 %v582
    %v5977 = vunpack.c.h.b16 %v582
    %v5978 = vunpack.c.l.b16 %v583
    %v5979 = vunpack.c.h.b16 %v583
    %v5980 = vunpack.c.l.b16 %v584
    %v5981 = vunpack.c.h.b16 %v584
    %v5982 = vunpack.c.l.b16 %v585
    %v5983 = vunpack.c.h.b16 %v585
    %v5984 = vunpack.c.l.b16 %v586
    %v5985 = vunpack.c.h.b16 %v586
    %v5986 = vunpack.c.l.b16 %v587
    %v5987 = vunpack.c.h.b16 %v587
    %v5988 = vunpack.c.l.b16 %v588
    %v5989 = vunpack.c.h.b16 %v588
    %v5990 = vunpack.c.l.b16 %v589
    %v5991 = vunpack.c.h.b16 %v589
    %v5992 = vunpack.c.l.b16 %v590
    %v5993 = vunpack.c.h.b16 %v590
    %v5994 = vunpack.c.l.b16 %v591
    %v5995 = vunpack.c.h.b16 %v591
    %v5996 = vunpack.c.l.b16 %v592
    %v5997 = vunpack.c.h.b16 %v592
    %v5998 = vunpack.c.l.b16 %v593
    %v5999 = vunpack.c.h.b16 %v593
    %v6000 = vunpack.c.l.b16 %v594
    %v6001 = vunpack.c.h.b16 %v594
    %v6002 = vunpack.c.l.b16 %v595
    %v6003 = vunpack.c.h.b16 %v595
    %v6004 = vunpack.c.l.b16 %v596
    %v6005 = vunpack.c.h.b16 %v596
    %v6006 = vunpack.c.l.b16 %v597
    %v6007 = vunpack.c.h.b16 %v597
    %v6008 = vunpack.c.l.b16 %v598
    %v6009 = vunpack.c.h.b16 %v598
    %v6010 = vunpack.c.l.b16 %v599
    %v6011 = vunpack.c.h.b16 %v599
    %v6012 = vunpack.c.l.b16 %v600
    %v6013 = vunpack.c.h.b16 %v600
    %v6014 = vunpack.c.l.b16 %v601
    %v6015 = vunpack.c.h.b16 %v601
    %v6016 = vunpack.c.l.b16 %v602
    %v6017 = vunpack.c.h.b16 %v602
    %v6018 = vunpack.c.l.b16 %v603
    %v6019 = vunpack.c.h.b16 %v603
    %v6020 = vunpack.c.l.b16 %v604
    %v6021 = vunpack.c.h.b16 %v604
    %v6022 = vunpack.c.l.b16 %v605
    %v6023 = vunpack.c.h.b16 %v605
    %v6024 = vunpack.c.l.b16 %v606
    %v6025 = vunpack.c.h.b16 %v606
    %v6026 = vunpack.c.l.b16 %v607
    %v6027 = vunpack.c.h.b16 %v607
    %v6028 = vunpack.c.l.b16 %v608
    %v6029 = vunpack.c.h.b16 %v608
    %v6030 = vunpack.c.l.b16 %v609
    %v6031 = vunpack.c.h.b16 %v609
    %v6032 = vunpack.c.l.b16 %v610
    %v6033 = vunpack.c.h.b16 %v610
    %v6034 = vunpack.c.l.b16 %v611
    %v6035 = vunpack.c.h.b16 %v611
    %v6036 = vunpack.c.l.b16 %v612
    %v6037 = vunpack.c.h.b16 %v612
    %v6038 = vunpack.c.l.b16 %v613
    %v6039 = vunpack.c.h.b16 %v613
    %v6040 = vunpack.c.l.b16 %v614
    %v6041 = vunpack.c.h.b16 %v614
    %v6042 = vunpack.c.l.b16 %v615
    %v6043 = vunpack.c.h.b16 %v615
    %v6044 = vunpack.c.l.b16 %v616
    %v6045 = vunpack.c.h.b16 %v616
    %v6046 = vunpack.c.l.b16 %v617
    %v6047 = vunpack.c.h.b16 %v617
    %v6048 = vunpack.c.l.b16 %v618
    %v6049 = vunpack.c.h.b16 %v618
    %v6050 = vunpack.c.l.b16 %v619
    %v6051 = vunpack.c.h.b16 %v619
    %v6052 = vunpack.c.l.b16 %v620
    %v6053 = vunpack.c.h.b16 %v620
    %v6054 = vunpack.c.l.b16 %v621
    %v6055 = vunpack.c.h.b16 %v621
    %v6056 = vunpack.c.l.b16 %v622
    %v6057 = vunpack.c.h.b16 %v622
    %v6058 = vunpack.c.l.b16 %v623
    %v6059 = vunpack.c.h.b16 %v623
    %v6060 = vunpack.c.l.b16 %v624
    %v6061 = vunpack.c.h.b16 %v624
    %v6062 = vunpack.c.l.b16 %v625
    %v6063 = vunpack.c.h.b16 %v625
    %v6064 = vunpack.c.l.b16 %v626
    %v6065 = vunpack.c.h.b16 %v626
    %v6066 = vunpack.c.l.b16 %v627
    %v6067 = vunpack.c.h.b16 %v627
    %v6068 = vunpack.c.l.b16 %v628
    %v6069 = vunpack.c.h.b16 %v628
    %v6070 = vunpack.c.l.b16 %v629
    %v6071 = vunpack.c.h.b16 %v629
    %v6072 = vunpack.c.l.b16 %v630
    %v6073 = vunpack.c.h.b16 %v630
    %v6074 = vunpack.c.l.b16 %v631
    %v6075 = vunpack.c.h.b16 %v631
    %v6076 = vunpack.c.l.b16 %v632
    %v6077 = vunpack.c.h.b16 %v632
    %v6078 = vunpack.c.l.b16 %v633
    %v6079 = vunpack.c.h.b16 %v633
    %v6080 = vunpack.c.l.b16 %v634
    %v6081 = vunpack.c.h.b16 %v634
    %v6082 = vunpack.c.l.b16 %v635
    %v6083 = vunpack.c.h.b16 %v635
    %v6084 = vunpack.c.l.b16 %v636
    %v6085 = vunpack.c.h.b16 %v636
    %v6086 = vunpack.c.l.b16 %v637
    %v6087 = vunpack.c.h.b16 %v637
    %v6088 = vunpack.c.l.b16 %v638
    %v6089 = vunpack.c.h.b16 %v638
    %v6090 = vunpack.c.l.b16 %v639
    %v6091 = vunpack.c.h.b16 %v639
    %v6092 = vunpack.c.l.b16 %v640
    %v6093 = vunpack.c.h.b16 %v640
    %v6094 = vunpack.c.l.b16 %v641
    %v6095 = vunpack.c.h.b16 %v641
    %v6096 = vunpack.c.l.b16 %v642
    %v6097 = vunpack.c.h.b16 %v642
    %v6098 = vunpack.c.l.b16 %v643
    %v6099 = vunpack.c.h.b16 %v643
    %v6100 = vunpack.c.l.b16 %v644
    %v6101 = vunpack.c.h.b16 %v644
    %v6102 = vunpack.c.l.b16 %v645
    %v6103 = vunpack.c.h.b16 %v645
    %v6104 = vunpack.c.l.b16 %v646
    %v6105 = vunpack.c.h.b16 %v646
    %v6106 = vunpack.c.l.b16 %v647
    %v6107 = vunpack.c.h.b16 %v647
    %v6108 = vunpack.c.l.b16 %v648
    %v6109 = vunpack.c.h.b16 %v648
    %v6110 = vunpack.c.l.b16 %v649
    %v6111 = vunpack.c.h.b16 %v649
    %v6112 = vunpack.c.l.b16 %v650
    %v6113 = vunpack.c.h.b16 %v650
    %v6114 = vunpack.c.l.b16 %v651
    %v6115 = vunpack.c.h.b16 %v651
    %v6116 = vunpack.c.l.b16 %v652
    %v6117 = vunpack.c.h.b16 %v652
    %v6118 = vunpack.c.l.b16 %v653
    %v6119 = vunpack.c.h.b16 %v653
    %v6120 = vunpack.c.l.b16 %v654
    %v6121 = vunpack.c.h.b16 %v654
    %v6122 = vunpack.c.l.b16 %v655
    %v6123 = vunpack.c.h.b16 %v655
    %v6124 = vunpack.c.l.b16 %v656
    %v6125 = vunpack.c.h.b16 %v656
    %v6126 = vunpack.c.l.b16 %v657
    %v6127 = vunpack.c.h.b16 %v657
    %v6128 = vunpack.c.l.b16 %v658
    %v6129 = vunpack.c.h.b16 %v658
    %v6130 = vunpack.c.l.b16 %v659
    %v6131 = vunpack.c.h.b16 %v659
    %v6132 = vunpack.c.l.b16 %v660
    %v6133 = vunpack.c.h.b16 %v660
    %v6134 = vunpack.c.l.b16 %v661
    %v6135 = vunpack.c.h.b16 %v661
    %v6136 = vunpack.c.l.b16 %v662
    %v6137 = vunpack.c.h.b16 %v662
    %v6138 = vunpack.c.l.b16 %v663
    %v6139 = vunpack.c.h.b16 %v663
    %v6140 = vunpack.c.l.b16 %v664
    %v6141 = vunpack.c.h.b16 %v664
    %v6142 = vunpack.c.l.b16 %v665
    %v6143 = vunpack.c.h.b16 %v665
    %v6144 = vunpack.c.l.b16 %v666
    %v6145 = vunpack.c.h.b16 %v666
    %v6146 = vunpack.c.l.b16 %v667
    %v6147 = vunpack.c.h.b16 %v667
    %v6148 = vunpack.c.l.b16 %v668
    %v6149 = vunpack.c.h.b16 %v668
    %v6150 = vunpack.c.l.b16 %v669
    %v6151 = vunpack.c.h.b16 %v669
    %v6152 = vunpack.c.l.b16 %v670
    %v6153 = vunpack.c.h.b16 %v670
    %v6154 = vunpack.c.l.b16 %v671
    %v6155 = vunpack.c.h.b16 %v671
    %v6156 = vunpack.c.l.b16 %v672
    %v6157 = vunpack.c.h.b16 %v672
    %v6158 = vunpack.c.l.b16 %v673
    %v6159 = vunpack.c.h.b16 %v673
    %v6160 = vunpack.c.l.b16 %v674
    %v6161 = vunpack.c.h.b16 %v674
    %v6162 = vunpack.c.l.b16 %v675
    %v6163 = vunpack.c.h.b16 %v675
    %v6164 = vunpack.c.l.b16 %v676
    %v6165 = vunpack.c.h.b16 %v676
    %v6166 = vunpack.c.l.b16 %v677
    %v6167 = vunpack.c.h.b16 %v677
    %v6168 = vunpack.c.l.b16 %v678
    %v6169 = vunpack.c.h.b16 %v678
    %v6170 = vunpack.c.l.b16 %v679
    %v6171 = vunpack.c.h.b16 %v679
    %v6172 = vunpack.c.l.b16 %v680
    %v6173 = vunpack.c.h.b16 %v680
    %v6174 = vunpack.c.l.b16 %v681
    %v6175 = vunpack.c.h.b16 %v681
    %v6176 = vunpack.c.l.b16 %v682
    %v6177 = vunpack.c.h.b16 %v682
    %v6178 = vunpack.c.l.b16 %v683
    %v6179 = vunpack.c.h.b16 %v683
    %v6180 = vunpack.c.l.b16 %v684
    %v6181 = vunpack.c.h.b16 %v684
    %v6182 = vunpack.c.l.b16 %v685
    %v6183 = vunpack.c.h.b16 %v685
    %v6184 = vunpack.c.l.b16 %v686
    %v6185 = vunpack.c.h.b16 %v686
    %v6186 = vunpack.c.l.b16 %v687
    %v6187 = vunpack.c.h.b16 %v687
    %v6188 = vunpack.c.l.b16 %v688
    %v6189 = vunpack.c.h.b16 %v688
    %v6190 = vunpack.c.l.b16 %v689
    %v6191 = vunpack.c.h.b16 %v689
    %v6192 = vunpack.c.l.b16 %v690
    %v6193 = vunpack.c.h.b16 %v690
    %v6194 = vunpack.c.l.b16 %v691
    %v6195 = vunpack.c.h.b16 %v691
    %v6196 = vunpack.c.l.b16 %v692
    %v6197 = vunpack.c.h.b16 %v692
    %v6198 = vunpack.c.l.b16 %v693
    %v6199 = vunpack.c.h.b16 %v693
    %v6200 = vunpack.c.l.b16 %v694
    %v6201 = vunpack.c.h.b16 %v694
    %v6202 = vunpack.c.l.b16 %v695
    %v6203 = vunpack.c.h.b16 %v695
    %v6204 = vunpack.c.l.b16 %v696
    %v6205 = vunpack.c.h.b16 %v696
    %v6206 = vunpack.c.l.b16 %v697
    %v6207 = vunpack.c.h.b16 %v697
    %v6208 = vunpack.c.l.b16 %v698
    %v6209 = vunpack.c.h.b16 %v698
    %v6210 = vunpack.c.l.b16 %v699
    %v6211 = vunpack.c.h.b16 %v699
    %v6212 = vunpack.c.l.b16 %v700
    %v6213 = vunpack.c.h.b16 %v700
    %v6214 = vunpack.c.l.b16 %v701
    %v6215 = vunpack.c.h.b16 %v701
    %v6216 = vunpack.c.l.b16 %v702
    %v6217 = vunpack.c.h.b16 %v702
    %v6218 = vunpack.c.l.b16 %v703
    %v6219 = vunpack.c.h.b16 %v703
    %v6220 = vunpack.c.l.b16 %v704
    %v6221 = vunpack.c.h.b16 %v704
    %v6222 = vunpack.c.l.b16 %v705
    %v6223 = vunpack.c.h.b16 %v705
    %v6224 = vunpack.c.l.b16 %v706
    %v6225 = vunpack.c.h.b16 %v706
    %v6226 = vunpack.c.l.b16 %v707
    %v6227 = vunpack.c.h.b16 %v707
    %v6228 = vunpack.c.l.b16 %v708
    %v6229 = vunpack.c.h.b16 %v708
    %v6230 = vunpack.c.l.b16 %v709
    %v6231 = vunpack.c.h.b16 %v709
    %v6232 = vunpack.c.l.b16 %v710
    %v6233 = vunpack.c.h.b16 %v710
    %v6234 = vunpack.c.l.b16 %v711
    %v6235 = vunpack.c.h.b16 %v711
    %v6236 = vunpack.c.l.b16 %v712
    %v6237 = vunpack.c.h.b16 %v712
    %v6238 = vunpack.c.l.b16 %v713
    %v6239 = vunpack.c.h.b16 %v713
    %v6240 = vunpack.c.l.b16 %v714
    %v6241 = vunpack.c.h.b16 %v714
    %v6242 = vunpack.c.l.b16 %v715
    %v6243 = vunpack.c.h.b16 %v715
    %v6244 = vunpack.c.l.b16 %v716
    %v6245 = vunpack.c.h.b16 %v716
    %v6246 = vunpack.c.l.b16 %v717
    %v6247 = vunpack.c.h.b16 %v717
    %v6248 = vunpack.c.l.b16 %v718
    %v6249 = vunpack.c.h.b16 %v718
    %v6250 = vunpack.c.l.b16 %v719
    %v6251 = vunpack.c.h.b16 %v719
    %v6252 = vunpack.c.l.b16 %v720
    %v6253 = vunpack.c.h.b16 %v720
    %v6254 = vunpack.c.l.b16 %v721
    %v6255 = vunpack.c.h.b16 %v721
    %v6256 = vunpack.c.l.b16 %v722
    %v6257 = vunpack.c.h.b16 %v722
    %v6258 = vunpack.c.l.b16 %v723
    %v6259 = vunpack.c.h.b16 %v723
    %v6260 = vunpack.c.l.b16 %v724
    %v6261 = vunpack.c.h.b16 %v724
    %v6262 = vunpack.c.l.b16 %v725
    %v6263 = vunpack.c.h.b16 %v725
    %v6264 = vunpack.c.l.b16 %v726
    %v6265 = vunpack.c.h.b16 %v726
    %v6266 = vunpack.c.l.b16 %v727
    %v6267 = vunpack.c.h.b16 %v727
    %v6268 = vunpack.c.l.b16 %v728
    %v6269 = vunpack.c.h.b16 %v728
    %v6270 = vunpack.c.l.b16 %v729
    %v6271 = vunpack.c.h.b16 %v729
    %v6272 = vunpack.c.l.b16 %v730
    %v6273 = vunpack.c.h.b16 %v730
    %v6274 = vunpack.c.l.b16 %v731
    %v6275 = vunpack.c.h.b16 %v731
    %v6276 = vunpack.c.l.b16 %v732
    %v6277 = vunpack.c.h.b16 %v732
    %v6278 = vunpack.c.l.b16 %v733
    %v6279 = vunpack.c.h.b16 %v733
    %v6280 = vunpack.c.l.b16 %v734
    %v6281 = vunpack.c.h.b16 %v734
    %v6282 = vunpack.c.l.b16 %v735
    %v6283 = vunpack.c.h.b16 %v735
    %v6284 = vunpack.c.l.b16 %v736
    %v6285 = vunpack.c.h.b16 %v736
    %v6286 = vunpack.c.l.b16 %v737
    %v6287 = vunpack.c.h.b16 %v737
    %v6288 = vunpack.c.l.b16 %v738
    %v6289 = vunpack.c.h.b16 %v738
    %v6290 = vunpack.c.l.b16 %v739
    %v6291 = vunpack.c.h.b16 %v739
    %v6292 = vunpack.c.l.b16 %v740
    %v6293 = vunpack.c.h.b16 %v740
    %v6294 = vunpack.c.l.b16 %v741
    %v6295 = vunpack.c.h.b16 %v741
    %v6296 = vunpack.c.l.b16 %v742
    %v6297 = vunpack.c.h.b16 %v742
    %v6298 = vunpack.c.l.b16 %v743
    %v6299 = vunpack.c.h.b16 %v743
    %v6300 = vunpack.c.l.b16 %v744
    %v6301 = vunpack.c.h.b16 %v744
    %v6302 = vunpack.c.l.b16 %v745
    %v6303 = vunpack.c.h.b16 %v745
    %v6304 = vunpack.c.l.b16 %v746
    %v6305 = vunpack.c.h.b16 %v746
    %v6306 = vunpack.c.l.b16 %v747
    %v6307 = vunpack.c.h.b16 %v747
    %v6308 = vunpack.c.l.b16 %v748
    %v6309 = vunpack.c.h.b16 %v748
    %v6310 = vunpack.c.l.b16 %v749
    %v6311 = vunpack.c.h.b16 %v749
    %v6312 = vunpack.c.l.b16 %v750
    %v6313 = vunpack.c.h.b16 %v750
    %v6314 = vunpack.c.l.b16 %v751
    %v6315 = vunpack.c.h.b16 %v751
    %v6316 = vunpack.c.l.b16 %v752
    %v6317 = vunpack.c.h.b16 %v752
    %v6318 = vunpack.c.l.b16 %v753
    %v6319 = vunpack.c.h.b16 %v753
    %v6320 = vunpack.c.l.b16 %v754
    %v6321 = vunpack.c.h.b16 %v754
    %v6322 = vunpack.c.l.b16 %v755
    %v6323 = vunpack.c.h.b16 %v755
    %v6324 = vunpack.c.l.b16 %v756
    %v6325 = vunpack.c.h.b16 %v756
    %v6326 = vunpack.c.l.b16 %v757
    %v6327 = vunpack.c.h.b16 %v757
    %v6328 = vunpack.c.l.b16 %v758
    %v6329 = vunpack.c.h.b16 %v758
    %v6330 = vunpack.c.l.b16 %v759
    %v6331 = vunpack.c.h.b16 %v759
    %v6332 = vunpack.c.l.b16 %v760
    %v6333 = vunpack.c.h.b16 %v760
    %v6334 = vunpack.c.l.b16 %v761
    %v6335 = vunpack.c.h.b16 %v761
    %v6336 = vunpack.c.l.b16 %v762
    %v6337 = vunpack.c.h.b16 %v762
    %v6338 = vunpack.c.l.b16 %v763
    %v6339 = vunpack.c.h.b16 %v763
    %v6340 = vunpack.c.l.b16 %v764
    %v6341 = vunpack.c.h.b16 %v764
    %v6342 = vunpack.c.l.b16 %v765
    %v6343 = vunpack.c.h.b16 %v765
    %v6344 = vunpack.c.l.b16 %v766
    %v6345 = vunpack.c.h.b16 %v766
    %v6346 = vunpack.c.l.b16 %v767
    %v6347 = vunpack.c.h.b16 %v767
    %v6348 = vunpack.c.l.b16 %v768
    %v6349 = vunpack.c.h.b16 %v768
    %v6350 = vunpack.c.l.b16 %v769
    %v6351 = vunpack.c.h.b16 %v769
    %v6352 = vunpack.c.l.b16 %v770
    %v6353 = vunpack.c.h.b16 %v770
    %v6354 = vunpack.c.l.b16 %v771
    %v6355 = vunpack.c.h.b16 %v771
    %v6356 = vunpack.c.l.b16 %v772
    %v6357 = vunpack.c.h.b16 %v772
    %v6358 = vunpack.c.l.b16 %v773
    %v6359 = vunpack.c.h.b16 %v773
    %v6360 = vunpack.c.l.b16 %v774
    %v6361 = vunpack.c.h.b16 %v774
    %v6362 = vunpack.c.l.b16 %v775
    %v6363 = vunpack.c.h.b16 %v775
    %v6364 = vunpack.c.l.b16 %v776
    %v6365 = vunpack.c.h.b16 %v776
    %v6366 = vunpack.c.l.b16 %v777
    %v6367 = vunpack.c.h.b16 %v777
    %v6368 = vunpack.c.l.b16 %v778
    %v6369 = vunpack.c.h.b16 %v778
    %v6370 = vunpack.c.l.b16 %v779
    %v6371 = vunpack.c.h.b16 %v779
    %v6372 = vunpack.c.l.b16 %v780
    %v6373 = vunpack.c.h.b16 %v780
    %v6374 = vunpack.c.l.b16 %v781
    %v6375 = vunpack.c.h.b16 %v781
    %v6376 = vunpack.c.l.b16 %v782
    %v6377 = vunpack.c.h.b16 %v782
    %v6378 = vunpack.c.l.b16 %v783
    %v6379 = vunpack.c.h.b16 %v783
    %v6380 = vunpack.c.l.b16 %v784
    %v6381 = vunpack.c.h.b16 %v784
    %v6382 = vunpack.c.l.b16 %v785
    %v6383 = vunpack.c.h.b16 %v785
    %v6384 = vunpack.c.l.b16 %v786
    %v6385 = vunpack.c.h.b16 %v786
    %v6386 = vunpack.c.l.b16 %v787
    %v6387 = vunpack.c.h.b16 %v787
    %v6388 = vunpack.c.l.b16 %v788
    %v6389 = vunpack.c.h.b16 %v788
    %v6390 = vunpack.c.l.b16 %v789
    %v6391 = vunpack.c.h.b16 %v789
    %v6392 = vunpack.c.l.b16 %v790
    %v6393 = vunpack.c.h.b16 %v790
    %v6394 = vunpack.c.l.b16 %v791
    %v6395 = vunpack.c.h.b16 %v791
    %v6396 = vunpack.c.l.b16 %v792
    %v6397 = vunpack.c.h.b16 %v792
    %v6398 = vunpack.c.l.b16 %v793
    %v6399 = vunpack.c.h.b16 %v793
    %v6400 = vunpack.c.l.b16 %v794
    %v6401 = vunpack.c.h.b16 %v794
    %v6402 = vunpack.c.l.b16 %v795
    %v6403 = vunpack.c.h.b16 %v795
    %v6404 = vunpack.c.l.b16 %v796
    %v6405 = vunpack.c.h.b16 %v796
    %v6406 = vunpack.c.l.b16 %v797
    %v6407 = vunpack.c.h.b16 %v797
    %v6408 = vunpack.c.l.b16 %v798
    %v6409 = vunpack.c.h.b16 %v798
    %v6410 = vunpack.c.l.b16 %v799
    %v6411 = vunpack.c.h.b16 %v799
    %v6412 = vunpack.c.l.b16 %v800
    %v6413 = vunpack.c.h.b16 %v800
    %v6414 = vunpack.c.l.b16 %v801
    %v6415 = vunpack.c.h.b16 %v801
    %v6416 = vunpack.c.l.b16 %v802
    %v6417 = vunpack.c.h.b16 %v802
    %v6418 = vunpack.c.l.b16 %v803
    %v6419 = vunpack.c.h.b16 %v803
    %v6420 = vunpack.c.l.b16 %v804
    %v6421 = vunpack.c.h.b16 %v804
    %v6422 = vunpack.c.l.b16 %v805
    %v6423 = vunpack.c.h.b16 %v805
    %v6424 = vunpack.c.l.b16 %v806
    %v6425 = vunpack.c.h.b16 %v806
    %v6426 = vunpack.c.l.b16 %v807
    %v6427 = vunpack.c.h.b16 %v807
    %v6428 = vunpack.c.l.b16 %v808
    %v6429 = vunpack.c.h.b16 %v808
    %v6430 = vunpack.c.l.b16 %v809
    %v6431 = vunpack.c.h.b16 %v809
    %v6432 = vunpack.c.l.b16 %v810
    %v6433 = vunpack.c.h.b16 %v810
    %v6434 = vunpack.c.l.b16 %v811
    %v6435 = vunpack.c.h.b16 %v811
    %v6436 = vunpack.c.l.b16 %v812
    %v6437 = vunpack.c.h.b16 %v812
    %v6438 = vunpack.c.l.b16 %v813
    %v6439 = vunpack.c.h.b16 %v813
    %v6440 = vunpack.c.l.b16 %v814
    %v6441 = vunpack.c.h.b16 %v814
    %v6442 = vunpack.c.l.b16 %v815
    %v6443 = vunpack.c.h.b16 %v815
    %v6444 = vunpack.c.l.b16 %v816
    %v6445 = vunpack.c.h.b16 %v816
    %v6446 = vunpack.c.l.b16 %v817
    %v6447 = vunpack.c.h.b16 %v817
    %v6448 = vunpack.c.l.b16 %v818
    %v6449 = vunpack.c.h.b16 %v818
    %v6450 = vunpack.c.l.b16 %v819
    %v6451 = vunpack.c.h.b16 %v819
    %v6452 = vunpack.c.l.b16 %v820
    %v6453 = vunpack.c.h.b16 %v820
    %v6454 = vunpack.c.l.b16 %v821
    %v6455 = vunpack.c.h.b16 %v821
    %v6456 = vunpack.c.l.b16 %v822
    %v6457 = vunpack.c.h.b16 %v822
    %v6458 = vunpack.c.l.b16 %v823
    %v6459 = vunpack.c.h.b16 %v823
    %v6460 = vunpack.c.l.b16 %v824
    %v6461 = vunpack.c.h.b16 %v824
    %v6462 = vunpack.c.l.b16 %v825
    %v6463 = vunpack.c.h.b16 %v825
    %v6464 = vunpack.c.l.b16 %v826
    %v6465 = vunpack.c.h.b16 %v826
    %v6466 = vunpack.c.l.b16 %v827
    %v6467 = vunpack.c.h.b16 %v827
    %v6468 = vunpack.c.l.b16 %v828
    %v6469 = vunpack.c.h.b16 %v828
    %v6470 = vunpack.c.l.b16 %v829
    %v6471 = vunpack.c.h.b16 %v829
    %v6472 = vunpack.c.l.b16 %v830
    %v6473 = vunpack.c.h.b16 %v830
    %v6474 = vunpack.c.l.b16 %v831
    %v6475 = vunpack.c.h.b16 %v831
    %v6476 = vunpack.c.l.b16 %v832
    %v6477 = vunpack.c.h.b16 %v832
    %v6478 = vunpack.c.l.b16 %v833
    %v6479 = vunpack.c.h.b16 %v833
    %v6480 = vunpack.c.l.b16 %v834
    %v6481 = vunpack.c.h.b16 %v834
    %v6482 = vunpack.c.l.b16 %v835
    %v6483 = vunpack.c.h.b16 %v835
    %v6484 = vunpack.c.l.b16 %v836
    %v6485 = vunpack.c.h.b16 %v836
    %v6486 = vunpack.c.l.b16 %v837
    %v6487 = vunpack.c.h.b16 %v837
    %v6488 = vunpack.c.l.b16 %v838
    %v6489 = vunpack.c.h.b16 %v838
    %v6490 = vunpack.c.l.b16 %v839
    %v6491 = vunpack.c.h.b16 %v839
    %v6492 = vunpack.c.l.b16 %v840
    %v6493 = vunpack.c.h.b16 %v840
    %v6494 = vunpack.c.l.b16 %v841
    %v6495 = vunpack.c.h.b16 %v841
    %v6496 = vunpack.c.l.b16 %v842
    %v6497 = vunpack.c.h.b16 %v842
    %v6498 = vunpack.c.l.b16 %v843
    %v6499 = vunpack.c.h.b16 %v843
    %v6500 = vunpack.c.l.b16 %v844
    %v6501 = vunpack.c.h.b16 %v844
    %v6502 = vunpack.c.l.b16 %v845
    %v6503 = vunpack.c.h.b16 %v845
    %v6504 = vunpack.c.l.b16 %v846
    %v6505 = vunpack.c.h.b16 %v846
    %v6506 = vunpack.c.l.b16 %v847
    %v6507 = vunpack.c.h.b16 %v847
    %v6508 = vunpack.c.l.b16 %v848
    %v6509 = vunpack.c.h.b16 %v848
    %v6510 = vunpack.c.l.b16 %v849
    %v6511 = vunpack.c.h.b16 %v849
    %v6512 = vunpack.c.l.b16 %v850
    %v6513 = vunpack.c.h.b16 %v850
    %v6514 = vunpack.c.l.b16 %v851
    %v6515 = vunpack.c.h.b16 %v851
    %v6516 = vunpack.c.l.b16 %v852
    %v6517 = vunpack.c.h.b16 %v852
    %v6518 = vunpack.c.l.b16 %v853
    %v6519 = vunpack.c.h.b16 %v853
    %v6520 = vunpack.c.l.b16 %v854
    %v6521 = vunpack.c.h.b16 %v854
    %v6522 = vunpack.c.l.b16 %v855
    %v6523 = vunpack.c.h.b16 %v855
    %v6524 = vunpack.c.l.b16 %v856
    %v6525 = vunpack.c.h.b16 %v856
    %v6526 = vunpack.c.l.b16 %v857
    %v6527 = vunpack.c.h.b16 %v857
    %v6528 = vunpack.c.l.b16 %v858
    %v6529 = vunpack.c.h.b16 %v858
    %v6530 = vunpack.c.l.b16 %v859
    %v6531 = vunpack.c.h.b16 %v859
    %v6532 = vunpack.c.l.b16 %v860
    %v6533 = vunpack.c.h.b16 %v860
    %v6534 = vunpack.c.l.b16 %v861
    %v6535 = vunpack.c.h.b16 %v861
    %v6536 = vunpack.c.l.b16 %v862
    %v6537 = vunpack.c.h.b16 %v862
    %v6538 = vunpack.c.l.b16 %v863
    %v6539 = vunpack.c.h.b16 %v863
    %v6540 = vunpack.c.l.b16 %v864
    %v6541 = vunpack.c.h.b16 %v864
    %v6542 = vunpack.c.l.b16 %v865
    %v6543 = vunpack.c.h.b16 %v865
    %v6544 = vunpack.c.l.b16 %v866
    %v6545 = vunpack.c.h.b16 %v866
    %v6546 = vunpack.c.l.b16 %v867
    %v6547 = vunpack.c.h.b16 %v867
    %v6548 = vunpack.c.l.b16 %v868
    %v6549 = vunpack.c.h.b16 %v868
    %v6550 = vunpack.c.l.b16 %v869
    %v6551 = vunpack.c.h.b16 %v869
    %v6552 = vunpack.c.l.b16 %v870
    %v6553 = vunpack.c.h.b16 %v870
    %v6554 = vunpack.c.l.b16 %v871
    %v6555 = vunpack.c.h.b16 %v871
    %v6556 = vunpack.c.l.b16 %v872
    %v6557 = vunpack.c.h.b16 %v872
    %v6558 = vunpack.c.l.b16 %v873
    %v6559 = vunpack.c.h.b16 %v873
    %v6560 = vunpack.c.l.b16 %v874
    %v6561 = vunpack.c.h.b16 %v874
    %v6562 = vunpack.c.l.b16 %v875
    %v6563 = vunpack.c.h.b16 %v875
    %v6564 = vunpack.c.l.b16 %v876
    %v6565 = vunpack.c.h.b16 %v876
    %v6566 = vunpack.c.l.b16 %v877
    %v6567 = vunpack.c.h.b16 %v877
    %v6568 = vunpack.c.l.b16 %v878
    %v6569 = vunpack.c.h.b16 %v878
    %v6570 = vpack.c.b16 %v5814, %v5802
    %v6571 = vpack.c.b16 %v5815, %v5803
    %v6572 = vpack.c.b16 %v5816, %v5804
    %v6573 = vpack.c.b16 %v5817, %v5805
    %v6574 = vpack.c.b16 %v5818, %v5806
    %v6575 = vpack.c.b16 %v5819, %v5807
    %v6576 = vpack.c.b16 %v5820, %v5808
    %v6577 = vpack.c.b16 %v5821, %v5809
    %v6578 = vpack.c.b16 %v5822, %v5810
    %v6579 = vpack.c.b16 %v5823, %v5811
    %v6580 = vpack.c.b16 %v5824, %v5812
    %v6581 = vpack.c.b16 %v5825, %v5813
    %v6582 = vpack.c.b16 %v5838, %v5826
    %v6583 = vpack.c.b16 %v5839, %v5827
    %v6584 = vpack.c.b16 %v5840, %v5828
    %v6585 = vpack.c.b16 %v5841, %v5829
    %v6586 = vpack.c.b16 %v5842, %v5830
    %v6587 = vpack.c.b16 %v5843, %v5831
    %v6588 = vpack.c.b16 %v5844, %v5832
    %v6589 = vpack.c.b16 %v5845, %v5833
    %v6590 = vpack.c.b16 %v5846, %v5834
    %v6591 = vpack.c.b16 %v5847, %v5835
    %v6592 = vpack.c.b16 %v5848, %v5836
    %v6593 = vpack.c.b16 %v5849, %v5837
    %v6594 = vpack.c.b16 %v5862, %v5850
    %v6595 = vpack.c.b16 %v5863, %v5851
    %v6596 = vpack.c.b16 %v5864, %v5852
    %v6597 = vpack.c.b16 %v5865, %v5853
    %v6598 = vpack.c.b16 %v5866, %v5854
    %v6599 = vpack.c.b16 %v5867, %v5855
    %v6600 = vpack.c.b16 %v5868, %v5856
    %v6601 = vpack.c.b16 %v5869, %v5857
    %v6602 = vpack.c.b16 %v5870, %v5858
    %v6603 = vpack.c.b16 %v5871, %v5859
    %v6604 = vpack.c.b16 %v5872, %v5860
    %v6605 = vpack.c.b16 %v5873, %v5861
    %v6606 = vpack.c.b16 %v5886, %v5874
    %v6607 = vpack.c.b16 %v5887, %v5875
    %v6608 = vpack.c.b16 %v5888, %v5876
    %v6609 = vpack.c.b16 %v5889, %v5877
    %v6610 = vpack.c.b16 %v5890, %v5878
    %v6611 = vpack.c.b16 %v5891, %v5879
    %v6612 = vpack.c.b16 %v5892, %v5880
    %v6613 = vpack.c.b16 %v5893, %v5881
    %v6614 = vpack.c.b16 %v5894, %v5882
    %v6615 = vpack.c.b16 %v5895, %v5883
    %v6616 = vpack.c.b16 %v5896, %v5884
    %v6617 = vpack.c.b16 %v5897, %v5885
    %v6618 = vpack.c.b16 %v5910, %v5898
    %v6619 = vpack.c.b16 %v5911, %v5899
    %v6620 = vpack.c.b16 %v5912, %v5900
    %v6621 = vpack.c.b16 %v5913, %v5901
    %v6622 = vpack.c.b16 %v5914, %v5902
    %v6623 = vpack.c.b16 %v5915, %v5903
    %v6624 = vpack.c.b16 %v5916, %v5904
    %v6625 = vpack.c.b16 %v5917, %v5905
    %v6626 = vpack.c.b16 %v5918, %v5906
    %v6627 = vpack.c.b16 %v5919, %v5907
    %v6628 = vpack.c.b16 %v5920, %v5908
    %v6629 = vpack.c.b16 %v5921, %v5909
    %v6630 = vpack.c.b16 %v5934, %v5922
    %v6631 = vpack.c.b16 %v5935, %v5923
    %v6632 = vpack.c.b16 %v5936, %v5924
    %v6633 = vpack.c.b16 %v5937, %v5925
    %v6634 = vpack.c.b16 %v5938, %v5926
    %v6635 = vpack.c.b16 %v5939, %v5927
    %v6636 = vpack.c.b16 %v5940, %v5928
    %v6637 = vpack.c.b16 %v5941, %v5929
    %v6638 = vpack.c.b16 %v5942, %v5930
    %v6639 = vpack.c.b16 %v5943, %v5931
    %v6640 = vpack.c.b16 %v5944, %v5932
    %v6641 = vpack.c.b16 %v5945, %v5933
    %v6642 = vpack.c.b16 %v5958, %v5946
    %v6643 = vpack.c.b16 %v5959, %v5947
    %v6644 = vpack.c.b16 %v5960, %v5948
    %v6645 = vpack.c.b16 %v5961, %v5949
    %v6646 = vpack.c.b16 %v5962, %v5950
    %v6647 = vpack.c.b16 %v5963, %v5951
    %v6648 = vpack.c.b16 %v5964, %v5952
    %v6649 = vpack.c.b16 %v5965, %v5953
    %v6650 = vpack.c.b16 %v5966, %v5954
    %v6651 = vpack.c.b16 %v5967, %v5955
    %v6652 = vpack.c.b16 %v5968, %v5956
    %v6653 = vpack.c.b16 %v5969, %v5957
    %v6654 = vpack.c.b16 %v5982, %v5970
    %v6655 = vpack.c.b16 %v5983, %v5971
    %v6656 = vpack.c.b16 %v5984, %v5972
    %v6657 = vpack.c.b16 %v5985, %v5973
    %v6658 = vpack.c.b16 %v5986, %v5974
    %v6659 = vpack.c.b16 %v5987, %v5975
    %v6660 = vpack.c.b16 %v5988, %v5976
    %v6661 = vpack.c.b16 %v5989, %v5977
    %v6662 = vpack.c.b16 %v5990, %v5978
    %v6663 = vpack.c.b16 %v5991, %v5979
    %v6664 = vpack.c.b16 %v5992, %v5980
    %v6665 = vpack.c.b16 %v5993, %v5981
    %v6666 = vpack.c.b16 %v6006, %v5994
    %v6667 = vpack.c.b16 %v6007, %v5995
    %v6668 = vpack.c.b16 %v6008, %v5996
    %v6669 = vpack.c.b16 %v6009, %v5997
    %v6670 = vpack.c.b16 %v6010, %v5998
    %v6671 = vpack.c.b16 %v6011, %v5999
    %v6672 = vpack.c.b16 %v6012, %v6000
    %v6673 = vpack.c.b16 %v6013, %v6001
    %v6674 = vpack.c.b16 %v6014, %v6002
    %v6675 = vpack.c.b16 %v6015, %v6003
    %v6676 = vpack.c.b16 %v6016, %v6004
    %v6677 = vpack.c.b16 %v6017, %v6005
    %v6678 = vpack.c.b16 %v6030, %v6018
    %v6679 = vpack.c.b16 %v6031, %v6019
    %v6680 = vpack.c.b16 %v6032, %v6020
    %v6681 = vpack.c.b16 %v6033, %v6021
    %v6682 = vpack.c.b16 %v6034, %v6022
    %v6683 = vpack.c.b16 %v6035, %v6023
    %v6684 = vpack.c.b16 %v6036, %v6024
    %v6685 = vpack.c.b16 %v6037, %v6025
    %v6686 = vpack.c.b16 %v6038, %v6026
    %v6687 = vpack.c.b16 %v6039, %v6027
    %v6688 = vpack.c.b16 %v6040, %v6028
    %v6689 = vpack.c.b16 %v6041, %v6029
    %v6690 = vpack.c.b16 %v6054, %v6042
    %v6691 = vpack.c.b16 %v6055, %v6043
    %v6692 = vpack.c.b16 %v6056, %v6044
    %v6693 = vpack.c.b16 %v6057, %v6045
    %v6694 = vpack.c.b16 %v6058, %v6046
    %v6695 = vpack.c.b16 %v6059, %v6047
    %v6696 = vpack.c.b16 %v6060, %v6048
    %v6697 = vpack.c.b16 %v6061, %v6049
    %v6698 = vpack.c.b16 %v6062, %v6050
    %v6699 = vpack.c.b16 %v6063, %v6051
    %v6700 = vpack.c.b16 %v6064, %v6052
    %v6701 = vpack.c.b16 %v6065, %v6053
    %v6702 = vpack.c.b16 %v6078, %v6066
    %v6703 = vpack.c.b16 %v6079, %v6067
    %v6704 = vpack.c.b16 %v6080, %v6068
    %v6705 = vpack.c.b16 %v6081, %v6069
    %v6706 = vpack.c.b16 %v6082, %v6070
    %v6707 = vpack.c.b16 %v6083, %v6071
    %v6708 = vpack.c.b16 %v6084, %v6072
    %v6709 = vpack.c.b16 %v6085, %v6073
    %v6710 = vpack.c.b16 %v6086, %v6074
    %v6711 = vpack.c.b16 %v6087, %v6075
    %v6712 = vpack.c.b16 %v6088, %v6076
    %v6713 = vpack.c.b16 %v6089, %v6077
    %v6714 = vpack.c.b16 %v6102, %v6090
    %v6715 = vpack.c.b16 %v6103, %v6091
    %v6716 = vpack.c.b16 %v6104, %v6092
    %v6717 = vpack.c.b16 %v6105, %v6093
    %v6718 = vpack.c.b16 %v6106, %v6094
    %v6719 = vpack.c.b16 %v6107, %v6095
    %v6720 = vpack.c.b16 %v6108, %v6096
    %v6721 = vpack.c.b16 %v6109, %v6097
    %v6722 = vpack.c.b16 %v6110, %v6098
    %v6723 = vpack.c.b16 %v6111, %v6099
    %v6724 = vpack.c.b16 %v6112, %v6100
    %v6725 = vpack.c.b16 %v6113, %v6101
    %v6726 = vpack.c.b16 %v6126, %v6114
    %v6727 = vpack.c.b16 %v6127, %v6115
    %v6728 = vpack.c.b16 %v6128, %v6116
    %v6729 = vpack.c.b16 %v6129, %v6117
    %v6730 = vpack.c.b16 %v6130, %v6118
    %v6731 = vpack.c.b16 %v6131, %v6119
    %v6732 = vpack.c.b16 %v6132, %v6120
    %v6733 = vpack.c.b16 %v6133, %v6121
    %v6734 = vpack.c.b16 %v6134, %v6122
    %v6735 = vpack.c.b16 %v6135, %v6123
    %v6736 = vpack.c.b16 %v6136, %v6124
    %v6737 = vpack.c.b16 %v6137, %v6125
    %v6738 = vpack.c.b16 %v6150, %v6138
    %v6739 = vpack.c.b16 %v6151, %v6139
    %v6740 = vpack.c.b16 %v6152, %v6140
    %v6741 = vpack.c.b16 %v6153, %v6141
    %v6742 = vpack.c.b16 %v6154, %v6142
    %v6743 = vpack.c.b16 %v6155, %v6143
    %v6744 = vpack.c.b16 %v6156, %v6144
    %v6745 = vpack.c.b16 %v6157, %v6145
    %v6746 = vpack.c.b16 %v6158, %v6146
    %v6747 = vpack.c.b16 %v6159, %v6147
    %v6748 = vpack.c.b16 %v6160, %v6148
    %v6749 = vpack.c.b16 %v6161, %v6149
    %v6750 = vpack.c.b16 %v6174, %v6162
    %v6751 = vpack.c.b16 %v6175, %v6163
    %v6752 = vpack.c.b16 %v6176, %v6164
    %v6753 = vpack.c.b16 %v6177, %v6165
    %v6754 = vpack.c.b16 %v6178, %v6166
    %v6755 = vpack.c.b16 %v6179, %v6167
    %v6756 = vpack.c.b16 %v6180, %v6168
    %v6757 = vpack.c.b16 %v6181, %v6169
    %v6758 = vpack.c.b16 %v6182, %v6170
    %v6759 = vpack.c.b16 %v6183, %v6171
    %v6760 = vpack.c.b16 %v6184, %v6172
    %v6761 = vpack.c.b16 %v6185, %v6173
    %v6762 = vpack.c.b16 %v6198, %v6186
    %v6763 = vpack.c.b16 %v6199, %v6187
    %v6764 = vpack.c.b16 %v6200, %v6188
    %v6765 = vpack.c.b16 %v6201, %v6189
    %v6766 = vpack.c.b16 %v6202, %v6190
    %v6767 = vpack.c.b16 %v6203, %v6191
    %v6768 = vpack.c.b16 %v6204, %v6192
    %v6769 = vpack.c.b16 %v6205, %v6193
    %v6770 = vpack.c.b16 %v6206, %v6194
    %v6771 = vpack.c.b16 %v6207, %v6195
    %v6772 = vpack.c.b16 %v6208, %v6196
    %v6773 = vpack.c.b16 %v6209, %v6197
    %v6774 = vpack.c.b16 %v6222, %v6210
    %v6775 = vpack.c.b16 %v6223, %v6211
    %v6776 = vpack.c.b16 %v6224, %v6212
    %v6777 = vpack.c.b16 %v6225, %v6213
    %v6778 = vpack.c.b16 %v6226, %v6214
    %v6779 = vpack.c.b16 %v6227, %v6215
    %v6780 = vpack.c.b16 %v6228, %v6216
    %v6781 = vpack.c.b16 %v6229, %v6217
    %v6782 = vpack.c.b16 %v6230, %v6218
    %v6783 = vpack.c.b16 %v6231, %v6219
    %v6784 = vpack.c.b16 %v6232, %v6220
    %v6785 = vpack.c.b16 %v6233, %v6221
    %v6786 = vpack.c.b16 %v6246, %v6234
    %v6787 = vpack.c.b16 %v6247, %v6235
    %v6788 = vpack.c.b16 %v6248, %v6236
    %v6789 = vpack.c.b16 %v6249, %v6237
    %v6790 = vpack.c.b16 %v6250, %v6238
    %v6791 = vpack.c.b16 %v6251, %v6239
    %v6792 = vpack.c.b16 %v6252, %v6240
    %v6793 = vpack.c.b16 %v6253, %v6241
    %v6794 = vpack.c.b16 %v6254, %v6242
    %v6795 = vpack.c.b16 %v6255, %v6243
    %v6796 = vpack.c.b16 %v6256, %v6244
    %v6797 = vpack.c.b16 %v6257, %v6245
    %v6798 = vpack.c.b16 %v6270, %v6258
    %v6799 = vpack.c.b16 %v6271, %v6259
    %v6800 = vpack.c.b16 %v6272, %v6260
    %v6801 = vpack.c.b16 %v6273, %v6261
    %v6802 = vpack.c.b16 %v6274, %v6262
    %v6803 = vpack.c.b16 %v6275, %v6263
    %v6804 = vpack.c.b16 %v6276, %v6264
    %v6805 = vpack.c.b16 %v6277, %v6265
    %v6806 = vpack.c.b16 %v6278, %v6266
    %v6807 = vpack.c.b16 %v6279, %v6267
    %v6808 = vpack.c.b16 %v6280, %v6268
    %v6809 = vpack.c.b16 %v6281, %v6269
    %v6810 = vpack.c.b16 %v6294, %v6282
    %v6811 = vpack.c.b16 %v6295, %v6283
    %v6812 = vpack.c.b16 %v6296, %v6284
    %v6813 = vpack.c.b16 %v6297, %v6285
    %v6814 = vpack.c.b16 %v6298, %v6286
    %v6815 = vpack.c.b16 %v6299, %v6287
    %v6816 = vpack.c.b16 %v6300, %v6288
    %v6817 = vpack.c.b16 %v6301, %v6289
    %v6818 = vpack.c.b16 %v6302, %v6290
    %v6819 = vpack.c.b16 %v6303, %v6291
    %v6820 = vpack.c.b16 %v6304, %v6292
    %v6821 = vpack.c.b16 %v6305, %v6293
    %v6822 = vpack.c.b16 %v6318, %v6306
    %v6823 = vpack.c.b16 %v6319, %v6307
    %v6824 = vpack.c.b16 %v6320, %v6308
    %v6825 = vpack.c.b16 %v6321, %v6309
    %v6826 = vpack.c.b16 %v6322, %v6310
    %v6827 = vpack.c.b16 %v6323, %v6311
    %v6828 = vpack.c.b16 %v6324, %v6312
    %v6829 = vpack.c.b16 %v6325, %v6313
    %v6830 = vpack.c.b16 %v6326, %v6314
    %v6831 = vpack.c.b16 %v6327, %v6315
    %v6832 = vpack.c.b16 %v6328, %v6316
    %v6833 = vpack.c.b16 %v6329, %v6317
    %v6834 = vpack.c.b16 %v6342, %v6330
    %v6835 = vpack.c.b16 %v6343, %v6331
    %v6836 = vpack.c.b16 %v6344, %v6332
    %v6837 = vpack.c.b16 %v6345, %v6333
    %v6838 = vpack.c.b16 %v6346, %v6334
    %v6839 = vpack.c.b16 %v6347, %v6335
    %v6840 = vpack.c.b16 %v6348, %v6336
    %v6841 = vpack.c.b16 %v6349, %v6337
    %v6842 = vpack.c.b16 %v6350, %v6338
    %v6843 = vpack.c.b16 %v6351, %v6339
    %v6844 = vpack.c.b16 %v6352, %v6340
    %v6845 = vpack.c.b16 %v6353, %v6341
    %v6846 = vpack.c.b16 %v6366, %v6354
    %v6847 = vpack.c.b16 %v6367, %v6355
    %v6848 = vpack.c.b16 %v6368, %v6356
    %v6849 = vpack.c.b16 %v6369, %v6357
    %v6850 = vpack.c.b16 %v6370, %v6358
    %v6851 = vpack.c.b16 %v6371, %v6359
    %v6852 = vpack.c.b16 %v6372, %v6360
    %v6853 = vpack.c.b16 %v6373, %v6361
    %v6854 = vpack.c.b16 %v6374, %v6362
    %v6855 = vpack.c.b16 %v6375, %v6363
    %v6856 = vpack.c.b16 %v6376, %v6364
    %v6857 = vpack.c.b16 %v6377, %v6365
    %v6858 = vpack.c.b16 %v6390, %v6378
    %v6859 = vpack.c.b16 %v6391, %v6379
    %v6860 = vpack.c.b16 %v6392, %v6380
    %v6861 = vpack.c.b16 %v6393, %v6381
    %v6862 = vpack.c.b16 %v6394, %v6382
    %v6863 = vpack.c.b16 %v6395, %v6383
    %v6864 = vpack.c.b16 %v6396, %v6384
    %v6865 = vpack.c.b16 %v6397, %v6385
    %v6866 = vpack.c.b16 %v6398, %v6386
    %v6867 = vpack.c.b16 %v6399, %v6387
    %v6868 = vpack.c.b16 %v6400, %v6388
    %v6869 = vpack.c.b16 %v6401, %v6389
    %v6870 = vpack.c.b16 %v6414, %v6402
    %v6871 = vpack.c.b16 %v6415, %v6403
    %v6872 = vpack.c.b16 %v6416, %v6404
    %v6873 = vpack.c.b16 %v6417, %v6405
    %v6874 = vpack.c.b16 %v6418, %v6406
    %v6875 = vpack.c.b16 %v6419, %v6407
    %v6876 = vpack.c.b16 %v6420, %v6408
    %v6877 = vpack.c.b16 %v6421, %v6409
    %v6878 = vpack.c.b16 %v6422, %v6410
    %v6879 = vpack.c.b16 %v6423, %v6411
    %v6880 = vpack.c.b16 %v6424, %v6412
    %v6881 = vpack.c.b16 %v6425, %v6413
    %v6882 = vpack.c.b16 %v6438, %v6426
    %v6883 = vpack.c.b16 %v6439, %v6427
    %v6884 = vpack.c.b16 %v6440, %v6428
    %v6885 = vpack.c.b16 %v6441, %v6429
    %v6886 = vpack.c.b16 %v6442, %v6430
    %v6887 = vpack.c.b16 %v6443, %v6431
    %v6888 = vpack.c.b16 %v6444, %v6432
    %v6889 = vpack.c.b16 %v6445, %v6433
    %v6890 = vpack.c.b16 %v6446, %v6434
    %v6891 = vpack.c.b16 %v6447, %v6435
    %v6892 = vpack.c.b16 %v6448, %v6436
    %v6893 = vpack.c.b16 %v6449, %v6437
    %v6894 = vpack.c.b16 %v6462, %v6450
    %v6895 = vpack.c.b16 %v6463, %v6451
    %v6896 = vpack.c.b16 %v6464, %v6452
    %v6897 = vpack.c.b16 %v6465, %v6453
    %v6898 = vpack.c.b16 %v6466, %v6454
    %v6899 = vpack.c.b16 %v6467, %v6455
    %v6900 = vpack.c.b16 %v6468, %v6456
    %v6901 = vpack.c.b16 %v6469, %v6457
    %v6902 = vpack.c.b16 %v6470, %v6458
    %v6903 = vpack.c.b16 %v6471, %v6459
    %v6904 = vpack.c.b16 %v6472, %v6460
    %v6905 = vpack.c.b16 %v6473, %v6461
    %v6906 = vpack.c.b16 %v6486, %v6474
    %v6907 = vpack.c.b16 %v6487, %v6475
    %v6908 = vpack.c.b16 %v6488, %v6476
    %v6909 = vpack.c.b16 %v6489, %v6477
    %v6910 = vpack.c.b16 %v6490, %v6478
    %v6911 = vpack.c.b16 %v6491, %v6479
    %v6912 = vpack.c.b16 %v6492, %v6480
    %v6913 = vpack.c.b16 %v6493, %v6481
    %v6914 = vpack.c.b16 %v6494, %v6482
    %v6915 = vpack.c.b16 %v6495, %v6483
    %v6916 = vpack.c.b16 %v6496, %v6484
    %v6917 = vpack.c.b16 %v6497, %v6485
    %v6918 = vpack.c.b16 %v6510, %v6498
    %v6919 = vpack.c.b16 %v6511, %v6499
    %v6920 = vpack.c.b16 %v6512, %v6500
    %v6921 = vpack.c.b16 %v6513, %v6501
    %v6922 = vpack.c.b16 %v6514, %v6502
    %v6923 = vpack.c.b16 %v6515, %v6503
    %v6924 = vpack.c.b16 %v6516, %v6504
    %v6925 = vpack.c.b16 %v6517, %v6505
    %v6926 = vpack.c.b16 %v6518, %v6506
    %v6927 = vpack.c.b16 %v6519, %v6507
    %v6928 = vpack.c.b16 %v6520, %v6508
    %v6929 = vpack.c.b16 %v6521, %v6509
    %v6930 = vpack.c.b16 %v6534, %v6522
    %v6931 = vpack.c.b16 %v6535, %v6523
    %v6932 = vpack.c.b16 %v6536, %v6524
    %v6933 = vpack.c.b16 %v6537, %v6525
    %v6934 = vpack.c.b16 %v6538, %v6526
    %v6935 = vpack.c.b16 %v6539, %v6527
    %v6936 = vpack.c.b16 %v6540, %v6528
    %v6937 = vpack.c.b16 %v6541, %v6529
    %v6938 = vpack.c.b16 %v6542, %v6530
    %v6939 = vpack.c.b16 %v6543, %v6531
    %v6940 = vpack.c.b16 %v6544, %v6532
    %v6941 = vpack.c.b16 %v6545, %v6533
    %v6942 = vpack.c.b16 %v6558, %v6546
    %v6943 = vpack.c.b16 %v6559, %v6547
    %v6944 = vpack.c.b16 %v6560, %v6548
    %v6945 = vpack.c.b16 %v6561, %v6549
    %v6946 = vpack.c.b16 %v6562, %v6550
    %v6947 = vpack.c.b16 %v6563, %v6551
    %v6948 = vpack.c.b16 %v6564, %v6552
    %v6949 = vpack.c.b16 %v6565, %v6553
    %v6950 = vpack.c.b16 %v6566, %v6554
    %v6951 = vpack.c.b16 %v6567, %v6555
    %v6952 = vpack.c.b16 %v6568, %v6556
    %v6953 = vpack.c.b16 %v6569, %v6557
    %7338 = vmatpush.bf16.msra.mxu0 %v6654
    %7339 = vmatpush.bf16.msra.mxu0 %v6642
    %7340 = vmatpush.bf16.msra.mxu0 %v6630
    %7341 = vmatpush.bf16.msra.mxu0 %v6618
    %7342 = vmatpush.bf16.msra.mxu0 %v6606
    %7343 = vmatpush.bf16.msra.mxu0 %v6594
    %7344 = vmatpush.bf16.msra.mxu0 %v6582
    %7345 = vmatpush.bf16.msra.mxu0 %v6570
    %7346 = vmatmul.bf16.gmra.mxu0 0
    %v7347 = vpop.f32.mrf.mxu0
    %v7348 = vadd.f32 %v5394, %v7347
    %v7349 = vpop.f32.mrf.mxu0
    %7350 = vdwg.mxu0
    %7351 = vmatpush.bf16.msra.mxu0 %v6750
    %7352 = vmatpush.bf16.msra.mxu0 %v6738
    %7353 = vmatpush.bf16.msra.mxu0 %v6726
    %7354 = vmatpush.bf16.msra.mxu0 %v6714
    %7355 = vmatpush.bf16.msra.mxu0 %v6702
    %7356 = vmatpush.bf16.msra.mxu0 %v6690
    %7357 = vmatpush.bf16.msra.mxu0 %v6678
    %7358 = vmatpush.bf16.msra.mxu0 %v6666
    %7359 = vmatmul.bf16.gmra.mxu0 0
    %v7360 = vpop.f32.mrf.mxu0
    %v7361 = vadd.f32 %v7348, %v7360
    %v7362 = vpop.f32.mrf.mxu0
    %7363 = vdwg.mxu0
    %7364 = vmatpush.bf16.msra.mxu0 %v6846
    %7365 = vmatpush.bf16.msra.mxu0 %v6834
    %7366 = vmatpush.bf16.msra.mxu0 %v6822
    %7367 = vmatpush.bf16.msra.mxu0 %v6810
    %7368 = vmatpush.bf16.msra.mxu0 %v6798
    %7369 = vmatpush.bf16.msra.mxu0 %v6786
    %7370 = vmatpush.bf16.msra.mxu0 %v6774
    %7371 = vmatpush.bf16.msra.mxu0 %v6762
    %7372 = vmatmul.bf16.gmra.mxu0 0
    %v7373 = vpop.f32.mrf.mxu0
    %v7374 = vadd.f32 %v7361, %v7373
    %v7375 = vpop.f32.mrf.mxu0
    %7376 = vdwg.mxu0
    %7377 = vmatpush.bf16.msra.mxu0 %v6942
    %7378 = vmatpush.bf16.msra.mxu0 %v6930
    %7379 = vmatpush.bf16.msra.mxu0 %v6918
    %7380 = vmatpush.bf16.msra.mxu0 %v6906
    %7381 = vmatpush.bf16.msra.mxu0 %v6894
    %7382 = vmatpush.bf16.msra.mxu0 %v6882
    %7383 = vmatpush.bf16.msra.mxu0 %v6870
    %7384 = vmatpush.bf16.msra.mxu0 %v6858
    %7385 = vmatmul.bf16.gmra.mxu0 0
    %v7386 = vpop.f32.mrf.mxu0
    %v7387 = vadd.f32 %v7374, %v7386
    %v7388 = vpop.f32.mrf.mxu0
    %7389 = vdwg.mxu0
    %7390 = vmatpush.bf16.msra.mxu0 %v6655
    %7391 = vmatpush.bf16.msra.mxu0 %v6643
    %7392 = vmatpush.bf16.msra.mxu0 %v6631
    %7393 = vmatpush.bf16.msra.mxu0 %v6619
    %7394 = vmatpush.bf16.msra.mxu0 %v6607
    %7395 = vmatpush.bf16.msra.mxu0 %v6595
    %7396 = vmatpush.bf16.msra.mxu0 %v6583
    %7397 = vmatpush.bf16.msra.mxu0 %v6571
    %7398 = vmatmul.bf16.gmra.mxu0 0
    %v7399 = vpop.f32.mrf.mxu0
    %v7400 = vadd.f32 %v5395, %v7399
    %v7401 = vpop.f32.mrf.mxu0
    %7402 = vdwg.mxu0
    %7403 = vmatpush.bf16.msra.mxu0 %v6751
    %7404 = vmatpush.bf16.msra.mxu0 %v6739
    %7405 = vmatpush.bf16.msra.mxu0 %v6727
    %7406 = vmatpush.bf16.msra.mxu0 %v6715
    %7407 = vmatpush.bf16.msra.mxu0 %v6703
    %7408 = vmatpush.bf16.msra.mxu0 %v6691
    %7409 = vmatpush.bf16.msra.mxu0 %v6679
    %7410 = vmatpush.bf16.msra.mxu0 %v6667
    %7411 = vmatmul.bf16.gmra.mxu0 0
    %v7412 = vpop.f32.mrf.mxu0
    %v7413 = vadd.f32 %v7400, %v7412
    %v7414 = vpop.f32.mrf.mxu0
    %7415 = vdwg.mxu0
    %7416 = vmatpush.bf16.msra.mxu0 %v6847
    %7417 = vmatpush.bf16.msra.mxu0 %v6835
    %7418 = vmatpush.bf16.msra.mxu0 %v6823
    %7419 = vmatpush.bf16.msra.mxu0 %v6811
    %7420 = vmatpush.bf16.msra.mxu0 %v6799
    %7421 = vmatpush.bf16.msra.mxu0 %v6787
    %7422 = vmatpush.bf16.msra.mxu0 %v6775
    %7423 = vmatpush.bf16.msra.mxu0 %v6763
    %7424 = vmatmul.bf16.gmra.mxu0 0
    %v7425 = vpop.f32.mrf.mxu0
    %v7426 = vadd.f32 %v7413, %v7425
    %v7427 = vpop.f32.mrf.mxu0
    %7428 = vdwg.mxu0
    %7429 = vmatpush.bf16.msra.mxu0 %v6943
    %7430 = vmatpush.bf16.msra.mxu0 %v6931
    %7431 = vmatpush.bf16.msra.mxu0 %v6919
    %7432 = vmatpush.bf16.msra.mxu0 %v6907
    %7433 = vmatpush.bf16.msra.mxu0 %v6895
    %7434 = vmatpush.bf16.msra.mxu0 %v6883
    %7435 = vmatpush.bf16.msra.mxu0 %v6871
    %7436 = vmatpush.bf16.msra.mxu0 %v6859
    %7437 = vmatmul.bf16.gmra.mxu0 0
    %v7438 = vpop.f32.mrf.mxu0
    %v7439 = vadd.f32 %v7426, %v7438
    %v7440 = vpop.f32.mrf.mxu0
    %7441 = vdwg.mxu0
    %7442 = vmatpush.bf16.msra.mxu0 %v6656
    %7443 = vmatpush.bf16.msra.mxu0 %v6644
    %7444 = vmatpush.bf16.msra.mxu0 %v6632
    %7445 = vmatpush.bf16.msra.mxu0 %v6620
    %7446 = vmatpush.bf16.msra.mxu0 %v6608
    %7447 = vmatpush.bf16.msra.mxu0 %v6596
    %7448 = vmatpush.bf16.msra.mxu0 %v6584
    %7449 = vmatpush.bf16.msra.mxu0 %v6572
    %7450 = vmatmul.bf16.gmra.mxu0 0
    %v7451 = vpop.f32.mrf.mxu0
    %v7452 = vadd.f32 %v5396, %v7451
    %v7453 = vpop.f32.mrf.mxu0
    %7454 = vdwg.mxu0
    %7455 = vmatpush.bf16.msra.mxu0 %v6752
    %7456 = vmatpush.bf16.msra.mxu0 %v6740
    %7457 = vmatpush.bf16.msra.mxu0 %v6728
    %7458 = vmatpush.bf16.msra.mxu0 %v6716
    %7459 = vmatpush.bf16.msra.mxu0 %v6704
    %7460 = vmatpush.bf16.msra.mxu0 %v6692
    %7461 = vmatpush.bf16.msra.mxu0 %v6680
    %7462 = vmatpush.bf16.msra.mxu0 %v6668
    %7463 = vmatmul.bf16.gmra.mxu0 0
    %v7464 = vpop.f32.mrf.mxu0
    %v7465 = vadd.f32 %v7452, %v7464
    %v7466 = vpop.f32.mrf.mxu0
    %7467 = vdwg.mxu0
    %7468 = vmatpush.bf16.msra.mxu0 %v6848
    %7469 = vmatpush.bf16.msra.mxu0 %v6836
    %7470 = vmatpush.bf16.msra.mxu0 %v6824
    %7471 = vmatpush.bf16.msra.mxu0 %v6812
    %7472 = vmatpush.bf16.msra.mxu0 %v6800
    %7473 = vmatpush.bf16.msra.mxu0 %v6788
    %7474 = vmatpush.bf16.msra.mxu0 %v6776
    %7475 = vmatpush.bf16.msra.mxu0 %v6764
    %7476 = vmatmul.bf16.gmra.mxu0 0
    %v7477 = vpop.f32.mrf.mxu0
    %v7478 = vadd.f32 %v7465, %v7477
    %v7479 = vpop.f32.mrf.mxu0
    %7480 = vdwg.mxu0
    %7481 = vmatpush.bf16.msra.mxu0 %v6944
    %7482 = vmatpush.bf16.msra.mxu0 %v6932
    %7483 = vmatpush.bf16.msra.mxu0 %v6920
    %7484 = vmatpush.bf16.msra.mxu0 %v6908
    %7485 = vmatpush.bf16.msra.mxu0 %v6896
    %7486 = vmatpush.bf16.msra.mxu0 %v6884
    %7487 = vmatpush.bf16.msra.mxu0 %v6872
    %7488 = vmatpush.bf16.msra.mxu0 %v6860
    %7489 = vmatmul.bf16.gmra.mxu0 0
    %v7490 = vpop.f32.mrf.mxu0
    %v7491 = vadd.f32 %v7478, %v7490
    %v7492 = vpop.f32.mrf.mxu0
    %7493 = vdwg.mxu0
    %7494 = vmatpush.bf16.msra.mxu0 %v6657
    %7495 = vmatpush.bf16.msra.mxu0 %v6645
    %7496 = vmatpush.bf16.msra.mxu0 %v6633
    %7497 = vmatpush.bf16.msra.mxu0 %v6621
    %7498 = vmatpush.bf16.msra.mxu0 %v6609
    %7499 = vmatpush.bf16.msra.mxu0 %v6597
    %7500 = vmatpush.bf16.msra.mxu0 %v6585
    %7501 = vmatpush.bf16.msra.mxu0 %v6573
    %7502 = vmatmul.bf16.gmra.mxu0 0
    %v7503 = vpop.f32.mrf.mxu0
    %v7504 = vadd.f32 %v5397, %v7503
    %v7505 = vpop.f32.mrf.mxu0
    %7506 = vdwg.mxu0
    %7507 = vmatpush.bf16.msra.mxu0 %v6753
    %7508 = vmatpush.bf16.msra.mxu0 %v6741
    %7509 = vmatpush.bf16.msra.mxu0 %v6729
    %7510 = vmatpush.bf16.msra.mxu0 %v6717
    %7511 = vmatpush.bf16.msra.mxu0 %v6705
    %7512 = vmatpush.bf16.msra.mxu0 %v6693
    %7513 = vmatpush.bf16.msra.mxu0 %v6681
    %7514 = vmatpush.bf16.msra.mxu0 %v6669
    %7515 = vmatmul.bf16.gmra.mxu0 0
    %v7516 = vpop.f32.mrf.mxu0
    %v7517 = vadd.f32 %v7504, %v7516
    %v7518 = vpop.f32.mrf.mxu0
    %7519 = vdwg.mxu0
    %7520 = vmatpush.bf16.msra.mxu0 %v6849
    %7521 = vmatpush.bf16.msra.mxu0 %v6837
    %7522 = vmatpush.bf16.msra.mxu0 %v6825
    %7523 = vmatpush.bf16.msra.mxu0 %v6813
    %7524 = vmatpush.bf16.msra.mxu0 %v6801
    %7525 = vmatpush.bf16.msra.mxu0 %v6789
    %7526 = vmatpush.bf16.msra.mxu0 %v6777
    %7527 = vmatpush.bf16.msra.mxu0 %v6765
    %7528 = vmatmul.bf16.gmra.mxu0 0
    %v7529 = vpop.f32.mrf.mxu0
    %v7530 = vadd.f32 %v7517, %v7529
    %v7531 = vpop.f32.mrf.mxu0
    %7532 = vdwg.mxu0
    %7533 = vmatpush.bf16.msra.mxu0 %v6945
    %7534 = vmatpush.bf16.msra.mxu0 %v6933
    %7535 = vmatpush.bf16.msra.mxu0 %v6921
    %7536 = vmatpush.bf16.msra.mxu0 %v6909
    %7537 = vmatpush.bf16.msra.mxu0 %v6897
    %7538 = vmatpush.bf16.msra.mxu0 %v6885
    %7539 = vmatpush.bf16.msra.mxu0 %v6873
    %7540 = vmatpush.bf16.msra.mxu0 %v6861
    %7541 = vmatmul.bf16.gmra.mxu0 0
    %v7542 = vpop.f32.mrf.mxu0
    %v7543 = vadd.f32 %v7530, %v7542
    %v7544 = vpop.f32.mrf.mxu0
    %7545 = vdwg.mxu0
    %7546 = vmatpush.bf16.msra.mxu0 %v6658
    %7547 = vmatpush.bf16.msra.mxu0 %v6646
    %7548 = vmatpush.bf16.msra.mxu0 %v6634
    %7549 = vmatpush.bf16.msra.mxu0 %v6622
    %7550 = vmatpush.bf16.msra.mxu0 %v6610
    %7551 = vmatpush.bf16.msra.mxu0 %v6598
    %7552 = vmatpush.bf16.msra.mxu0 %v6586
    %7553 = vmatpush.bf16.msra.mxu0 %v6574
    %7554 = vmatmul.bf16.gmra.mxu0 0
    %v7555 = vpop.f32.mrf.mxu0
    %v7556 = vadd.f32 %v5398, %v7555
    %v7557 = vpop.f32.mrf.mxu0
    %7558 = vdwg.mxu0
    %7559 = vmatpush.bf16.msra.mxu0 %v6754
    %7560 = vmatpush.bf16.msra.mxu0 %v6742
    %7561 = vmatpush.bf16.msra.mxu0 %v6730
    %7562 = vmatpush.bf16.msra.mxu0 %v6718
    %7563 = vmatpush.bf16.msra.mxu0 %v6706
    %7564 = vmatpush.bf16.msra.mxu0 %v6694
    %7565 = vmatpush.bf16.msra.mxu0 %v6682
    %7566 = vmatpush.bf16.msra.mxu0 %v6670
    %7567 = vmatmul.bf16.gmra.mxu0 0
    %v7568 = vpop.f32.mrf.mxu0
    %v7569 = vadd.f32 %v7556, %v7568
    %v7570 = vpop.f32.mrf.mxu0
    %7571 = vdwg.mxu0
    %7572 = vmatpush.bf16.msra.mxu0 %v6850
    %7573 = vmatpush.bf16.msra.mxu0 %v6838
    %7574 = vmatpush.bf16.msra.mxu0 %v6826
    %7575 = vmatpush.bf16.msra.mxu0 %v6814
    %7576 = vmatpush.bf16.msra.mxu0 %v6802
    %7577 = vmatpush.bf16.msra.mxu0 %v6790
    %7578 = vmatpush.bf16.msra.mxu0 %v6778
    %7579 = vmatpush.bf16.msra.mxu0 %v6766
    %7580 = vmatmul.bf16.gmra.mxu0 0
    %v7581 = vpop.f32.mrf.mxu0
    %v7582 = vadd.f32 %v7569, %v7581
    %v7583 = vpop.f32.mrf.mxu0
    %7584 = vdwg.mxu0
    %7585 = vmatpush.bf16.msra.mxu0 %v6946
    %7586 = vmatpush.bf16.msra.mxu0 %v6934
    %7587 = vmatpush.bf16.msra.mxu0 %v6922
    %7588 = vmatpush.bf16.msra.mxu0 %v6910
    %7589 = vmatpush.bf16.msra.mxu0 %v6898
    %7590 = vmatpush.bf16.msra.mxu0 %v6886
    %7591 = vmatpush.bf16.msra.mxu0 %v6874
    %7592 = vmatpush.bf16.msra.mxu0 %v6862
    %7593 = vmatmul.bf16.gmra.mxu0 0
    %v7594 = vpop.f32.mrf.mxu0
    %v7595 = vadd.f32 %v7582, %v7594
    %v7596 = vpop.f32.mrf.mxu0
    %7597 = vdwg.mxu0
    %7598 = vmatpush.bf16.msra.mxu0 %v6659
    %7599 = vmatpush.bf16.msra.mxu0 %v6647
    %7600 = vmatpush.bf16.msra.mxu0 %v6635
    %7601 = vmatpush.bf16.msra.mxu0 %v6623
    %7602 = vmatpush.bf16.msra.mxu0 %v6611
    %7603 = vmatpush.bf16.msra.mxu0 %v6599
    %7604 = vmatpush.bf16.msra.mxu0 %v6587
    %7605 = vmatpush.bf16.msra.mxu0 %v6575
    %7606 = vmatmul.bf16.gmra.mxu0 0
    %v7607 = vpop.f32.mrf.mxu0
    %v7608 = vadd.f32 %v5399, %v7607
    %v7609 = vpop.f32.mrf.mxu0
    %7610 = vdwg.mxu0
    %7611 = vmatpush.bf16.msra.mxu0 %v6755
    %7612 = vmatpush.bf16.msra.mxu0 %v6743
    %7613 = vmatpush.bf16.msra.mxu0 %v6731
    %7614 = vmatpush.bf16.msra.mxu0 %v6719
    %7615 = vmatpush.bf16.msra.mxu0 %v6707
    %7616 = vmatpush.bf16.msra.mxu0 %v6695
    %7617 = vmatpush.bf16.msra.mxu0 %v6683
    %7618 = vmatpush.bf16.msra.mxu0 %v6671
    %7619 = vmatmul.bf16.gmra.mxu0 0
    %v7620 = vpop.f32.mrf.mxu0
    %v7621 = vadd.f32 %v7608, %v7620
    %v7622 = vpop.f32.mrf.mxu0
    %7623 = vdwg.mxu0
    %7624 = vmatpush.bf16.msra.mxu0 %v6851
    %7625 = vmatpush.bf16.msra.mxu0 %v6839
    %7626 = vmatpush.bf16.msra.mxu0 %v6827
    %7627 = vmatpush.bf16.msra.mxu0 %v6815
    %7628 = vmatpush.bf16.msra.mxu0 %v6803
    %7629 = vmatpush.bf16.msra.mxu0 %v6791
    %7630 = vmatpush.bf16.msra.mxu0 %v6779
    %7631 = vmatpush.bf16.msra.mxu0 %v6767
    %7632 = vmatmul.bf16.gmra.mxu0 0
    %v7633 = vpop.f32.mrf.mxu0
    %v7634 = vadd.f32 %v7621, %v7633
    %v7635 = vpop.f32.mrf.mxu0
    %7636 = vdwg.mxu0
    %7637 = vmatpush.bf16.msra.mxu0 %v6947
    %7638 = vmatpush.bf16.msra.mxu0 %v6935
    %7639 = vmatpush.bf16.msra.mxu0 %v6923
    %7640 = vmatpush.bf16.msra.mxu0 %v6911
    %7641 = vmatpush.bf16.msra.mxu0 %v6899
    %7642 = vmatpush.bf16.msra.mxu0 %v6887
    %7643 = vmatpush.bf16.msra.mxu0 %v6875
    %7644 = vmatpush.bf16.msra.mxu0 %v6863
    %7645 = vmatmul.bf16.gmra.mxu0 0
    %v7646 = vpop.f32.mrf.mxu0
    %v7647 = vadd.f32 %v7634, %v7646
    %v7648 = vpop.f32.mrf.mxu0
    %7649 = vdwg.mxu0
    %7650 = vmatpush.bf16.msra.mxu0 %v6660
    %7651 = vmatpush.bf16.msra.mxu0 %v6648
    %7652 = vmatpush.bf16.msra.mxu0 %v6636
    %7653 = vmatpush.bf16.msra.mxu0 %v6624
    %7654 = vmatpush.bf16.msra.mxu0 %v6612
    %7655 = vmatpush.bf16.msra.mxu0 %v6600
    %7656 = vmatpush.bf16.msra.mxu0 %v6588
    %7657 = vmatpush.bf16.msra.mxu0 %v6576
    %7658 = vmatmul.bf16.gmra.mxu0 0
    %v7659 = vpop.f32.mrf.mxu0
    %v7660 = vadd.f32 %v5400, %v7659
    %v7661 = vpop.f32.mrf.mxu0
    %7662 = vdwg.mxu0
    %7663 = vmatpush.bf16.msra.mxu0 %v6756
    %7664 = vmatpush.bf16.msra.mxu0 %v6744
    %7665 = vmatpush.bf16.msra.mxu0 %v6732
    %7666 = vmatpush.bf16.msra.mxu0 %v6720
    %7667 = vmatpush.bf16.msra.mxu0 %v6708
    %7668 = vmatpush.bf16.msra.mxu0 %v6696
    %7669 = vmatpush.bf16.msra.mxu0 %v6684
    %7670 = vmatpush.bf16.msra.mxu0 %v6672
    %7671 = vmatmul.bf16.gmra.mxu0 0
    %v7672 = vpop.f32.mrf.mxu0
    %v7673 = vadd.f32 %v7660, %v7672
    %v7674 = vpop.f32.mrf.mxu0
    %7675 = vdwg.mxu0
    %7676 = vmatpush.bf16.msra.mxu0 %v6852
    %7677 = vmatpush.bf16.msra.mxu0 %v6840
    %7678 = vmatpush.bf16.msra.mxu0 %v6828
    %7679 = vmatpush.bf16.msra.mxu0 %v6816
    %7680 = vmatpush.bf16.msra.mxu0 %v6804
    %7681 = vmatpush.bf16.msra.mxu0 %v6792
    %7682 = vmatpush.bf16.msra.mxu0 %v6780
    %7683 = vmatpush.bf16.msra.mxu0 %v6768
    %7684 = vmatmul.bf16.gmra.mxu0 0
    %v7685 = vpop.f32.mrf.mxu0
    %v7686 = vadd.f32 %v7673, %v7685
    %v7687 = vpop.f32.mrf.mxu0
    %7688 = vdwg.mxu0
    %7689 = vmatpush.bf16.msra.mxu0 %v6948
    %7690 = vmatpush.bf16.msra.mxu0 %v6936
    %7691 = vmatpush.bf16.msra.mxu0 %v6924
    %7692 = vmatpush.bf16.msra.mxu0 %v6912
    %7693 = vmatpush.bf16.msra.mxu0 %v6900
    %7694 = vmatpush.bf16.msra.mxu0 %v6888
    %7695 = vmatpush.bf16.msra.mxu0 %v6876
    %7696 = vmatpush.bf16.msra.mxu0 %v6864
    %7697 = vmatmul.bf16.gmra.mxu0 0
    %v7698 = vpop.f32.mrf.mxu0
    %v7699 = vadd.f32 %v7686, %v7698
    %v7700 = vpop.f32.mrf.mxu0
    %7701 = vdwg.mxu0
    %7702 = vmatpush.bf16.msra.mxu0 %v6661
    %7703 = vmatpush.bf16.msra.mxu0 %v6649
    %7704 = vmatpush.bf16.msra.mxu0 %v6637
    %7705 = vmatpush.bf16.msra.mxu0 %v6625
    %7706 = vmatpush.bf16.msra.mxu0 %v6613
    %7707 = vmatpush.bf16.msra.mxu0 %v6601
    %7708 = vmatpush.bf16.msra.mxu0 %v6589
    %7709 = vmatpush.bf16.msra.mxu0 %v6577
    %7710 = vmatmul.bf16.gmra.mxu0 0
    %v7711 = vpop.f32.mrf.mxu0
    %v7712 = vadd.f32 %v5401, %v7711
    %v7713 = vpop.f32.mrf.mxu0
    %7714 = vdwg.mxu0
    %7715 = vmatpush.bf16.msra.mxu0 %v6757
    %7716 = vmatpush.bf16.msra.mxu0 %v6745
    %7717 = vmatpush.bf16.msra.mxu0 %v6733
    %7718 = vmatpush.bf16.msra.mxu0 %v6721
    %7719 = vmatpush.bf16.msra.mxu0 %v6709
    %7720 = vmatpush.bf16.msra.mxu0 %v6697
    %7721 = vmatpush.bf16.msra.mxu0 %v6685
    %7722 = vmatpush.bf16.msra.mxu0 %v6673
    %7723 = vmatmul.bf16.gmra.mxu0 0
    %v7724 = vpop.f32.mrf.mxu0
    %v7725 = vadd.f32 %v7712, %v7724
    %v7726 = vpop.f32.mrf.mxu0
    %7727 = vdwg.mxu0
    %7728 = vmatpush.bf16.msra.mxu0 %v6853
    %7729 = vmatpush.bf16.msra.mxu0 %v6841
    %7730 = vmatpush.bf16.msra.mxu0 %v6829
    %7731 = vmatpush.bf16.msra.mxu0 %v6817
    %7732 = vmatpush.bf16.msra.mxu0 %v6805
    %7733 = vmatpush.bf16.msra.mxu0 %v6793
    %7734 = vmatpush.bf16.msra.mxu0 %v6781
    %7735 = vmatpush.bf16.msra.mxu0 %v6769
    %7736 = vmatmul.bf16.gmra.mxu0 0
    %v7737 = vpop.f32.mrf.mxu0
    %v7738 = vadd.f32 %v7725, %v7737
    %v7739 = vpop.f32.mrf.mxu0
    %7740 = vdwg.mxu0
    %7741 = vmatpush.bf16.msra.mxu0 %v6949
    %7742 = vmatpush.bf16.msra.mxu0 %v6937
    %7743 = vmatpush.bf16.msra.mxu0 %v6925
    %7744 = vmatpush.bf16.msra.mxu0 %v6913
    %7745 = vmatpush.bf16.msra.mxu0 %v6901
    %7746 = vmatpush.bf16.msra.mxu0 %v6889
    %7747 = vmatpush.bf16.msra.mxu0 %v6877
    %7748 = vmatpush.bf16.msra.mxu0 %v6865
    %7749 = vmatmul.bf16.gmra.mxu0 0
    %v7750 = vpop.f32.mrf.mxu0
    %v7751 = vadd.f32 %v7738, %v7750
    %v7752 = vpop.f32.mrf.mxu0
    %7753 = vdwg.mxu0
    %7754 = vmatpush.bf16.msra.mxu0 %v6662
    %7755 = vmatpush.bf16.msra.mxu0 %v6650
    %7756 = vmatpush.bf16.msra.mxu0 %v6638
    %7757 = vmatpush.bf16.msra.mxu0 %v6626
    %7758 = vmatpush.bf16.msra.mxu0 %v6614
    %7759 = vmatpush.bf16.msra.mxu0 %v6602
    %7760 = vmatpush.bf16.msra.mxu0 %v6590
    %7761 = vmatpush.bf16.msra.mxu0 %v6578
    %7762 = vmatmul.bf16.gmra.mxu0 0
    %v7763 = vpop.f32.mrf.mxu0
    %v7764 = vadd.f32 %v5402, %v7763
    %v7765 = vpop.f32.mrf.mxu0
    %7766 = vdwg.mxu0
    %7767 = vmatpush.bf16.msra.mxu0 %v6758
    %7768 = vmatpush.bf16.msra.mxu0 %v6746
    %7769 = vmatpush.bf16.msra.mxu0 %v6734
    %7770 = vmatpush.bf16.msra.mxu0 %v6722
    %7771 = vmatpush.bf16.msra.mxu0 %v6710
    %7772 = vmatpush.bf16.msra.mxu0 %v6698
    %7773 = vmatpush.bf16.msra.mxu0 %v6686
    %7774 = vmatpush.bf16.msra.mxu0 %v6674
    %7775 = vmatmul.bf16.gmra.mxu0 0
    %v7776 = vpop.f32.mrf.mxu0
    %v7777 = vadd.f32 %v7764, %v7776
    %v7778 = vpop.f32.mrf.mxu0
    %7779 = vdwg.mxu0
    %7780 = vmatpush.bf16.msra.mxu0 %v6854
    %7781 = vmatpush.bf16.msra.mxu0 %v6842
    %7782 = vmatpush.bf16.msra.mxu0 %v6830
    %7783 = vmatpush.bf16.msra.mxu0 %v6818
    %7784 = vmatpush.bf16.msra.mxu0 %v6806
    %7785 = vmatpush.bf16.msra.mxu0 %v6794
    %7786 = vmatpush.bf16.msra.mxu0 %v6782
    %7787 = vmatpush.bf16.msra.mxu0 %v6770
    %7788 = vmatmul.bf16.gmra.mxu0 0
    %v7789 = vpop.f32.mrf.mxu0
    %v7790 = vadd.f32 %v7777, %v7789
    %v7791 = vpop.f32.mrf.mxu0
    %7792 = vdwg.mxu0
    %7793 = vmatpush.bf16.msra.mxu0 %v6950
    %7794 = vmatpush.bf16.msra.mxu0 %v6938
    %7795 = vmatpush.bf16.msra.mxu0 %v6926
    %7796 = vmatpush.bf16.msra.mxu0 %v6914
    %7797 = vmatpush.bf16.msra.mxu0 %v6902
    %7798 = vmatpush.bf16.msra.mxu0 %v6890
    %7799 = vmatpush.bf16.msra.mxu0 %v6878
    %7800 = vmatpush.bf16.msra.mxu0 %v6866
    %7801 = vmatmul.bf16.gmra.mxu0 0
    %v7802 = vpop.f32.mrf.mxu0
    %v7803 = vadd.f32 %v7790, %v7802
    %v7804 = vpop.f32.mrf.mxu0
    %7805 = vdwg.mxu0
    %7806 = vmatpush.bf16.msra.mxu0 %v6663
    %7807 = vmatpush.bf16.msra.mxu0 %v6651
    %7808 = vmatpush.bf16.msra.mxu0 %v6639
    %7809 = vmatpush.bf16.msra.mxu0 %v6627
    %7810 = vmatpush.bf16.msra.mxu0 %v6615
    %7811 = vmatpush.bf16.msra.mxu0 %v6603
    %7812 = vmatpush.bf16.msra.mxu0 %v6591
    %7813 = vmatpush.bf16.msra.mxu0 %v6579
    %7814 = vmatmul.bf16.gmra.mxu0 0
    %v7815 = vpop.f32.mrf.mxu0
    %v7816 = vadd.f32 %v5403, %v7815
    %v7817 = vpop.f32.mrf.mxu0
    %7818 = vdwg.mxu0
    %7819 = vmatpush.bf16.msra.mxu0 %v6759
    %7820 = vmatpush.bf16.msra.mxu0 %v6747
    %7821 = vmatpush.bf16.msra.mxu0 %v6735
    %7822 = vmatpush.bf16.msra.mxu0 %v6723
    %7823 = vmatpush.bf16.msra.mxu0 %v6711
    %7824 = vmatpush.bf16.msra.mxu0 %v6699
    %7825 = vmatpush.bf16.msra.mxu0 %v6687
    %7826 = vmatpush.bf16.msra.mxu0 %v6675
    %7827 = vmatmul.bf16.gmra.mxu0 0
    %v7828 = vpop.f32.mrf.mxu0
    %v7829 = vadd.f32 %v7816, %v7828
    %v7830 = vpop.f32.mrf.mxu0
    %7831 = vdwg.mxu0
    %7832 = vmatpush.bf16.msra.mxu0 %v6855
    %7833 = vmatpush.bf16.msra.mxu0 %v6843
    %7834 = vmatpush.bf16.msra.mxu0 %v6831
    %7835 = vmatpush.bf16.msra.mxu0 %v6819
    %7836 = vmatpush.bf16.msra.mxu0 %v6807
    %7837 = vmatpush.bf16.msra.mxu0 %v6795
    %7838 = vmatpush.bf16.msra.mxu0 %v6783
    %7839 = vmatpush.bf16.msra.mxu0 %v6771
    %7840 = vmatmul.bf16.gmra.mxu0 0
    %v7841 = vpop.f32.mrf.mxu0
    %v7842 = vadd.f32 %v7829, %v7841
    %v7843 = vpop.f32.mrf.mxu0
    %7844 = vdwg.mxu0
    %7845 = vmatpush.bf16.msra.mxu0 %v6951
    %7846 = vmatpush.bf16.msra.mxu0 %v6939
    %7847 = vmatpush.bf16.msra.mxu0 %v6927
    %7848 = vmatpush.bf16.msra.mxu0 %v6915
    %7849 = vmatpush.bf16.msra.mxu0 %v6903
    %7850 = vmatpush.bf16.msra.mxu0 %v6891
    %7851 = vmatpush.bf16.msra.mxu0 %v6879
    %7852 = vmatpush.bf16.msra.mxu0 %v6867
    %7853 = vmatmul.bf16.gmra.mxu0 0
    %v7854 = vpop.f32.mrf.mxu0
    %v7855 = vadd.f32 %v7842, %v7854
    %v7856 = vpop.f32.mrf.mxu0
    %7857 = vdwg.mxu0
    %7858 = vmatpush.bf16.msra.mxu0 %v6664
    %7859 = vmatpush.bf16.msra.mxu0 %v6652
    %7860 = vmatpush.bf16.msra.mxu0 %v6640
    %7861 = vmatpush.bf16.msra.mxu0 %v6628
    %7862 = vmatpush.bf16.msra.mxu0 %v6616
    %7863 = vmatpush.bf16.msra.mxu0 %v6604
    %7864 = vmatpush.bf16.msra.mxu0 %v6592
    %7865 = vmatpush.bf16.msra.mxu0 %v6580
    %7866 = vmatmul.bf16.gmra.mxu0 0
    %v7867 = vpop.f32.mrf.mxu0
    %v7868 = vadd.f32 %v5404, %v7867
    %v7869 = vpop.f32.mrf.mxu0
    %7870 = vdwg.mxu0
    %7871 = vmatpush.bf16.msra.mxu0 %v6760
    %7872 = vmatpush.bf16.msra.mxu0 %v6748
    %7873 = vmatpush.bf16.msra.mxu0 %v6736
    %7874 = vmatpush.bf16.msra.mxu0 %v6724
    %7875 = vmatpush.bf16.msra.mxu0 %v6712
    %7876 = vmatpush.bf16.msra.mxu0 %v6700
    %7877 = vmatpush.bf16.msra.mxu0 %v6688
    %7878 = vmatpush.bf16.msra.mxu0 %v6676
    %7879 = vmatmul.bf16.gmra.mxu0 0
    %v7880 = vpop.f32.mrf.mxu0
    %v7881 = vadd.f32 %v7868, %v7880
    %v7882 = vpop.f32.mrf.mxu0
    %7883 = vdwg.mxu0
    %7884 = vmatpush.bf16.msra.mxu0 %v6856
    %7885 = vmatpush.bf16.msra.mxu0 %v6844
    %7886 = vmatpush.bf16.msra.mxu0 %v6832
    %7887 = vmatpush.bf16.msra.mxu0 %v6820
    %7888 = vmatpush.bf16.msra.mxu0 %v6808
    %7889 = vmatpush.bf16.msra.mxu0 %v6796
    %7890 = vmatpush.bf16.msra.mxu0 %v6784
    %7891 = vmatpush.bf16.msra.mxu0 %v6772
    %7892 = vmatmul.bf16.gmra.mxu0 0
    %v7893 = vpop.f32.mrf.mxu0
    %v7894 = vadd.f32 %v7881, %v7893
    %v7895 = vpop.f32.mrf.mxu0
    %7896 = vdwg.mxu0
    %7897 = vmatpush.bf16.msra.mxu0 %v6952
    %7898 = vmatpush.bf16.msra.mxu0 %v6940
    %7899 = vmatpush.bf16.msra.mxu0 %v6928
    %7900 = vmatpush.bf16.msra.mxu0 %v6916
    %7901 = vmatpush.bf16.msra.mxu0 %v6904
    %7902 = vmatpush.bf16.msra.mxu0 %v6892
    %7903 = vmatpush.bf16.msra.mxu0 %v6880
    %7904 = vmatpush.bf16.msra.mxu0 %v6868
    %7905 = vmatmul.bf16.gmra.mxu0 0
    %v7906 = vpop.f32.mrf.mxu0
    %v7907 = vadd.f32 %v7894, %v7906
    %v7908 = vpop.f32.mrf.mxu0
    %7909 = vdwg.mxu0
    %7910 = vmatpush.bf16.msra.mxu0 %v6665
    %7911 = vmatpush.bf16.msra.mxu0 %v6653
    %7912 = vmatpush.bf16.msra.mxu0 %v6641
    %7913 = vmatpush.bf16.msra.mxu0 %v6629
    %7914 = vmatpush.bf16.msra.mxu0 %v6617
    %7915 = vmatpush.bf16.msra.mxu0 %v6605
    %7916 = vmatpush.bf16.msra.mxu0 %v6593
    %7917 = vmatpush.bf16.msra.mxu0 %v6581
    %7918 = vmatmul.bf16.gmra.mxu0 0
    %v7919 = vpop.f32.mrf.mxu0
    %v7920 = vadd.f32 %v5405, %v7919
    %v7921 = vpop.f32.mrf.mxu0
    %7922 = vdwg.mxu0
    %7923 = vmatpush.bf16.msra.mxu0 %v6761
    %7924 = vmatpush.bf16.msra.mxu0 %v6749
    %7925 = vmatpush.bf16.msra.mxu0 %v6737
    %7926 = vmatpush.bf16.msra.mxu0 %v6725
    %7927 = vmatpush.bf16.msra.mxu0 %v6713
    %7928 = vmatpush.bf16.msra.mxu0 %v6701
    %7929 = vmatpush.bf16.msra.mxu0 %v6689
    %7930 = vmatpush.bf16.msra.mxu0 %v6677
    %7931 = vmatmul.bf16.gmra.mxu0 0
    %v7932 = vpop.f32.mrf.mxu0
    %v7933 = vadd.f32 %v7920, %v7932
    %v7934 = vpop.f32.mrf.mxu0
    %7935 = vdwg.mxu0
    %7936 = vmatpush.bf16.msra.mxu0 %v6857
    %7937 = vmatpush.bf16.msra.mxu0 %v6845
    %7938 = vmatpush.bf16.msra.mxu0 %v6833
    %7939 = vmatpush.bf16.msra.mxu0 %v6821
    %7940 = vmatpush.bf16.msra.mxu0 %v6809
    %7941 = vmatpush.bf16.msra.mxu0 %v6797
    %7942 = vmatpush.bf16.msra.mxu0 %v6785
    %7943 = vmatpush.bf16.msra.mxu0 %v6773
    %7944 = vmatmul.bf16.gmra.mxu0 0
    %v7945 = vpop.f32.mrf.mxu0
    %v7946 = vadd.f32 %v7933, %v7945
    %v7947 = vpop.f32.mrf.mxu0
    %7948 = vdwg.mxu0
    %7949 = vmatpush.bf16.msra.mxu0 %v6953
    %7950 = vmatpush.bf16.msra.mxu0 %v6941
    %7951 = vmatpush.bf16.msra.mxu0 %v6929
    %7952 = vmatpush.bf16.msra.mxu0 %v6917
    %7953 = vmatpush.bf16.msra.mxu0 %v6905
    %7954 = vmatpush.bf16.msra.mxu0 %v6893
    %7955 = vmatpush.bf16.msra.mxu0 %v6881
    %7956 = vmatpush.bf16.msra.mxu0 %v6869
    %7957 = vmatmul.bf16.gmra.mxu0 0
    %v7958 = vpop.f32.mrf.mxu0
    %v7959 = vadd.f32 %v7946, %v7958
    %v7960 = vpop.f32.mrf.mxu0
    %7961 = vdwg.mxu0
    %v7962 = vadd.f32 %v2894, %v7387
    %v7963 = vadd.f32 %v2946, %v7439
    %v7964 = vadd.f32 %v2998, %v7491
    %v7965 = vadd.f32 %v3050, %v7543
    %v7966 = vxor.u32 %v7962, 2147483648
    %v7967 = vxor.u32 %v7963, 2147483648
    %v7968 = vxor.u32 %v7964, 2147483648
    %v7969 = vxor.u32 %v7965, 2147483648
    %v7970 = vmul.f32 %v7966, 1.442695
    %v7971 = vpow.pop %v7970
    %v7972 = vmul.f32 %v7967, 1.442695
    %v7973 = vpow.pop %v7972
    %v7974 = vmul.f32 %v7968, 1.442695
    %v7975 = vpow.pop %v7974
    %v7976 = vmul.f32 %v7969, 1.442695
    %v7977 = vpow.pop %v7976
    %v7978 = vadd.f32 %v7971, 1.0
    %v7979 = vadd.f32 %v7973, 1.0
    %v7980 = vadd.f32 %v7975, 1.0
    %v7981 = vadd.f32 %v7977, 1.0
    %v7982 = vrcp.pop %v7978
    %v7983 = vmul.f32 %v7978, %v7982
    %v7984 = vsub.f32 1.0, %v7983
    %v7985 = vmul.f32 %v7982, %v7984
    %v7986 = vadd.f32 %v7982, %v7985
    %vm7987 = vweird.f32 %v7978
    %vm7988 = vweird.f32 %v7982
    %vm7989 = vmor %vm7987, %vm7988
    %v7990 = vsel %vm7989, %v7982, %v7986
    %v7991 = vand.u32 2147483647, %v7978
    %vm7992 = vcmp.eq.f32.partialorder %v7991, 8.507059e+37
    %v7993 = vand.u32 %v7978, 2147483648
    %v7994 = vor.u32 1.1754944e-38, %v7993
    %v7995 = vsel %vm7992, %v7994, %v7990
    %v7996 = vmul.f32 1.0, %v7995
    %v7997 = vrcp.pop %v7979
    %v7998 = vmul.f32 %v7979, %v7997
    %v7999 = vsub.f32 1.0, %v7998
    %v8000 = vmul.f32 %v7997, %v7999
    %v8001 = vadd.f32 %v7997, %v8000
    %vm8002 = vweird.f32 %v7979
    %vm8003 = vweird.f32 %v7997
    %vm8004 = vmor %vm8002, %vm8003
    %v8005 = vsel %vm8004, %v7997, %v8001
    %v8006 = vand.u32 2147483647, %v7979
    %vm8007 = vcmp.eq.f32.partialorder %v8006, 8.507059e+37
    %v8008 = vand.u32 %v7979, 2147483648
    %v8009 = vor.u32 1.1754944e-38, %v8008
    %v8010 = vsel %vm8007, %v8009, %v8005
    %v8011 = vmul.f32 1.0, %v8010
    %v8012 = vrcp.pop %v7980
    %v8013 = vmul.f32 %v7980, %v8012
    %v8014 = vsub.f32 1.0, %v8013
    %v8015 = vmul.f32 %v8012, %v8014
    %v8016 = vadd.f32 %v8012, %v8015
    %vm8017 = vweird.f32 %v7980
    %vm8018 = vweird.f32 %v8012
    %vm8019 = vmor %vm8017, %vm8018
    %v8020 = vsel %vm8019, %v8012, %v8016
    %v8021 = vand.u32 2147483647, %v7980
    %vm8022 = vcmp.eq.f32.partialorder %v8021, 8.507059e+37
    %v8023 = vand.u32 %v7980, 2147483648
    %v8024 = vor.u32 1.1754944e-38, %v8023
    %v8025 = vsel %vm8022, %v8024, %v8020
    %v8026 = vmul.f32 1.0, %v8025
    %v8027 = vrcp.pop %v7981
    %v8028 = vmul.f32 %v7981, %v8027
    %v8029 = vsub.f32 1.0, %v8028
    %v8030 = vmul.f32 %v8027, %v8029
    %v8031 = vadd.f32 %v8027, %v8030
    %vm8032 = vweird.f32 %v7981
    %vm8033 = vweird.f32 %v8027
    %vm8034 = vmor %vm8032, %vm8033
    %v8035 = vsel %vm8034, %v8027, %v8031
    %v8036 = vand.u32 2147483647, %v7981
    %vm8037 = vcmp.eq.f32.partialorder %v8036, 8.507059e+37
    %v8038 = vand.u32 %v7981, 2147483648
    %v8039 = vor.u32 1.1754944e-38, %v8038
    %v8040 = vsel %vm8037, %v8039, %v8035
    %v8041 = vmul.f32 1.0, %v8040
    %v8042 = vadd.f32 %v3102, %v7595
    %v8043 = vadd.f32 %v3154, %v7647
    %v8044 = vadd.f32 %v3206, %v7699
    %v8045 = vadd.f32 %v3258, %v7751
    %v8046 = vxor.u32 %v8042, 2147483648
    %v8047 = vxor.u32 %v8043, 2147483648
    %v8048 = vxor.u32 %v8044, 2147483648
    %v8049 = vxor.u32 %v8045, 2147483648
    %v8050 = vmul.f32 %v8046, 1.442695
    %v8051 = vpow.pop %v8050
    %v8052 = vmul.f32 %v8047, 1.442695
    %v8053 = vpow.pop %v8052
    %v8054 = vmul.f32 %v8048, 1.442695
    %v8055 = vpow.pop %v8054
    %v8056 = vmul.f32 %v8049, 1.442695
    %v8057 = vpow.pop %v8056
    %v8058 = vadd.f32 %v8051, 1.0
    %v8059 = vadd.f32 %v8053, 1.0
    %v8060 = vadd.f32 %v8055, 1.0
    %v8061 = vadd.f32 %v8057, 1.0
    %v8062 = vrcp.pop %v8058
    %v8063 = vmul.f32 %v8058, %v8062
    %v8064 = vsub.f32 1.0, %v8063
    %v8065 = vmul.f32 %v8062, %v8064
    %v8066 = vadd.f32 %v8062, %v8065
    %vm8067 = vweird.f32 %v8058
    %vm8068 = vweird.f32 %v8062
    %vm8069 = vmor %vm8067, %vm8068
    %v8070 = vsel %vm8069, %v8062, %v8066
    %v8071 = vand.u32 2147483647, %v8058
    %vm8072 = vcmp.eq.f32.partialorder %v8071, 8.507059e+37
    %v8073 = vand.u32 %v8058, 2147483648
    %v8074 = vor.u32 1.1754944e-38, %v8073
    %v8075 = vsel %vm8072, %v8074, %v8070
    %v8076 = vmul.f32 1.0, %v8075
    %v8077 = vrcp.pop %v8059
    %v8078 = vmul.f32 %v8059, %v8077
    %v8079 = vsub.f32 1.0, %v8078
    %v8080 = vmul.f32 %v8077, %v8079
    %v8081 = vadd.f32 %v8077, %v8080
    %vm8082 = vweird.f32 %v8059
    %vm8083 = vweird.f32 %v8077
    %vm8084 = vmor %vm8082, %vm8083
    %v8085 = vsel %vm8084, %v8077, %v8081
    %v8086 = vand.u32 2147483647, %v8059
    %vm8087 = vcmp.eq.f32.partialorder %v8086, 8.507059e+37
    %v8088 = vand.u32 %v8059, 2147483648
    %v8089 = vor.u32 1.1754944e-38, %v8088
    %v8090 = vsel %vm8087, %v8089, %v8085
    %v8091 = vmul.f32 1.0, %v8090
    %v8092 = vrcp.pop %v8060
    %v8093 = vmul.f32 %v8060, %v8092
    %v8094 = vsub.f32 1.0, %v8093
    %v8095 = vmul.f32 %v8092, %v8094
    %v8096 = vadd.f32 %v8092, %v8095
    %vm8097 = vweird.f32 %v8060
    %vm8098 = vweird.f32 %v8092
    %vm8099 = vmor %vm8097, %vm8098
    %v8100 = vsel %vm8099, %v8092, %v8096
    %v8101 = vand.u32 2147483647, %v8060
    %vm8102 = vcmp.eq.f32.partialorder %v8101, 8.507059e+37
    %v8103 = vand.u32 %v8060, 2147483648
    %v8104 = vor.u32 1.1754944e-38, %v8103
    %v8105 = vsel %vm8102, %v8104, %v8100
    %v8106 = vmul.f32 1.0, %v8105
    %v8107 = vrcp.pop %v8061
    %v8108 = vmul.f32 %v8061, %v8107
    %v8109 = vsub.f32 1.0, %v8108
    %v8110 = vmul.f32 %v8107, %v8109
    %v8111 = vadd.f32 %v8107, %v8110
    %vm8112 = vweird.f32 %v8061
    %vm8113 = vweird.f32 %v8107
    %vm8114 = vmor %vm8112, %vm8113
    %v8115 = vsel %vm8114, %v8107, %v8111
    %v8116 = vand.u32 2147483647, %v8061
    %vm8117 = vcmp.eq.f32.partialorder %v8116, 8.507059e+37
    %v8118 = vand.u32 %v8061, 2147483648
    %v8119 = vor.u32 1.1754944e-38, %v8118
    %v8120 = vsel %vm8117, %v8119, %v8115
    %v8121 = vmul.f32 1.0, %v8120
    %v8122 = vmul.f32 %v7996, %v7803
    %v8123 = vmul.f32 %v8011, %v7855
    %v8124 = vmul.f32 %v8026, %v7907
    %v8125 = vmul.f32 %v8041, %v7959
    %v8126 = vadd.f32 %v3310, %v8122
    %v8127 = vadd.f32 %v3362, %v8123
    %v8128 = vadd.f32 %v3414, %v8124
    %v8129 = vadd.f32 %v3466, %v8125
    %v8130 = vtanh.pop %v8126
    %v8131 = vtanh.pop %v8127
    %v8132 = vtanh.pop %v8128
    %v8133 = vtanh.pop %v8129
    %v8134 = vsub.f32 1.0, %v8076
    %v8135 = vsub.f32 1.0, %v8091
    %v8136 = vsub.f32 1.0, %v8106
    %v8137 = vsub.f32 1.0, %v8121
    %v8138 = vmul.f32 %v8134, %v8130
    %v8139 = vmul.f32 %v8135, %v8131
    %v8140 = vmul.f32 %v8136, %v8132
    %v8141 = vmul.f32 %v8137, %v8133
    %v8142 = vmul.f32 %v8076, 0.0
    %v8143 = vmul.f32 %v8091, 0.0
    %v8144 = vmul.f32 %v8106, 0.0
    %v8145 = vmul.f32 %v8121, 0.0
    %v8146 = vadd.f32 %v8138, %v8142
    %v8147 = vadd.f32 %v8139, %v8143
    %v8148 = vadd.f32 %v8140, %v8144
    %v8149 = vadd.f32 %v8141, %v8145
    %v8150 = vpack.c.bf16 %v8146, %v8146
    %v8151 = vpack.c.bf16 %v8147, %v8147
    %v8152 = vpack.c.bf16 %v8148, %v8148
    %v8153 = vpack.c.bf16 %v8149, %v8149
    %8154 = vmatpush.bf16.msra.mxu0 %v6654
    %8155 = vmatpush.bf16.msra.mxu0 %v6642
    %8156 = vmatpush.bf16.msra.mxu0 %v6630
    %8157 = vmatpush.bf16.msra.mxu0 %v6618
    %8158 = vmatpush.bf16.msra.mxu0 %v6606
    %8159 = vmatpush.bf16.msra.mxu0 %v6594
    %8160 = vmatpush.bf16.msra.mxu0 %v6582
    %8161 = vmatpush.bf16.msra.mxu0 %v6570
    %8162 = vmatmul.bf16.gmra.mxu0 %v8150
    %v8163 = vpop.f32.mrf.mxu0
    %v8164 = vadd.f32 %v5394, %v8163
    %v8165 = vpop.f32.mrf.mxu0
    %8166 = vdwg.mxu0
    %8167 = vmatpush.bf16.msra.mxu0 %v6750
    %8168 = vmatpush.bf16.msra.mxu0 %v6738
    %8169 = vmatpush.bf16.msra.mxu0 %v6726
    %8170 = vmatpush.bf16.msra.mxu0 %v6714
    %8171 = vmatpush.bf16.msra.mxu0 %v6702
    %8172 = vmatpush.bf16.msra.mxu0 %v6690
    %8173 = vmatpush.bf16.msra.mxu0 %v6678
    %8174 = vmatpush.bf16.msra.mxu0 %v6666
    %8175 = vmatmul.bf16.gmra.mxu0 %v8151
    %v8176 = vpop.f32.mrf.mxu0
    %v8177 = vadd.f32 %v8164, %v8176
    %v8178 = vpop.f32.mrf.mxu0
    %8179 = vdwg.mxu0
    %8180 = vmatpush.bf16.msra.mxu0 %v6846
    %8181 = vmatpush.bf16.msra.mxu0 %v6834
    %8182 = vmatpush.bf16.msra.mxu0 %v6822
    %8183 = vmatpush.bf16.msra.mxu0 %v6810
    %8184 = vmatpush.bf16.msra.mxu0 %v6798
    %8185 = vmatpush.bf16.msra.mxu0 %v6786
    %8186 = vmatpush.bf16.msra.mxu0 %v6774
    %8187 = vmatpush.bf16.msra.mxu0 %v6762
    %8188 = vmatmul.bf16.gmra.mxu0 %v8152
    %v8189 = vpop.f32.mrf.mxu0
    %v8190 = vadd.f32 %v8177, %v8189
    %v8191 = vpop.f32.mrf.mxu0
    %8192 = vdwg.mxu0
    %8193 = vmatpush.bf16.msra.mxu0 %v6942
    %8194 = vmatpush.bf16.msra.mxu0 %v6930
    %8195 = vmatpush.bf16.msra.mxu0 %v6918
    %8196 = vmatpush.bf16.msra.mxu0 %v6906
    %8197 = vmatpush.bf16.msra.mxu0 %v6894
    %8198 = vmatpush.bf16.msra.mxu0 %v6882
    %8199 = vmatpush.bf16.msra.mxu0 %v6870
    %8200 = vmatpush.bf16.msra.mxu0 %v6858
    %8201 = vmatmul.bf16.gmra.mxu0 %v8153
    %v8202 = vpop.f32.mrf.mxu0
    %v8203 = vadd.f32 %v8190, %v8202
    %v8204 = vpop.f32.mrf.mxu0
    %8205 = vdwg.mxu0
    %8206 = vmatpush.bf16.msra.mxu0 %v6655
    %8207 = vmatpush.bf16.msra.mxu0 %v6643
    %8208 = vmatpush.bf16.msra.mxu0 %v6631
    %8209 = vmatpush.bf16.msra.mxu0 %v6619
    %8210 = vmatpush.bf16.msra.mxu0 %v6607
    %8211 = vmatpush.bf16.msra.mxu0 %v6595
    %8212 = vmatpush.bf16.msra.mxu0 %v6583
    %8213 = vmatpush.bf16.msra.mxu0 %v6571
    %8214 = vmatmul.bf16.gmra.mxu0 %v8150
    %v8215 = vpop.f32.mrf.mxu0
    %v8216 = vadd.f32 %v5395, %v8215
    %v8217 = vpop.f32.mrf.mxu0
    %8218 = vdwg.mxu0
    %8219 = vmatpush.bf16.msra.mxu0 %v6751
    %8220 = vmatpush.bf16.msra.mxu0 %v6739
    %8221 = vmatpush.bf16.msra.mxu0 %v6727
    %8222 = vmatpush.bf16.msra.mxu0 %v6715
    %8223 = vmatpush.bf16.msra.mxu0 %v6703
    %8224 = vmatpush.bf16.msra.mxu0 %v6691
    %8225 = vmatpush.bf16.msra.mxu0 %v6679
    %8226 = vmatpush.bf16.msra.mxu0 %v6667
    %8227 = vmatmul.bf16.gmra.mxu0 %v8151
    %v8228 = vpop.f32.mrf.mxu0
    %v8229 = vadd.f32 %v8216, %v8228
    %v8230 = vpop.f32.mrf.mxu0
    %8231 = vdwg.mxu0
    %8232 = vmatpush.bf16.msra.mxu0 %v6847
    %8233 = vmatpush.bf16.msra.mxu0 %v6835
    %8234 = vmatpush.bf16.msra.mxu0 %v6823
    %8235 = vmatpush.bf16.msra.mxu0 %v6811
    %8236 = vmatpush.bf16.msra.mxu0 %v6799
    %8237 = vmatpush.bf16.msra.mxu0 %v6787
    %8238 = vmatpush.bf16.msra.mxu0 %v6775
    %8239 = vmatpush.bf16.msra.mxu0 %v6763
    %8240 = vmatmul.bf16.gmra.mxu0 %v8152
    %v8241 = vpop.f32.mrf.mxu0
    %v8242 = vadd.f32 %v8229, %v8241
    %v8243 = vpop.f32.mrf.mxu0
    %8244 = vdwg.mxu0
    %8245 = vmatpush.bf16.msra.mxu0 %v6943
    %8246 = vmatpush.bf16.msra.mxu0 %v6931
    %8247 = vmatpush.bf16.msra.mxu0 %v6919
    %8248 = vmatpush.bf16.msra.mxu0 %v6907
    %8249 = vmatpush.bf16.msra.mxu0 %v6895
    %8250 = vmatpush.bf16.msra.mxu0 %v6883
    %8251 = vmatpush.bf16.msra.mxu0 %v6871
    %8252 = vmatpush.bf16.msra.mxu0 %v6859
    %8253 = vmatmul.bf16.gmra.mxu0 %v8153
    %v8254 = vpop.f32.mrf.mxu0
    %v8255 = vadd.f32 %v8242, %v8254
    %v8256 = vpop.f32.mrf.mxu0
    %8257 = vdwg.mxu0
    %8258 = vmatpush.bf16.msra.mxu0 %v6656
    %8259 = vmatpush.bf16.msra.mxu0 %v6644
    %8260 = vmatpush.bf16.msra.mxu0 %v6632
    %8261 = vmatpush.bf16.msra.mxu0 %v6620
    %8262 = vmatpush.bf16.msra.mxu0 %v6608
    %8263 = vmatpush.bf16.msra.mxu0 %v6596
    %8264 = vmatpush.bf16.msra.mxu0 %v6584
    %8265 = vmatpush.bf16.msra.mxu0 %v6572
    %8266 = vmatmul.bf16.gmra.mxu0 %v8150
    %v8267 = vpop.f32.mrf.mxu0
    %v8268 = vadd.f32 %v5396, %v8267
    %v8269 = vpop.f32.mrf.mxu0
    %8270 = vdwg.mxu0
    %8271 = vmatpush.bf16.msra.mxu0 %v6752
    %8272 = vmatpush.bf16.msra.mxu0 %v6740
    %8273 = vmatpush.bf16.msra.mxu0 %v6728
    %8274 = vmatpush.bf16.msra.mxu0 %v6716
    %8275 = vmatpush.bf16.msra.mxu0 %v6704
    %8276 = vmatpush.bf16.msra.mxu0 %v6692
    %8277 = vmatpush.bf16.msra.mxu0 %v6680
    %8278 = vmatpush.bf16.msra.mxu0 %v6668
    %8279 = vmatmul.bf16.gmra.mxu0 %v8151
    %v8280 = vpop.f32.mrf.mxu0
    %v8281 = vadd.f32 %v8268, %v8280
    %v8282 = vpop.f32.mrf.mxu0
    %8283 = vdwg.mxu0
    %8284 = vmatpush.bf16.msra.mxu0 %v6848
    %8285 = vmatpush.bf16.msra.mxu0 %v6836
    %8286 = vmatpush.bf16.msra.mxu0 %v6824
    %8287 = vmatpush.bf16.msra.mxu0 %v6812
    %8288 = vmatpush.bf16.msra.mxu0 %v6800
    %8289 = vmatpush.bf16.msra.mxu0 %v6788
    %8290 = vmatpush.bf16.msra.mxu0 %v6776
    %8291 = vmatpush.bf16.msra.mxu0 %v6764
    %8292 = vmatmul.bf16.gmra.mxu0 %v8152
    %v8293 = vpop.f32.mrf.mxu0
    %v8294 = vadd.f32 %v8281, %v8293
    %v8295 = vpop.f32.mrf.mxu0
    %8296 = vdwg.mxu0
    %8297 = vmatpush.bf16.msra.mxu0 %v6944
    %8298 = vmatpush.bf16.msra.mxu0 %v6932
    %8299 = vmatpush.bf16.msra.mxu0 %v6920
    %8300 = vmatpush.bf16.msra.mxu0 %v6908
    %8301 = vmatpush.bf16.msra.mxu0 %v6896
    %8302 = vmatpush.bf16.msra.mxu0 %v6884
    %8303 = vmatpush.bf16.msra.mxu0 %v6872
    %8304 = vmatpush.bf16.msra.mxu0 %v6860
    %8305 = vmatmul.bf16.gmra.mxu0 %v8153
    %v8306 = vpop.f32.mrf.mxu0
    %v8307 = vadd.f32 %v8294, %v8306
    %v8308 = vpop.f32.mrf.mxu0
    %8309 = vdwg.mxu0
    %8310 = vmatpush.bf16.msra.mxu0 %v6657
    %8311 = vmatpush.bf16.msra.mxu0 %v6645
    %8312 = vmatpush.bf16.msra.mxu0 %v6633
    %8313 = vmatpush.bf16.msra.mxu0 %v6621
    %8314 = vmatpush.bf16.msra.mxu0 %v6609
    %8315 = vmatpush.bf16.msra.mxu0 %v6597
    %8316 = vmatpush.bf16.msra.mxu0 %v6585
    %8317 = vmatpush.bf16.msra.mxu0 %v6573
    %8318 = vmatmul.bf16.gmra.mxu0 %v8150
    %v8319 = vpop.f32.mrf.mxu0
    %v8320 = vadd.f32 %v5397, %v8319
    %v8321 = vpop.f32.mrf.mxu0
    %8322 = vdwg.mxu0
    %8323 = vmatpush.bf16.msra.mxu0 %v6753
    %8324 = vmatpush.bf16.msra.mxu0 %v6741
    %8325 = vmatpush.bf16.msra.mxu0 %v6729
    %8326 = vmatpush.bf16.msra.mxu0 %v6717
    %8327 = vmatpush.bf16.msra.mxu0 %v6705
    %8328 = vmatpush.bf16.msra.mxu0 %v6693
    %8329 = vmatpush.bf16.msra.mxu0 %v6681
    %8330 = vmatpush.bf16.msra.mxu0 %v6669
    %8331 = vmatmul.bf16.gmra.mxu0 %v8151
    %v8332 = vpop.f32.mrf.mxu0
    %v8333 = vadd.f32 %v8320, %v8332
    %v8334 = vpop.f32.mrf.mxu0
    %8335 = vdwg.mxu0
    %8336 = vmatpush.bf16.msra.mxu0 %v6849
    %8337 = vmatpush.bf16.msra.mxu0 %v6837
    %8338 = vmatpush.bf16.msra.mxu0 %v6825
    %8339 = vmatpush.bf16.msra.mxu0 %v6813
    %8340 = vmatpush.bf16.msra.mxu0 %v6801
    %8341 = vmatpush.bf16.msra.mxu0 %v6789
    %8342 = vmatpush.bf16.msra.mxu0 %v6777
    %8343 = vmatpush.bf16.msra.mxu0 %v6765
    %8344 = vmatmul.bf16.gmra.mxu0 %v8152
    %v8345 = vpop.f32.mrf.mxu0
    %v8346 = vadd.f32 %v8333, %v8345
    %v8347 = vpop.f32.mrf.mxu0
    %8348 = vdwg.mxu0
    %8349 = vmatpush.bf16.msra.mxu0 %v6945
    %8350 = vmatpush.bf16.msra.mxu0 %v6933
    %8351 = vmatpush.bf16.msra.mxu0 %v6921
    %8352 = vmatpush.bf16.msra.mxu0 %v6909
    %8353 = vmatpush.bf16.msra.mxu0 %v6897
    %8354 = vmatpush.bf16.msra.mxu0 %v6885
    %8355 = vmatpush.bf16.msra.mxu0 %v6873
    %8356 = vmatpush.bf16.msra.mxu0 %v6861
    %8357 = vmatmul.bf16.gmra.mxu0 %v8153
    %v8358 = vpop.f32.mrf.mxu0
    %v8359 = vadd.f32 %v8346, %v8358
    %v8360 = vpop.f32.mrf.mxu0
    %8361 = vdwg.mxu0
    %8362 = vmatpush.bf16.msra.mxu0 %v6658
    %8363 = vmatpush.bf16.msra.mxu0 %v6646
    %8364 = vmatpush.bf16.msra.mxu0 %v6634
    %8365 = vmatpush.bf16.msra.mxu0 %v6622
    %8366 = vmatpush.bf16.msra.mxu0 %v6610
    %8367 = vmatpush.bf16.msra.mxu0 %v6598
    %8368 = vmatpush.bf16.msra.mxu0 %v6586
    %8369 = vmatpush.bf16.msra.mxu0 %v6574
    %8370 = vmatmul.bf16.gmra.mxu0 %v8150
    %v8371 = vpop.f32.mrf.mxu0
    %v8372 = vadd.f32 %v5398, %v8371
    %v8373 = vpop.f32.mrf.mxu0
    %8374 = vdwg.mxu0
    %8375 = vmatpush.bf16.msra.mxu0 %v6754
    %8376 = vmatpush.bf16.msra.mxu0 %v6742
    %8377 = vmatpush.bf16.msra.mxu0 %v6730
    %8378 = vmatpush.bf16.msra.mxu0 %v6718
    %8379 = vmatpush.bf16.msra.mxu0 %v6706
    %8380 = vmatpush.bf16.msra.mxu0 %v6694
    %8381 = vmatpush.bf16.msra.mxu0 %v6682
    %8382 = vmatpush.bf16.msra.mxu0 %v6670
    %8383 = vmatmul.bf16.gmra.mxu0 %v8151
    %v8384 = vpop.f32.mrf.mxu0
    %v8385 = vadd.f32 %v8372, %v8384
    %v8386 = vpop.f32.mrf.mxu0
    %8387 = vdwg.mxu0
    %8388 = vmatpush.bf16.msra.mxu0 %v6850
    %8389 = vmatpush.bf16.msra.mxu0 %v6838
    %8390 = vmatpush.bf16.msra.mxu0 %v6826
    %8391 = vmatpush.bf16.msra.mxu0 %v6814
    %8392 = vmatpush.bf16.msra.mxu0 %v6802
    %8393 = vmatpush.bf16.msra.mxu0 %v6790
    %8394 = vmatpush.bf16.msra.mxu0 %v6778
    %8395 = vmatpush.bf16.msra.mxu0 %v6766
    %8396 = vmatmul.bf16.gmra.mxu0 %v8152
    %v8397 = vpop.f32.mrf.mxu0
    %v8398 = vadd.f32 %v8385, %v8397
    %v8399 = vpop.f32.mrf.mxu0
    %8400 = vdwg.mxu0
    %8401 = vmatpush.bf16.msra.mxu0 %v6946
    %8402 = vmatpush.bf16.msra.mxu0 %v6934
    %8403 = vmatpush.bf16.msra.mxu0 %v6922
    %8404 = vmatpush.bf16.msra.mxu0 %v6910
    %8405 = vmatpush.bf16.msra.mxu0 %v6898
    %8406 = vmatpush.bf16.msra.mxu0 %v6886
    %8407 = vmatpush.bf16.msra.mxu0 %v6874
    %8408 = vmatpush.bf16.msra.mxu0 %v6862
    %8409 = vmatmul.bf16.gmra.mxu0 %v8153
    %v8410 = vpop.f32.mrf.mxu0
    %v8411 = vadd.f32 %v8398, %v8410
    %v8412 = vpop.f32.mrf.mxu0
    %8413 = vdwg.mxu0
    %8414 = vmatpush.bf16.msra.mxu0 %v6659
    %8415 = vmatpush.bf16.msra.mxu0 %v6647
    %8416 = vmatpush.bf16.msra.mxu0 %v6635
    %8417 = vmatpush.bf16.msra.mxu0 %v6623
    %8418 = vmatpush.bf16.msra.mxu0 %v6611
    %8419 = vmatpush.bf16.msra.mxu0 %v6599
    %8420 = vmatpush.bf16.msra.mxu0 %v6587
    %8421 = vmatpush.bf16.msra.mxu0 %v6575
    %8422 = vmatmul.bf16.gmra.mxu0 %v8150
    %v8423 = vpop.f32.mrf.mxu0
    %v8424 = vadd.f32 %v5399, %v8423
    %v8425 = vpop.f32.mrf.mxu0
    %8426 = vdwg.mxu0
    %8427 = vmatpush.bf16.msra.mxu0 %v6755
    %8428 = vmatpush.bf16.msra.mxu0 %v6743
    %8429 = vmatpush.bf16.msra.mxu0 %v6731
    %8430 = vmatpush.bf16.msra.mxu0 %v6719
    %8431 = vmatpush.bf16.msra.mxu0 %v6707
    %8432 = vmatpush.bf16.msra.mxu0 %v6695
    %8433 = vmatpush.bf16.msra.mxu0 %v6683
    %8434 = vmatpush.bf16.msra.mxu0 %v6671
    %8435 = vmatmul.bf16.gmra.mxu0 %v8151
    %v8436 = vpop.f32.mrf.mxu0
    %v8437 = vadd.f32 %v8424, %v8436
    %v8438 = vpop.f32.mrf.mxu0
    %8439 = vdwg.mxu0
    %8440 = vmatpush.bf16.msra.mxu0 %v6851
    %8441 = vmatpush.bf16.msra.mxu0 %v6839
    %8442 = vmatpush.bf16.msra.mxu0 %v6827
    %8443 = vmatpush.bf16.msra.mxu0 %v6815
    %8444 = vmatpush.bf16.msra.mxu0 %v6803
    %8445 = vmatpush.bf16.msra.mxu0 %v6791
    %8446 = vmatpush.bf16.msra.mxu0 %v6779
    %8447 = vmatpush.bf16.msra.mxu0 %v6767
    %8448 = vmatmul.bf16.gmra.mxu0 %v8152
    %v8449 = vpop.f32.mrf.mxu0
    %v8450 = vadd.f32 %v8437, %v8449
    %v8451 = vpop.f32.mrf.mxu0
    %8452 = vdwg.mxu0
    %8453 = vmatpush.bf16.msra.mxu0 %v6947
    %8454 = vmatpush.bf16.msra.mxu0 %v6935
    %8455 = vmatpush.bf16.msra.mxu0 %v6923
    %8456 = vmatpush.bf16.msra.mxu0 %v6911
    %8457 = vmatpush.bf16.msra.mxu0 %v6899
    %8458 = vmatpush.bf16.msra.mxu0 %v6887
    %8459 = vmatpush.bf16.msra.mxu0 %v6875
    %8460 = vmatpush.bf16.msra.mxu0 %v6863
    %8461 = vmatmul.bf16.gmra.mxu0 %v8153
    %v8462 = vpop.f32.mrf.mxu0
    %v8463 = vadd.f32 %v8450, %v8462
    %v8464 = vpop.f32.mrf.mxu0
    %8465 = vdwg.mxu0
    %8466 = vmatpush.bf16.msra.mxu0 %v6660
    %8467 = vmatpush.bf16.msra.mxu0 %v6648
    %8468 = vmatpush.bf16.msra.mxu0 %v6636
    %8469 = vmatpush.bf16.msra.mxu0 %v6624
    %8470 = vmatpush.bf16.msra.mxu0 %v6612
    %8471 = vmatpush.bf16.msra.mxu0 %v6600
    %8472 = vmatpush.bf16.msra.mxu0 %v6588
    %8473 = vmatpush.bf16.msra.mxu0 %v6576
    %8474 = vmatmul.bf16.gmra.mxu0 %v8150
    %v8475 = vpop.f32.mrf.mxu0
    %v8476 = vadd.f32 %v5400, %v8475
    %v8477 = vpop.f32.mrf.mxu0
    %8478 = vdwg.mxu0
    %8479 = vmatpush.bf16.msra.mxu0 %v6756
    %8480 = vmatpush.bf16.msra.mxu0 %v6744
    %8481 = vmatpush.bf16.msra.mxu0 %v6732
    %8482 = vmatpush.bf16.msra.mxu0 %v6720
    %8483 = vmatpush.bf16.msra.mxu0 %v6708
    %8484 = vmatpush.bf16.msra.mxu0 %v6696
    %8485 = vmatpush.bf16.msra.mxu0 %v6684
    %8486 = vmatpush.bf16.msra.mxu0 %v6672
    %8487 = vmatmul.bf16.gmra.mxu0 %v8151
    %v8488 = vpop.f32.mrf.mxu0
    %v8489 = vadd.f32 %v8476, %v8488
    %v8490 = vpop.f32.mrf.mxu0
    %8491 = vdwg.mxu0
    %8492 = vmatpush.bf16.msra.mxu0 %v6852
    %8493 = vmatpush.bf16.msra.mxu0 %v6840
    %8494 = vmatpush.bf16.msra.mxu0 %v6828
    %8495 = vmatpush.bf16.msra.mxu0 %v6816
    %8496 = vmatpush.bf16.msra.mxu0 %v6804
    %8497 = vmatpush.bf16.msra.mxu0 %v6792
    %8498 = vmatpush.bf16.msra.mxu0 %v6780
    %8499 = vmatpush.bf16.msra.mxu0 %v6768
    %8500 = vmatmul.bf16.gmra.mxu0 %v8152
    %v8501 = vpop.f32.mrf.mxu0
    %v8502 = vadd.f32 %v8489, %v8501
    %v8503 = vpop.f32.mrf.mxu0
    %8504 = vdwg.mxu0
    %8505 = vmatpush.bf16.msra.mxu0 %v6948
    %8506 = vmatpush.bf16.msra.mxu0 %v6936
    %8507 = vmatpush.bf16.msra.mxu0 %v6924
    %8508 = vmatpush.bf16.msra.mxu0 %v6912
    %8509 = vmatpush.bf16.msra.mxu0 %v6900
    %8510 = vmatpush.bf16.msra.mxu0 %v6888
    %8511 = vmatpush.bf16.msra.mxu0 %v6876
    %8512 = vmatpush.bf16.msra.mxu0 %v6864
    %8513 = vmatmul.bf16.gmra.mxu0 %v8153
    %v8514 = vpop.f32.mrf.mxu0
    %v8515 = vadd.f32 %v8502, %v8514
    %v8516 = vpop.f32.mrf.mxu0
    %8517 = vdwg.mxu0
    %8518 = vmatpush.bf16.msra.mxu0 %v6661
    %8519 = vmatpush.bf16.msra.mxu0 %v6649
    %8520 = vmatpush.bf16.msra.mxu0 %v6637
    %8521 = vmatpush.bf16.msra.mxu0 %v6625
    %8522 = vmatpush.bf16.msra.mxu0 %v6613
    %8523 = vmatpush.bf16.msra.mxu0 %v6601
    %8524 = vmatpush.bf16.msra.mxu0 %v6589
    %8525 = vmatpush.bf16.msra.mxu0 %v6577
    %8526 = vmatmul.bf16.gmra.mxu0 %v8150
    %v8527 = vpop.f32.mrf.mxu0
    %v8528 = vadd.f32 %v5401, %v8527
    %v8529 = vpop.f32.mrf.mxu0
    %8530 = vdwg.mxu0
    %8531 = vmatpush.bf16.msra.mxu0 %v6757
    %8532 = vmatpush.bf16.msra.mxu0 %v6745
    %8533 = vmatpush.bf16.msra.mxu0 %v6733
    %8534 = vmatpush.bf16.msra.mxu0 %v6721
    %8535 = vmatpush.bf16.msra.mxu0 %v6709
    %8536 = vmatpush.bf16.msra.mxu0 %v6697
    %8537 = vmatpush.bf16.msra.mxu0 %v6685
    %8538 = vmatpush.bf16.msra.mxu0 %v6673
    %8539 = vmatmul.bf16.gmra.mxu0 %v8151
    %v8540 = vpop.f32.mrf.mxu0
    %v8541 = vadd.f32 %v8528, %v8540
    %v8542 = vpop.f32.mrf.mxu0
    %8543 = vdwg.mxu0
    %8544 = vmatpush.bf16.msra.mxu0 %v6853
    %8545 = vmatpush.bf16.msra.mxu0 %v6841
    %8546 = vmatpush.bf16.msra.mxu0 %v6829
    %8547 = vmatpush.bf16.msra.mxu0 %v6817
    %8548 = vmatpush.bf16.msra.mxu0 %v6805
    %8549 = vmatpush.bf16.msra.mxu0 %v6793
    %8550 = vmatpush.bf16.msra.mxu0 %v6781
    %8551 = vmatpush.bf16.msra.mxu0 %v6769
    %8552 = vmatmul.bf16.gmra.mxu0 %v8152
    %v8553 = vpop.f32.mrf.mxu0
    %v8554 = vadd.f32 %v8541, %v8553
    %v8555 = vpop.f32.mrf.mxu0
    %8556 = vdwg.mxu0
    %8557 = vmatpush.bf16.msra.mxu0 %v6949
    %8558 = vmatpush.bf16.msra.mxu0 %v6937
    %8559 = vmatpush.bf16.msra.mxu0 %v6925
    %8560 = vmatpush.bf16.msra.mxu0 %v6913
    %8561 = vmatpush.bf16.msra.mxu0 %v6901
    %8562 = vmatpush.bf16.msra.mxu0 %v6889
    %8563 = vmatpush.bf16.msra.mxu0 %v6877
    %8564 = vmatpush.bf16.msra.mxu0 %v6865
    %8565 = vmatmul.bf16.gmra.mxu0 %v8153
    %v8566 = vpop.f32.mrf.mxu0
    %v8567 = vadd.f32 %v8554, %v8566
    %v8568 = vpop.f32.mrf.mxu0
    %8569 = vdwg.mxu0
    %8570 = vmatpush.bf16.msra.mxu0 %v6662
    %8571 = vmatpush.bf16.msra.mxu0 %v6650
    %8572 = vmatpush.bf16.msra.mxu0 %v6638
    %8573 = vmatpush.bf16.msra.mxu0 %v6626
    %8574 = vmatpush.bf16.msra.mxu0 %v6614
    %8575 = vmatpush.bf16.msra.mxu0 %v6602
    %8576 = vmatpush.bf16.msra.mxu0 %v6590
    %8577 = vmatpush.bf16.msra.mxu0 %v6578
    %8578 = vmatmul.bf16.gmra.mxu0 %v8150
    %v8579 = vpop.f32.mrf.mxu0
    %v8580 = vadd.f32 %v5402, %v8579
    %v8581 = vpop.f32.mrf.mxu0
    %8582 = vdwg.mxu0
    %8583 = vmatpush.bf16.msra.mxu0 %v6758
    %8584 = vmatpush.bf16.msra.mxu0 %v6746
    %8585 = vmatpush.bf16.msra.mxu0 %v6734
    %8586 = vmatpush.bf16.msra.mxu0 %v6722
    %8587 = vmatpush.bf16.msra.mxu0 %v6710
    %8588 = vmatpush.bf16.msra.mxu0 %v6698
    %8589 = vmatpush.bf16.msra.mxu0 %v6686
    %8590 = vmatpush.bf16.msra.mxu0 %v6674
    %8591 = vmatmul.bf16.gmra.mxu0 %v8151
    %v8592 = vpop.f32.mrf.mxu0
    %v8593 = vadd.f32 %v8580, %v8592
    %v8594 = vpop.f32.mrf.mxu0
    %8595 = vdwg.mxu0
    %8596 = vmatpush.bf16.msra.mxu0 %v6854
    %8597 = vmatpush.bf16.msra.mxu0 %v6842
    %8598 = vmatpush.bf16.msra.mxu0 %v6830
    %8599 = vmatpush.bf16.msra.mxu0 %v6818
    %8600 = vmatpush.bf16.msra.mxu0 %v6806
    %8601 = vmatpush.bf16.msra.mxu0 %v6794
    %8602 = vmatpush.bf16.msra.mxu0 %v6782
    %8603 = vmatpush.bf16.msra.mxu0 %v6770
    %8604 = vmatmul.bf16.gmra.mxu0 %v8152
    %v8605 = vpop.f32.mrf.mxu0
    %v8606 = vadd.f32 %v8593, %v8605
    %v8607 = vpop.f32.mrf.mxu0
    %8608 = vdwg.mxu0
    %8609 = vmatpush.bf16.msra.mxu0 %v6950
    %8610 = vmatpush.bf16.msra.mxu0 %v6938
    %8611 = vmatpush.bf16.msra.mxu0 %v6926
    %8612 = vmatpush.bf16.msra.mxu0 %v6914
    %8613 = vmatpush.bf16.msra.mxu0 %v6902
    %8614 = vmatpush.bf16.msra.mxu0 %v6890
    %8615 = vmatpush.bf16.msra.mxu0 %v6878
    %8616 = vmatpush.bf16.msra.mxu0 %v6866
    %8617 = vmatmul.bf16.gmra.mxu0 %v8153
    %v8618 = vpop.f32.mrf.mxu0
    %v8619 = vadd.f32 %v8606, %v8618
    %v8620 = vpop.f32.mrf.mxu0
    %8621 = vdwg.mxu0
    %8622 = vmatpush.bf16.msra.mxu0 %v6663
    %8623 = vmatpush.bf16.msra.mxu0 %v6651
    %8624 = vmatpush.bf16.msra.mxu0 %v6639
    %8625 = vmatpush.bf16.msra.mxu0 %v6627
    %8626 = vmatpush.bf16.msra.mxu0 %v6615
    %8627 = vmatpush.bf16.msra.mxu0 %v6603
    %8628 = vmatpush.bf16.msra.mxu0 %v6591
    %8629 = vmatpush.bf16.msra.mxu0 %v6579
    %8630 = vmatmul.bf16.gmra.mxu0 %v8150
    %v8631 = vpop.f32.mrf.mxu0
    %v8632 = vadd.f32 %v5403, %v8631
    %v8633 = vpop.f32.mrf.mxu0
    %8634 = vdwg.mxu0
    %8635 = vmatpush.bf16.msra.mxu0 %v6759
    %8636 = vmatpush.bf16.msra.mxu0 %v6747
    %8637 = vmatpush.bf16.msra.mxu0 %v6735
    %8638 = vmatpush.bf16.msra.mxu0 %v6723
    %8639 = vmatpush.bf16.msra.mxu0 %v6711
    %8640 = vmatpush.bf16.msra.mxu0 %v6699
    %8641 = vmatpush.bf16.msra.mxu0 %v6687
    %8642 = vmatpush.bf16.msra.mxu0 %v6675
    %8643 = vmatmul.bf16.gmra.mxu0 %v8151
    %v8644 = vpop.f32.mrf.mxu0
    %v8645 = vadd.f32 %v8632, %v8644
    %v8646 = vpop.f32.mrf.mxu0
    %8647 = vdwg.mxu0
    %8648 = vmatpush.bf16.msra.mxu0 %v6855
    %8649 = vmatpush.bf16.msra.mxu0 %v6843
    %8650 = vmatpush.bf16.msra.mxu0 %v6831
    %8651 = vmatpush.bf16.msra.mxu0 %v6819
    %8652 = vmatpush.bf16.msra.mxu0 %v6807
    %8653 = vmatpush.bf16.msra.mxu0 %v6795
    %8654 = vmatpush.bf16.msra.mxu0 %v6783
    %8655 = vmatpush.bf16.msra.mxu0 %v6771
    %8656 = vmatmul.bf16.gmra.mxu0 %v8152
    %v8657 = vpop.f32.mrf.mxu0
    %v8658 = vadd.f32 %v8645, %v8657
    %v8659 = vpop.f32.mrf.mxu0
    %8660 = vdwg.mxu0
    %8661 = vmatpush.bf16.msra.mxu0 %v6951
    %8662 = vmatpush.bf16.msra.mxu0 %v6939
    %8663 = vmatpush.bf16.msra.mxu0 %v6927
    %8664 = vmatpush.bf16.msra.mxu0 %v6915
    %8665 = vmatpush.bf16.msra.mxu0 %v6903
    %8666 = vmatpush.bf16.msra.mxu0 %v6891
    %8667 = vmatpush.bf16.msra.mxu0 %v6879
    %8668 = vmatpush.bf16.msra.mxu0 %v6867
    %8669 = vmatmul.bf16.gmra.mxu0 %v8153
    %v8670 = vpop.f32.mrf.mxu0
    %v8671 = vadd.f32 %v8658, %v8670
    %v8672 = vpop.f32.mrf.mxu0
    %8673 = vdwg.mxu0
    %8674 = vmatpush.bf16.msra.mxu0 %v6664
    %8675 = vmatpush.bf16.msra.mxu0 %v6652
    %8676 = vmatpush.bf16.msra.mxu0 %v6640
    %8677 = vmatpush.bf16.msra.mxu0 %v6628
    %8678 = vmatpush.bf16.msra.mxu0 %v6616
    %8679 = vmatpush.bf16.msra.mxu0 %v6604
    %8680 = vmatpush.bf16.msra.mxu0 %v6592
    %8681 = vmatpush.bf16.msra.mxu0 %v6580
    %8682 = vmatmul.bf16.gmra.mxu0 %v8150
    %v8683 = vpop.f32.mrf.mxu0
    %v8684 = vadd.f32 %v5404, %v8683
    %v8685 = vpop.f32.mrf.mxu0
    %8686 = vdwg.mxu0
    %8687 = vmatpush.bf16.msra.mxu0 %v6760
    %8688 = vmatpush.bf16.msra.mxu0 %v6748
    %8689 = vmatpush.bf16.msra.mxu0 %v6736
    %8690 = vmatpush.bf16.msra.mxu0 %v6724
    %8691 = vmatpush.bf16.msra.mxu0 %v6712
    %8692 = vmatpush.bf16.msra.mxu0 %v6700
    %8693 = vmatpush.bf16.msra.mxu0 %v6688
    %8694 = vmatpush.bf16.msra.mxu0 %v6676
    %8695 = vmatmul.bf16.gmra.mxu0 %v8151
    %v8696 = vpop.f32.mrf.mxu0
    %v8697 = vadd.f32 %v8684, %v8696
    %v8698 = vpop.f32.mrf.mxu0
    %8699 = vdwg.mxu0
    %8700 = vmatpush.bf16.msra.mxu0 %v6856
    %8701 = vmatpush.bf16.msra.mxu0 %v6844
    %8702 = vmatpush.bf16.msra.mxu0 %v6832
    %8703 = vmatpush.bf16.msra.mxu0 %v6820
    %8704 = vmatpush.bf16.msra.mxu0 %v6808
    %8705 = vmatpush.bf16.msra.mxu0 %v6796
    %8706 = vmatpush.bf16.msra.mxu0 %v6784
    %8707 = vmatpush.bf16.msra.mxu0 %v6772
    %8708 = vmatmul.bf16.gmra.mxu0 %v8152
    %v8709 = vpop.f32.mrf.mxu0
    %v8710 = vadd.f32 %v8697, %v8709
    %v8711 = vpop.f32.mrf.mxu0
    %8712 = vdwg.mxu0
    %8713 = vmatpush.bf16.msra.mxu0 %v6952
    %8714 = vmatpush.bf16.msra.mxu0 %v6940
    %8715 = vmatpush.bf16.msra.mxu0 %v6928
    %8716 = vmatpush.bf16.msra.mxu0 %v6916
    %8717 = vmatpush.bf16.msra.mxu0 %v6904
    %8718 = vmatpush.bf16.msra.mxu0 %v6892
    %8719 = vmatpush.bf16.msra.mxu0 %v6880
    %8720 = vmatpush.bf16.msra.mxu0 %v6868
    %8721 = vmatmul.bf16.gmra.mxu0 %v8153
    %v8722 = vpop.f32.mrf.mxu0
    %v8723 = vadd.f32 %v8710, %v8722
    %v8724 = vpop.f32.mrf.mxu0
    %8725 = vdwg.mxu0
    %8726 = vmatpush.bf16.msra.mxu0 %v6665
    %8727 = vmatpush.bf16.msra.mxu0 %v6653
    %8728 = vmatpush.bf16.msra.mxu0 %v6641
    %8729 = vmatpush.bf16.msra.mxu0 %v6629
    %8730 = vmatpush.bf16.msra.mxu0 %v6617
    %8731 = vmatpush.bf16.msra.mxu0 %v6605
    %8732 = vmatpush.bf16.msra.mxu0 %v6593
    %8733 = vmatpush.bf16.msra.mxu0 %v6581
    %8734 = vmatmul.bf16.gmra.mxu0 %v8150
    %v8735 = vpop.f32.mrf.mxu0
    %v8736 = vadd.f32 %v5405, %v8735
    %v8737 = vpop.f32.mrf.mxu0
    %8738 = vdwg.mxu0
    %8739 = vmatpush.bf16.msra.mxu0 %v6761
    %8740 = vmatpush.bf16.msra.mxu0 %v6749
    %8741 = vmatpush.bf16.msra.mxu0 %v6737
    %8742 = vmatpush.bf16.msra.mxu0 %v6725
    %8743 = vmatpush.bf16.msra.mxu0 %v6713
    %8744 = vmatpush.bf16.msra.mxu0 %v6701
    %8745 = vmatpush.bf16.msra.mxu0 %v6689
    %8746 = vmatpush.bf16.msra.mxu0 %v6677
    %8747 = vmatmul.bf16.gmra.mxu0 %v8151
    %v8748 = vpop.f32.mrf.mxu0
    %v8749 = vadd.f32 %v8736, %v8748
    %v8750 = vpop.f32.mrf.mxu0
    %8751 = vdwg.mxu0
    %8752 = vmatpush.bf16.msra.mxu0 %v6857
    %8753 = vmatpush.bf16.msra.mxu0 %v6845
    %8754 = vmatpush.bf16.msra.mxu0 %v6833
    %8755 = vmatpush.bf16.msra.mxu0 %v6821
    %8756 = vmatpush.bf16.msra.mxu0 %v6809
    %8757 = vmatpush.bf16.msra.mxu0 %v6797
    %8758 = vmatpush.bf16.msra.mxu0 %v6785
    %8759 = vmatpush.bf16.msra.mxu0 %v6773
    %8760 = vmatmul.bf16.gmra.mxu0 %v8152
    %v8761 = vpop.f32.mrf.mxu0
    %v8762 = vadd.f32 %v8749, %v8761
    %v8763 = vpop.f32.mrf.mxu0
    %8764 = vdwg.mxu0
    %8765 = vmatpush.bf16.msra.mxu0 %v6953
    %8766 = vmatpush.bf16.msra.mxu0 %v6941
    %8767 = vmatpush.bf16.msra.mxu0 %v6929
    %8768 = vmatpush.bf16.msra.mxu0 %v6917
    %8769 = vmatpush.bf16.msra.mxu0 %v6905
    %8770 = vmatpush.bf16.msra.mxu0 %v6893
    %8771 = vmatpush.bf16.msra.mxu0 %v6881
    %8772 = vmatpush.bf16.msra.mxu0 %v6869
    %8773 = vmatmul.bf16.gmra.mxu0 %v8153
    %v8774 = vpop.f32.mrf.mxu0
    %v8775 = vadd.f32 %v8762, %v8774
    %v8776 = vpop.f32.mrf.mxu0
    %8777 = vdwg.mxu0
    %v8778 = vadd.f32 %v3535, %v8203
    %v8779 = vadd.f32 %v3587, %v8255
    %v8780 = vadd.f32 %v3639, %v8307
    %v8781 = vadd.f32 %v3691, %v8359
    %v8782 = vxor.u32 %v8778, 2147483648
    %v8783 = vxor.u32 %v8779, 2147483648
    %v8784 = vxor.u32 %v8780, 2147483648
    %v8785 = vxor.u32 %v8781, 2147483648
    %v8786 = vmul.f32 %v8782, 1.442695
    %v8787 = vpow.pop %v8786
    %v8788 = vmul.f32 %v8783, 1.442695
    %v8789 = vpow.pop %v8788
    %v8790 = vmul.f32 %v8784, 1.442695
    %v8791 = vpow.pop %v8790
    %v8792 = vmul.f32 %v8785, 1.442695
    %v8793 = vpow.pop %v8792
    %v8794 = vadd.f32 %v8787, 1.0
    %v8795 = vadd.f32 %v8789, 1.0
    %v8796 = vadd.f32 %v8791, 1.0
    %v8797 = vadd.f32 %v8793, 1.0
    %v8798 = vrcp.pop %v8794
    %v8799 = vmul.f32 %v8794, %v8798
    %v8800 = vsub.f32 1.0, %v8799
    %v8801 = vmul.f32 %v8798, %v8800
    %v8802 = vadd.f32 %v8798, %v8801
    %vm8803 = vweird.f32 %v8794
    %vm8804 = vweird.f32 %v8798
    %vm8805 = vmor %vm8803, %vm8804
    %v8806 = vsel %vm8805, %v8798, %v8802
    %v8807 = vand.u32 2147483647, %v8794
    %vm8808 = vcmp.eq.f32.partialorder %v8807, 8.507059e+37
    %v8809 = vand.u32 %v8794, 2147483648
    %v8810 = vor.u32 1.1754944e-38, %v8809
    %v8811 = vsel %vm8808, %v8810, %v8806
    %v8812 = vmul.f32 1.0, %v8811
    %v8813 = vrcp.pop %v8795
    %v8814 = vmul.f32 %v8795, %v8813
    %v8815 = vsub.f32 1.0, %v8814
    %v8816 = vmul.f32 %v8813, %v8815
    %v8817 = vadd.f32 %v8813, %v8816
    %vm8818 = vweird.f32 %v8795
    %vm8819 = vweird.f32 %v8813
    %vm8820 = vmor %vm8818, %vm8819
    %v8821 = vsel %vm8820, %v8813, %v8817
    %v8822 = vand.u32 2147483647, %v8795
    %vm8823 = vcmp.eq.f32.partialorder %v8822, 8.507059e+37
    %v8824 = vand.u32 %v8795, 2147483648
    %v8825 = vor.u32 1.1754944e-38, %v8824
    %v8826 = vsel %vm8823, %v8825, %v8821
    %v8827 = vmul.f32 1.0, %v8826
    %v8828 = vrcp.pop %v8796
    %v8829 = vmul.f32 %v8796, %v8828
    %v8830 = vsub.f32 1.0, %v8829
    %v8831 = vmul.f32 %v8828, %v8830
    %v8832 = vadd.f32 %v8828, %v8831
    %vm8833 = vweird.f32 %v8796
    %vm8834 = vweird.f32 %v8828
    %vm8835 = vmor %vm8833, %vm8834
    %v8836 = vsel %vm8835, %v8828, %v8832
    %v8837 = vand.u32 2147483647, %v8796
    %vm8838 = vcmp.eq.f32.partialorder %v8837, 8.507059e+37
    %v8839 = vand.u32 %v8796, 2147483648
    %v8840 = vor.u32 1.1754944e-38, %v8839
    %v8841 = vsel %vm8838, %v8840, %v8836
    %v8842 = vmul.f32 1.0, %v8841
    %v8843 = vrcp.pop %v8797
    %v8844 = vmul.f32 %v8797, %v8843
    %v8845 = vsub.f32 1.0, %v8844
    %v8846 = vmul.f32 %v8843, %v8845
    %v8847 = vadd.f32 %v8843, %v8846
    %vm8848 = vweird.f32 %v8797
    %vm8849 = vweird.f32 %v8843
    %vm8850 = vmor %vm8848, %vm8849
    %v8851 = vsel %vm8850, %v8843, %v8847
    %v8852 = vand.u32 2147483647, %v8797
    %vm8853 = vcmp.eq.f32.partialorder %v8852, 8.507059e+37
    %v8854 = vand.u32 %v8797, 2147483648
    %v8855 = vor.u32 1.1754944e-38, %v8854
    %v8856 = vsel %vm8853, %v8855, %v8851
    %v8857 = vmul.f32 1.0, %v8856
    %v8858 = vadd.f32 %v3743, %v8411
    %v8859 = vadd.f32 %v3795, %v8463
    %v8860 = vadd.f32 %v3847, %v8515
    %v8861 = vadd.f32 %v3899, %v8567
    %v8862 = vxor.u32 %v8858, 2147483648
    %v8863 = vxor.u32 %v8859, 2147483648
    %v8864 = vxor.u32 %v8860, 2147483648
    %v8865 = vxor.u32 %v8861, 2147483648
    %v8866 = vmul.f32 %v8862, 1.442695
    %v8867 = vpow.pop %v8866
    %v8868 = vmul.f32 %v8863, 1.442695
    %v8869 = vpow.pop %v8868
    %v8870 = vmul.f32 %v8864, 1.442695
    %v8871 = vpow.pop %v8870
    %v8872 = vmul.f32 %v8865, 1.442695
    %v8873 = vpow.pop %v8872
    %v8874 = vadd.f32 %v8867, 1.0
    %v8875 = vadd.f32 %v8869, 1.0
    %v8876 = vadd.f32 %v8871, 1.0
    %v8877 = vadd.f32 %v8873, 1.0
    %v8878 = vrcp.pop %v8874
    %v8879 = vmul.f32 %v8874, %v8878
    %v8880 = vsub.f32 1.0, %v8879
    %v8881 = vmul.f32 %v8878, %v8880
    %v8882 = vadd.f32 %v8878, %v8881
    %vm8883 = vweird.f32 %v8874
    %vm8884 = vweird.f32 %v8878
    %vm8885 = vmor %vm8883, %vm8884
    %v8886 = vsel %vm8885, %v8878, %v8882
    %v8887 = vand.u32 2147483647, %v8874
    %vm8888 = vcmp.eq.f32.partialorder %v8887, 8.507059e+37
    %v8889 = vand.u32 %v8874, 2147483648
    %v8890 = vor.u32 1.1754944e-38, %v8889
    %v8891 = vsel %vm8888, %v8890, %v8886
    %v8892 = vmul.f32 1.0, %v8891
    %v8893 = vrcp.pop %v8875
    %v8894 = vmul.f32 %v8875, %v8893
    %v8895 = vsub.f32 1.0, %v8894
    %v8896 = vmul.f32 %v8893, %v8895
    %v8897 = vadd.f32 %v8893, %v8896
    %vm8898 = vweird.f32 %v8875
    %vm8899 = vweird.f32 %v8893
    %vm8900 = vmor %vm8898, %vm8899
    %v8901 = vsel %vm8900, %v8893, %v8897
    %v8902 = vand.u32 2147483647, %v8875
    %vm8903 = vcmp.eq.f32.partialorder %v8902, 8.507059e+37
    %v8904 = vand.u32 %v8875, 2147483648
    %v8905 = vor.u32 1.1754944e-38, %v8904
    %v8906 = vsel %vm8903, %v8905, %v8901
    %v8907 = vmul.f32 1.0, %v8906
    %v8908 = vrcp.pop %v8876
    %v8909 = vmul.f32 %v8876, %v8908
    %v8910 = vsub.f32 1.0, %v8909
    %v8911 = vmul.f32 %v8908, %v8910
    %v8912 = vadd.f32 %v8908, %v8911
    %vm8913 = vweird.f32 %v8876
    %vm8914 = vweird.f32 %v8908
    %vm8915 = vmor %vm8913, %vm8914
    %v8916 = vsel %vm8915, %v8908, %v8912
    %v8917 = vand.u32 2147483647, %v8876
    %vm8918 = vcmp.eq.f32.partialorder %v8917, 8.507059e+37
    %v8919 = vand.u32 %v8876, 2147483648
    %v8920 = vor.u32 1.1754944e-38, %v8919
    %v8921 = vsel %vm8918, %v8920, %v8916
    %v8922 = vmul.f32 1.0, %v8921
    %v8923 = vrcp.pop %v8877
    %v8924 = vmul.f32 %v8877, %v8923
    %v8925 = vsub.f32 1.0, %v8924
    %v8926 = vmul.f32 %v8923, %v8925
    %v8927 = vadd.f32 %v8923, %v8926
    %vm8928 = vweird.f32 %v8877
    %vm8929 = vweird.f32 %v8923
    %vm8930 = vmor %vm8928, %vm8929
    %v8931 = vsel %vm8930, %v8923, %v8927
    %v8932 = vand.u32 2147483647, %v8877
    %vm8933 = vcmp.eq.f32.partialorder %v8932, 8.507059e+37
    %v8934 = vand.u32 %v8877, 2147483648
    %v8935 = vor.u32 1.1754944e-38, %v8934
    %v8936 = vsel %vm8933, %v8935, %v8931
    %v8937 = vmul.f32 1.0, %v8936
    %v8938 = vmul.f32 %v8812, %v8619
    %v8939 = vmul.f32 %v8827, %v8671
    %v8940 = vmul.f32 %v8842, %v8723
    %v8941 = vmul.f32 %v8857, %v8775
    %v8942 = vadd.f32 %v3951, %v8938
    %v8943 = vadd.f32 %v4003, %v8939
    %v8944 = vadd.f32 %v4055, %v8940
    %v8945 = vadd.f32 %v4107, %v8941
    %v8946 = vtanh.pop %v8942
    %v8947 = vtanh.pop %v8943
    %v8948 = vtanh.pop %v8944
    %v8949 = vtanh.pop %v8945
    %v8950 = vsub.f32 1.0, %v8892
    %v8951 = vsub.f32 1.0, %v8907
    %v8952 = vsub.f32 1.0, %v8922
    %v8953 = vsub.f32 1.0, %v8937
    %v8954 = vmul.f32 %v8950, %v8946
    %v8955 = vmul.f32 %v8951, %v8947
    %v8956 = vmul.f32 %v8952, %v8948
    %v8957 = vmul.f32 %v8953, %v8949
    %v8958 = vmul.f32 %v8892, %v8146
    %v8959 = vmul.f32 %v8907, %v8147
    %v8960 = vmul.f32 %v8922, %v8148
    %v8961 = vmul.f32 %v8937, %v8149
    %v8962 = vadd.f32 %v8954, %v8958
    %v8963 = vadd.f32 %v8955, %v8959
    %v8964 = vadd.f32 %v8956, %v8960
    %v8965 = vadd.f32 %v8957, %v8961
    %v8966 = vpack.c.bf16 %v8962, %v8962
    %v8967 = vpack.c.bf16 %v8963, %v8963
    %v8968 = vpack.c.bf16 %v8964, %v8964
    %v8969 = vpack.c.bf16 %v8965, %v8965
    %8970 = vmatpush.bf16.msra.mxu0 %v6654
    %8971 = vmatpush.bf16.msra.mxu0 %v6642
    %8972 = vmatpush.bf16.msra.mxu0 %v6630
    %8973 = vmatpush.bf16.msra.mxu0 %v6618
    %8974 = vmatpush.bf16.msra.mxu0 %v6606
    %8975 = vmatpush.bf16.msra.mxu0 %v6594
    %8976 = vmatpush.bf16.msra.mxu0 %v6582
    %8977 = vmatpush.bf16.msra.mxu0 %v6570
    %8978 = vmatmul.bf16.gmra.mxu0 %v8966
    %v8979 = vpop.f32.mrf.mxu0
    %v8980 = vadd.f32 %v5394, %v8979
    %v8981 = vpop.f32.mrf.mxu0
    %8982 = vdwg.mxu0
    %8983 = vmatpush.bf16.msra.mxu0 %v6750
    %8984 = vmatpush.bf16.msra.mxu0 %v6738
    %8985 = vmatpush.bf16.msra.mxu0 %v6726
    %8986 = vmatpush.bf16.msra.mxu0 %v6714
    %8987 = vmatpush.bf16.msra.mxu0 %v6702
    %8988 = vmatpush.bf16.msra.mxu0 %v6690
    %8989 = vmatpush.bf16.msra.mxu0 %v6678
    %8990 = vmatpush.bf16.msra.mxu0 %v6666
    %8991 = vmatmul.bf16.gmra.mxu0 %v8967
    %v8992 = vpop.f32.mrf.mxu0
    %v8993 = vadd.f32 %v8980, %v8992
    %v8994 = vpop.f32.mrf.mxu0
    %8995 = vdwg.mxu0
    %8996 = vmatpush.bf16.msra.mxu0 %v6846
    %8997 = vmatpush.bf16.msra.mxu0 %v6834
    %8998 = vmatpush.bf16.msra.mxu0 %v6822
    %8999 = vmatpush.bf16.msra.mxu0 %v6810
    %9000 = vmatpush.bf16.msra.mxu0 %v6798
    %9001 = vmatpush.bf16.msra.mxu0 %v6786
    %9002 = vmatpush.bf16.msra.mxu0 %v6774
    %9003 = vmatpush.bf16.msra.mxu0 %v6762
    %9004 = vmatmul.bf16.gmra.mxu0 %v8968
    %v9005 = vpop.f32.mrf.mxu0
    %v9006 = vadd.f32 %v8993, %v9005
    %v9007 = vpop.f32.mrf.mxu0
    %9008 = vdwg.mxu0
    %9009 = vmatpush.bf16.msra.mxu0 %v6942
    %9010 = vmatpush.bf16.msra.mxu0 %v6930
    %9011 = vmatpush.bf16.msra.mxu0 %v6918
    %9012 = vmatpush.bf16.msra.mxu0 %v6906
    %9013 = vmatpush.bf16.msra.mxu0 %v6894
    %9014 = vmatpush.bf16.msra.mxu0 %v6882
    %9015 = vmatpush.bf16.msra.mxu0 %v6870
    %9016 = vmatpush.bf16.msra.mxu0 %v6858
    %9017 = vmatmul.bf16.gmra.mxu0 %v8969
    %v9018 = vpop.f32.mrf.mxu0
    %v9019 = vadd.f32 %v9006, %v9018
    %v9020 = vpop.f32.mrf.mxu0
    %9021 = vdwg.mxu0
    %9022 = vmatpush.bf16.msra.mxu0 %v6655
    %9023 = vmatpush.bf16.msra.mxu0 %v6643
    %9024 = vmatpush.bf16.msra.mxu0 %v6631
    %9025 = vmatpush.bf16.msra.mxu0 %v6619
    %9026 = vmatpush.bf16.msra.mxu0 %v6607
    %9027 = vmatpush.bf16.msra.mxu0 %v6595
    %9028 = vmatpush.bf16.msra.mxu0 %v6583
    %9029 = vmatpush.bf16.msra.mxu0 %v6571
    %9030 = vmatmul.bf16.gmra.mxu0 %v8966
    %v9031 = vpop.f32.mrf.mxu0
    %v9032 = vadd.f32 %v5395, %v9031
    %v9033 = vpop.f32.mrf.mxu0
    %9034 = vdwg.mxu0
    %9035 = vmatpush.bf16.msra.mxu0 %v6751
    %9036 = vmatpush.bf16.msra.mxu0 %v6739
    %9037 = vmatpush.bf16.msra.mxu0 %v6727
    %9038 = vmatpush.bf16.msra.mxu0 %v6715
    %9039 = vmatpush.bf16.msra.mxu0 %v6703
    %9040 = vmatpush.bf16.msra.mxu0 %v6691
    %9041 = vmatpush.bf16.msra.mxu0 %v6679
    %9042 = vmatpush.bf16.msra.mxu0 %v6667
    %9043 = vmatmul.bf16.gmra.mxu0 %v8967
    %v9044 = vpop.f32.mrf.mxu0
    %v9045 = vadd.f32 %v9032, %v9044
    %v9046 = vpop.f32.mrf.mxu0
    %9047 = vdwg.mxu0
    %9048 = vmatpush.bf16.msra.mxu0 %v6847
    %9049 = vmatpush.bf16.msra.mxu0 %v6835
    %9050 = vmatpush.bf16.msra.mxu0 %v6823
    %9051 = vmatpush.bf16.msra.mxu0 %v6811
    %9052 = vmatpush.bf16.msra.mxu0 %v6799
    %9053 = vmatpush.bf16.msra.mxu0 %v6787
    %9054 = vmatpush.bf16.msra.mxu0 %v6775
    %9055 = vmatpush.bf16.msra.mxu0 %v6763
    %9056 = vmatmul.bf16.gmra.mxu0 %v8968
    %v9057 = vpop.f32.mrf.mxu0
    %v9058 = vadd.f32 %v9045, %v9057
    %v9059 = vpop.f32.mrf.mxu0
    %9060 = vdwg.mxu0
    %9061 = vmatpush.bf16.msra.mxu0 %v6943
    %9062 = vmatpush.bf16.msra.mxu0 %v6931
    %9063 = vmatpush.bf16.msra.mxu0 %v6919
    %9064 = vmatpush.bf16.msra.mxu0 %v6907
    %9065 = vmatpush.bf16.msra.mxu0 %v6895
    %9066 = vmatpush.bf16.msra.mxu0 %v6883
    %9067 = vmatpush.bf16.msra.mxu0 %v6871
    %9068 = vmatpush.bf16.msra.mxu0 %v6859
    %9069 = vmatmul.bf16.gmra.mxu0 %v8969
    %v9070 = vpop.f32.mrf.mxu0
    %v9071 = vadd.f32 %v9058, %v9070
    %v9072 = vpop.f32.mrf.mxu0
    %9073 = vdwg.mxu0
    %9074 = vmatpush.bf16.msra.mxu0 %v6656
    %9075 = vmatpush.bf16.msra.mxu0 %v6644
    %9076 = vmatpush.bf16.msra.mxu0 %v6632
    %9077 = vmatpush.bf16.msra.mxu0 %v6620
    %9078 = vmatpush.bf16.msra.mxu0 %v6608
    %9079 = vmatpush.bf16.msra.mxu0 %v6596
    %9080 = vmatpush.bf16.msra.mxu0 %v6584
    %9081 = vmatpush.bf16.msra.mxu0 %v6572
    %9082 = vmatmul.bf16.gmra.mxu0 %v8966
    %v9083 = vpop.f32.mrf.mxu0
    %v9084 = vadd.f32 %v5396, %v9083
    %v9085 = vpop.f32.mrf.mxu0
    %9086 = vdwg.mxu0
    %9087 = vmatpush.bf16.msra.mxu0 %v6752
    %9088 = vmatpush.bf16.msra.mxu0 %v6740
    %9089 = vmatpush.bf16.msra.mxu0 %v6728
    %9090 = vmatpush.bf16.msra.mxu0 %v6716
    %9091 = vmatpush.bf16.msra.mxu0 %v6704
    %9092 = vmatpush.bf16.msra.mxu0 %v6692
    %9093 = vmatpush.bf16.msra.mxu0 %v6680
    %9094 = vmatpush.bf16.msra.mxu0 %v6668
    %9095 = vmatmul.bf16.gmra.mxu0 %v8967
    %v9096 = vpop.f32.mrf.mxu0
    %v9097 = vadd.f32 %v9084, %v9096
    %v9098 = vpop.f32.mrf.mxu0
    %9099 = vdwg.mxu0
    %9100 = vmatpush.bf16.msra.mxu0 %v6848
    %9101 = vmatpush.bf16.msra.mxu0 %v6836
    %9102 = vmatpush.bf16.msra.mxu0 %v6824
    %9103 = vmatpush.bf16.msra.mxu0 %v6812
    %9104 = vmatpush.bf16.msra.mxu0 %v6800
    %9105 = vmatpush.bf16.msra.mxu0 %v6788
    %9106 = vmatpush.bf16.msra.mxu0 %v6776
    %9107 = vmatpush.bf16.msra.mxu0 %v6764
    %9108 = vmatmul.bf16.gmra.mxu0 %v8968
    %v9109 = vpop.f32.mrf.mxu0
    %v9110 = vadd.f32 %v9097, %v9109
    %v9111 = vpop.f32.mrf.mxu0
    %9112 = vdwg.mxu0
    %9113 = vmatpush.bf16.msra.mxu0 %v6944
    %9114 = vmatpush.bf16.msra.mxu0 %v6932
    %9115 = vmatpush.bf16.msra.mxu0 %v6920
    %9116 = vmatpush.bf16.msra.mxu0 %v6908
    %9117 = vmatpush.bf16.msra.mxu0 %v6896
    %9118 = vmatpush.bf16.msra.mxu0 %v6884
    %9119 = vmatpush.bf16.msra.mxu0 %v6872
    %9120 = vmatpush.bf16.msra.mxu0 %v6860
    %9121 = vmatmul.bf16.gmra.mxu0 %v8969
    %v9122 = vpop.f32.mrf.mxu0
    %v9123 = vadd.f32 %v9110, %v9122
    %v9124 = vpop.f32.mrf.mxu0
    %9125 = vdwg.mxu0
    %9126 = vmatpush.bf16.msra.mxu0 %v6657
    %9127 = vmatpush.bf16.msra.mxu0 %v6645
    %9128 = vmatpush.bf16.msra.mxu0 %v6633
    %9129 = vmatpush.bf16.msra.mxu0 %v6621
    %9130 = vmatpush.bf16.msra.mxu0 %v6609
    %9131 = vmatpush.bf16.msra.mxu0 %v6597
    %9132 = vmatpush.bf16.msra.mxu0 %v6585
    %9133 = vmatpush.bf16.msra.mxu0 %v6573
    %9134 = vmatmul.bf16.gmra.mxu0 %v8966
    %v9135 = vpop.f32.mrf.mxu0
    %v9136 = vadd.f32 %v5397, %v9135
    %v9137 = vpop.f32.mrf.mxu0
    %9138 = vdwg.mxu0
    %9139 = vmatpush.bf16.msra.mxu0 %v6753
    %9140 = vmatpush.bf16.msra.mxu0 %v6741
    %9141 = vmatpush.bf16.msra.mxu0 %v6729
    %9142 = vmatpush.bf16.msra.mxu0 %v6717
    %9143 = vmatpush.bf16.msra.mxu0 %v6705
    %9144 = vmatpush.bf16.msra.mxu0 %v6693
    %9145 = vmatpush.bf16.msra.mxu0 %v6681
    %9146 = vmatpush.bf16.msra.mxu0 %v6669
    %9147 = vmatmul.bf16.gmra.mxu0 %v8967
    %v9148 = vpop.f32.mrf.mxu0
    %v9149 = vadd.f32 %v9136, %v9148
    %v9150 = vpop.f32.mrf.mxu0
    %9151 = vdwg.mxu0
    %9152 = vmatpush.bf16.msra.mxu0 %v6849
    %9153 = vmatpush.bf16.msra.mxu0 %v6837
    %9154 = vmatpush.bf16.msra.mxu0 %v6825
    %9155 = vmatpush.bf16.msra.mxu0 %v6813
    %9156 = vmatpush.bf16.msra.mxu0 %v6801
    %9157 = vmatpush.bf16.msra.mxu0 %v6789
    %9158 = vmatpush.bf16.msra.mxu0 %v6777
    %9159 = vmatpush.bf16.msra.mxu0 %v6765
    %9160 = vmatmul.bf16.gmra.mxu0 %v8968
    %v9161 = vpop.f32.mrf.mxu0
    %v9162 = vadd.f32 %v9149, %v9161
    %v9163 = vpop.f32.mrf.mxu0
    %9164 = vdwg.mxu0
    %9165 = vmatpush.bf16.msra.mxu0 %v6945
    %9166 = vmatpush.bf16.msra.mxu0 %v6933
    %9167 = vmatpush.bf16.msra.mxu0 %v6921
    %9168 = vmatpush.bf16.msra.mxu0 %v6909
    %9169 = vmatpush.bf16.msra.mxu0 %v6897
    %9170 = vmatpush.bf16.msra.mxu0 %v6885
    %9171 = vmatpush.bf16.msra.mxu0 %v6873
    %9172 = vmatpush.bf16.msra.mxu0 %v6861
    %9173 = vmatmul.bf16.gmra.mxu0 %v8969
    %v9174 = vpop.f32.mrf.mxu0
    %v9175 = vadd.f32 %v9162, %v9174
    %v9176 = vpop.f32.mrf.mxu0
    %9177 = vdwg.mxu0
    %9178 = vmatpush.bf16.msra.mxu0 %v6658
    %9179 = vmatpush.bf16.msra.mxu0 %v6646
    %9180 = vmatpush.bf16.msra.mxu0 %v6634
    %9181 = vmatpush.bf16.msra.mxu0 %v6622
    %9182 = vmatpush.bf16.msra.mxu0 %v6610
    %9183 = vmatpush.bf16.msra.mxu0 %v6598
    %9184 = vmatpush.bf16.msra.mxu0 %v6586
    %9185 = vmatpush.bf16.msra.mxu0 %v6574
    %9186 = vmatmul.bf16.gmra.mxu0 %v8966
    %v9187 = vpop.f32.mrf.mxu0
    %v9188 = vadd.f32 %v5398, %v9187
    %v9189 = vpop.f32.mrf.mxu0
    %9190 = vdwg.mxu0
    %9191 = vmatpush.bf16.msra.mxu0 %v6754
    %9192 = vmatpush.bf16.msra.mxu0 %v6742
    %9193 = vmatpush.bf16.msra.mxu0 %v6730
    %9194 = vmatpush.bf16.msra.mxu0 %v6718
    %9195 = vmatpush.bf16.msra.mxu0 %v6706
    %9196 = vmatpush.bf16.msra.mxu0 %v6694
    %9197 = vmatpush.bf16.msra.mxu0 %v6682
    %9198 = vmatpush.bf16.msra.mxu0 %v6670
    %9199 = vmatmul.bf16.gmra.mxu0 %v8967
    %v9200 = vpop.f32.mrf.mxu0
    %v9201 = vadd.f32 %v9188, %v9200
    %v9202 = vpop.f32.mrf.mxu0
    %9203 = vdwg.mxu0
    %9204 = vmatpush.bf16.msra.mxu0 %v6850
    %9205 = vmatpush.bf16.msra.mxu0 %v6838
    %9206 = vmatpush.bf16.msra.mxu0 %v6826
    %9207 = vmatpush.bf16.msra.mxu0 %v6814
    %9208 = vmatpush.bf16.msra.mxu0 %v6802
    %9209 = vmatpush.bf16.msra.mxu0 %v6790
    %9210 = vmatpush.bf16.msra.mxu0 %v6778
    %9211 = vmatpush.bf16.msra.mxu0 %v6766
    %9212 = vmatmul.bf16.gmra.mxu0 %v8968
    %v9213 = vpop.f32.mrf.mxu0
    %v9214 = vadd.f32 %v9201, %v9213
    %v9215 = vpop.f32.mrf.mxu0
    %9216 = vdwg.mxu0
    %9217 = vmatpush.bf16.msra.mxu0 %v6946
    %9218 = vmatpush.bf16.msra.mxu0 %v6934
    %9219 = vmatpush.bf16.msra.mxu0 %v6922
    %9220 = vmatpush.bf16.msra.mxu0 %v6910
    %9221 = vmatpush.bf16.msra.mxu0 %v6898
    %9222 = vmatpush.bf16.msra.mxu0 %v6886
    %9223 = vmatpush.bf16.msra.mxu0 %v6874
    %9224 = vmatpush.bf16.msra.mxu0 %v6862
    %9225 = vmatmul.bf16.gmra.mxu0 %v8969
    %v9226 = vpop.f32.mrf.mxu0
    %v9227 = vadd.f32 %v9214, %v9226
    %v9228 = vpop.f32.mrf.mxu0
    %9229 = vdwg.mxu0
    %9230 = vmatpush.bf16.msra.mxu0 %v6659
    %9231 = vmatpush.bf16.msra.mxu0 %v6647
    %9232 = vmatpush.bf16.msra.mxu0 %v6635
    %9233 = vmatpush.bf16.msra.mxu0 %v6623
    %9234 = vmatpush.bf16.msra.mxu0 %v6611
    %9235 = vmatpush.bf16.msra.mxu0 %v6599
    %9236 = vmatpush.bf16.msra.mxu0 %v6587
    %9237 = vmatpush.bf16.msra.mxu0 %v6575
    %9238 = vmatmul.bf16.gmra.mxu0 %v8966
    %v9239 = vpop.f32.mrf.mxu0
    %v9240 = vadd.f32 %v5399, %v9239
    %v9241 = vpop.f32.mrf.mxu0
    %9242 = vdwg.mxu0
    %9243 = vmatpush.bf16.msra.mxu0 %v6755
    %9244 = vmatpush.bf16.msra.mxu0 %v6743
    %9245 = vmatpush.bf16.msra.mxu0 %v6731
    %9246 = vmatpush.bf16.msra.mxu0 %v6719
    %9247 = vmatpush.bf16.msra.mxu0 %v6707
    %9248 = vmatpush.bf16.msra.mxu0 %v6695
    %9249 = vmatpush.bf16.msra.mxu0 %v6683
    %9250 = vmatpush.bf16.msra.mxu0 %v6671
    %9251 = vmatmul.bf16.gmra.mxu0 %v8967
    %v9252 = vpop.f32.mrf.mxu0
    %v9253 = vadd.f32 %v9240, %v9252
    %v9254 = vpop.f32.mrf.mxu0
    %9255 = vdwg.mxu0
    %9256 = vmatpush.bf16.msra.mxu0 %v6851
    %9257 = vmatpush.bf16.msra.mxu0 %v6839
    %9258 = vmatpush.bf16.msra.mxu0 %v6827
    %9259 = vmatpush.bf16.msra.mxu0 %v6815
    %9260 = vmatpush.bf16.msra.mxu0 %v6803
    %9261 = vmatpush.bf16.msra.mxu0 %v6791
    %9262 = vmatpush.bf16.msra.mxu0 %v6779
    %9263 = vmatpush.bf16.msra.mxu0 %v6767
    %9264 = vmatmul.bf16.gmra.mxu0 %v8968
    %v9265 = vpop.f32.mrf.mxu0
    %v9266 = vadd.f32 %v9253, %v9265
    %v9267 = vpop.f32.mrf.mxu0
    %9268 = vdwg.mxu0
    %9269 = vmatpush.bf16.msra.mxu0 %v6947
    %9270 = vmatpush.bf16.msra.mxu0 %v6935
    %9271 = vmatpush.bf16.msra.mxu0 %v6923
    %9272 = vmatpush.bf16.msra.mxu0 %v6911
    %9273 = vmatpush.bf16.msra.mxu0 %v6899
    %9274 = vmatpush.bf16.msra.mxu0 %v6887
    %9275 = vmatpush.bf16.msra.mxu0 %v6875
    %9276 = vmatpush.bf16.msra.mxu0 %v6863
    %9277 = vmatmul.bf16.gmra.mxu0 %v8969
    %v9278 = vpop.f32.mrf.mxu0
    %v9279 = vadd.f32 %v9266, %v9278
    %v9280 = vpop.f32.mrf.mxu0
    %9281 = vdwg.mxu0
    %9282 = vmatpush.bf16.msra.mxu0 %v6660
    %9283 = vmatpush.bf16.msra.mxu0 %v6648
    %9284 = vmatpush.bf16.msra.mxu0 %v6636
    %9285 = vmatpush.bf16.msra.mxu0 %v6624
    %9286 = vmatpush.bf16.msra.mxu0 %v6612
    %9287 = vmatpush.bf16.msra.mxu0 %v6600
    %9288 = vmatpush.bf16.msra.mxu0 %v6588
    %9289 = vmatpush.bf16.msra.mxu0 %v6576
    %9290 = vmatmul.bf16.gmra.mxu0 %v8966
    %v9291 = vpop.f32.mrf.mxu0
    %v9292 = vadd.f32 %v5400, %v9291
    %v9293 = vpop.f32.mrf.mxu0
    %9294 = vdwg.mxu0
    %9295 = vmatpush.bf16.msra.mxu0 %v6756
    %9296 = vmatpush.bf16.msra.mxu0 %v6744
    %9297 = vmatpush.bf16.msra.mxu0 %v6732
    %9298 = vmatpush.bf16.msra.mxu0 %v6720
    %9299 = vmatpush.bf16.msra.mxu0 %v6708
    %9300 = vmatpush.bf16.msra.mxu0 %v6696
    %9301 = vmatpush.bf16.msra.mxu0 %v6684
    %9302 = vmatpush.bf16.msra.mxu0 %v6672
    %9303 = vmatmul.bf16.gmra.mxu0 %v8967
    %v9304 = vpop.f32.mrf.mxu0
    %v9305 = vadd.f32 %v9292, %v9304
    %v9306 = vpop.f32.mrf.mxu0
    %9307 = vdwg.mxu0
    %9308 = vmatpush.bf16.msra.mxu0 %v6852
    %9309 = vmatpush.bf16.msra.mxu0 %v6840
    %9310 = vmatpush.bf16.msra.mxu0 %v6828
    %9311 = vmatpush.bf16.msra.mxu0 %v6816
    %9312 = vmatpush.bf16.msra.mxu0 %v6804
    %9313 = vmatpush.bf16.msra.mxu0 %v6792
    %9314 = vmatpush.bf16.msra.mxu0 %v6780
    %9315 = vmatpush.bf16.msra.mxu0 %v6768
    %9316 = vmatmul.bf16.gmra.mxu0 %v8968
    %v9317 = vpop.f32.mrf.mxu0
    %v9318 = vadd.f32 %v9305, %v9317
    %v9319 = vpop.f32.mrf.mxu0
    %9320 = vdwg.mxu0
    %9321 = vmatpush.bf16.msra.mxu0 %v6948
    %9322 = vmatpush.bf16.msra.mxu0 %v6936
    %9323 = vmatpush.bf16.msra.mxu0 %v6924
    %9324 = vmatpush.bf16.msra.mxu0 %v6912
    %9325 = vmatpush.bf16.msra.mxu0 %v6900
    %9326 = vmatpush.bf16.msra.mxu0 %v6888
    %9327 = vmatpush.bf16.msra.mxu0 %v6876
    %9328 = vmatpush.bf16.msra.mxu0 %v6864
    %9329 = vmatmul.bf16.gmra.mxu0 %v8969
    %v9330 = vpop.f32.mrf.mxu0
    %v9331 = vadd.f32 %v9318, %v9330
    %v9332 = vpop.f32.mrf.mxu0
    %9333 = vdwg.mxu0
    %9334 = vmatpush.bf16.msra.mxu0 %v6661
    %9335 = vmatpush.bf16.msra.mxu0 %v6649
    %9336 = vmatpush.bf16.msra.mxu0 %v6637
    %9337 = vmatpush.bf16.msra.mxu0 %v6625
    %9338 = vmatpush.bf16.msra.mxu0 %v6613
    %9339 = vmatpush.bf16.msra.mxu0 %v6601
    %9340 = vmatpush.bf16.msra.mxu0 %v6589
    %9341 = vmatpush.bf16.msra.mxu0 %v6577
    %9342 = vmatmul.bf16.gmra.mxu0 %v8966
    %v9343 = vpop.f32.mrf.mxu0
    %v9344 = vadd.f32 %v5401, %v9343
    %v9345 = vpop.f32.mrf.mxu0
    %9346 = vdwg.mxu0
    %9347 = vmatpush.bf16.msra.mxu0 %v6757
    %9348 = vmatpush.bf16.msra.mxu0 %v6745
    %9349 = vmatpush.bf16.msra.mxu0 %v6733
    %9350 = vmatpush.bf16.msra.mxu0 %v6721
    %9351 = vmatpush.bf16.msra.mxu0 %v6709
    %9352 = vmatpush.bf16.msra.mxu0 %v6697
    %9353 = vmatpush.bf16.msra.mxu0 %v6685
    %9354 = vmatpush.bf16.msra.mxu0 %v6673
    %9355 = vmatmul.bf16.gmra.mxu0 %v8967
    %v9356 = vpop.f32.mrf.mxu0
    %v9357 = vadd.f32 %v9344, %v9356
    %v9358 = vpop.f32.mrf.mxu0
    %9359 = vdwg.mxu0
    %9360 = vmatpush.bf16.msra.mxu0 %v6853
    %9361 = vmatpush.bf16.msra.mxu0 %v6841
    %9362 = vmatpush.bf16.msra.mxu0 %v6829
    %9363 = vmatpush.bf16.msra.mxu0 %v6817
    %9364 = vmatpush.bf16.msra.mxu0 %v6805
    %9365 = vmatpush.bf16.msra.mxu0 %v6793
    %9366 = vmatpush.bf16.msra.mxu0 %v6781
    %9367 = vmatpush.bf16.msra.mxu0 %v6769
    %9368 = vmatmul.bf16.gmra.mxu0 %v8968
    %v9369 = vpop.f32.mrf.mxu0
    %v9370 = vadd.f32 %v9357, %v9369
    %v9371 = vpop.f32.mrf.mxu0
    %9372 = vdwg.mxu0
    %9373 = vmatpush.bf16.msra.mxu0 %v6949
    %9374 = vmatpush.bf16.msra.mxu0 %v6937
    %9375 = vmatpush.bf16.msra.mxu0 %v6925
    %9376 = vmatpush.bf16.msra.mxu0 %v6913
    %9377 = vmatpush.bf16.msra.mxu0 %v6901
    %9378 = vmatpush.bf16.msra.mxu0 %v6889
    %9379 = vmatpush.bf16.msra.mxu0 %v6877
    %9380 = vmatpush.bf16.msra.mxu0 %v6865
    %9381 = vmatmul.bf16.gmra.mxu0 %v8969
    %v9382 = vpop.f32.mrf.mxu0
    %v9383 = vadd.f32 %v9370, %v9382
    %v9384 = vpop.f32.mrf.mxu0
    %9385 = vdwg.mxu0
    %9386 = vmatpush.bf16.msra.mxu0 %v6662
    %9387 = vmatpush.bf16.msra.mxu0 %v6650
    %9388 = vmatpush.bf16.msra.mxu0 %v6638
    %9389 = vmatpush.bf16.msra.mxu0 %v6626
    %9390 = vmatpush.bf16.msra.mxu0 %v6614
    %9391 = vmatpush.bf16.msra.mxu0 %v6602
    %9392 = vmatpush.bf16.msra.mxu0 %v6590
    %9393 = vmatpush.bf16.msra.mxu0 %v6578
    %9394 = vmatmul.bf16.gmra.mxu0 %v8966
    %v9395 = vpop.f32.mrf.mxu0
    %v9396 = vadd.f32 %v5402, %v9395
    %v9397 = vpop.f32.mrf.mxu0
    %9398 = vdwg.mxu0
    %9399 = vmatpush.bf16.msra.mxu0 %v6758
    %9400 = vmatpush.bf16.msra.mxu0 %v6746
    %9401 = vmatpush.bf16.msra.mxu0 %v6734
    %9402 = vmatpush.bf16.msra.mxu0 %v6722
    %9403 = vmatpush.bf16.msra.mxu0 %v6710
    %9404 = vmatpush.bf16.msra.mxu0 %v6698
    %9405 = vmatpush.bf16.msra.mxu0 %v6686
    %9406 = vmatpush.bf16.msra.mxu0 %v6674
    %9407 = vmatmul.bf16.gmra.mxu0 %v8967
    %v9408 = vpop.f32.mrf.mxu0
    %v9409 = vadd.f32 %v9396, %v9408
    %v9410 = vpop.f32.mrf.mxu0
    %9411 = vdwg.mxu0
    %9412 = vmatpush.bf16.msra.mxu0 %v6854
    %9413 = vmatpush.bf16.msra.mxu0 %v6842
    %9414 = vmatpush.bf16.msra.mxu0 %v6830
    %9415 = vmatpush.bf16.msra.mxu0 %v6818
    %9416 = vmatpush.bf16.msra.mxu0 %v6806
    %9417 = vmatpush.bf16.msra.mxu0 %v6794
    %9418 = vmatpush.bf16.msra.mxu0 %v6782
    %9419 = vmatpush.bf16.msra.mxu0 %v6770
    %9420 = vmatmul.bf16.gmra.mxu0 %v8968
    %v9421 = vpop.f32.mrf.mxu0
    %v9422 = vadd.f32 %v9409, %v9421
    %v9423 = vpop.f32.mrf.mxu0
    %9424 = vdwg.mxu0
    %9425 = vmatpush.bf16.msra.mxu0 %v6950
    %9426 = vmatpush.bf16.msra.mxu0 %v6938
    %9427 = vmatpush.bf16.msra.mxu0 %v6926
    %9428 = vmatpush.bf16.msra.mxu0 %v6914
    %9429 = vmatpush.bf16.msra.mxu0 %v6902
    %9430 = vmatpush.bf16.msra.mxu0 %v6890
    %9431 = vmatpush.bf16.msra.mxu0 %v6878
    %9432 = vmatpush.bf16.msra.mxu0 %v6866
    %9433 = vmatmul.bf16.gmra.mxu0 %v8969
    %v9434 = vpop.f32.mrf.mxu0
    %v9435 = vadd.f32 %v9422, %v9434
    %v9436 = vpop.f32.mrf.mxu0
    %9437 = vdwg.mxu0
    %9438 = vmatpush.bf16.msra.mxu0 %v6663
    %9439 = vmatpush.bf16.msra.mxu0 %v6651
    %9440 = vmatpush.bf16.msra.mxu0 %v6639
    %9441 = vmatpush.bf16.msra.mxu0 %v6627
    %9442 = vmatpush.bf16.msra.mxu0 %v6615
    %9443 = vmatpush.bf16.msra.mxu0 %v6603
    %9444 = vmatpush.bf16.msra.mxu0 %v6591
    %9445 = vmatpush.bf16.msra.mxu0 %v6579
    %9446 = vmatmul.bf16.gmra.mxu0 %v8966
    %v9447 = vpop.f32.mrf.mxu0
    %v9448 = vadd.f32 %v5403, %v9447
    %v9449 = vpop.f32.mrf.mxu0
    %9450 = vdwg.mxu0
    %9451 = vmatpush.bf16.msra.mxu0 %v6759
    %9452 = vmatpush.bf16.msra.mxu0 %v6747
    %9453 = vmatpush.bf16.msra.mxu0 %v6735
    %9454 = vmatpush.bf16.msra.mxu0 %v6723
    %9455 = vmatpush.bf16.msra.mxu0 %v6711
    %9456 = vmatpush.bf16.msra.mxu0 %v6699
    %9457 = vmatpush.bf16.msra.mxu0 %v6687
    %9458 = vmatpush.bf16.msra.mxu0 %v6675
    %9459 = vmatmul.bf16.gmra.mxu0 %v8967
    %v9460 = vpop.f32.mrf.mxu0
    %v9461 = vadd.f32 %v9448, %v9460
    %v9462 = vpop.f32.mrf.mxu0
    %9463 = vdwg.mxu0
    %9464 = vmatpush.bf16.msra.mxu0 %v6855
    %9465 = vmatpush.bf16.msra.mxu0 %v6843
    %9466 = vmatpush.bf16.msra.mxu0 %v6831
    %9467 = vmatpush.bf16.msra.mxu0 %v6819
    %9468 = vmatpush.bf16.msra.mxu0 %v6807
    %9469 = vmatpush.bf16.msra.mxu0 %v6795
    %9470 = vmatpush.bf16.msra.mxu0 %v6783
    %9471 = vmatpush.bf16.msra.mxu0 %v6771
    %9472 = vmatmul.bf16.gmra.mxu0 %v8968
    %v9473 = vpop.f32.mrf.mxu0
    %v9474 = vadd.f32 %v9461, %v9473
    %v9475 = vpop.f32.mrf.mxu0
    %9476 = vdwg.mxu0
    %9477 = vmatpush.bf16.msra.mxu0 %v6951
    %9478 = vmatpush.bf16.msra.mxu0 %v6939
    %9479 = vmatpush.bf16.msra.mxu0 %v6927
    %9480 = vmatpush.bf16.msra.mxu0 %v6915
    %9481 = vmatpush.bf16.msra.mxu0 %v6903
    %9482 = vmatpush.bf16.msra.mxu0 %v6891
    %9483 = vmatpush.bf16.msra.mxu0 %v6879
    %9484 = vmatpush.bf16.msra.mxu0 %v6867
    %9485 = vmatmul.bf16.gmra.mxu0 %v8969
    %v9486 = vpop.f32.mrf.mxu0
    %v9487 = vadd.f32 %v9474, %v9486
    %v9488 = vpop.f32.mrf.mxu0
    %9489 = vdwg.mxu0
    %9490 = vmatpush.bf16.msra.mxu0 %v6664
    %9491 = vmatpush.bf16.msra.mxu0 %v6652
    %9492 = vmatpush.bf16.msra.mxu0 %v6640
    %9493 = vmatpush.bf16.msra.mxu0 %v6628
    %9494 = vmatpush.bf16.msra.mxu0 %v6616
    %9495 = vmatpush.bf16.msra.mxu0 %v6604
    %9496 = vmatpush.bf16.msra.mxu0 %v6592
    %9497 = vmatpush.bf16.msra.mxu0 %v6580
    %9498 = vmatmul.bf16.gmra.mxu0 %v8966
    %v9499 = vpop.f32.mrf.mxu0
    %v9500 = vadd.f32 %v5404, %v9499
    %v9501 = vpop.f32.mrf.mxu0
    %9502 = vdwg.mxu0
    %9503 = vmatpush.bf16.msra.mxu0 %v6760
    %9504 = vmatpush.bf16.msra.mxu0 %v6748
    %9505 = vmatpush.bf16.msra.mxu0 %v6736
    %9506 = vmatpush.bf16.msra.mxu0 %v6724
    %9507 = vmatpush.bf16.msra.mxu0 %v6712
    %9508 = vmatpush.bf16.msra.mxu0 %v6700
    %9509 = vmatpush.bf16.msra.mxu0 %v6688
    %9510 = vmatpush.bf16.msra.mxu0 %v6676
    %9511 = vmatmul.bf16.gmra.mxu0 %v8967
    %v9512 = vpop.f32.mrf.mxu0
    %v9513 = vadd.f32 %v9500, %v9512
    %v9514 = vpop.f32.mrf.mxu0
    %9515 = vdwg.mxu0
    %9516 = vmatpush.bf16.msra.mxu0 %v6856
    %9517 = vmatpush.bf16.msra.mxu0 %v6844
    %9518 = vmatpush.bf16.msra.mxu0 %v6832
    %9519 = vmatpush.bf16.msra.mxu0 %v6820
    %9520 = vmatpush.bf16.msra.mxu0 %v6808
    %9521 = vmatpush.bf16.msra.mxu0 %v6796
    %9522 = vmatpush.bf16.msra.mxu0 %v6784
    %9523 = vmatpush.bf16.msra.mxu0 %v6772
    %9524 = vmatmul.bf16.gmra.mxu0 %v8968
    %v9525 = vpop.f32.mrf.mxu0
    %v9526 = vadd.f32 %v9513, %v9525
    %v9527 = vpop.f32.mrf.mxu0
    %9528 = vdwg.mxu0
    %9529 = vmatpush.bf16.msra.mxu0 %v6952
    %9530 = vmatpush.bf16.msra.mxu0 %v6940
    %9531 = vmatpush.bf16.msra.mxu0 %v6928
    %9532 = vmatpush.bf16.msra.mxu0 %v6916
    %9533 = vmatpush.bf16.msra.mxu0 %v6904
    %9534 = vmatpush.bf16.msra.mxu0 %v6892
    %9535 = vmatpush.bf16.msra.mxu0 %v6880
    %9536 = vmatpush.bf16.msra.mxu0 %v6868
    %9537 = vmatmul.bf16.gmra.mxu0 %v8969
    %v9538 = vpop.f32.mrf.mxu0
    %v9539 = vadd.f32 %v9526, %v9538
    %v9540 = vpop.f32.mrf.mxu0
    %9541 = vdwg.mxu0
    %9542 = vmatpush.bf16.msra.mxu0 %v6665
    %9543 = vmatpush.bf16.msra.mxu0 %v6653
    %9544 = vmatpush.bf16.msra.mxu0 %v6641
    %9545 = vmatpush.bf16.msra.mxu0 %v6629
    %9546 = vmatpush.bf16.msra.mxu0 %v6617
    %9547 = vmatpush.bf16.msra.mxu0 %v6605
    %9548 = vmatpush.bf16.msra.mxu0 %v6593
    %9549 = vmatpush.bf16.msra.mxu0 %v6581
    %9550 = vmatmul.bf16.gmra.mxu0 %v8966
    %v9551 = vpop.f32.mrf.mxu0
    %v9552 = vadd.f32 %v5405, %v9551
    %v9553 = vpop.f32.mrf.mxu0
    %9554 = vdwg.mxu0
    %9555 = vmatpush.bf16.msra.mxu0 %v6761
    %9556 = vmatpush.bf16.msra.mxu0 %v6749
    %9557 = vmatpush.bf16.msra.mxu0 %v6737
    %9558 = vmatpush.bf16.msra.mxu0 %v6725
    %9559 = vmatpush.bf16.msra.mxu0 %v6713
    %9560 = vmatpush.bf16.msra.mxu0 %v6701
    %9561 = vmatpush.bf16.msra.mxu0 %v6689
    %9562 = vmatpush.bf16.msra.mxu0 %v6677
    %9563 = vmatmul.bf16.gmra.mxu0 %v8967
    %v9564 = vpop.f32.mrf.mxu0
    %v9565 = vadd.f32 %v9552, %v9564
    %v9566 = vpop.f32.mrf.mxu0
    %9567 = vdwg.mxu0
    %9568 = vmatpush.bf16.msra.mxu0 %v6857
    %9569 = vmatpush.bf16.msra.mxu0 %v6845
    %9570 = vmatpush.bf16.msra.mxu0 %v6833
    %9571 = vmatpush.bf16.msra.mxu0 %v6821
    %9572 = vmatpush.bf16.msra.mxu0 %v6809
    %9573 = vmatpush.bf16.msra.mxu0 %v6797
    %9574 = vmatpush.bf16.msra.mxu0 %v6785
    %9575 = vmatpush.bf16.msra.mxu0 %v6773
    %9576 = vmatmul.bf16.gmra.mxu0 %v8968
    %v9577 = vpop.f32.mrf.mxu0
    %v9578 = vadd.f32 %v9565, %v9577
    %v9579 = vpop.f32.mrf.mxu0
    %9580 = vdwg.mxu0
    %9581 = vmatpush.bf16.msra.mxu0 %v6953
    %9582 = vmatpush.bf16.msra.mxu0 %v6941
    %9583 = vmatpush.bf16.msra.mxu0 %v6929
    %9584 = vmatpush.bf16.msra.mxu0 %v6917
    %9585 = vmatpush.bf16.msra.mxu0 %v6905
    %9586 = vmatpush.bf16.msra.mxu0 %v6893
    %9587 = vmatpush.bf16.msra.mxu0 %v6881
    %9588 = vmatpush.bf16.msra.mxu0 %v6869
    %9589 = vmatmul.bf16.gmra.mxu0 %v8969
    %v9590 = vpop.f32.mrf.mxu0
    %v9591 = vadd.f32 %v9578, %v9590
    %v9592 = vpop.f32.mrf.mxu0
    %9593 = vdwg.mxu0
    %v9594 = vadd.f32 %v4176, %v9019
    %v9595 = vadd.f32 %v4228, %v9071
    %v9596 = vadd.f32 %v4280, %v9123
    %v9597 = vadd.f32 %v4332, %v9175
    %v9598 = vxor.u32 %v9594, 2147483648
    %v9599 = vxor.u32 %v9595, 2147483648
    %v9600 = vxor.u32 %v9596, 2147483648
    %v9601 = vxor.u32 %v9597, 2147483648
    %v9602 = vmul.f32 %v9598, 1.442695
    %v9603 = vpow.pop %v9602
    %v9604 = vmul.f32 %v9599, 1.442695
    %v9605 = vpow.pop %v9604
    %v9606 = vmul.f32 %v9600, 1.442695
    %v9607 = vpow.pop %v9606
    %v9608 = vmul.f32 %v9601, 1.442695
    %v9609 = vpow.pop %v9608
    %v9610 = vadd.f32 %v9603, 1.0
    %v9611 = vadd.f32 %v9605, 1.0
    %v9612 = vadd.f32 %v9607, 1.0
    %v9613 = vadd.f32 %v9609, 1.0
    %v9614 = vrcp.pop %v9610
    %v9615 = vmul.f32 %v9610, %v9614
    %v9616 = vsub.f32 1.0, %v9615
    %v9617 = vmul.f32 %v9614, %v9616
    %v9618 = vadd.f32 %v9614, %v9617
    %vm9619 = vweird.f32 %v9610
    %vm9620 = vweird.f32 %v9614
    %vm9621 = vmor %vm9619, %vm9620
    %v9622 = vsel %vm9621, %v9614, %v9618
    %v9623 = vand.u32 2147483647, %v9610
    %vm9624 = vcmp.eq.f32.partialorder %v9623, 8.507059e+37
    %v9625 = vand.u32 %v9610, 2147483648
    %v9626 = vor.u32 1.1754944e-38, %v9625
    %v9627 = vsel %vm9624, %v9626, %v9622
    %v9628 = vmul.f32 1.0, %v9627
    %v9629 = vrcp.pop %v9611
    %v9630 = vmul.f32 %v9611, %v9629
    %v9631 = vsub.f32 1.0, %v9630
    %v9632 = vmul.f32 %v9629, %v9631
    %v9633 = vadd.f32 %v9629, %v9632
    %vm9634 = vweird.f32 %v9611
    %vm9635 = vweird.f32 %v9629
    %vm9636 = vmor %vm9634, %vm9635
    %v9637 = vsel %vm9636, %v9629, %v9633
    %v9638 = vand.u32 2147483647, %v9611
    %vm9639 = vcmp.eq.f32.partialorder %v9638, 8.507059e+37
    %v9640 = vand.u32 %v9611, 2147483648
    %v9641 = vor.u32 1.1754944e-38, %v9640
    %v9642 = vsel %vm9639, %v9641, %v9637
    %v9643 = vmul.f32 1.0, %v9642
    %v9644 = vrcp.pop %v9612
    %v9645 = vmul.f32 %v9612, %v9644
    %v9646 = vsub.f32 1.0, %v9645
    %v9647 = vmul.f32 %v9644, %v9646
    %v9648 = vadd.f32 %v9644, %v9647
    %vm9649 = vweird.f32 %v9612
    %vm9650 = vweird.f32 %v9644
    %vm9651 = vmor %vm9649, %vm9650
    %v9652 = vsel %vm9651, %v9644, %v9648
    %v9653 = vand.u32 2147483647, %v9612
    %vm9654 = vcmp.eq.f32.partialorder %v9653, 8.507059e+37
    %v9655 = vand.u32 %v9612, 2147483648
    %v9656 = vor.u32 1.1754944e-38, %v9655
    %v9657 = vsel %vm9654, %v9656, %v9652
    %v9658 = vmul.f32 1.0, %v9657
    %v9659 = vrcp.pop %v9613
    %v9660 = vmul.f32 %v9613, %v9659
    %v9661 = vsub.f32 1.0, %v9660
    %v9662 = vmul.f32 %v9659, %v9661
    %v9663 = vadd.f32 %v9659, %v9662
    %vm9664 = vweird.f32 %v9613
    %vm9665 = vweird.f32 %v9659
    %vm9666 = vmor %vm9664, %vm9665
    %v9667 = vsel %vm9666, %v9659, %v9663
    %v9668 = vand.u32 2147483647, %v9613
    %vm9669 = vcmp.eq.f32.partialorder %v9668, 8.507059e+37
    %v9670 = vand.u32 %v9613, 2147483648
    %v9671 = vor.u32 1.1754944e-38, %v9670
    %v9672 = vsel %vm9669, %v9671, %v9667
    %v9673 = vmul.f32 1.0, %v9672
    %v9674 = vadd.f32 %v4384, %v9227
    %v9675 = vadd.f32 %v4436, %v9279
    %v9676 = vadd.f32 %v4488, %v9331
    %v9677 = vadd.f32 %v4540, %v9383
    %v9678 = vxor.u32 %v9674, 2147483648
    %v9679 = vxor.u32 %v9675, 2147483648
    %v9680 = vxor.u32 %v9676, 2147483648
    %v9681 = vxor.u32 %v9677, 2147483648
    %v9682 = vmul.f32 %v9678, 1.442695
    %v9683 = vpow.pop %v9682
    %v9684 = vmul.f32 %v9679, 1.442695
    %v9685 = vpow.pop %v9684
    %v9686 = vmul.f32 %v9680, 1.442695
    %v9687 = vpow.pop %v9686
    %v9688 = vmul.f32 %v9681, 1.442695
    %v9689 = vpow.pop %v9688
    %v9690 = vadd.f32 %v9683, 1.0
    %v9691 = vadd.f32 %v9685, 1.0
    %v9692 = vadd.f32 %v9687, 1.0
    %v9693 = vadd.f32 %v9689, 1.0
    %v9694 = vrcp.pop %v9690
    %v9695 = vmul.f32 %v9690, %v9694
    %v9696 = vsub.f32 1.0, %v9695
    %v9697 = vmul.f32 %v9694, %v9696
    %v9698 = vadd.f32 %v9694, %v9697
    %vm9699 = vweird.f32 %v9690
    %vm9700 = vweird.f32 %v9694
    %vm9701 = vmor %vm9699, %vm9700
    %v9702 = vsel %vm9701, %v9694, %v9698
    %v9703 = vand.u32 2147483647, %v9690
    %vm9704 = vcmp.eq.f32.partialorder %v9703, 8.507059e+37
    %v9705 = vand.u32 %v9690, 2147483648
    %v9706 = vor.u32 1.1754944e-38, %v9705
    %v9707 = vsel %vm9704, %v9706, %v9702
    %v9708 = vmul.f32 1.0, %v9707
    %v9709 = vrcp.pop %v9691
    %v9710 = vmul.f32 %v9691, %v9709
    %v9711 = vsub.f32 1.0, %v9710
    %v9712 = vmul.f32 %v9709, %v9711
    %v9713 = vadd.f32 %v9709, %v9712
    %vm9714 = vweird.f32 %v9691
    %vm9715 = vweird.f32 %v9709
    %vm9716 = vmor %vm9714, %vm9715
    %v9717 = vsel %vm9716, %v9709, %v9713
    %v9718 = vand.u32 2147483647, %v9691
    %vm9719 = vcmp.eq.f32.partialorder %v9718, 8.507059e+37
    %v9720 = vand.u32 %v9691, 2147483648
    %v9721 = vor.u32 1.1754944e-38, %v9720
    %v9722 = vsel %vm9719, %v9721, %v9717
    %v9723 = vmul.f32 1.0, %v9722
    %v9724 = vrcp.pop %v9692
    %v9725 = vmul.f32 %v9692, %v9724
    %v9726 = vsub.f32 1.0, %v9725
    %v9727 = vmul.f32 %v9724, %v9726
    %v9728 = vadd.f32 %v9724, %v9727
    %vm9729 = vweird.f32 %v9692
    %vm9730 = vweird.f32 %v9724
    %vm9731 = vmor %vm9729, %vm9730
    %v9732 = vsel %vm9731, %v9724, %v9728
    %v9733 = vand.u32 2147483647, %v9692
    %vm9734 = vcmp.eq.f32.partialorder %v9733, 8.507059e+37
    %v9735 = vand.u32 %v9692, 2147483648
    %v9736 = vor.u32 1.1754944e-38, %v9735
    %v9737 = vsel %vm9734, %v9736, %v9732
    %v9738 = vmul.f32 1.0, %v9737
    %v9739 = vrcp.pop %v9693
    %v9740 = vmul.f32 %v9693, %v9739
    %v9741 = vsub.f32 1.0, %v9740
    %v9742 = vmul.f32 %v9739, %v9741
    %v9743 = vadd.f32 %v9739, %v9742
    %vm9744 = vweird.f32 %v9693
    %vm9745 = vweird.f32 %v9739
    %vm9746 = vmor %vm9744, %vm9745
    %v9747 = vsel %vm9746, %v9739, %v9743
    %v9748 = vand.u32 2147483647, %v9693
    %vm9749 = vcmp.eq.f32.partialorder %v9748, 8.507059e+37
    %v9750 = vand.u32 %v9693, 2147483648
    %v9751 = vor.u32 1.1754944e-38, %v9750
    %v9752 = vsel %vm9749, %v9751, %v9747
    %v9753 = vmul.f32 1.0, %v9752
    %v9754 = vmul.f32 %v9628, %v9435
    %v9755 = vmul.f32 %v9643, %v9487
    %v9756 = vmul.f32 %v9658, %v9539
    %v9757 = vmul.f32 %v9673, %v9591
    %v9758 = vadd.f32 %v4592, %v9754
    %v9759 = vadd.f32 %v4644, %v9755
    %v9760 = vadd.f32 %v4696, %v9756
    %v9761 = vadd.f32 %v4748, %v9757
    %v9762 = vtanh.pop %v9758
    %v9763 = vtanh.pop %v9759
    %v9764 = vtanh.pop %v9760
    %v9765 = vtanh.pop %v9761
    %v9766 = vsub.f32 1.0, %v9708
    %v9767 = vsub.f32 1.0, %v9723
    %v9768 = vsub.f32 1.0, %v9738
    %v9769 = vsub.f32 1.0, %v9753
    %v9770 = vmul.f32 %v9766, %v9762
    %v9771 = vmul.f32 %v9767, %v9763
    %v9772 = vmul.f32 %v9768, %v9764
    %v9773 = vmul.f32 %v9769, %v9765
    %v9774 = vmul.f32 %v9708, %v8962
    %v9775 = vmul.f32 %v9723, %v8963
    %v9776 = vmul.f32 %v9738, %v8964
    %v9777 = vmul.f32 %v9753, %v8965
    %v9778 = vadd.f32 %v9770, %v9774
    %v9779 = vadd.f32 %v9771, %v9775
    %v9780 = vadd.f32 %v9772, %v9776
    %v9781 = vadd.f32 %v9773, %v9777
    %v9782 = vpack.c.bf16 %v9778, %v9778
    %v9783 = vpack.c.bf16 %v9779, %v9779
    %v9784 = vpack.c.bf16 %v9780, %v9780
    %v9785 = vpack.c.bf16 %v9781, %v9781
    %9786 = vmatpush.bf16.msra.mxu0 %v6654
    %9787 = vmatpush.bf16.msra.mxu0 %v6642
    %9788 = vmatpush.bf16.msra.mxu0 %v6630
    %9789 = vmatpush.bf16.msra.mxu0 %v6618
    %9790 = vmatpush.bf16.msra.mxu0 %v6606
    %9791 = vmatpush.bf16.msra.mxu0 %v6594
    %9792 = vmatpush.bf16.msra.mxu0 %v6582
    %9793 = vmatpush.bf16.msra.mxu0 %v6570
    %9794 = vmatmul.bf16.gmra.mxu0 %v9782
    %v9795 = vpop.f32.mrf.mxu0
    %v9796 = vadd.f32 %v5394, %v9795
    %v9797 = vpop.f32.mrf.mxu0
    %9798 = vdwg.mxu0
    %9799 = vmatpush.bf16.msra.mxu0 %v6750
    %9800 = vmatpush.bf16.msra.mxu0 %v6738
    %9801 = vmatpush.bf16.msra.mxu0 %v6726
    %9802 = vmatpush.bf16.msra.mxu0 %v6714
    %9803 = vmatpush.bf16.msra.mxu0 %v6702
    %9804 = vmatpush.bf16.msra.mxu0 %v6690
    %9805 = vmatpush.bf16.msra.mxu0 %v6678
    %9806 = vmatpush.bf16.msra.mxu0 %v6666
    %9807 = vmatmul.bf16.gmra.mxu0 %v9783
    %v9808 = vpop.f32.mrf.mxu0
    %v9809 = vadd.f32 %v9796, %v9808
    %v9810 = vpop.f32.mrf.mxu0
    %9811 = vdwg.mxu0
    %9812 = vmatpush.bf16.msra.mxu0 %v6846
    %9813 = vmatpush.bf16.msra.mxu0 %v6834
    %9814 = vmatpush.bf16.msra.mxu0 %v6822
    %9815 = vmatpush.bf16.msra.mxu0 %v6810
    %9816 = vmatpush.bf16.msra.mxu0 %v6798
    %9817 = vmatpush.bf16.msra.mxu0 %v6786
    %9818 = vmatpush.bf16.msra.mxu0 %v6774
    %9819 = vmatpush.bf16.msra.mxu0 %v6762
    %9820 = vmatmul.bf16.gmra.mxu0 %v9784
    %v9821 = vpop.f32.mrf.mxu0
    %v9822 = vadd.f32 %v9809, %v9821
    %v9823 = vpop.f32.mrf.mxu0
    %9824 = vdwg.mxu0
    %9825 = vmatpush.bf16.msra.mxu0 %v6942
    %9826 = vmatpush.bf16.msra.mxu0 %v6930
    %9827 = vmatpush.bf16.msra.mxu0 %v6918
    %9828 = vmatpush.bf16.msra.mxu0 %v6906
    %9829 = vmatpush.bf16.msra.mxu0 %v6894
    %9830 = vmatpush.bf16.msra.mxu0 %v6882
    %9831 = vmatpush.bf16.msra.mxu0 %v6870
    %9832 = vmatpush.bf16.msra.mxu0 %v6858
    %9833 = vmatmul.bf16.gmra.mxu0 %v9785
    %v9834 = vpop.f32.mrf.mxu0
    %v9835 = vadd.f32 %v9822, %v9834
    %v9836 = vpop.f32.mrf.mxu0
    %9837 = vdwg.mxu0
    %9838 = vmatpush.bf16.msra.mxu0 %v6655
    %9839 = vmatpush.bf16.msra.mxu0 %v6643
    %9840 = vmatpush.bf16.msra.mxu0 %v6631
    %9841 = vmatpush.bf16.msra.mxu0 %v6619
    %9842 = vmatpush.bf16.msra.mxu0 %v6607
    %9843 = vmatpush.bf16.msra.mxu0 %v6595
    %9844 = vmatpush.bf16.msra.mxu0 %v6583
    %9845 = vmatpush.bf16.msra.mxu0 %v6571
    %9846 = vmatmul.bf16.gmra.mxu0 %v9782
    %v9847 = vpop.f32.mrf.mxu0
    %v9848 = vadd.f32 %v5395, %v9847
    %v9849 = vpop.f32.mrf.mxu0
    %9850 = vdwg.mxu0
    %9851 = vmatpush.bf16.msra.mxu0 %v6751
    %9852 = vmatpush.bf16.msra.mxu0 %v6739
    %9853 = vmatpush.bf16.msra.mxu0 %v6727
    %9854 = vmatpush.bf16.msra.mxu0 %v6715
    %9855 = vmatpush.bf16.msra.mxu0 %v6703
    %9856 = vmatpush.bf16.msra.mxu0 %v6691
    %9857 = vmatpush.bf16.msra.mxu0 %v6679
    %9858 = vmatpush.bf16.msra.mxu0 %v6667
    %9859 = vmatmul.bf16.gmra.mxu0 %v9783
    %v9860 = vpop.f32.mrf.mxu0
    %v9861 = vadd.f32 %v9848, %v9860
    %v9862 = vpop.f32.mrf.mxu0
    %9863 = vdwg.mxu0
    %9864 = vmatpush.bf16.msra.mxu0 %v6847
    %9865 = vmatpush.bf16.msra.mxu0 %v6835
    %9866 = vmatpush.bf16.msra.mxu0 %v6823
    %9867 = vmatpush.bf16.msra.mxu0 %v6811
    %9868 = vmatpush.bf16.msra.mxu0 %v6799
    %9869 = vmatpush.bf16.msra.mxu0 %v6787
    %9870 = vmatpush.bf16.msra.mxu0 %v6775
    %9871 = vmatpush.bf16.msra.mxu0 %v6763
    %9872 = vmatmul.bf16.gmra.mxu0 %v9784
    %v9873 = vpop.f32.mrf.mxu0
    %v9874 = vadd.f32 %v9861, %v9873
    %v9875 = vpop.f32.mrf.mxu0
    %9876 = vdwg.mxu0
    %9877 = vmatpush.bf16.msra.mxu0 %v6943
    %9878 = vmatpush.bf16.msra.mxu0 %v6931
    %9879 = vmatpush.bf16.msra.mxu0 %v6919
    %9880 = vmatpush.bf16.msra.mxu0 %v6907
    %9881 = vmatpush.bf16.msra.mxu0 %v6895
    %9882 = vmatpush.bf16.msra.mxu0 %v6883
    %9883 = vmatpush.bf16.msra.mxu0 %v6871
    %9884 = vmatpush.bf16.msra.mxu0 %v6859
    %9885 = vmatmul.bf16.gmra.mxu0 %v9785
    %v9886 = vpop.f32.mrf.mxu0
    %v9887 = vadd.f32 %v9874, %v9886
    %v9888 = vpop.f32.mrf.mxu0
    %9889 = vdwg.mxu0
    %9890 = vmatpush.bf16.msra.mxu0 %v6656
    %9891 = vmatpush.bf16.msra.mxu0 %v6644
    %9892 = vmatpush.bf16.msra.mxu0 %v6632
    %9893 = vmatpush.bf16.msra.mxu0 %v6620
    %9894 = vmatpush.bf16.msra.mxu0 %v6608
    %9895 = vmatpush.bf16.msra.mxu0 %v6596
    %9896 = vmatpush.bf16.msra.mxu0 %v6584
    %9897 = vmatpush.bf16.msra.mxu0 %v6572
    %9898 = vmatmul.bf16.gmra.mxu0 %v9782
    %v9899 = vpop.f32.mrf.mxu0
    %v9900 = vadd.f32 %v5396, %v9899
    %v9901 = vpop.f32.mrf.mxu0
    %9902 = vdwg.mxu0
    %9903 = vmatpush.bf16.msra.mxu0 %v6752
    %9904 = vmatpush.bf16.msra.mxu0 %v6740
    %9905 = vmatpush.bf16.msra.mxu0 %v6728
    %9906 = vmatpush.bf16.msra.mxu0 %v6716
    %9907 = vmatpush.bf16.msra.mxu0 %v6704
    %9908 = vmatpush.bf16.msra.mxu0 %v6692
    %9909 = vmatpush.bf16.msra.mxu0 %v6680
    %9910 = vmatpush.bf16.msra.mxu0 %v6668
    %9911 = vmatmul.bf16.gmra.mxu0 %v9783
    %v9912 = vpop.f32.mrf.mxu0
    %v9913 = vadd.f32 %v9900, %v9912
    %v9914 = vpop.f32.mrf.mxu0
    %9915 = vdwg.mxu0
    %9916 = vmatpush.bf16.msra.mxu0 %v6848
    %9917 = vmatpush.bf16.msra.mxu0 %v6836
    %9918 = vmatpush.bf16.msra.mxu0 %v6824
    %9919 = vmatpush.bf16.msra.mxu0 %v6812
    %9920 = vmatpush.bf16.msra.mxu0 %v6800
    %9921 = vmatpush.bf16.msra.mxu0 %v6788
    %9922 = vmatpush.bf16.msra.mxu0 %v6776
    %9923 = vmatpush.bf16.msra.mxu0 %v6764
    %9924 = vmatmul.bf16.gmra.mxu0 %v9784
    %v9925 = vpop.f32.mrf.mxu0
    %v9926 = vadd.f32 %v9913, %v9925
    %v9927 = vpop.f32.mrf.mxu0
    %9928 = vdwg.mxu0
    %9929 = vmatpush.bf16.msra.mxu0 %v6944
    %9930 = vmatpush.bf16.msra.mxu0 %v6932
    %9931 = vmatpush.bf16.msra.mxu0 %v6920
    %9932 = vmatpush.bf16.msra.mxu0 %v6908
    %9933 = vmatpush.bf16.msra.mxu0 %v6896
    %9934 = vmatpush.bf16.msra.mxu0 %v6884
    %9935 = vmatpush.bf16.msra.mxu0 %v6872
    %9936 = vmatpush.bf16.msra.mxu0 %v6860
    %9937 = vmatmul.bf16.gmra.mxu0 %v9785
    %v9938 = vpop.f32.mrf.mxu0
    %v9939 = vadd.f32 %v9926, %v9938
    %v9940 = vpop.f32.mrf.mxu0
    %9941 = vdwg.mxu0
    %9942 = vmatpush.bf16.msra.mxu0 %v6657
    %9943 = vmatpush.bf16.msra.mxu0 %v6645
    %9944 = vmatpush.bf16.msra.mxu0 %v6633
    %9945 = vmatpush.bf16.msra.mxu0 %v6621
    %9946 = vmatpush.bf16.msra.mxu0 %v6609
    %9947 = vmatpush.bf16.msra.mxu0 %v6597
    %9948 = vmatpush.bf16.msra.mxu0 %v6585
    %9949 = vmatpush.bf16.msra.mxu0 %v6573
    %9950 = vmatmul.bf16.gmra.mxu0 %v9782
    %v9951 = vpop.f32.mrf.mxu0
    %v9952 = vadd.f32 %v5397, %v9951
    %v9953 = vpop.f32.mrf.mxu0
    %9954 = vdwg.mxu0
    %9955 = vmatpush.bf16.msra.mxu0 %v6753
    %9956 = vmatpush.bf16.msra.mxu0 %v6741
    %9957 = vmatpush.bf16.msra.mxu0 %v6729
    %9958 = vmatpush.bf16.msra.mxu0 %v6717
    %9959 = vmatpush.bf16.msra.mxu0 %v6705
    %9960 = vmatpush.bf16.msra.mxu0 %v6693
    %9961 = vmatpush.bf16.msra.mxu0 %v6681
    %9962 = vmatpush.bf16.msra.mxu0 %v6669
    %9963 = vmatmul.bf16.gmra.mxu0 %v9783
    %v9964 = vpop.f32.mrf.mxu0
    %v9965 = vadd.f32 %v9952, %v9964
    %v9966 = vpop.f32.mrf.mxu0
    %9967 = vdwg.mxu0
    %9968 = vmatpush.bf16.msra.mxu0 %v6849
    %9969 = vmatpush.bf16.msra.mxu0 %v6837
    %9970 = vmatpush.bf16.msra.mxu0 %v6825
    %9971 = vmatpush.bf16.msra.mxu0 %v6813
    %9972 = vmatpush.bf16.msra.mxu0 %v6801
    %9973 = vmatpush.bf16.msra.mxu0 %v6789
    %9974 = vmatpush.bf16.msra.mxu0 %v6777
    %9975 = vmatpush.bf16.msra.mxu0 %v6765
    %9976 = vmatmul.bf16.gmra.mxu0 %v9784
    %v9977 = vpop.f32.mrf.mxu0
    %v9978 = vadd.f32 %v9965, %v9977
    %v9979 = vpop.f32.mrf.mxu0
    %9980 = vdwg.mxu0
    %9981 = vmatpush.bf16.msra.mxu0 %v6945
    %9982 = vmatpush.bf16.msra.mxu0 %v6933
    %9983 = vmatpush.bf16.msra.mxu0 %v6921
    %9984 = vmatpush.bf16.msra.mxu0 %v6909
    %9985 = vmatpush.bf16.msra.mxu0 %v6897
    %9986 = vmatpush.bf16.msra.mxu0 %v6885
    %9987 = vmatpush.bf16.msra.mxu0 %v6873
    %9988 = vmatpush.bf16.msra.mxu0 %v6861
    %9989 = vmatmul.bf16.gmra.mxu0 %v9785
    %v9990 = vpop.f32.mrf.mxu0
    %v9991 = vadd.f32 %v9978, %v9990
    %v9992 = vpop.f32.mrf.mxu0
    %9993 = vdwg.mxu0
    %9994 = vmatpush.bf16.msra.mxu0 %v6658
    %9995 = vmatpush.bf16.msra.mxu0 %v6646
    %9996 = vmatpush.bf16.msra.mxu0 %v6634
    %9997 = vmatpush.bf16.msra.mxu0 %v6622
    %9998 = vmatpush.bf16.msra.mxu0 %v6610
    %9999 = vmatpush.bf16.msra.mxu0 %v6598
    %10000 = vmatpush.bf16.msra.mxu0 %v6586
    %10001 = vmatpush.bf16.msra.mxu0 %v6574
    %10002 = vmatmul.bf16.gmra.mxu0 %v9782
    %v10003 = vpop.f32.mrf.mxu0
    %v10004 = vadd.f32 %v5398, %v10003
    %v10005 = vpop.f32.mrf.mxu0
    %10006 = vdwg.mxu0
    %10007 = vmatpush.bf16.msra.mxu0 %v6754
    %10008 = vmatpush.bf16.msra.mxu0 %v6742
    %10009 = vmatpush.bf16.msra.mxu0 %v6730
    %10010 = vmatpush.bf16.msra.mxu0 %v6718
    %10011 = vmatpush.bf16.msra.mxu0 %v6706
    %10012 = vmatpush.bf16.msra.mxu0 %v6694
    %10013 = vmatpush.bf16.msra.mxu0 %v6682
    %10014 = vmatpush.bf16.msra.mxu0 %v6670
    %10015 = vmatmul.bf16.gmra.mxu0 %v9783
    %v10016 = vpop.f32.mrf.mxu0
    %v10017 = vadd.f32 %v10004, %v10016
    %v10018 = vpop.f32.mrf.mxu0
    %10019 = vdwg.mxu0
    %10020 = vmatpush.bf16.msra.mxu0 %v6850
    %10021 = vmatpush.bf16.msra.mxu0 %v6838
    %10022 = vmatpush.bf16.msra.mxu0 %v6826
    %10023 = vmatpush.bf16.msra.mxu0 %v6814
    %10024 = vmatpush.bf16.msra.mxu0 %v6802
    %10025 = vmatpush.bf16.msra.mxu0 %v6790
    %10026 = vmatpush.bf16.msra.mxu0 %v6778
    %10027 = vmatpush.bf16.msra.mxu0 %v6766
    %10028 = vmatmul.bf16.gmra.mxu0 %v9784
    %v10029 = vpop.f32.mrf.mxu0
    %v10030 = vadd.f32 %v10017, %v10029
    %v10031 = vpop.f32.mrf.mxu0
    %10032 = vdwg.mxu0
    %10033 = vmatpush.bf16.msra.mxu0 %v6946
    %10034 = vmatpush.bf16.msra.mxu0 %v6934
    %10035 = vmatpush.bf16.msra.mxu0 %v6922
    %10036 = vmatpush.bf16.msra.mxu0 %v6910
    %10037 = vmatpush.bf16.msra.mxu0 %v6898
    %10038 = vmatpush.bf16.msra.mxu0 %v6886
    %10039 = vmatpush.bf16.msra.mxu0 %v6874
    %10040 = vmatpush.bf16.msra.mxu0 %v6862
    %10041 = vmatmul.bf16.gmra.mxu0 %v9785
    %v10042 = vpop.f32.mrf.mxu0
    %v10043 = vadd.f32 %v10030, %v10042
    %v10044 = vpop.f32.mrf.mxu0
    %10045 = vdwg.mxu0
    %10046 = vmatpush.bf16.msra.mxu0 %v6659
    %10047 = vmatpush.bf16.msra.mxu0 %v6647
    %10048 = vmatpush.bf16.msra.mxu0 %v6635
    %10049 = vmatpush.bf16.msra.mxu0 %v6623
    %10050 = vmatpush.bf16.msra.mxu0 %v6611
    %10051 = vmatpush.bf16.msra.mxu0 %v6599
    %10052 = vmatpush.bf16.msra.mxu0 %v6587
    %10053 = vmatpush.bf16.msra.mxu0 %v6575
    %10054 = vmatmul.bf16.gmra.mxu0 %v9782
    %v10055 = vpop.f32.mrf.mxu0
    %v10056 = vadd.f32 %v5399, %v10055
    %v10057 = vpop.f32.mrf.mxu0
    %10058 = vdwg.mxu0
    %10059 = vmatpush.bf16.msra.mxu0 %v6755
    %10060 = vmatpush.bf16.msra.mxu0 %v6743
    %10061 = vmatpush.bf16.msra.mxu0 %v6731
    %10062 = vmatpush.bf16.msra.mxu0 %v6719
    %10063 = vmatpush.bf16.msra.mxu0 %v6707
    %10064 = vmatpush.bf16.msra.mxu0 %v6695
    %10065 = vmatpush.bf16.msra.mxu0 %v6683
    %10066 = vmatpush.bf16.msra.mxu0 %v6671
    %10067 = vmatmul.bf16.gmra.mxu0 %v9783
    %v10068 = vpop.f32.mrf.mxu0
    %v10069 = vadd.f32 %v10056, %v10068
    %v10070 = vpop.f32.mrf.mxu0
    %10071 = vdwg.mxu0
    %10072 = vmatpush.bf16.msra.mxu0 %v6851
    %10073 = vmatpush.bf16.msra.mxu0 %v6839
    %10074 = vmatpush.bf16.msra.mxu0 %v6827
    %10075 = vmatpush.bf16.msra.mxu0 %v6815
    %10076 = vmatpush.bf16.msra.mxu0 %v6803
    %10077 = vmatpush.bf16.msra.mxu0 %v6791
    %10078 = vmatpush.bf16.msra.mxu0 %v6779
    %10079 = vmatpush.bf16.msra.mxu0 %v6767
    %10080 = vmatmul.bf16.gmra.mxu0 %v9784
    %v10081 = vpop.f32.mrf.mxu0
    %v10082 = vadd.f32 %v10069, %v10081
    %v10083 = vpop.f32.mrf.mxu0
    %10084 = vdwg.mxu0
    %10085 = vmatpush.bf16.msra.mxu0 %v6947
    %10086 = vmatpush.bf16.msra.mxu0 %v6935
    %10087 = vmatpush.bf16.msra.mxu0 %v6923
    %10088 = vmatpush.bf16.msra.mxu0 %v6911
    %10089 = vmatpush.bf16.msra.mxu0 %v6899
    %10090 = vmatpush.bf16.msra.mxu0 %v6887
    %10091 = vmatpush.bf16.msra.mxu0 %v6875
    %10092 = vmatpush.bf16.msra.mxu0 %v6863
    %10093 = vmatmul.bf16.gmra.mxu0 %v9785
    %v10094 = vpop.f32.mrf.mxu0
    %v10095 = vadd.f32 %v10082, %v10094
    %v10096 = vpop.f32.mrf.mxu0
    %10097 = vdwg.mxu0
    %10098 = vmatpush.bf16.msra.mxu0 %v6660
    %10099 = vmatpush.bf16.msra.mxu0 %v6648
    %10100 = vmatpush.bf16.msra.mxu0 %v6636
    %10101 = vmatpush.bf16.msra.mxu0 %v6624
    %10102 = vmatpush.bf16.msra.mxu0 %v6612
    %10103 = vmatpush.bf16.msra.mxu0 %v6600
    %10104 = vmatpush.bf16.msra.mxu0 %v6588
    %10105 = vmatpush.bf16.msra.mxu0 %v6576
    %10106 = vmatmul.bf16.gmra.mxu0 %v9782
    %v10107 = vpop.f32.mrf.mxu0
    %v10108 = vadd.f32 %v5400, %v10107
    %v10109 = vpop.f32.mrf.mxu0
    %10110 = vdwg.mxu0
    %10111 = vmatpush.bf16.msra.mxu0 %v6756
    %10112 = vmatpush.bf16.msra.mxu0 %v6744
    %10113 = vmatpush.bf16.msra.mxu0 %v6732
    %10114 = vmatpush.bf16.msra.mxu0 %v6720
    %10115 = vmatpush.bf16.msra.mxu0 %v6708
    %10116 = vmatpush.bf16.msra.mxu0 %v6696
    %10117 = vmatpush.bf16.msra.mxu0 %v6684
    %10118 = vmatpush.bf16.msra.mxu0 %v6672
    %10119 = vmatmul.bf16.gmra.mxu0 %v9783
    %v10120 = vpop.f32.mrf.mxu0
    %v10121 = vadd.f32 %v10108, %v10120
    %v10122 = vpop.f32.mrf.mxu0
    %10123 = vdwg.mxu0
    %10124 = vmatpush.bf16.msra.mxu0 %v6852
    %10125 = vmatpush.bf16.msra.mxu0 %v6840
    %10126 = vmatpush.bf16.msra.mxu0 %v6828
    %10127 = vmatpush.bf16.msra.mxu0 %v6816
    %10128 = vmatpush.bf16.msra.mxu0 %v6804
    %10129 = vmatpush.bf16.msra.mxu0 %v6792
    %10130 = vmatpush.bf16.msra.mxu0 %v6780
    %10131 = vmatpush.bf16.msra.mxu0 %v6768
    %10132 = vmatmul.bf16.gmra.mxu0 %v9784
    %v10133 = vpop.f32.mrf.mxu0
    %v10134 = vadd.f32 %v10121, %v10133
    %v10135 = vpop.f32.mrf.mxu0
    %10136 = vdwg.mxu0
    %10137 = vmatpush.bf16.msra.mxu0 %v6948
    %10138 = vmatpush.bf16.msra.mxu0 %v6936
    %10139 = vmatpush.bf16.msra.mxu0 %v6924
    %10140 = vmatpush.bf16.msra.mxu0 %v6912
    %10141 = vmatpush.bf16.msra.mxu0 %v6900
    %10142 = vmatpush.bf16.msra.mxu0 %v6888
    %10143 = vmatpush.bf16.msra.mxu0 %v6876
    %10144 = vmatpush.bf16.msra.mxu0 %v6864
    %10145 = vmatmul.bf16.gmra.mxu0 %v9785
    %v10146 = vpop.f32.mrf.mxu0
    %v10147 = vadd.f32 %v10134, %v10146
    %v10148 = vpop.f32.mrf.mxu0
    %10149 = vdwg.mxu0
    %10150 = vmatpush.bf16.msra.mxu0 %v6661
    %10151 = vmatpush.bf16.msra.mxu0 %v6649
    %10152 = vmatpush.bf16.msra.mxu0 %v6637
    %10153 = vmatpush.bf16.msra.mxu0 %v6625
    %10154 = vmatpush.bf16.msra.mxu0 %v6613
    %10155 = vmatpush.bf16.msra.mxu0 %v6601
    %10156 = vmatpush.bf16.msra.mxu0 %v6589
    %10157 = vmatpush.bf16.msra.mxu0 %v6577
    %10158 = vmatmul.bf16.gmra.mxu0 %v9782
    %v10159 = vpop.f32.mrf.mxu0
    %v10160 = vadd.f32 %v5401, %v10159
    %v10161 = vpop.f32.mrf.mxu0
    %10162 = vdwg.mxu0
    %10163 = vmatpush.bf16.msra.mxu0 %v6757
    %10164 = vmatpush.bf16.msra.mxu0 %v6745
    %10165 = vmatpush.bf16.msra.mxu0 %v6733
    %10166 = vmatpush.bf16.msra.mxu0 %v6721
    %10167 = vmatpush.bf16.msra.mxu0 %v6709
    %10168 = vmatpush.bf16.msra.mxu0 %v6697
    %10169 = vmatpush.bf16.msra.mxu0 %v6685
    %10170 = vmatpush.bf16.msra.mxu0 %v6673
    %10171 = vmatmul.bf16.gmra.mxu0 %v9783
    %v10172 = vpop.f32.mrf.mxu0
    %v10173 = vadd.f32 %v10160, %v10172
    %v10174 = vpop.f32.mrf.mxu0
    %10175 = vdwg.mxu0
    %10176 = vmatpush.bf16.msra.mxu0 %v6853
    %10177 = vmatpush.bf16.msra.mxu0 %v6841
    %10178 = vmatpush.bf16.msra.mxu0 %v6829
    %10179 = vmatpush.bf16.msra.mxu0 %v6817
    %10180 = vmatpush.bf16.msra.mxu0 %v6805
    %10181 = vmatpush.bf16.msra.mxu0 %v6793
    %10182 = vmatpush.bf16.msra.mxu0 %v6781
    %10183 = vmatpush.bf16.msra.mxu0 %v6769
    %10184 = vmatmul.bf16.gmra.mxu0 %v9784
    %v10185 = vpop.f32.mrf.mxu0
    %v10186 = vadd.f32 %v10173, %v10185
    %v10187 = vpop.f32.mrf.mxu0
    %10188 = vdwg.mxu0
    %10189 = vmatpush.bf16.msra.mxu0 %v6949
    %10190 = vmatpush.bf16.msra.mxu0 %v6937
    %10191 = vmatpush.bf16.msra.mxu0 %v6925
    %10192 = vmatpush.bf16.msra.mxu0 %v6913
    %10193 = vmatpush.bf16.msra.mxu0 %v6901
    %10194 = vmatpush.bf16.msra.mxu0 %v6889
    %10195 = vmatpush.bf16.msra.mxu0 %v6877
    %10196 = vmatpush.bf16.msra.mxu0 %v6865
    %10197 = vmatmul.bf16.gmra.mxu0 %v9785
    %v10198 = vpop.f32.mrf.mxu0
    %v10199 = vadd.f32 %v10186, %v10198
    %v10200 = vpop.f32.mrf.mxu0
    %10201 = vdwg.mxu0
    %10202 = vmatpush.bf16.msra.mxu0 %v6662
    %10203 = vmatpush.bf16.msra.mxu0 %v6650
    %10204 = vmatpush.bf16.msra.mxu0 %v6638
    %10205 = vmatpush.bf16.msra.mxu0 %v6626
    %10206 = vmatpush.bf16.msra.mxu0 %v6614
    %10207 = vmatpush.bf16.msra.mxu0 %v6602
    %10208 = vmatpush.bf16.msra.mxu0 %v6590
    %10209 = vmatpush.bf16.msra.mxu0 %v6578
    %10210 = vmatmul.bf16.gmra.mxu0 %v9782
    %v10211 = vpop.f32.mrf.mxu0
    %v10212 = vadd.f32 %v5402, %v10211
    %v10213 = vpop.f32.mrf.mxu0
    %10214 = vdwg.mxu0
    %10215 = vmatpush.bf16.msra.mxu0 %v6758
    %10216 = vmatpush.bf16.msra.mxu0 %v6746
    %10217 = vmatpush.bf16.msra.mxu0 %v6734
    %10218 = vmatpush.bf16.msra.mxu0 %v6722
    %10219 = vmatpush.bf16.msra.mxu0 %v6710
    %10220 = vmatpush.bf16.msra.mxu0 %v6698
    %10221 = vmatpush.bf16.msra.mxu0 %v6686
    %10222 = vmatpush.bf16.msra.mxu0 %v6674
    %10223 = vmatmul.bf16.gmra.mxu0 %v9783
    %v10224 = vpop.f32.mrf.mxu0
    %v10225 = vadd.f32 %v10212, %v10224
    %v10226 = vpop.f32.mrf.mxu0
    %10227 = vdwg.mxu0
    %10228 = vmatpush.bf16.msra.mxu0 %v6854
    %10229 = vmatpush.bf16.msra.mxu0 %v6842
    %10230 = vmatpush.bf16.msra.mxu0 %v6830
    %10231 = vmatpush.bf16.msra.mxu0 %v6818
    %10232 = vmatpush.bf16.msra.mxu0 %v6806
    %10233 = vmatpush.bf16.msra.mxu0 %v6794
    %10234 = vmatpush.bf16.msra.mxu0 %v6782
    %10235 = vmatpush.bf16.msra.mxu0 %v6770
    %10236 = vmatmul.bf16.gmra.mxu0 %v9784
    %v10237 = vpop.f32.mrf.mxu0
    %v10238 = vadd.f32 %v10225, %v10237
    %v10239 = vpop.f32.mrf.mxu0
    %10240 = vdwg.mxu0
    %10241 = vmatpush.bf16.msra.mxu0 %v6950
    %10242 = vmatpush.bf16.msra.mxu0 %v6938
    %10243 = vmatpush.bf16.msra.mxu0 %v6926
    %10244 = vmatpush.bf16.msra.mxu0 %v6914
    %10245 = vmatpush.bf16.msra.mxu0 %v6902
    %10246 = vmatpush.bf16.msra.mxu0 %v6890
    %10247 = vmatpush.bf16.msra.mxu0 %v6878
    %10248 = vmatpush.bf16.msra.mxu0 %v6866
    %10249 = vmatmul.bf16.gmra.mxu0 %v9785
    %v10250 = vpop.f32.mrf.mxu0
    %v10251 = vadd.f32 %v10238, %v10250
    %v10252 = vpop.f32.mrf.mxu0
    %10253 = vdwg.mxu0
    %10254 = vmatpush.bf16.msra.mxu0 %v6663
    %10255 = vmatpush.bf16.msra.mxu0 %v6651
    %10256 = vmatpush.bf16.msra.mxu0 %v6639
    %10257 = vmatpush.bf16.msra.mxu0 %v6627
    %10258 = vmatpush.bf16.msra.mxu0 %v6615
    %10259 = vmatpush.bf16.msra.mxu0 %v6603
    %10260 = vmatpush.bf16.msra.mxu0 %v6591
    %10261 = vmatpush.bf16.msra.mxu0 %v6579
    %10262 = vmatmul.bf16.gmra.mxu0 %v9782
    %v10263 = vpop.f32.mrf.mxu0
    %v10264 = vadd.f32 %v5403, %v10263
    %v10265 = vpop.f32.mrf.mxu0
    %10266 = vdwg.mxu0
    %10267 = vmatpush.bf16.msra.mxu0 %v6759
    %10268 = vmatpush.bf16.msra.mxu0 %v6747
    %10269 = vmatpush.bf16.msra.mxu0 %v6735
    %10270 = vmatpush.bf16.msra.mxu0 %v6723
    %10271 = vmatpush.bf16.msra.mxu0 %v6711
    %10272 = vmatpush.bf16.msra.mxu0 %v6699
    %10273 = vmatpush.bf16.msra.mxu0 %v6687
    %10274 = vmatpush.bf16.msra.mxu0 %v6675
    %10275 = vmatmul.bf16.gmra.mxu0 %v9783
    %v10276 = vpop.f32.mrf.mxu0
    %v10277 = vadd.f32 %v10264, %v10276
    %v10278 = vpop.f32.mrf.mxu0
    %10279 = vdwg.mxu0
    %10280 = vmatpush.bf16.msra.mxu0 %v6855
    %10281 = vmatpush.bf16.msra.mxu0 %v6843
    %10282 = vmatpush.bf16.msra.mxu0 %v6831
    %10283 = vmatpush.bf16.msra.mxu0 %v6819
    %10284 = vmatpush.bf16.msra.mxu0 %v6807
    %10285 = vmatpush.bf16.msra.mxu0 %v6795
    %10286 = vmatpush.bf16.msra.mxu0 %v6783
    %10287 = vmatpush.bf16.msra.mxu0 %v6771
    %10288 = vmatmul.bf16.gmra.mxu0 %v9784
    %v10289 = vpop.f32.mrf.mxu0
    %v10290 = vadd.f32 %v10277, %v10289
    %v10291 = vpop.f32.mrf.mxu0
    %10292 = vdwg.mxu0
    %10293 = vmatpush.bf16.msra.mxu0 %v6951
    %10294 = vmatpush.bf16.msra.mxu0 %v6939
    %10295 = vmatpush.bf16.msra.mxu0 %v6927
    %10296 = vmatpush.bf16.msra.mxu0 %v6915
    %10297 = vmatpush.bf16.msra.mxu0 %v6903
    %10298 = vmatpush.bf16.msra.mxu0 %v6891
    %10299 = vmatpush.bf16.msra.mxu0 %v6879
    %10300 = vmatpush.bf16.msra.mxu0 %v6867
    %10301 = vmatmul.bf16.gmra.mxu0 %v9785
    %v10302 = vpop.f32.mrf.mxu0
    %v10303 = vadd.f32 %v10290, %v10302
    %v10304 = vpop.f32.mrf.mxu0
    %10305 = vdwg.mxu0
    %10306 = vmatpush.bf16.msra.mxu0 %v6664
    %10307 = vmatpush.bf16.msra.mxu0 %v6652
    %10308 = vmatpush.bf16.msra.mxu0 %v6640
    %10309 = vmatpush.bf16.msra.mxu0 %v6628
    %10310 = vmatpush.bf16.msra.mxu0 %v6616
    %10311 = vmatpush.bf16.msra.mxu0 %v6604
    %10312 = vmatpush.bf16.msra.mxu0 %v6592
    %10313 = vmatpush.bf16.msra.mxu0 %v6580
    %10314 = vmatmul.bf16.gmra.mxu0 %v9782
    %v10315 = vpop.f32.mrf.mxu0
    %v10316 = vadd.f32 %v5404, %v10315
    %v10317 = vpop.f32.mrf.mxu0
    %10318 = vdwg.mxu0
    %10319 = vmatpush.bf16.msra.mxu0 %v6760
    %10320 = vmatpush.bf16.msra.mxu0 %v6748
    %10321 = vmatpush.bf16.msra.mxu0 %v6736
    %10322 = vmatpush.bf16.msra.mxu0 %v6724
    %10323 = vmatpush.bf16.msra.mxu0 %v6712
    %10324 = vmatpush.bf16.msra.mxu0 %v6700
    %10325 = vmatpush.bf16.msra.mxu0 %v6688
    %10326 = vmatpush.bf16.msra.mxu0 %v6676
    %10327 = vmatmul.bf16.gmra.mxu0 %v9783
    %v10328 = vpop.f32.mrf.mxu0
    %v10329 = vadd.f32 %v10316, %v10328
    %v10330 = vpop.f32.mrf.mxu0
    %10331 = vdwg.mxu0
    %10332 = vmatpush.bf16.msra.mxu0 %v6856
    %10333 = vmatpush.bf16.msra.mxu0 %v6844
    %10334 = vmatpush.bf16.msra.mxu0 %v6832
    %10335 = vmatpush.bf16.msra.mxu0 %v6820
    %10336 = vmatpush.bf16.msra.mxu0 %v6808
    %10337 = vmatpush.bf16.msra.mxu0 %v6796
    %10338 = vmatpush.bf16.msra.mxu0 %v6784
    %10339 = vmatpush.bf16.msra.mxu0 %v6772
    %10340 = vmatmul.bf16.gmra.mxu0 %v9784
    %v10341 = vpop.f32.mrf.mxu0
    %v10342 = vadd.f32 %v10329, %v10341
    %v10343 = vpop.f32.mrf.mxu0
    %10344 = vdwg.mxu0
    %10345 = vmatpush.bf16.msra.mxu0 %v6952
    %10346 = vmatpush.bf16.msra.mxu0 %v6940
    %10347 = vmatpush.bf16.msra.mxu0 %v6928
    %10348 = vmatpush.bf16.msra.mxu0 %v6916
    %10349 = vmatpush.bf16.msra.mxu0 %v6904
    %10350 = vmatpush.bf16.msra.mxu0 %v6892
    %10351 = vmatpush.bf16.msra.mxu0 %v6880
    %10352 = vmatpush.bf16.msra.mxu0 %v6868
    %10353 = vmatmul.bf16.gmra.mxu0 %v9785
    %v10354 = vpop.f32.mrf.mxu0
    %v10355 = vadd.f32 %v10342, %v10354
    %v10356 = vpop.f32.mrf.mxu0
    %10357 = vdwg.mxu0
    %10358 = vmatpush.bf16.msra.mxu0 %v6665
    %10359 = vmatpush.bf16.msra.mxu0 %v6653
    %10360 = vmatpush.bf16.msra.mxu0 %v6641
    %10361 = vmatpush.bf16.msra.mxu0 %v6629
    %10362 = vmatpush.bf16.msra.mxu0 %v6617
    %10363 = vmatpush.bf16.msra.mxu0 %v6605
    %10364 = vmatpush.bf16.msra.mxu0 %v6593
    %10365 = vmatpush.bf16.msra.mxu0 %v6581
    %10366 = vmatmul.bf16.gmra.mxu0 %v9782
    %v10367 = vpop.f32.mrf.mxu0
    %v10368 = vadd.f32 %v5405, %v10367
    %v10369 = vpop.f32.mrf.mxu0
    %10370 = vdwg.mxu0
    %10371 = vmatpush.bf16.msra.mxu0 %v6761
    %10372 = vmatpush.bf16.msra.mxu0 %v6749
    %10373 = vmatpush.bf16.msra.mxu0 %v6737
    %10374 = vmatpush.bf16.msra.mxu0 %v6725
    %10375 = vmatpush.bf16.msra.mxu0 %v6713
    %10376 = vmatpush.bf16.msra.mxu0 %v6701
    %10377 = vmatpush.bf16.msra.mxu0 %v6689
    %10378 = vmatpush.bf16.msra.mxu0 %v6677
    %10379 = vmatmul.bf16.gmra.mxu0 %v9783
    %v10380 = vpop.f32.mrf.mxu0
    %v10381 = vadd.f32 %v10368, %v10380
    %v10382 = vpop.f32.mrf.mxu0
    %10383 = vdwg.mxu0
    %10384 = vmatpush.bf16.msra.mxu0 %v6857
    %10385 = vmatpush.bf16.msra.mxu0 %v6845
    %10386 = vmatpush.bf16.msra.mxu0 %v6833
    %10387 = vmatpush.bf16.msra.mxu0 %v6821
    %10388 = vmatpush.bf16.msra.mxu0 %v6809
    %10389 = vmatpush.bf16.msra.mxu0 %v6797
    %10390 = vmatpush.bf16.msra.mxu0 %v6785
    %10391 = vmatpush.bf16.msra.mxu0 %v6773
    %10392 = vmatmul.bf16.gmra.mxu0 %v9784
    %v10393 = vpop.f32.mrf.mxu0
    %v10394 = vadd.f32 %v10381, %v10393
    %v10395 = vpop.f32.mrf.mxu0
    %10396 = vdwg.mxu0
    %10397 = vmatpush.bf16.msra.mxu0 %v6953
    %10398 = vmatpush.bf16.msra.mxu0 %v6941
    %10399 = vmatpush.bf16.msra.mxu0 %v6929
    %10400 = vmatpush.bf16.msra.mxu0 %v6917
    %10401 = vmatpush.bf16.msra.mxu0 %v6905
    %10402 = vmatpush.bf16.msra.mxu0 %v6893
    %10403 = vmatpush.bf16.msra.mxu0 %v6881
    %10404 = vmatpush.bf16.msra.mxu0 %v6869
    %10405 = vmatmul.bf16.gmra.mxu0 %v9785
    %v10406 = vpop.f32.mrf.mxu0
    %v10407 = vadd.f32 %v10394, %v10406
    %v10408 = vpop.f32.mrf.mxu0
    %10409 = vdwg.mxu0
    %v10410 = vadd.f32 %v4817, %v9835
    %v10411 = vadd.f32 %v4869, %v9887
    %v10412 = vadd.f32 %v4921, %v9939
    %v10413 = vadd.f32 %v4973, %v9991
    %v10414 = vxor.u32 %v10410, 2147483648
    %v10415 = vxor.u32 %v10411, 2147483648
    %v10416 = vxor.u32 %v10412, 2147483648
    %v10417 = vxor.u32 %v10413, 2147483648
    %v10418 = vmul.f32 %v10414, 1.442695
    %v10419 = vpow.pop %v10418
    %v10420 = vmul.f32 %v10415, 1.442695
    %v10421 = vpow.pop %v10420
    %v10422 = vmul.f32 %v10416, 1.442695
    %v10423 = vpow.pop %v10422
    %v10424 = vmul.f32 %v10417, 1.442695
    %v10425 = vpow.pop %v10424
    %v10426 = vadd.f32 %v10419, 1.0
    %v10427 = vadd.f32 %v10421, 1.0
    %v10428 = vadd.f32 %v10423, 1.0
    %v10429 = vadd.f32 %v10425, 1.0
    %v10430 = vrcp.pop %v10426
    %v10431 = vmul.f32 %v10426, %v10430
    %v10432 = vsub.f32 1.0, %v10431
    %v10433 = vmul.f32 %v10430, %v10432
    %v10434 = vadd.f32 %v10430, %v10433
    %vm10435 = vweird.f32 %v10426
    %vm10436 = vweird.f32 %v10430
    %vm10437 = vmor %vm10435, %vm10436
    %v10438 = vsel %vm10437, %v10430, %v10434
    %v10439 = vand.u32 2147483647, %v10426
    %vm10440 = vcmp.eq.f32.partialorder %v10439, 8.507059e+37
    %v10441 = vand.u32 %v10426, 2147483648
    %v10442 = vor.u32 1.1754944e-38, %v10441
    %v10443 = vsel %vm10440, %v10442, %v10438
    %v10444 = vmul.f32 1.0, %v10443
    %v10445 = vrcp.pop %v10427
    %v10446 = vmul.f32 %v10427, %v10445
    %v10447 = vsub.f32 1.0, %v10446
    %v10448 = vmul.f32 %v10445, %v10447
    %v10449 = vadd.f32 %v10445, %v10448
    %vm10450 = vweird.f32 %v10427
    %vm10451 = vweird.f32 %v10445
    %vm10452 = vmor %vm10450, %vm10451
    %v10453 = vsel %vm10452, %v10445, %v10449
    %v10454 = vand.u32 2147483647, %v10427
    %vm10455 = vcmp.eq.f32.partialorder %v10454, 8.507059e+37
    %v10456 = vand.u32 %v10427, 2147483648
    %v10457 = vor.u32 1.1754944e-38, %v10456
    %v10458 = vsel %vm10455, %v10457, %v10453
    %v10459 = vmul.f32 1.0, %v10458
    %v10460 = vrcp.pop %v10428
    %v10461 = vmul.f32 %v10428, %v10460
    %v10462 = vsub.f32 1.0, %v10461
    %v10463 = vmul.f32 %v10460, %v10462
    %v10464 = vadd.f32 %v10460, %v10463
    %vm10465 = vweird.f32 %v10428
    %vm10466 = vweird.f32 %v10460
    %vm10467 = vmor %vm10465, %vm10466
    %v10468 = vsel %vm10467, %v10460, %v10464
    %v10469 = vand.u32 2147483647, %v10428
    %vm10470 = vcmp.eq.f32.partialorder %v10469, 8.507059e+37
    %v10471 = vand.u32 %v10428, 2147483648
    %v10472 = vor.u32 1.1754944e-38, %v10471
    %v10473 = vsel %vm10470, %v10472, %v10468
    %v10474 = vmul.f32 1.0, %v10473
    %v10475 = vrcp.pop %v10429
    %v10476 = vmul.f32 %v10429, %v10475
    %v10477 = vsub.f32 1.0, %v10476
    %v10478 = vmul.f32 %v10475, %v10477
    %v10479 = vadd.f32 %v10475, %v10478
    %vm10480 = vweird.f32 %v10429
    %vm10481 = vweird.f32 %v10475
    %vm10482 = vmor %vm10480, %vm10481
    %v10483 = vsel %vm10482, %v10475, %v10479
    %v10484 = vand.u32 2147483647, %v10429
    %vm10485 = vcmp.eq.f32.partialorder %v10484, 8.507059e+37
    %v10486 = vand.u32 %v10429, 2147483648
    %v10487 = vor.u32 1.1754944e-38, %v10486
    %v10488 = vsel %vm10485, %v10487, %v10483
    %v10489 = vmul.f32 1.0, %v10488
    %v10490 = vadd.f32 %v5025, %v10043
    %v10491 = vadd.f32 %v5077, %v10095
    %v10492 = vadd.f32 %v5129, %v10147
    %v10493 = vadd.f32 %v5181, %v10199
    %v10494 = vxor.u32 %v10490, 2147483648
    %v10495 = vxor.u32 %v10491, 2147483648
    %v10496 = vxor.u32 %v10492, 2147483648
    %v10497 = vxor.u32 %v10493, 2147483648
    %v10498 = vmul.f32 %v10494, 1.442695
    %v10499 = vpow.pop %v10498
    %v10500 = vmul.f32 %v10495, 1.442695
    %v10501 = vpow.pop %v10500
    %v10502 = vmul.f32 %v10496, 1.442695
    %v10503 = vpow.pop %v10502
    %v10504 = vmul.f32 %v10497, 1.442695
    %v10505 = vpow.pop %v10504
    %v10506 = vadd.f32 %v10499, 1.0
    %v10507 = vadd.f32 %v10501, 1.0
    %v10508 = vadd.f32 %v10503, 1.0
    %v10509 = vadd.f32 %v10505, 1.0
    %v10510 = vrcp.pop %v10506
    %v10511 = vmul.f32 %v10506, %v10510
    %v10512 = vsub.f32 1.0, %v10511
    %v10513 = vmul.f32 %v10510, %v10512
    %v10514 = vadd.f32 %v10510, %v10513
    %vm10515 = vweird.f32 %v10506
    %vm10516 = vweird.f32 %v10510
    %vm10517 = vmor %vm10515, %vm10516
    %v10518 = vsel %vm10517, %v10510, %v10514
    %v10519 = vand.u32 2147483647, %v10506
    %vm10520 = vcmp.eq.f32.partialorder %v10519, 8.507059e+37
    %v10521 = vand.u32 %v10506, 2147483648
    %v10522 = vor.u32 1.1754944e-38, %v10521
    %v10523 = vsel %vm10520, %v10522, %v10518
    %v10524 = vmul.f32 1.0, %v10523
    %v10525 = vrcp.pop %v10507
    %v10526 = vmul.f32 %v10507, %v10525
    %v10527 = vsub.f32 1.0, %v10526
    %v10528 = vmul.f32 %v10525, %v10527
    %v10529 = vadd.f32 %v10525, %v10528
    %vm10530 = vweird.f32 %v10507
    %vm10531 = vweird.f32 %v10525
    %vm10532 = vmor %vm10530, %vm10531
    %v10533 = vsel %vm10532, %v10525, %v10529
    %v10534 = vand.u32 2147483647, %v10507
    %vm10535 = vcmp.eq.f32.partialorder %v10534, 8.507059e+37
    %v10536 = vand.u32 %v10507, 2147483648
    %v10537 = vor.u32 1.1754944e-38, %v10536
    %v10538 = vsel %vm10535, %v10537, %v10533
    %v10539 = vmul.f32 1.0, %v10538
    %v10540 = vrcp.pop %v10508
    %v10541 = vmul.f32 %v10508, %v10540
    %v10542 = vsub.f32 1.0, %v10541
    %v10543 = vmul.f32 %v10540, %v10542
    %v10544 = vadd.f32 %v10540, %v10543
    %vm10545 = vweird.f32 %v10508
    %vm10546 = vweird.f32 %v10540
    %vm10547 = vmor %vm10545, %vm10546
    %v10548 = vsel %vm10547, %v10540, %v10544
    %v10549 = vand.u32 2147483647, %v10508
    %vm10550 = vcmp.eq.f32.partialorder %v10549, 8.507059e+37
    %v10551 = vand.u32 %v10508, 2147483648
    %v10552 = vor.u32 1.1754944e-38, %v10551
    %v10553 = vsel %vm10550, %v10552, %v10548
    %v10554 = vmul.f32 1.0, %v10553
    %v10555 = vrcp.pop %v10509
    %v10556 = vmul.f32 %v10509, %v10555
    %v10557 = vsub.f32 1.0, %v10556
    %v10558 = vmul.f32 %v10555, %v10557
    %v10559 = vadd.f32 %v10555, %v10558
    %vm10560 = vweird.f32 %v10509
    %vm10561 = vweird.f32 %v10555
    %vm10562 = vmor %vm10560, %vm10561
    %v10563 = vsel %vm10562, %v10555, %v10559
    %v10564 = vand.u32 2147483647, %v10509
    %vm10565 = vcmp.eq.f32.partialorder %v10564, 8.507059e+37
    %v10566 = vand.u32 %v10509, 2147483648
    %v10567 = vor.u32 1.1754944e-38, %v10566
    %v10568 = vsel %vm10565, %v10567, %v10563
    %v10569 = vmul.f32 1.0, %v10568
    %v10570 = vmul.f32 %v10444, %v10251
    %v10571 = vmul.f32 %v10459, %v10303
    %v10572 = vmul.f32 %v10474, %v10355
    %v10573 = vmul.f32 %v10489, %v10407
    %v10574 = vadd.f32 %v5233, %v10570
    %v10575 = vadd.f32 %v5285, %v10571
    %v10576 = vadd.f32 %v5337, %v10572
    %v10577 = vadd.f32 %v5389, %v10573
    %v10578 = vtanh.pop %v10574
    %v10579 = vtanh.pop %v10575
    %v10580 = vtanh.pop %v10576
    %v10581 = vtanh.pop %v10577
    %v10582 = vsub.f32 1.0, %v10524
    %v10583 = vsub.f32 1.0, %v10539
    %v10584 = vsub.f32 1.0, %v10554
    %v10585 = vsub.f32 1.0, %v10569
    %v10586 = vmul.f32 %v10582, %v10578
    %v10587 = vmul.f32 %v10583, %v10579
    %v10588 = vmul.f32 %v10584, %v10580
    %v10589 = vmul.f32 %v10585, %v10581
    %v10590 = vmul.f32 %v10524, %v9778
    %v10591 = vmul.f32 %v10539, %v9779
    %v10592 = vmul.f32 %v10554, %v9780
    %v10593 = vmul.f32 %v10569, %v9781
    %v10594 = vadd.f32 %v10586, %v10590
    %v10595 = vadd.f32 %v10587, %v10591
    %v10596 = vadd.f32 %v10588, %v10592
    %v10597 = vadd.f32 %v10589, %v10593
    %s10598 = sld [smem:[#allocation11]]
    %s10599 = sld [smem:[#allocation10]]
    %v10600 = vstv %s10599
    %v10601 = vmul.f32 %v10600, %v8146
    %v10602 = vmul.f32 %v10600, %v8147
    %v10603 = vmul.f32 %v10600, %v8148
    %v10604 = vmul.f32 %v10600, %v8149
    %v10605 = vstv %s10598
    %v10606 = vadd.f32 %v10605, %v10601
    %v10607 = vadd.f32 %v10605, %v10602
    %v10608 = vadd.f32 %v10605, %v10603
    %v10609 = vadd.f32 %v10605, %v10604
    %s10610 = sld [smem:[#allocation10 + $0x1]]
    %v10611 = vstv %s10610
    %v10612 = vmul.f32 %v10611, %v8962
    %v10613 = vmul.f32 %v10611, %v8963
    %v10614 = vmul.f32 %v10611, %v8964
    %v10615 = vmul.f32 %v10611, %v8965
    %v10616 = vadd.f32 %v10606, %v10612
    %v10617 = vadd.f32 %v10607, %v10613
    %v10618 = vadd.f32 %v10608, %v10614
    %v10619 = vadd.f32 %v10609, %v10615
    %s10620 = sld [smem:[#allocation10 + $0x2]]
    %v10621 = vstv %s10620
    %v10622 = vmul.f32 %v10621, %v9778
    %v10623 = vmul.f32 %v10621, %v9779
    %v10624 = vmul.f32 %v10621, %v9780
    %v10625 = vmul.f32 %v10621, %v9781
    %v10626 = vadd.f32 %v10616, %v10622
    %v10627 = vadd.f32 %v10617, %v10623
    %v10628 = vadd.f32 %v10618, %v10624
    %v10629 = vadd.f32 %v10619, %v10625
    %s10630 = sld [smem:[#allocation10 + $0x3]]
    %v10631 = vstv %s10630
    %v10632 = vmul.f32 %v10631, %v10594
    %v10633 = vmul.f32 %v10631, %v10595
    %v10634 = vmul.f32 %v10631, %v10596
    %v10635 = vmul.f32 %v10631, %v10597
    %v10636 = vadd.f32 %v10626, %v10632
    %v10637 = vadd.f32 %v10627, %v10633
    %v10638 = vadd.f32 %v10628, %v10634
    %v10639 = vadd.f32 %v10629, %v10635
    %10640 = vst [vmem:[%s7] sm:$0xff] %v10636
    %10641 = vst [vmem:[%s7 + $0x8] sm:$0xff] %v10637
    %10642 = vst [vmem:[%s7 + $0x10] sm:$0xff] %v10638
    %10643 = vst [vmem:[%s7 + $0x18] sm:$0xff] %v10639
    %s10644 = sld [smem:[#allocation11 + $0x1]]
    %s10645 = sld [smem:[#allocation10 + $0x4]]
    %v10646 = vstv %s10645
    %v10647 = vmul.f32 %v10646, %v8146
    %v10648 = vmul.f32 %v10646, %v8147
    %v10649 = vmul.f32 %v10646, %v8148
    %v10650 = vmul.f32 %v10646, %v8149
    %v10651 = vstv %s10644
    %v10652 = vadd.f32 %v10651, %v10647
    %v10653 = vadd.f32 %v10651, %v10648
    %v10654 = vadd.f32 %v10651, %v10649
    %v10655 = vadd.f32 %v10651, %v10650
    %s10656 = sld [smem:[#allocation10 + $0x5]]
    %v10657 = vstv %s10656
    %v10658 = vmul.f32 %v10657, %v8962
    %v10659 = vmul.f32 %v10657, %v8963
    %v10660 = vmul.f32 %v10657, %v8964
    %v10661 = vmul.f32 %v10657, %v8965
    %v10662 = vadd.f32 %v10652, %v10658
    %v10663 = vadd.f32 %v10653, %v10659
    %v10664 = vadd.f32 %v10654, %v10660
    %v10665 = vadd.f32 %v10655, %v10661
    %s10666 = sld [smem:[#allocation10 + $0x6]]
    %v10667 = vstv %s10666
    %v10668 = vmul.f32 %v10667, %v9778
    %v10669 = vmul.f32 %v10667, %v9779
    %v10670 = vmul.f32 %v10667, %v9780
    %v10671 = vmul.f32 %v10667, %v9781
    %v10672 = vadd.f32 %v10662, %v10668
    %v10673 = vadd.f32 %v10663, %v10669
    %v10674 = vadd.f32 %v10664, %v10670
    %v10675 = vadd.f32 %v10665, %v10671
    %s10676 = sld [smem:[#allocation10 + $0x7]]
    %v10677 = vstv %s10676
    %v10678 = vmul.f32 %v10677, %v10594
    %v10679 = vmul.f32 %v10677, %v10595
    %v10680 = vmul.f32 %v10677, %v10596
    %v10681 = vmul.f32 %v10677, %v10597
    %v10682 = vadd.f32 %v10672, %v10678
    %v10683 = vadd.f32 %v10673, %v10679
    %v10684 = vadd.f32 %v10674, %v10680
    %v10685 = vadd.f32 %v10675, %v10681
    %s10686 = scalar_lea.vmem %s7, 32
    %10687 = vst [vmem:[%s10686] sm:$0xff] %v10682
    %10688 = vst [vmem:[%s10686 + $0x8] sm:$0xff] %v10683
    %10689 = vst [vmem:[%s10686 + $0x10] sm:$0xff] %v10684
    %10690 = vst [vmem:[%s10686 + $0x18] sm:$0xff] %v10685
    %s10691 = sld [smem:[#allocation11 + $0x2]]
    %s10692 = sld [smem:[#allocation10 + $0x8]]
    %v10693 = vstv %s10692
    %v10694 = vmul.f32 %v10693, %v8146
    %v10695 = vmul.f32 %v10693, %v8147
    %v10696 = vmul.f32 %v10693, %v8148
    %v10697 = vmul.f32 %v10693, %v8149
    %v10698 = vstv %s10691
    %v10699 = vadd.f32 %v10698, %v10694
    %v10700 = vadd.f32 %v10698, %v10695
    %v10701 = vadd.f32 %v10698, %v10696
    %v10702 = vadd.f32 %v10698, %v10697
    %s10703 = sld [smem:[#allocation10 + $0x9]]
    %v10704 = vstv %s10703
    %v10705 = vmul.f32 %v10704, %v8962
    %v10706 = vmul.f32 %v10704, %v8963
    %v10707 = vmul.f32 %v10704, %v8964
    %v10708 = vmul.f32 %v10704, %v8965
    %v10709 = vadd.f32 %v10699, %v10705
    %v10710 = vadd.f32 %v10700, %v10706
    %v10711 = vadd.f32 %v10701, %v10707
    %v10712 = vadd.f32 %v10702, %v10708
    %s10713 = sld [smem:[#allocation10 + $0xa]]
    %v10714 = vstv %s10713
    %v10715 = vmul.f32 %v10714, %v9778
    %v10716 = vmul.f32 %v10714, %v9779
    %v10717 = vmul.f32 %v10714, %v9780
    %v10718 = vmul.f32 %v10714, %v9781
    %v10719 = vadd.f32 %v10709, %v10715
    %v10720 = vadd.f32 %v10710, %v10716
    %v10721 = vadd.f32 %v10711, %v10717
    %v10722 = vadd.f32 %v10712, %v10718
    %s10723 = sld [smem:[#allocation10 + $0xb]]
    %v10724 = vstv %s10723
    %v10725 = vmul.f32 %v10724, %v10594
    %v10726 = vmul.f32 %v10724, %v10595
    %v10727 = vmul.f32 %v10724, %v10596
    %v10728 = vmul.f32 %v10724, %v10597
    %v10729 = vadd.f32 %v10719, %v10725
    %v10730 = vadd.f32 %v10720, %v10726
    %v10731 = vadd.f32 %v10721, %v10727
    %v10732 = vadd.f32 %v10722, %v10728
    %s10733 = scalar_lea.vmem %s7, 64
    %10734 = vst [vmem:[%s10733] sm:$0xff] %v10729
    %10735 = vst [vmem:[%s10733 + $0x8] sm:$0xff] %v10730
    %10736 = vst [vmem:[%s10733 + $0x10] sm:$0xff] %v10731
    %10737 = vst [vmem:[%s10733 + $0x18] sm:$0xff] %v10732
    %s10738 = sld [smem:[#allocation11 + $0x3]]
    %s10739 = sld [smem:[#allocation10 + $0xc]]
    %v10740 = vstv %s10739
    %v10741 = vmul.f32 %v10740, %v8146
    %v10742 = vmul.f32 %v10740, %v8147
    %v10743 = vmul.f32 %v10740, %v8148
    %v10744 = vmul.f32 %v10740, %v8149
    %v10745 = vstv %s10738
    %v10746 = vadd.f32 %v10745, %v10741
    %v10747 = vadd.f32 %v10745, %v10742
    %v10748 = vadd.f32 %v10745, %v10743
    %v10749 = vadd.f32 %v10745, %v10744
    %s10750 = sld [smem:[#allocation10 + $0xd]]
    %v10751 = vstv %s10750
    %v10752 = vmul.f32 %v10751, %v8962
    %v10753 = vmul.f32 %v10751, %v8963
    %v10754 = vmul.f32 %v10751, %v8964
    %v10755 = vmul.f32 %v10751, %v8965
    %v10756 = vadd.f32 %v10746, %v10752
    %v10757 = vadd.f32 %v10747, %v10753
    %v10758 = vadd.f32 %v10748, %v10754
    %v10759 = vadd.f32 %v10749, %v10755
    %s10760 = sld [smem:[#allocation10 + $0xe]]
    %v10761 = vstv %s10760
    %v10762 = vmul.f32 %v10761, %v9778
    %v10763 = vmul.f32 %v10761, %v9779
    %v10764 = vmul.f32 %v10761, %v9780
    %v10765 = vmul.f32 %v10761, %v9781
    %v10766 = vadd.f32 %v10756, %v10762
    %v10767 = vadd.f32 %v10757, %v10763
    %v10768 = vadd.f32 %v10758, %v10764
    %v10769 = vadd.f32 %v10759, %v10765
    %s10770 = sld [smem:[#allocation10 + $0xf]]
    %v10771 = vstv %s10770
    %v10772 = vmul.f32 %v10771, %v10594
    %v10773 = vmul.f32 %v10771, %v10595
    %v10774 = vmul.f32 %v10771, %v10596
    %v10775 = vmul.f32 %v10771, %v10597
    %v10776 = vadd.f32 %v10766, %v10772
    %v10777 = vadd.f32 %v10767, %v10773
    %v10778 = vadd.f32 %v10768, %v10774
    %v10779 = vadd.f32 %v10769, %v10775
    %s10780 = scalar_lea.vmem %s7, 96
    %10781 = vst [vmem:[%s10780] sm:$0xff] %v10776
    %10782 = vst [vmem:[%s10780 + $0x8] sm:$0xff] %v10777
    %10783 = vst [vmem:[%s10780 + $0x10] sm:$0xff] %v10778
    %10784 = vst [vmem:[%s10780 + $0x18] sm:$0xff] %v10779
    %s10785 = sld [smem:[#allocation11 + $0x4]]
    %s10786 = sld [smem:[#allocation10 + $0x10]]
    %v10787 = vstv %s10786
    %v10788 = vmul.f32 %v10787, %v8146
    %v10789 = vmul.f32 %v10787, %v8147
    %v10790 = vmul.f32 %v10787, %v8148
    %v10791 = vmul.f32 %v10787, %v8149
    %v10792 = vstv %s10785
    %v10793 = vadd.f32 %v10792, %v10788
    %v10794 = vadd.f32 %v10792, %v10789
    %v10795 = vadd.f32 %v10792, %v10790
    %v10796 = vadd.f32 %v10792, %v10791
    %s10797 = sld [smem:[#allocation10 + $0x11]]
    %v10798 = vstv %s10797
    %v10799 = vmul.f32 %v10798, %v8962
    %v10800 = vmul.f32 %v10798, %v8963
    %v10801 = vmul.f32 %v10798, %v8964
    %v10802 = vmul.f32 %v10798, %v8965
    %v10803 = vadd.f32 %v10793, %v10799
    %v10804 = vadd.f32 %v10794, %v10800
    %v10805 = vadd.f32 %v10795, %v10801
    %v10806 = vadd.f32 %v10796, %v10802
    %s10807 = sld [smem:[#allocation10 + $0x12]]
    %v10808 = vstv %s10807
    %v10809 = vmul.f32 %v10808, %v9778
    %v10810 = vmul.f32 %v10808, %v9779
    %v10811 = vmul.f32 %v10808, %v9780
    %v10812 = vmul.f32 %v10808, %v9781
    %v10813 = vadd.f32 %v10803, %v10809
    %v10814 = vadd.f32 %v10804, %v10810
    %v10815 = vadd.f32 %v10805, %v10811
    %v10816 = vadd.f32 %v10806, %v10812
    %s10817 = sld [smem:[#allocation10 + $0x13]]
    %v10818 = vstv %s10817
    %v10819 = vmul.f32 %v10818, %v10594
    %v10820 = vmul.f32 %v10818, %v10595
    %v10821 = vmul.f32 %v10818, %v10596
    %v10822 = vmul.f32 %v10818, %v10597
    %v10823 = vadd.f32 %v10813, %v10819
    %v10824 = vadd.f32 %v10814, %v10820
    %v10825 = vadd.f32 %v10815, %v10821
    %v10826 = vadd.f32 %v10816, %v10822
    %s10827 = scalar_lea.vmem %s7, 128
    %10828 = vst [vmem:[%s10827] sm:$0xff] %v10823
    %10829 = vst [vmem:[%s10827 + $0x8] sm:$0xff] %v10824
    %10830 = vst [vmem:[%s10827 + $0x10] sm:$0xff] %v10825
    %10831 = vst [vmem:[%s10827 + $0x18] sm:$0xff] %v10826
    %s10832 = sld [smem:[#allocation11 + $0x5]]
    %s10833 = sld [smem:[#allocation10 + $0x14]]
    %v10834 = vstv %s10833
    %v10835 = vmul.f32 %v10834, %v8146
    %v10836 = vmul.f32 %v10834, %v8147
    %v10837 = vmul.f32 %v10834, %v8148
    %v10838 = vmul.f32 %v10834, %v8149
    %v10839 = vstv %s10832
    %v10840 = vadd.f32 %v10839, %v10835
    %v10841 = vadd.f32 %v10839, %v10836
    %v10842 = vadd.f32 %v10839, %v10837
    %v10843 = vadd.f32 %v10839, %v10838
    %s10844 = sld [smem:[#allocation10 + $0x15]]
    %v10845 = vstv %s10844
    %v10846 = vmul.f32 %v10845, %v8962
    %v10847 = vmul.f32 %v10845, %v8963
    %v10848 = vmul.f32 %v10845, %v8964
    %v10849 = vmul.f32 %v10845, %v8965
    %v10850 = vadd.f32 %v10840, %v10846
    %v10851 = vadd.f32 %v10841, %v10847
    %v10852 = vadd.f32 %v10842, %v10848
    %v10853 = vadd.f32 %v10843, %v10849
    %s10854 = sld [smem:[#allocation10 + $0x16]]
    %v10855 = vstv %s10854
    %v10856 = vmul.f32 %v10855, %v9778
    %v10857 = vmul.f32 %v10855, %v9779
    %v10858 = vmul.f32 %v10855, %v9780
    %v10859 = vmul.f32 %v10855, %v9781
    %v10860 = vadd.f32 %v10850, %v10856
    %v10861 = vadd.f32 %v10851, %v10857
    %v10862 = vadd.f32 %v10852, %v10858
    %v10863 = vadd.f32 %v10853, %v10859
    %s10864 = sld [smem:[#allocation10 + $0x17]]
    %v10865 = vstv %s10864
    %v10866 = vmul.f32 %v10865, %v10594
    %v10867 = vmul.f32 %v10865, %v10595
    %v10868 = vmul.f32 %v10865, %v10596
    %v10869 = vmul.f32 %v10865, %v10597
    %v10870 = vadd.f32 %v10860, %v10866
    %v10871 = vadd.f32 %v10861, %v10867
    %v10872 = vadd.f32 %v10862, %v10868
    %v10873 = vadd.f32 %v10863, %v10869
    %s10874 = scalar_lea.vmem %s7, 160
    %10875 = vst [vmem:[%s10874] sm:$0xff] %v10870
    %10876 = vst [vmem:[%s10874 + $0x8] sm:$0xff] %v10871
    %10877 = vst [vmem:[%s10874 + $0x10] sm:$0xff] %v10872
    %10878 = vst [vmem:[%s10874 + $0x18] sm:$0xff] %v10873
    // Predicated region
    $region54: #{grunet_forward.1} parent=1 // pred_check
      _
    $region55: #{grunet_forward.1} parent=1 // pred_check_branch
      %10880 = sbr.rel (0) target = $region57
    $region56: #{grunet_forward.1} parent=1 // pred_region
      _
    $region57: #{grunet_forward.1} parent=1 // pred_fallthru
      _
    // Predicated region
    $region58: #{grunet_forward.1} parent=1 // pred_check
      _
    $region59: #{grunet_forward.1} parent=1 // pred_check_branch
      %10882 = sbr.rel (0) target = $region61
    $region60: #{grunet_forward.1} parent=1 // pred_region
      _
    $region61: #{grunet_forward.1} parent=1 // pred_fallthru
      _
    %10883 = vsyncpa [#allocation3], 1
    %10884 = vsyncpa [#allocation6], 1
    %10885 = vsyncpa [#allocation9], 1
    %10886 = vsyncpa [#allocation4], 1
    %10887 = vsyncpa [#allocation12], 1

</llo_original>
